<compile_context>
chip_gen: v7x
topology: tpu7x:2x2x1
jax: 0.10.0
libtpu: 0.0.40
codegen_flags: <defaults>
</compile_context>

<pallas_src>
import jax
import jax.numpy as jnp
from jax.experimental import pallas as pl
from jax.experimental.pallas import tpu as pltpu

HEADS = 4


# ----------------------------------------------------------------------------
# Fused kernel: encoder -> adjacency aggregation -> attention -> heads -> sample
# ----------------------------------------------------------------------------
def _actor_fused_kernel(
    x_ref, adjk_ref,
    w1e_ref, b1e_ref, w2e_ref, b2e_ref,
    wq_ref, wk_ref, wv_ref, wo_ref,
    wm1_ref, bm1_ref, wm2_ref, bm2_ref,
    ws1_ref, bs1_ref, ws2_ref, bs2_ref,
    eps_ref,
    act_ref, lp_ref,
    q_sc, k_sc, v_sc, ctx_sc, cf_sc,
):
    B, NH = x_ref.shape
    A = w1e_ref.shape[0]
    _, N, H = q_sc.shape
    NF = wm2_ref.shape[-1]
    F = NF // N
    dh = H // HEADS
    scale = 1.0 / (dh ** 0.5)

    x_flat = x_ref[...]                                        # (B, N*H)
    lp_acc = jnp.zeros((B, NF), jnp.float32)                   # per-(node, freedom) terms

    for a in range(A):                                         # A = 3, static unroll
        # ---- per-action / per-node encoder MMLP: block-diagonal weights => two
        #      lane-dense (B, N*H) @ (N*H, N*H) MXU matmuls.
        h1 = jnp.dot(x_flat, w1e_ref[a], preferred_element_type=jnp.float32) + b1e_ref[a]
        h1 = jnp.maximum(h1, 0.0)
        enc = jnp.dot(h1, w2e_ref[a], preferred_element_type=jnp.float32) + b2e_ref[a]

        # ---- scatter_add over edges == dense adjacency matmul (Kronecker form keeps the
        #      flat layout: agg[b, d, :] = sum_s adj[d, s] * enc[b, s, :]).
        agg = jnp.dot(enc, adjk_ref[a], preferred_element_type=jnp.float32)

        # ---- 4-head self-attention over nodes with residual.  Q/K/V/O projections stay
        #      in the flat layout via kron(I_N, W); only the tiny (N, H) score math runs
        #      node-major (relayout through VMEM scratch, static lane slices only).
        qf = jnp.dot(agg, wq_ref[...], preferred_element_type=jnp.float32)
        kf = jnp.dot(agg, wk_ref[...], preferred_element_type=jnp.float32)
        vf = jnp.dot(agg, wv_ref[...], preferred_element_type=jnp.float32)
        for n in range(N):
            q_sc[:, n, :] = qf[:, n * H:(n + 1) * H]
            k_sc[:, n, :] = kf[:, n * H:(n + 1) * H]
            v_sc[:, n, :] = vf[:, n * H:(n + 1) * H]
        for b in range(B):
            qb = q_sc[b]
            kb = k_sc[b]
            vb = v_sc[b]
            for hh in range(HEADS):
                sl = slice(hh * dh, (hh + 1) * dh)
                s = jnp.dot(qb[:, sl], kb[:, sl].T,
                            preferred_element_type=jnp.float32) * scale
                s = s - jnp.max(s, axis=-1, keepdims=True)
                e = jnp.exp(s)
                p = e * pl.reciprocal(jnp.sum(e, axis=-1, keepdims=True), approx=True)
                ctx_sc[b, :, sl] = jnp.dot(p, vb[:, sl], preferred_element_type=jnp.float32)
        for n in range(N):                                     # node-major ctx -> flat
            cf_sc[:, n * H:(n + 1) * H] = ctx_sc[:, n, :]
        xt = agg + jnp.dot(cf_sc[...], wo_ref[...], preferred_element_type=jnp.float32)

        # ---- decision heads (mu / ln_sigma), block-diagonal per-node MLPs (VMEM resident).
        hm = jnp.maximum(
            jnp.dot(xt, wm1_ref[a], preferred_element_type=jnp.float32) + bm1_ref[a], 0.0)
        mu = jnp.dot(hm, wm2_ref[a], preferred_element_type=jnp.float32) + bm2_ref[a]
        hs = jnp.maximum(
            jnp.dot(xt, ws1_ref[a], preferred_element_type=jnp.float32) + bs1_ref[a], 0.0)
        ls = jnp.dot(hs, ws2_ref[a], preferred_element_type=jnp.float32) + bs2_ref[a]

        # ---- reparameterized sample + Gaussian log-prob.  ln_sigma is log-VARIANCE like the
        #      reference: std = exp(ls)**0.5, and (sample-mu)^2/(2 exp(ls)) == eps^2/2 exactly.
        eps = eps_ref[a]                                       # (B, N*F)
        sample = mu + eps * jnp.exp(0.5 * ls)
        lp_acc = lp_acc + (-0.5 * ls - 0.5 * eps * eps)

        # ---- per-action squash (same hard-coded channel order as the reference).
        if a == 0:                                             # softmax(tanh(.)) over freedom dim
            t = jnp.tanh(sample)
            for n in range(N):
                tn = t[:, n * F:(n + 1) * F]
                tn = tn - jnp.max(tn, axis=-1, keepdims=True)
                en = jnp.exp(tn)
                act_ref[a, :, n * F:(n + 1) * F] = en / jnp.sum(en, axis=-1, keepdims=True)
        elif a == 1:                                           # sigmoid
            act_ref[a] = 1.0 / (1.0 + jnp.exp(-sample))
        else:                                                  # tanh
            act_ref[a] = jnp.tanh(sample)

    # ---- log_prob[b, n] = sum over (action, freedom) of the Gaussian terms.
    for n in range(N):
        lp_ref[:, n:n + 1] = jnp.sum(lp_acc[:, n * F:(n + 1) * F], axis=-1, keepdims=True)


def _actor_pallas_call(x_flat, adjk, pk, eps, node_nums):
    B, NH = x_flat.shape
    N = node_nums
    H = NH // N
    A = pk["w1e"].shape[0]
    NF = pk["wm2"].shape[-1]
    vmem = pl.BlockSpec(memory_space=pltpu.MemorySpace.VMEM)
    return pl.pallas_call(
        _actor_fused_kernel,
        out_shape=(jax.ShapeDtypeStruct((A, B, NF), jnp.float32),
                   jax.ShapeDtypeStruct((B, N), jnp.float32)),
        in_specs=[vmem] * 19,
        out_specs=(vmem, vmem),
        scratch_shapes=[
            pltpu.VMEM((B, N, H), jnp.float32),    # q (node-major)
            pltpu.VMEM((B, N, H), jnp.float32),    # k
            pltpu.VMEM((B, N, H), jnp.float32),    # v
            pltpu.VMEM((B, N, H), jnp.float32),    # per-head context
            pltpu.VMEM((B, NH), jnp.float32),      # context back in flat layout
        ],
    )(x_flat, adjk,
      pk["w1e"], pk["b1e"], pk["w2e"], pk["b2e"],
      pk["wq"], pk["wk"], pk["wv"], pk["wo"],
      pk["wm1"], pk["bm1"], pk["wm2"], pk["bm2"],
      pk["ws1"], pk["bs1"], pk["ws2"], pk["bs2"],
      eps)


# ----------------------------------------------------------------------------
# Parameter init (PyTorch-like per-node weights) + one-time packing to MXU-friendly forms
# ----------------------------------------------------------------------------
def _init_mmlp(key, n_actions, n_nodes, d_in, d_out, scale=0.1):
    k1, k2, k3, k4 = jax.random.split(key, 4)
    return {
        "w1": jax.random.normal(k1, (n_actions, n_nodes, d_in, d_in), jnp.float32) * scale,
        "b1": jax.random.normal(k2, (n_actions, n_nodes, d_in), jnp.float32) * scale,
        "w2": jax.random.normal(k3, (n_actions, n_nodes, d_in, d_out), jnp.float32) * scale,
        "b2": jax.random.normal(k4, (n_actions, n_nodes, d_out), jnp.float32) * scale,
    }


def init_actor(key, hidden, freedom_degree, node_nums, scale=0.1):
    A = len(freedom_degree)
    assert all(f == freedom_degree[0] for f in freedom_degree), "stack(dim=2) needs equal freedom"
    F = freedom_degree[0]
    k_mlp, k_mu, k_sg, kq, kk, kv, ko = jax.random.split(key, 7)
    return {
        "mlp": _init_mmlp(k_mlp, A, node_nums, hidden, hidden, scale),
        "mu": _init_mmlp(k_mu, A, node_nums, hidden, F, scale),
        "sigma": _init_mmlp(k_sg, A, node_nums, hidden, F, scale),
        "transformer": {
            "wq": jax.random.normal(kq, (hidden, hidden), jnp.float32) * scale,
            "wk": jax.random.normal(kk, (hidden, hidden), jnp.float32) * scale,
            "wv": jax.random.normal(kv, (hidden, hidden), jnp.float32) * scale,
            "wo": jax.random.normal(ko, (hidden, hidden), jnp.float32) * scale,
        },
    }


def _block_diag(w):
    """(A, N, Di, Do) per-node weights -> (A, N*Di, N*Do) block-diagonal stack."""
    A, N, Di, Do = w.shape
    eye = jnp.eye(N, dtype=w.dtype)
    return (eye[None, :, None, :, None] * w[:, :, :, None, :]).reshape(A, N * Di, N * Do)


def pack_actor_params(params, node_nums, hidden):
    """One-time packing: block-diag per-node weights, kron'd shared projections, flat biases."""
    N, H = node_nums, hidden
    mlp, mu, sg, tr = params["mlp"], params["mu"], params["sigma"], params["transformer"]
    A = mlp["w1"].shape[0]
    F = mu["w2"].shape[-1]
    eye_n = jnp.eye(N, dtype=jnp.float32)
    kron_i = lambda w: jnp.kron(eye_n, w)      # apply a shared (H,H) proj per node in flat layout
    return {
        "w1e": _block_diag(mlp["w1"]), "b1e": mlp["b1"].reshape(A, 1, N * H),
        "w2e": _block_diag(mlp["w2"]), "b2e": mlp["b2"].reshape(A, 1, N * H),
        "wq": kron_i(tr["wq"]), "wk": kron_i(tr["wk"]),
        "wv": kron_i(tr["wv"]), "wo": kron_i(tr["wo"]),
        "wm1": _block_diag(mu["w1"]), "bm1": mu["b1"].reshape(A, 1, N * H),
        "wm2": _block_diag(mu["w2"]), "bm2": mu["b2"].reshape(A, 1, N * F),
        "ws1": _block_diag(sg["w1"]), "bs1": sg["b1"].reshape(A, 1, N * H),
        "ws2": _block_diag(sg["w2"]), "bs2": sg["b2"].reshape(A, 1, N * F),
    }


# ----------------------------------------------------------------------------
# Actor forward (glue: adjacency construction + the single fused pallas_call)
# ----------------------------------------------------------------------------
def actor_forward(packed, x, edge_index, noise_key, node_nums, shapley_index=None):
    B, N, H = x.shape
    A = packed["w1e"].shape[0]
    assert A == 3, "reference forward hard-codes 3 action channels"
    NH = N * H
    NF = packed["wm2"].shape[-1]
    F = NF // N

    # Dense adjacency (scatter_add over edges == Adj @ node features), then its Kronecker
    # lift kron(Adj^T, I_H) so in-kernel aggregation is one (B, NH) @ (NH, NH) MXU matmul.
    dst = edge_index[0].astype(jnp.int32)
    src = edge_index[1].astype(jnp.int32)
    E = dst.shape[0]
    if shapley_index is None:
        w_edge = jnp.ones((A, E), jnp.float32)
    else:
        si = jnp.asarray(shapley_index, jnp.float32)
        # TODO(synk): only per-edge / per-(edge, action) shapley weights fold into the dense
        #             adjacency; batch- or feature-dependent shapley_index is not supported here.
        if si.ndim == 4:                       # torch broadcast layout (B, E, A, H)
            si = si[0, :, :, 0]
        if si.ndim == 1:
            si = jnp.broadcast_to(si[:, None], (E, A))
        w_edge = si.T                          # (A, E)
    d1h = jax.nn.one_hot(dst, node_nums, dtype=jnp.float32)      # (E, N)
    s1h = jax.nn.one_hot(src, node_nums, dtype=jnp.float32)      # (E, N)
    adj = jnp.einsum("ae,ed,es->ads", w_edge, d1h, s1h)          # adj[a, dst, src]
    eye_h = jnp.eye(H, dtype=jnp.float32)
    adjk = jnp.einsum("ads,ij->asidj", adj, eye_h).reshape(A, NH, NH)

    x_flat = x.reshape(B, NH)
    # TODO(synk): eps could be drawn in-kernel (pltpu.prng_seed + stateful draw) to drop this
    #             input; kept external so sampling exactly matches jax.random.normal semantics.
    eps = jax.random.normal(noise_key, (A, B, NF), jnp.float32)

    act_flat, log_prob = _actor_pallas_call(x_flat, adjk, packed, eps, node_nums)
    sample_action = jnp.transpose(act_flat.reshape(A, B, N, F), (1, 2, 0, 3))   # (B, N, A, F)
    return sample_action, log_prob


if __name__ == "__main__":
    key = jax.random.PRNGKey(0)
    B, N, H = 2, 4, 32
    freedom_degree = [5, 5, 5]

    k_param, k_x, k_noise = jax.random.split(key, 3)
    params = init_actor(k_param, H, freedom_degree, N)
    packed = pack_actor_params(params, N, H)
    x = jax.random.normal(k_x, (B, N, H), jnp.float32)

    # small directed graph on N=4 nodes: edge_index[0]=dst, edge_index[1]=src
    dst = jnp.array([0, 1, 2, 3, 0, 1, 2, 3], jnp.int32)
    src = jnp.array([1, 2, 3, 0, 3, 0, 1, 2], jnp.int32)
    edge_index = jnp.stack([dst, src])

    fwd = jax.jit(actor_forward, static_argnames=("node_nums",))
    sample_action, log_prob = fwd(packed, x, edge_index, k_noise, node_nums=N)
    jax.block_until_ready((sample_action, log_prob))

    assert sample_action.shape == (B, N, len(freedom_degree), freedom_degree[0])
    assert log_prob.shape == (B, N)
    assert bool(jnp.all(jnp.isfinite(sample_action))) and bool(jnp.all(jnp.isfinite(log_prob)))
    print("KERNEL_OK")
</pallas_src>

<mosaic_0001>
module attributes {stable_mosaic.version = 11 : i64} {
  func.func @_actor_fused_kernel(%arg0: memref<2x128xf32, #tpu.memory_space<vmem>>, %arg1: memref<3x128x128xf32, #tpu.memory_space<vmem>>, %arg2: memref<3x128x128xf32, #tpu.memory_space<vmem>>, %arg3: memref<3x1x128xf32, #tpu.memory_space<vmem>>, %arg4: memref<3x128x128xf32, #tpu.memory_space<vmem>>, %arg5: memref<3x1x128xf32, #tpu.memory_space<vmem>>, %arg6: memref<128x128xf32, #tpu.memory_space<vmem>>, %arg7: memref<128x128xf32, #tpu.memory_space<vmem>>, %arg8: memref<128x128xf32, #tpu.memory_space<vmem>>, %arg9: memref<128x128xf32, #tpu.memory_space<vmem>>, %arg10: memref<3x128x128xf32, #tpu.memory_space<vmem>>, %arg11: memref<3x1x128xf32, #tpu.memory_space<vmem>>, %arg12: memref<3x128x20xf32, #tpu.memory_space<vmem>>, %arg13: memref<3x1x20xf32, #tpu.memory_space<vmem>>, %arg14: memref<3x128x128xf32, #tpu.memory_space<vmem>>, %arg15: memref<3x1x128xf32, #tpu.memory_space<vmem>>, %arg16: memref<3x128x20xf32, #tpu.memory_space<vmem>>, %arg17: memref<3x1x20xf32, #tpu.memory_space<vmem>>, %arg18: memref<3x2x20xf32, #tpu.memory_space<vmem>>, %arg19: memref<3x2x20xf32, #tpu.memory_space<vmem>>, %arg20: memref<2x4xf32, #tpu.memory_space<vmem>>, %arg21: memref<2x4x32xf32, #tpu.memory_space<vmem>>, %arg22: memref<2x4x32xf32, #tpu.memory_space<vmem>>, %arg23: memref<2x4x32xf32, #tpu.memory_space<vmem>>, %arg24: memref<2x4x32xf32, #tpu.memory_space<vmem>>, %arg25: memref<2x128xf32, #tpu.memory_space<vmem>>) attributes {dimension_semantics = [], scalar_prefetch = 0 : i64, scratch_operands = 5 : i64, tpu.core_type = #tpu.core_type<tc>} {
    %c0 = arith.constant 0 : index
    %c0_0 = arith.constant 0 : index
    %0 = vector.load %arg0[%c0, %c0_0] : memref<2x128xf32, #tpu.memory_space<vmem>>, vector<2x128xf32>
    %cst = arith.constant 0.000000e+00 : f32
    %1 = vector.broadcast %cst : f32 to vector<2x20xf32>
    %c0_1 = arith.constant 0 : index
    %c0_2 = arith.constant 0 : index
    %c0_3 = arith.constant 0 : index
    %2 = vector.load %arg2[%c0_1, %c0_2, %c0_3] : memref<3x128x128xf32, #tpu.memory_space<vmem>>, vector<1x128x128xf32>
    %3 = vector.shape_cast %2 : vector<1x128x128xf32> to vector<128x128xf32>
    %cst_4 = arith.constant dense<0.000000e+00> : vector<2x128xf32>
    %4 = tpu.matmul %0, %3, %cst_4 {dimension_numbers = #tpu.dot_dimension_numbers<[1], [0], [0], [1], [0, 0, 1, 1], [], []>} : vector<2x128xf32>, vector<128x128xf32>, vector<2x128xf32> -> vector<2x128xf32>
    %c0_5 = arith.constant 0 : index
    %c0_6 = arith.constant 0 : index
    %c0_7 = arith.constant 0 : index
    %5 = vector.load %arg3[%c0_5, %c0_6, %c0_7] : memref<3x1x128xf32, #tpu.memory_space<vmem>>, vector<1x1x128xf32>
    %6 = vector.shape_cast %5 : vector<1x1x128xf32> to vector<1x128xf32>
    %7 = vector.broadcast %6 : vector<1x128xf32> to vector<2x128xf32>
    %8 = arith.addf %4, %7 : vector<2x128xf32>
    %cst_8 = arith.constant 0.000000e+00 : f32
    %9 = vector.broadcast %cst_8 : f32 to vector<2x128xf32>
    %10 = arith.maximumf %8, %9 : vector<2x128xf32>
    %c0_9 = arith.constant 0 : index
    %c0_10 = arith.constant 0 : index
    %c0_11 = arith.constant 0 : index
    %11 = vector.load %arg4[%c0_9, %c0_10, %c0_11] : memref<3x128x128xf32, #tpu.memory_space<vmem>>, vector<1x128x128xf32>
    %12 = vector.shape_cast %11 : vector<1x128x128xf32> to vector<128x128xf32>
    %cst_12 = arith.constant dense<0.000000e+00> : vector<2x128xf32>
    %13 = tpu.matmul %10, %12, %cst_12 {dimension_numbers = #tpu.dot_dimension_numbers<[1], [0], [0], [1], [0, 0, 1, 1], [], []>} : vector<2x128xf32>, vector<128x128xf32>, vector<2x128xf32> -> vector<2x128xf32>
    %c0_13 = arith.constant 0 : index
    %c0_14 = arith.constant 0 : index
    %c0_15 = arith.constant 0 : index
    %14 = vector.load %arg5[%c0_13, %c0_14, %c0_15] : memref<3x1x128xf32, #tpu.memory_space<vmem>>, vector<1x1x128xf32>
    %15 = vector.shape_cast %14 : vector<1x1x128xf32> to vector<1x128xf32>
    %16 = vector.broadcast %15 : vector<1x128xf32> to vector<2x128xf32>
    %17 = arith.addf %13, %16 : vector<2x128xf32>
    %c0_16 = arith.constant 0 : index
    %c0_17 = arith.constant 0 : index
    %c0_18 = arith.constant 0 : index
    %18 = vector.load %arg1[%c0_16, %c0_17, %c0_18] : memref<3x128x128xf32, #tpu.memory_space<vmem>>, vector<1x128x128xf32>
    %19 = vector.shape_cast %18 : vector<1x128x128xf32> to vector<128x128xf32>
    %cst_19 = arith.constant dense<0.000000e+00> : vector<2x128xf32>
    %20 = tpu.matmul %17, %19, %cst_19 {dimension_numbers = #tpu.dot_dimension_numbers<[1], [0], [0], [1], [0, 0, 1, 1], [], []>} : vector<2x128xf32>, vector<128x128xf32>, vector<2x128xf32> -> vector<2x128xf32>
    %c0_20 = arith.constant 0 : index
    %c0_21 = arith.constant 0 : index
    %21 = vector.load %arg6[%c0_20, %c0_21] : memref<128x128xf32, #tpu.memory_space<vmem>>, vector<128x128xf32>
    %cst_22 = arith.constant dense<0.000000e+00> : vector<2x128xf32>
    %22 = tpu.matmul %20, %21, %cst_22 {dimension_numbers = #tpu.dot_dimension_numbers<[1], [0], [0], [1], [0, 0, 1, 1], [], []>} : vector<2x128xf32>, vector<128x128xf32>, vector<2x128xf32> -> vector<2x128xf32>
    %c0_23 = arith.constant 0 : index
    %c0_24 = arith.constant 0 : index
    %23 = vector.load %arg7[%c0_23, %c0_24] : memref<128x128xf32, #tpu.memory_space<vmem>>, vector<128x128xf32>
    %cst_25 = arith.constant dense<0.000000e+00> : vector<2x128xf32>
    %24 = tpu.matmul %20, %23, %cst_25 {dimension_numbers = #tpu.dot_dimension_numbers<[1], [0], [0], [1], [0, 0, 1, 1], [], []>} : vector<2x128xf32>, vector<128x128xf32>, vector<2x128xf32> -> vector<2x128xf32>
    %c0_26 = arith.constant 0 : index
    %c0_27 = arith.constant 0 : index
    %25 = vector.load %arg8[%c0_26, %c0_27] : memref<128x128xf32, #tpu.memory_space<vmem>>, vector<128x128xf32>
    %cst_28 = arith.constant dense<0.000000e+00> : vector<2x128xf32>
    %26 = tpu.matmul %20, %25, %cst_28 {dimension_numbers = #tpu.dot_dimension_numbers<[1], [0], [0], [1], [0, 0, 1, 1], [], []>} : vector<2x128xf32>, vector<128x128xf32>, vector<2x128xf32> -> vector<2x128xf32>
    %27 = vector.extract_strided_slice %22 {offsets = [0, 0], sizes = [2, 32], strides = [1, 1]} : vector<2x128xf32> to vector<2x32xf32>
    %c0_29 = arith.constant 0 : index
    %c0_30 = arith.constant 0 : index
    %c0_31 = arith.constant 0 : index
    %28 = vector.load %arg21[%c0_29, %c0_30, %c0_31] : memref<2x4x32xf32, #tpu.memory_space<vmem>>, vector<2x1x32xf32>
    %29 = vector.shape_cast %28 : vector<2x1x32xf32> to vector<2x32xf32>
    %30 = vector.shape_cast %27 : vector<2x32xf32> to vector<2x1x32xf32>
    tpu.vector_store %arg21[%c0_29, %c0_30, %c0_31], %30 {strides = array<i32>} : memref<2x4x32xf32, #tpu.memory_space<vmem>>, vector<2x1x32xf32>,
    %31 = vector.extract_strided_slice %24 {offsets = [0, 0], sizes = [2, 32], strides = [1, 1]} : vector<2x128xf32> to vector<2x32xf32>
    %c0_32 = arith.constant 0 : index
    %c0_33 = arith.constant 0 : index
    %c0_34 = arith.constant 0 : index
    %32 = vector.load %arg22[%c0_32, %c0_33, %c0_34] : memref<2x4x32xf32, #tpu.memory_space<vmem>>, vector<2x1x32xf32>
    %33 = vector.shape_cast %32 : vector<2x1x32xf32> to vector<2x32xf32>
    %34 = vector.shape_cast %31 : vector<2x32xf32> to vector<2x1x32xf32>
    tpu.vector_store %arg22[%c0_32, %c0_33, %c0_34], %34 {strides = array<i32>} : memref<2x4x32xf32, #tpu.memory_space<vmem>>, vector<2x1x32xf32>,
    %35 = vector.extract_strided_slice %26 {offsets = [0, 0], sizes = [2, 32], strides = [1, 1]} : vector<2x128xf32> to vector<2x32xf32>
    %c0_35 = arith.constant 0 : index
    %c0_36 = arith.constant 0 : index
    %c0_37 = arith.constant 0 : index
    %36 = vector.load %arg23[%c0_35, %c0_36, %c0_37] : memref<2x4x32xf32, #tpu.memory_space<vmem>>, vector<2x1x32xf32>
    %37 = vector.shape_cast %36 : vector<2x1x32xf32> to vector<2x32xf32>
    %38 = vector.shape_cast %35 : vector<2x32xf32> to vector<2x1x32xf32>
    tpu.vector_store %arg23[%c0_35, %c0_36, %c0_37], %38 {strides = array<i32>} : memref<2x4x32xf32, #tpu.memory_space<vmem>>, vector<2x1x32xf32>,
    %39 = vector.extract_strided_slice %22 {offsets = [0, 32], sizes = [2, 32], strides = [1, 1]} : vector<2x128xf32> to vector<2x32xf32>
    %c0_38 = arith.constant 0 : index
    %c1 = arith.constant 1 : index
    %c0_39 = arith.constant 0 : index
    %40 = vector.load %arg21[%c0_38, %c1, %c0_39] : memref<2x4x32xf32, #tpu.memory_space<vmem>>, vector<2x1x32xf32>
    %41 = vector.shape_cast %40 : vector<2x1x32xf32> to vector<2x32xf32>
    %42 = vector.shape_cast %39 : vector<2x32xf32> to vector<2x1x32xf32>
    tpu.vector_store %arg21[%c0_38, %c1, %c0_39], %42 {strides = array<i32>} : memref<2x4x32xf32, #tpu.memory_space<vmem>>, vector<2x1x32xf32>,
    %43 = vector.extract_strided_slice %24 {offsets = [0, 32], sizes = [2, 32], strides = [1, 1]} : vector<2x128xf32> to vector<2x32xf32>
    %c0_40 = arith.constant 0 : index
    %c1_41 = arith.constant 1 : index
    %c0_42 = arith.constant 0 : index
    %44 = vector.load %arg22[%c0_40, %c1_41, %c0_42] : memref<2x4x32xf32, #tpu.memory_space<vmem>>, vector<2x1x32xf32>
    %45 = vector.shape_cast %44 : vector<2x1x32xf32> to vector<2x32xf32>
    %46 = vector.shape_cast %43 : vector<2x32xf32> to vector<2x1x32xf32>
    tpu.vector_store %arg22[%c0_40, %c1_41, %c0_42], %46 {strides = array<i32>} : memref<2x4x32xf32, #tpu.memory_space<vmem>>, vector<2x1x32xf32>,
    %47 = vector.extract_strided_slice %26 {offsets = [0, 32], sizes = [2, 32], strides = [1, 1]} : vector<2x128xf32> to vector<2x32xf32>
    %c0_43 = arith.constant 0 : index
    %c1_44 = arith.constant 1 : index
    %c0_45 = arith.constant 0 : index
    %48 = vector.load %arg23[%c0_43, %c1_44, %c0_45] : memref<2x4x32xf32, #tpu.memory_space<vmem>>, vector<2x1x32xf32>
    %49 = vector.shape_cast %48 : vector<2x1x32xf32> to vector<2x32xf32>
    %50 = vector.shape_cast %47 : vector<2x32xf32> to vector<2x1x32xf32>
    tpu.vector_store %arg23[%c0_43, %c1_44, %c0_45], %50 {strides = array<i32>} : memref<2x4x32xf32, #tpu.memory_space<vmem>>, vector<2x1x32xf32>,
    %51 = vector.extract_strided_slice %22 {offsets = [0, 64], sizes = [2, 32], strides = [1, 1]} : vector<2x128xf32> to vector<2x32xf32>
    %c0_46 = arith.constant 0 : index
    %c2 = arith.constant 2 : index
    %c0_47 = arith.constant 0 : index
    %52 = vector.load %arg21[%c0_46, %c2, %c0_47] : memref<2x4x32xf32, #tpu.memory_space<vmem>>, vector<2x1x32xf32>
    %53 = vector.shape_cast %52 : vector<2x1x32xf32> to vector<2x32xf32>
    %54 = vector.shape_cast %51 : vector<2x32xf32> to vector<2x1x32xf32>
    tpu.vector_store %arg21[%c0_46, %c2, %c0_47], %54 {strides = array<i32>} : memref<2x4x32xf32, #tpu.memory_space<vmem>>, vector<2x1x32xf32>,
    %55 = vector.extract_strided_slice %24 {offsets = [0, 64], sizes = [2, 32], strides = [1, 1]} : vector<2x128xf32> to vector<2x32xf32>
    %c0_48 = arith.constant 0 : index
    %c2_49 = arith.constant 2 : index
    %c0_50 = arith.constant 0 : index
    %56 = vector.load %arg22[%c0_48, %c2_49, %c0_50] : memref<2x4x32xf32, #tpu.memory_space<vmem>>, vector<2x1x32xf32>
    %57 = vector.shape_cast %56 : vector<2x1x32xf32> to vector<2x32xf32>
    %58 = vector.shape_cast %55 : vector<2x32xf32> to vector<2x1x32xf32>
    tpu.vector_store %arg22[%c0_48, %c2_49, %c0_50], %58 {strides = array<i32>} : memref<2x4x32xf32, #tpu.memory_space<vmem>>, vector<2x1x32xf32>,
    %59 = vector.extract_strided_slice %26 {offsets = [0, 64], sizes = [2, 32], strides = [1, 1]} : vector<2x128xf32> to vector<2x32xf32>
    %c0_51 = arith.constant 0 : index
    %c2_52 = arith.constant 2 : index
    %c0_53 = arith.constant 0 : index
    %60 = vector.load %arg23[%c0_51, %c2_52, %c0_53] : memref<2x4x32xf32, #tpu.memory_space<vmem>>, vector<2x1x32xf32>
    %61 = vector.shape_cast %60 : vector<2x1x32xf32> to vector<2x32xf32>
    %62 = vector.shape_cast %59 : vector<2x32xf32> to vector<2x1x32xf32>
    tpu.vector_store %arg23[%c0_51, %c2_52, %c0_53], %62 {strides = array<i32>} : memref<2x4x32xf32, #tpu.memory_space<vmem>>, vector<2x1x32xf32>,
    %63 = vector.extract_strided_slice %22 {offsets = [0, 96], sizes = [2, 32], strides = [1, 1]} : vector<2x128xf32> to vector<2x32xf32>
    %c0_54 = arith.constant 0 : index
    %c3 = arith.constant 3 : index
    %c0_55 = arith.constant 0 : index
    %64 = vector.load %arg21[%c0_54, %c3, %c0_55] : memref<2x4x32xf32, #tpu.memory_space<vmem>>, vector<2x1x32xf32>
    %65 = vector.shape_cast %64 : vector<2x1x32xf32> to vector<2x32xf32>
    %66 = vector.shape_cast %63 : vector<2x32xf32> to vector<2x1x32xf32>
    tpu.vector_store %arg21[%c0_54, %c3, %c0_55], %66 {strides = array<i32>} : memref<2x4x32xf32, #tpu.memory_space<vmem>>, vector<2x1x32xf32>,
    %67 = vector.extract_strided_slice %24 {offsets = [0, 96], sizes = [2, 32], strides = [1, 1]} : vector<2x128xf32> to vector<2x32xf32>
    %c0_56 = arith.constant 0 : index
    %c3_57 = arith.constant 3 : index
    %c0_58 = arith.constant 0 : index
    %68 = vector.load %arg22[%c0_56, %c3_57, %c0_58] : memref<2x4x32xf32, #tpu.memory_space<vmem>>, vector<2x1x32xf32>
    %69 = vector.shape_cast %68 : vector<2x1x32xf32> to vector<2x32xf32>
    %70 = vector.shape_cast %67 : vector<2x32xf32> to vector<2x1x32xf32>
    tpu.vector_store %arg22[%c0_56, %c3_57, %c0_58], %70 {strides = array<i32>} : memref<2x4x32xf32, #tpu.memory_space<vmem>>, vector<2x1x32xf32>,
    %71 = vector.extract_strided_slice %26 {offsets = [0, 96], sizes = [2, 32], strides = [1, 1]} : vector<2x128xf32> to vector<2x32xf32>
    %c0_59 = arith.constant 0 : index
    %c3_60 = arith.constant 3 : index
    %c0_61 = arith.constant 0 : index
    %72 = vector.load %arg23[%c0_59, %c3_60, %c0_61] : memref<2x4x32xf32, #tpu.memory_space<vmem>>, vector<2x1x32xf32>
    %73 = vector.shape_cast %72 : vector<2x1x32xf32> to vector<2x32xf32>
    %74 = vector.shape_cast %71 : vector<2x32xf32> to vector<2x1x32xf32>
    tpu.vector_store %arg23[%c0_59, %c3_60, %c0_61], %74 {strides = array<i32>} : memref<2x4x32xf32, #tpu.memory_space<vmem>>, vector<2x1x32xf32>,
    %c0_62 = arith.constant 0 : index
    %c0_63 = arith.constant 0 : index
    %c0_64 = arith.constant 0 : index
    %75 = vector.load %arg21[%c0_62, %c0_63, %c0_64] : memref<2x4x32xf32, #tpu.memory_space<vmem>>, vector<1x4x32xf32>
    %76 = vector.shape_cast %75 : vector<1x4x32xf32> to vector<4x32xf32>
    %c0_65 = arith.constant 0 : index
    %c0_66 = arith.constant 0 : index
    %c0_67 = arith.constant 0 : index
    %77 = vector.load %arg22[%c0_65, %c0_66, %c0_67] : memref<2x4x32xf32, #tpu.memory_space<vmem>>, vector<1x4x32xf32>
    %78 = vector.shape_cast %77 : vector<1x4x32xf32> to vector<4x32xf32>
    %c0_68 = arith.constant 0 : index
    %c0_69 = arith.constant 0 : index
    %c0_70 = arith.constant 0 : index
    %79 = vector.load %arg23[%c0_68, %c0_69, %c0_70] : memref<2x4x32xf32, #tpu.memory_space<vmem>>, vector<1x4x32xf32>
    %80 = vector.shape_cast %79 : vector<1x4x32xf32> to vector<4x32xf32>
    %81 = vector.extract_strided_slice %76 {offsets = [0, 0], sizes = [4, 8], strides = [1, 1]} : vector<4x32xf32> to vector<4x8xf32>
    %82 = vector.extract_strided_slice %78 {offsets = [0, 0], sizes = [4, 8], strides = [1, 1]} : vector<4x32xf32> to vector<4x8xf32>
    %83 = tpu.transpose %82, [1, 0] : vector<4x8xf32> -> vector<8x4xf32>
    %cst_71 = arith.constant dense<0.000000e+00> : vector<4x4xf32>
    %84 = tpu.matmul %81, %83, %cst_71 {dimension_numbers = #tpu.dot_dimension_numbers<[1], [0], [0], [1], [0, 0, 1, 1], [], []>} : vector<4x8xf32>, vector<8x4xf32>, vector<4x4xf32> -> vector<4x4xf32>
    %cst_72 = arith.constant 0.353553385 : f32
    %85 = vector.broadcast %cst_72 : f32 to vector<4x4xf32>
    %86 = arith.mulf %84, %85 : vector<4x4xf32>
    %cst_73 = arith.constant dense<0xFF800000> : vector<4xf32>
    %87 = vector.multi_reduction <maximumf>, %86, %cst_73 [1] : vector<4x4xf32> to vector<4xf32>
    %88 = vector.shape_cast %87 : vector<4xf32> to vector<4x1xf32>
    %89 = vector.broadcast %88 : vector<4x1xf32> to vector<4x4xf32>
    %90 = arith.subf %86, %89 : vector<4x4xf32>
    %91 = math.exp %90 : vector<4x4xf32>
    %cst_74 = arith.constant dense<0.000000e+00> : vector<4xf32>
    %92 = vector.multi_reduction <add>, %91, %cst_74 [1] : vector<4x4xf32> to vector<4xf32>
    %93 = vector.shape_cast %92 : vector<4xf32> to vector<4x1xf32>
    %94 = tpu.reciprocal %93 {approx = true} : vector<4x1xf32> -> vector<4x1xf32>
    %95 = vector.broadcast %94 : vector<4x1xf32> to vector<4x4xf32>
    %96 = arith.mulf %91, %95 : vector<4x4xf32>
    %97 = vector.extract_strided_slice %80 {offsets = [0, 0], sizes = [4, 8], strides = [1, 1]} : vector<4x32xf32> to vector<4x8xf32>
    %cst_75 = arith.constant dense<0.000000e+00> : vector<4x8xf32>
    %98 = tpu.matmul %96, %97, %cst_75 {dimension_numbers = #tpu.dot_dimension_numbers<[1], [0], [0], [1], [0, 0, 1, 1], [], []>} : vector<4x4xf32>, vector<4x8xf32>, vector<4x8xf32> -> vector<4x8xf32>
    %c0_76 = arith.constant 0 : index
    %c0_77 = arith.constant 0 : index
    %c0_78 = arith.constant 0 : index
    %99 = vector.load %arg24[%c0_76, %c0_77, %c0_78] : memref<2x4x32xf32, #tpu.memory_space<vmem>>, vector<1x4x8xf32>
    %100 = vector.shape_cast %99 : vector<1x4x8xf32> to vector<4x8xf32>
    %101 = vector.shape_cast %98 : vector<4x8xf32> to vector<1x4x8xf32>
    tpu.vector_store %arg24[%c0_76, %c0_77, %c0_78], %101 {strides = array<i32>} : memref<2x4x32xf32, #tpu.memory_space<vmem>>, vector<1x4x8xf32>,
    %102 = vector.extract_strided_slice %76 {offsets = [0, 8], sizes = [4, 8], strides = [1, 1]} : vector<4x32xf32> to vector<4x8xf32>
    %103 = vector.extract_strided_slice %78 {offsets = [0, 8], sizes = [4, 8], strides = [1, 1]} : vector<4x32xf32> to vector<4x8xf32>
    %104 = tpu.transpose %103, [1, 0] : vector<4x8xf32> -> vector<8x4xf32>
    %cst_79 = arith.constant dense<0.000000e+00> : vector<4x4xf32>
    %105 = tpu.matmul %102, %104, %cst_79 {dimension_numbers = #tpu.dot_dimension_numbers<[1], [0], [0], [1], [0, 0, 1, 1], [], []>} : vector<4x8xf32>, vector<8x4xf32>, vector<4x4xf32> -> vector<4x4xf32>
    %cst_80 = arith.constant 0.353553385 : f32
    %106 = vector.broadcast %cst_80 : f32 to vector<4x4xf32>
    %107 = arith.mulf %105, %106 : vector<4x4xf32>
    %cst_81 = arith.constant dense<0xFF800000> : vector<4xf32>
    %108 = vector.multi_reduction <maximumf>, %107, %cst_81 [1] : vector<4x4xf32> to vector<4xf32>
    %109 = vector.shape_cast %108 : vector<4xf32> to vector<4x1xf32>
    %110 = vector.broadcast %109 : vector<4x1xf32> to vector<4x4xf32>
    %111 = arith.subf %107, %110 : vector<4x4xf32>
    %112 = math.exp %111 : vector<4x4xf32>
    %cst_82 = arith.constant dense<0.000000e+00> : vector<4xf32>
    %113 = vector.multi_reduction <add>, %112, %cst_82 [1] : vector<4x4xf32> to vector<4xf32>
    %114 = vector.shape_cast %113 : vector<4xf32> to vector<4x1xf32>
    %115 = tpu.reciprocal %114 {approx = true} : vector<4x1xf32> -> vector<4x1xf32>
    %116 = vector.broadcast %115 : vector<4x1xf32> to vector<4x4xf32>
    %117 = arith.mulf %112, %116 : vector<4x4xf32>
    %118 = vector.extract_strided_slice %80 {offsets = [0, 8], sizes = [4, 8], strides = [1, 1]} : vector<4x32xf32> to vector<4x8xf32>
    %cst_83 = arith.constant dense<0.000000e+00> : vector<4x8xf32>
    %119 = tpu.matmul %117, %118, %cst_83 {dimension_numbers = #tpu.dot_dimension_numbers<[1], [0], [0], [1], [0, 0, 1, 1], [], []>} : vector<4x4xf32>, vector<4x8xf32>, vector<4x8xf32> -> vector<4x8xf32>
    %c0_84 = arith.constant 0 : index
    %c0_85 = arith.constant 0 : index
    %c8 = arith.constant 8 : index
    %120 = vector.load %arg24[%c0_84, %c0_85, %c8] : memref<2x4x32xf32, #tpu.memory_space<vmem>>, vector<1x4x8xf32>
    %121 = vector.shape_cast %120 : vector<1x4x8xf32> to vector<4x8xf32>
    %122 = vector.shape_cast %119 : vector<4x8xf32> to vector<1x4x8xf32>
    tpu.vector_store %arg24[%c0_84, %c0_85, %c8], %122 {strides = array<i32>} : memref<2x4x32xf32, #tpu.memory_space<vmem>>, vector<1x4x8xf32>,
    %123 = vector.extract_strided_slice %76 {offsets = [0, 16], sizes = [4, 8], strides = [1, 1]} : vector<4x32xf32> to vector<4x8xf32>
    %124 = vector.extract_strided_slice %78 {offsets = [0, 16], sizes = [4, 8], strides = [1, 1]} : vector<4x32xf32> to vector<4x8xf32>
    %125 = tpu.transpose %124, [1, 0] : vector<4x8xf32> -> vector<8x4xf32>
    %cst_86 = arith.constant dense<0.000000e+00> : vector<4x4xf32>
    %126 = tpu.matmul %123, %125, %cst_86 {dimension_numbers = #tpu.dot_dimension_numbers<[1], [0], [0], [1], [0, 0, 1, 1], [], []>} : vector<4x8xf32>, vector<8x4xf32>, vector<4x4xf32> -> vector<4x4xf32>
    %cst_87 = arith.constant 0.353553385 : f32
    %127 = vector.broadcast %cst_87 : f32 to vector<4x4xf32>
    %128 = arith.mulf %126, %127 : vector<4x4xf32>
    %cst_88 = arith.constant dense<0xFF800000> : vector<4xf32>
    %129 = vector.multi_reduction <maximumf>, %128, %cst_88 [1] : vector<4x4xf32> to vector<4xf32>
    %130 = vector.shape_cast %129 : vector<4xf32> to vector<4x1xf32>
    %131 = vector.broadcast %130 : vector<4x1xf32> to vector<4x4xf32>
    %132 = arith.subf %128, %131 : vector<4x4xf32>
    %133 = math.exp %132 : vector<4x4xf32>
    %cst_89 = arith.constant dense<0.000000e+00> : vector<4xf32>
    %134 = vector.multi_reduction <add>, %133, %cst_89 [1] : vector<4x4xf32> to vector<4xf32>
    %135 = vector.shape_cast %134 : vector<4xf32> to vector<4x1xf32>
    %136 = tpu.reciprocal %135 {approx = true} : vector<4x1xf32> -> vector<4x1xf32>
    %137 = vector.broadcast %136 : vector<4x1xf32> to vector<4x4xf32>
    %138 = arith.mulf %133, %137 : vector<4x4xf32>
    %139 = vector.extract_strided_slice %80 {offsets = [0, 16], sizes = [4, 8], strides = [1, 1]} : vector<4x32xf32> to vector<4x8xf32>
    %cst_90 = arith.constant dense<0.000000e+00> : vector<4x8xf32>
    %140 = tpu.matmul %138, %139, %cst_90 {dimension_numbers = #tpu.dot_dimension_numbers<[1], [0], [0], [1], [0, 0, 1, 1], [], []>} : vector<4x4xf32>, vector<4x8xf32>, vector<4x8xf32> -> vector<4x8xf32>
    %c0_91 = arith.constant 0 : index
    %c0_92 = arith.constant 0 : index
    %c16 = arith.constant 16 : index
    %141 = vector.load %arg24[%c0_91, %c0_92, %c16] : memref<2x4x32xf32, #tpu.memory_space<vmem>>, vector<1x4x8xf32>
    %142 = vector.shape_cast %141 : vector<1x4x8xf32> to vector<4x8xf32>
    %143 = vector.shape_cast %140 : vector<4x8xf32> to vector<1x4x8xf32>
    tpu.vector_store %arg24[%c0_91, %c0_92, %c16], %143 {strides = array<i32>} : memref<2x4x32xf32, #tpu.memory_space<vmem>>, vector<1x4x8xf32>,
    %144 = vector.extract_strided_slice %76 {offsets = [0, 24], sizes = [4, 8], strides = [1, 1]} : vector<4x32xf32> to vector<4x8xf32>
    %145 = vector.extract_strided_slice %78 {offsets = [0, 24], sizes = [4, 8], strides = [1, 1]} : vector<4x32xf32> to vector<4x8xf32>
    %146 = tpu.transpose %145, [1, 0] : vector<4x8xf32> -> vector<8x4xf32>
    %cst_93 = arith.constant dense<0.000000e+00> : vector<4x4xf32>
    %147 = tpu.matmul %144, %146, %cst_93 {dimension_numbers = #tpu.dot_dimension_numbers<[1], [0], [0], [1], [0, 0, 1, 1], [], []>} : vector<4x8xf32>, vector<8x4xf32>, vector<4x4xf32> -> vector<4x4xf32>
    %cst_94 = arith.constant 0.353553385 : f32
    %148 = vector.broadcast %cst_94 : f32 to vector<4x4xf32>
    %149 = arith.mulf %147, %148 : vector<4x4xf32>
    %cst_95 = arith.constant dense<0xFF800000> : vector<4xf32>
    %150 = vector.multi_reduction <maximumf>, %149, %cst_95 [1] : vector<4x4xf32> to vector<4xf32>
    %151 = vector.shape_cast %150 : vector<4xf32> to vector<4x1xf32>
    %152 = vector.broadcast %151 : vector<4x1xf32> to vector<4x4xf32>
    %153 = arith.subf %149, %152 : vector<4x4xf32>
    %154 = math.exp %153 : vector<4x4xf32>
    %cst_96 = arith.constant dense<0.000000e+00> : vector<4xf32>
    %155 = vector.multi_reduction <add>, %154, %cst_96 [1] : vector<4x4xf32> to vector<4xf32>
    %156 = vector.shape_cast %155 : vector<4xf32> to vector<4x1xf32>
    %157 = tpu.reciprocal %156 {approx = true} : vector<4x1xf32> -> vector<4x1xf32>
    %158 = vector.broadcast %157 : vector<4x1xf32> to vector<4x4xf32>
    %159 = arith.mulf %154, %158 : vector<4x4xf32>
    %160 = vector.extract_strided_slice %80 {offsets = [0, 24], sizes = [4, 8], strides = [1, 1]} : vector<4x32xf32> to vector<4x8xf32>
    %cst_97 = arith.constant dense<0.000000e+00> : vector<4x8xf32>
    %161 = tpu.matmul %159, %160, %cst_97 {dimension_numbers = #tpu.dot_dimension_numbers<[1], [0], [0], [1], [0, 0, 1, 1], [], []>} : vector<4x4xf32>, vector<4x8xf32>, vector<4x8xf32> -> vector<4x8xf32>
    %c0_98 = arith.constant 0 : index
    %c0_99 = arith.constant 0 : index
    %c24 = arith.constant 24 : index
    %162 = vector.load %arg24[%c0_98, %c0_99, %c24] : memref<2x4x32xf32, #tpu.memory_space<vmem>>, vector<1x4x8xf32>
    %163 = vector.shape_cast %162 : vector<1x4x8xf32> to vector<4x8xf32>
    %164 = vector.shape_cast %161 : vector<4x8xf32> to vector<1x4x8xf32>
    tpu.vector_store %arg24[%c0_98, %c0_99, %c24], %164 {strides = array<i32>} : memref<2x4x32xf32, #tpu.memory_space<vmem>>, vector<1x4x8xf32>,
    %c1_100 = arith.constant 1 : index
    %c0_101 = arith.constant 0 : index
    %c0_102 = arith.constant 0 : index
    %165 = vector.load %arg21[%c1_100, %c0_101, %c0_102] : memref<2x4x32xf32, #tpu.memory_space<vmem>>, vector<1x4x32xf32>
    %166 = vector.shape_cast %165 : vector<1x4x32xf32> to vector<4x32xf32>
    %c1_103 = arith.constant 1 : index
    %c0_104 = arith.constant 0 : index
    %c0_105 = arith.constant 0 : index
    %167 = vector.load %arg22[%c1_103, %c0_104, %c0_105] : memref<2x4x32xf32, #tpu.memory_space<vmem>>, vector<1x4x32xf32>
    %168 = vector.shape_cast %167 : vector<1x4x32xf32> to vector<4x32xf32>
    %c1_106 = arith.constant 1 : index
    %c0_107 = arith.constant 0 : index
    %c0_108 = arith.constant 0 : index
    %169 = vector.load %arg23[%c1_106, %c0_107, %c0_108] : memref<2x4x32xf32, #tpu.memory_space<vmem>>, vector<1x4x32xf32>
    %170 = vector.shape_cast %169 : vector<1x4x32xf32> to vector<4x32xf32>
    %171 = vector.extract_strided_slice %166 {offsets = [0, 0], sizes = [4, 8], strides = [1, 1]} : vector<4x32xf32> to vector<4x8xf32>
    %172 = vector.extract_strided_slice %168 {offsets = [0, 0], sizes = [4, 8], strides = [1, 1]} : vector<4x32xf32> to vector<4x8xf32>
    %173 = tpu.transpose %172, [1, 0] : vector<4x8xf32> -> vector<8x4xf32>
    %cst_109 = arith.constant dense<0.000000e+00> : vector<4x4xf32>
    %174 = tpu.matmul %171, %173, %cst_109 {dimension_numbers = #tpu.dot_dimension_numbers<[1], [0], [0], [1], [0, 0, 1, 1], [], []>} : vector<4x8xf32>, vector<8x4xf32>, vector<4x4xf32> -> vector<4x4xf32>
    %cst_110 = arith.constant 0.353553385 : f32
    %175 = vector.broadcast %cst_110 : f32 to vector<4x4xf32>
    %176 = arith.mulf %174, %175 : vector<4x4xf32>
    %cst_111 = arith.constant dense<0xFF800000> : vector<4xf32>
    %177 = vector.multi_reduction <maximumf>, %176, %cst_111 [1] : vector<4x4xf32> to vector<4xf32>
    %178 = vector.shape_cast %177 : vector<4xf32> to vector<4x1xf32>
    %179 = vector.broadcast %178 : vector<4x1xf32> to vector<4x4xf32>
    %180 = arith.subf %176, %179 : vector<4x4xf32>
    %181 = math.exp %180 : vector<4x4xf32>
    %cst_112 = arith.constant dense<0.000000e+00> : vector<4xf32>
    %182 = vector.multi_reduction <add>, %181, %cst_112 [1] : vector<4x4xf32> to vector<4xf32>
    %183 = vector.shape_cast %182 : vector<4xf32> to vector<4x1xf32>
    %184 = tpu.reciprocal %183 {approx = true} : vector<4x1xf32> -> vector<4x1xf32>
    %185 = vector.broadcast %184 : vector<4x1xf32> to vector<4x4xf32>
    %186 = arith.mulf %181, %185 : vector<4x4xf32>
    %187 = vector.extract_strided_slice %170 {offsets = [0, 0], sizes = [4, 8], strides = [1, 1]} : vector<4x32xf32> to vector<4x8xf32>
    %cst_113 = arith.constant dense<0.000000e+00> : vector<4x8xf32>
    %188 = tpu.matmul %186, %187, %cst_113 {dimension_numbers = #tpu.dot_dimension_numbers<[1], [0], [0], [1], [0, 0, 1, 1], [], []>} : vector<4x4xf32>, vector<4x8xf32>, vector<4x8xf32> -> vector<4x8xf32>
    %c1_114 = arith.constant 1 : index
    %c0_115 = arith.constant 0 : index
    %c0_116 = arith.constant 0 : index
    %189 = vector.load %arg24[%c1_114, %c0_115, %c0_116] : memref<2x4x32xf32, #tpu.memory_space<vmem>>, vector<1x4x8xf32>
    %190 = vector.shape_cast %189 : vector<1x4x8xf32> to vector<4x8xf32>
    %191 = vector.shape_cast %188 : vector<4x8xf32> to vector<1x4x8xf32>
    tpu.vector_store %arg24[%c1_114, %c0_115, %c0_116], %191 {strides = array<i32>} : memref<2x4x32xf32, #tpu.memory_space<vmem>>, vector<1x4x8xf32>,
    %192 = vector.extract_strided_slice %166 {offsets = [0, 8], sizes = [4, 8], strides = [1, 1]} : vector<4x32xf32> to vector<4x8xf32>
    %193 = vector.extract_strided_slice %168 {offsets = [0, 8], sizes = [4, 8], strides = [1, 1]} : vector<4x32xf32> to vector<4x8xf32>
    %194 = tpu.transpose %193, [1, 0] : vector<4x8xf32> -> vector<8x4xf32>
    %cst_117 = arith.constant dense<0.000000e+00> : vector<4x4xf32>
    %195 = tpu.matmul %192, %194, %cst_117 {dimension_numbers = #tpu.dot_dimension_numbers<[1], [0], [0], [1], [0, 0, 1, 1], [], []>} : vector<4x8xf32>, vector<8x4xf32>, vector<4x4xf32> -> vector<4x4xf32>
    %cst_118 = arith.constant 0.353553385 : f32
    %196 = vector.broadcast %cst_118 : f32 to vector<4x4xf32>
    %197 = arith.mulf %195, %196 : vector<4x4xf32>
    %cst_119 = arith.constant dense<0xFF800000> : vector<4xf32>
    %198 = vector.multi_reduction <maximumf>, %197, %cst_119 [1] : vector<4x4xf32> to vector<4xf32>
    %199 = vector.shape_cast %198 : vector<4xf32> to vector<4x1xf32>
    %200 = vector.broadcast %199 : vector<4x1xf32> to vector<4x4xf32>
    %201 = arith.subf %197, %200 : vector<4x4xf32>
    %202 = math.exp %201 : vector<4x4xf32>
    %cst_120 = arith.constant dense<0.000000e+00> : vector<4xf32>
    %203 = vector.multi_reduction <add>, %202, %cst_120 [1] : vector<4x4xf32> to vector<4xf32>
    %204 = vector.shape_cast %203 : vector<4xf32> to vector<4x1xf32>
    %205 = tpu.reciprocal %204 {approx = true} : vector<4x1xf32> -> vector<4x1xf32>
    %206 = vector.broadcast %205 : vector<4x1xf32> to vector<4x4xf32>
    %207 = arith.mulf %202, %206 : vector<4x4xf32>
    %208 = vector.extract_strided_slice %170 {offsets = [0, 8], sizes = [4, 8], strides = [1, 1]} : vector<4x32xf32> to vector<4x8xf32>
    %cst_121 = arith.constant dense<0.000000e+00> : vector<4x8xf32>
    %209 = tpu.matmul %207, %208, %cst_121 {dimension_numbers = #tpu.dot_dimension_numbers<[1], [0], [0], [1], [0, 0, 1, 1], [], []>} : vector<4x4xf32>, vector<4x8xf32>, vector<4x8xf32> -> vector<4x8xf32>
    %c1_122 = arith.constant 1 : index
    %c0_123 = arith.constant 0 : index
    %c8_124 = arith.constant 8 : index
    %210 = vector.load %arg24[%c1_122, %c0_123, %c8_124] : memref<2x4x32xf32, #tpu.memory_space<vmem>>, vector<1x4x8xf32>
    %211 = vector.shape_cast %210 : vector<1x4x8xf32> to vector<4x8xf32>
    %212 = vector.shape_cast %209 : vector<4x8xf32> to vector<1x4x8xf32>
    tpu.vector_store %arg24[%c1_122, %c0_123, %c8_124], %212 {strides = array<i32>} : memref<2x4x32xf32, #tpu.memory_space<vmem>>, vector<1x4x8xf32>,
    %213 = vector.extract_strided_slice %166 {offsets = [0, 16], sizes = [4, 8], strides = [1, 1]} : vector<4x32xf32> to vector<4x8xf32>
    %214 = vector.extract_strided_slice %168 {offsets = [0, 16], sizes = [4, 8], strides = [1, 1]} : vector<4x32xf32> to vector<4x8xf32>
    %215 = tpu.transpose %214, [1, 0] : vector<4x8xf32> -> vector<8x4xf32>
    %cst_125 = arith.constant dense<0.000000e+00> : vector<4x4xf32>
    %216 = tpu.matmul %213, %215, %cst_125 {dimension_numbers = #tpu.dot_dimension_numbers<[1], [0], [0], [1], [0, 0, 1, 1], [], []>} : vector<4x8xf32>, vector<8x4xf32>, vector<4x4xf32> -> vector<4x4xf32>
    %cst_126 = arith.constant 0.353553385 : f32
    %217 = vector.broadcast %cst_126 : f32 to vector<4x4xf32>
    %218 = arith.mulf %216, %217 : vector<4x4xf32>
    %cst_127 = arith.constant dense<0xFF800000> : vector<4xf32>
    %219 = vector.multi_reduction <maximumf>, %218, %cst_127 [1] : vector<4x4xf32> to vector<4xf32>
    %220 = vector.shape_cast %219 : vector<4xf32> to vector<4x1xf32>
    %221 = vector.broadcast %220 : vector<4x1xf32> to vector<4x4xf32>
    %222 = arith.subf %218, %221 : vector<4x4xf32>
    %223 = math.exp %222 : vector<4x4xf32>
    %cst_128 = arith.constant dense<0.000000e+00> : vector<4xf32>
    %224 = vector.multi_reduction <add>, %223, %cst_128 [1] : vector<4x4xf32> to vector<4xf32>
    %225 = vector.shape_cast %224 : vector<4xf32> to vector<4x1xf32>
    %226 = tpu.reciprocal %225 {approx = true} : vector<4x1xf32> -> vector<4x1xf32>
    %227 = vector.broadcast %226 : vector<4x1xf32> to vector<4x4xf32>
    %228 = arith.mulf %223, %227 : vector<4x4xf32>
    %229 = vector.extract_strided_slice %170 {offsets = [0, 16], sizes = [4, 8], strides = [1, 1]} : vector<4x32xf32> to vector<4x8xf32>
    %cst_129 = arith.constant dense<0.000000e+00> : vector<4x8xf32>
    %230 = tpu.matmul %228, %229, %cst_129 {dimension_numbers = #tpu.dot_dimension_numbers<[1], [0], [0], [1], [0, 0, 1, 1], [], []>} : vector<4x4xf32>, vector<4x8xf32>, vector<4x8xf32> -> vector<4x8xf32>
    %c1_130 = arith.constant 1 : index
    %c0_131 = arith.constant 0 : index
    %c16_132 = arith.constant 16 : index
    %231 = vector.load %arg24[%c1_130, %c0_131, %c16_132] : memref<2x4x32xf32, #tpu.memory_space<vmem>>, vector<1x4x8xf32>
    %232 = vector.shape_cast %231 : vector<1x4x8xf32> to vector<4x8xf32>
    %233 = vector.shape_cast %230 : vector<4x8xf32> to vector<1x4x8xf32>
    tpu.vector_store %arg24[%c1_130, %c0_131, %c16_132], %233 {strides = array<i32>} : memref<2x4x32xf32, #tpu.memory_space<vmem>>, vector<1x4x8xf32>,
    %234 = vector.extract_strided_slice %166 {offsets = [0, 24], sizes = [4, 8], strides = [1, 1]} : vector<4x32xf32> to vector<4x8xf32>
    %235 = vector.extract_strided_slice %168 {offsets = [0, 24], sizes = [4, 8], strides = [1, 1]} : vector<4x32xf32> to vector<4x8xf32>
    %236 = tpu.transpose %235, [1, 0] : vector<4x8xf32> -> vector<8x4xf32>
    %cst_133 = arith.constant dense<0.000000e+00> : vector<4x4xf32>
    %237 = tpu.matmul %234, %236, %cst_133 {dimension_numbers = #tpu.dot_dimension_numbers<[1], [0], [0], [1], [0, 0, 1, 1], [], []>} : vector<4x8xf32>, vector<8x4xf32>, vector<4x4xf32> -> vector<4x4xf32>
    %cst_134 = arith.constant 0.353553385 : f32
    %238 = vector.broadcast %cst_134 : f32 to vector<4x4xf32>
    %239 = arith.mulf %237, %238 : vector<4x4xf32>
    %cst_135 = arith.constant dense<0xFF800000> : vector<4xf32>
    %240 = vector.multi_reduction <maximumf>, %239, %cst_135 [1] : vector<4x4xf32> to vector<4xf32>
    %241 = vector.shape_cast %240 : vector<4xf32> to vector<4x1xf32>
    %242 = vector.broadcast %241 : vector<4x1xf32> to vector<4x4xf32>
    %243 = arith.subf %239, %242 : vector<4x4xf32>
    %244 = math.exp %243 : vector<4x4xf32>
    %cst_136 = arith.constant dense<0.000000e+00> : vector<4xf32>
    %245 = vector.multi_reduction <add>, %244, %cst_136 [1] : vector<4x4xf32> to vector<4xf32>
    %246 = vector.shape_cast %245 : vector<4xf32> to vector<4x1xf32>
    %247 = tpu.reciprocal %246 {approx = true} : vector<4x1xf32> -> vector<4x1xf32>
    %248 = vector.broadcast %247 : vector<4x1xf32> to vector<4x4xf32>
    %249 = arith.mulf %244, %248 : vector<4x4xf32>
    %250 = vector.extract_strided_slice %170 {offsets = [0, 24], sizes = [4, 8], strides = [1, 1]} : vector<4x32xf32> to vector<4x8xf32>
    %cst_137 = arith.constant dense<0.000000e+00> : vector<4x8xf32>
    %251 = tpu.matmul %249, %250, %cst_137 {dimension_numbers = #tpu.dot_dimension_numbers<[1], [0], [0], [1], [0, 0, 1, 1], [], []>} : vector<4x4xf32>, vector<4x8xf32>, vector<4x8xf32> -> vector<4x8xf32>
    %c1_138 = arith.constant 1 : index
    %c0_139 = arith.constant 0 : index
    %c24_140 = arith.constant 24 : index
    %252 = vector.load %arg24[%c1_138, %c0_139, %c24_140] : memref<2x4x32xf32, #tpu.memory_space<vmem>>, vector<1x4x8xf32>
    %253 = vector.shape_cast %252 : vector<1x4x8xf32> to vector<4x8xf32>
    %254 = vector.shape_cast %251 : vector<4x8xf32> to vector<1x4x8xf32>
    tpu.vector_store %arg24[%c1_138, %c0_139, %c24_140], %254 {strides = array<i32>} : memref<2x4x32xf32, #tpu.memory_space<vmem>>, vector<1x4x8xf32>,
    %c0_141 = arith.constant 0 : index
    %c0_142 = arith.constant 0 : index
    %c0_143 = arith.constant 0 : index
    %255 = vector.load %arg24[%c0_141, %c0_142, %c0_143] : memref<2x4x32xf32, #tpu.memory_space<vmem>>, vector<2x1x32xf32>
    %256 = vector.shape_cast %255 : vector<2x1x32xf32> to vector<2x32xf32>
    %c0_144 = arith.constant 0 : index
    %c0_145 = arith.constant 0 : index
    %257 = vector.load %arg25[%c0_144, %c0_145] : memref<2x128xf32, #tpu.memory_space<vmem>>, vector<2x32xf32>
    tpu.vector_store %arg25[%c0_144, %c0_145], %256 {strides = array<i32>} : memref<2x128xf32, #tpu.memory_space<vmem>>, vector<2x32xf32>,
    %c0_146 = arith.constant 0 : index
    %c1_147 = arith.constant 1 : index
    %c0_148 = arith.constant 0 : index
    %258 = vector.load %arg24[%c0_146, %c1_147, %c0_148] : memref<2x4x32xf32, #tpu.memory_space<vmem>>, vector<2x1x32xf32>
    %259 = vector.shape_cast %258 : vector<2x1x32xf32> to vector<2x32xf32>
    %c0_149 = arith.constant 0 : index
    %c32 = arith.constant 32 : index
    %260 = vector.load %arg25[%c0_149, %c32] : memref<2x128xf32, #tpu.memory_space<vmem>>, vector<2x32xf32>
    tpu.vector_store %arg25[%c0_149, %c32], %259 {strides = array<i32>} : memref<2x128xf32, #tpu.memory_space<vmem>>, vector<2x32xf32>,
    %c0_150 = arith.constant 0 : index
    %c2_151 = arith.constant 2 : index
    %c0_152 = arith.constant 0 : index
    %261 = vector.load %arg24[%c0_150, %c2_151, %c0_152] : memref<2x4x32xf32, #tpu.memory_space<vmem>>, vector<2x1x32xf32>
    %262 = vector.shape_cast %261 : vector<2x1x32xf32> to vector<2x32xf32>
    %c0_153 = arith.constant 0 : index
    %c64 = arith.constant 64 : index
    %263 = vector.load %arg25[%c0_153, %c64] : memref<2x128xf32, #tpu.memory_space<vmem>>, vector<2x32xf32>
    tpu.vector_store %arg25[%c0_153, %c64], %262 {strides = array<i32>} : memref<2x128xf32, #tpu.memory_space<vmem>>, vector<2x32xf32>,
    %c0_154 = arith.constant 0 : index
    %c3_155 = arith.constant 3 : index
    %c0_156 = arith.constant 0 : index
    %264 = vector.load %arg24[%c0_154, %c3_155, %c0_156] : memref<2x4x32xf32, #tpu.memory_space<vmem>>, vector<2x1x32xf32>
    %265 = vector.shape_cast %264 : vector<2x1x32xf32> to vector<2x32xf32>
    %c0_157 = arith.constant 0 : index
    %c96 = arith.constant 96 : index
    %266 = vector.load %arg25[%c0_157, %c96] : memref<2x128xf32, #tpu.memory_space<vmem>>, vector<2x32xf32>
    tpu.vector_store %arg25[%c0_157, %c96], %265 {strides = array<i32>} : memref<2x128xf32, #tpu.memory_space<vmem>>, vector<2x32xf32>,
    %c0_158 = arith.constant 0 : index
    %c0_159 = arith.constant 0 : index
    %267 = vector.load %arg25[%c0_158, %c0_159] : memref<2x128xf32, #tpu.memory_space<vmem>>, vector<2x128xf32>
    %c0_160 = arith.constant 0 : index
    %c0_161 = arith.constant 0 : index
    %268 = vector.load %arg9[%c0_160, %c0_161] : memref<128x128xf32, #tpu.memory_space<vmem>>, vector<128x128xf32>
    %cst_162 = arith.constant dense<0.000000e+00> : vector<2x128xf32>
    %269 = tpu.matmul %267, %268, %cst_162 {dimension_numbers = #tpu.dot_dimension_numbers<[1], [0], [0], [1], [0, 0, 1, 1], [], []>} : vector<2x128xf32>, vector<128x128xf32>, vector<2x128xf32> -> vector<2x128xf32>
    %270 = arith.addf %20, %269 : vector<2x128xf32>
    %c0_163 = arith.constant 0 : index
    %c0_164 = arith.constant 0 : index
    %c0_165 = arith.constant 0 : index
    %271 = vector.load %arg10[%c0_163, %c0_164, %c0_165] : memref<3x128x128xf32, #tpu.memory_space<vmem>>, vector<1x128x128xf32>
    %272 = vector.shape_cast %271 : vector<1x128x128xf32> to vector<128x128xf32>
    %cst_166 = arith.constant dense<0.000000e+00> : vector<2x128xf32>
    %273 = tpu.matmul %270, %272, %cst_166 {dimension_numbers = #tpu.dot_dimension_numbers<[1], [0], [0], [1], [0, 0, 1, 1], [], []>} : vector<2x128xf32>, vector<128x128xf32>, vector<2x128xf32> -> vector<2x128xf32>
    %c0_167 = arith.constant 0 : index
    %c0_168 = arith.constant 0 : index
    %c0_169 = arith.constant 0 : index
    %274 = vector.load %arg11[%c0_167, %c0_168, %c0_169] : memref<3x1x128xf32, #tpu.memory_space<vmem>>, vector<1x1x128xf32>
    %275 = vector.shape_cast %274 : vector<1x1x128xf32> to vector<1x128xf32>
    %276 = vector.broadcast %275 : vector<1x128xf32> to vector<2x128xf32>
    %277 = arith.addf %273, %276 : vector<2x128xf32>
    %cst_170 = arith.constant 0.000000e+00 : f32
    %278 = vector.broadcast %cst_170 : f32 to vector<2x128xf32>
    %279 = arith.maximumf %277, %278 : vector<2x128xf32>
    %c0_171 = arith.constant 0 : index
    %c0_172 = arith.constant 0 : index
    %c0_173 = arith.constant 0 : index
    %280 = vector.load %arg12[%c0_171, %c0_172, %c0_173] : memref<3x128x20xf32, #tpu.memory_space<vmem>>, vector<1x128x20xf32>
    %281 = vector.shape_cast %280 : vector<1x128x20xf32> to vector<128x20xf32>
    %cst_174 = arith.constant dense<0.000000e+00> : vector<2x20xf32>
    %282 = tpu.matmul %279, %281, %cst_174 {dimension_numbers = #tpu.dot_dimension_numbers<[1], [0], [0], [1], [0, 0, 1, 1], [], []>} : vector<2x128xf32>, vector<128x20xf32>, vector<2x20xf32> -> vector<2x20xf32>
    %c0_175 = arith.constant 0 : index
    %c0_176 = arith.constant 0 : index
    %c0_177 = arith.constant 0 : index
    %283 = vector.load %arg13[%c0_175, %c0_176, %c0_177] : memref<3x1x20xf32, #tpu.memory_space<vmem>>, vector<1x1x20xf32>
    %284 = vector.shape_cast %283 : vector<1x1x20xf32> to vector<1x20xf32>
    %285 = vector.broadcast %284 : vector<1x20xf32> to vector<2x20xf32>
    %286 = arith.addf %282, %285 : vector<2x20xf32>
    %c0_178 = arith.constant 0 : index
    %c0_179 = arith.constant 0 : index
    %c0_180 = arith.constant 0 : index
    %287 = vector.load %arg14[%c0_178, %c0_179, %c0_180] : memref<3x128x128xf32, #tpu.memory_space<vmem>>, vector<1x128x128xf32>
    %288 = vector.shape_cast %287 : vector<1x128x128xf32> to vector<128x128xf32>
    %cst_181 = arith.constant dense<0.000000e+00> : vector<2x128xf32>
    %289 = tpu.matmul %270, %288, %cst_181 {dimension_numbers = #tpu.dot_dimension_numbers<[1], [0], [0], [1], [0, 0, 1, 1], [], []>} : vector<2x128xf32>, vector<128x128xf32>, vector<2x128xf32> -> vector<2x128xf32>
    %c0_182 = arith.constant 0 : index
    %c0_183 = arith.constant 0 : index
    %c0_184 = arith.constant 0 : index
    %290 = vector.load %arg15[%c0_182, %c0_183, %c0_184] : memref<3x1x128xf32, #tpu.memory_space<vmem>>, vector<1x1x128xf32>
    %291 = vector.shape_cast %290 : vector<1x1x128xf32> to vector<1x128xf32>
    %292 = vector.broadcast %291 : vector<1x128xf32> to vector<2x128xf32>
    %293 = arith.addf %289, %292 : vector<2x128xf32>
    %cst_185 = arith.constant 0.000000e+00 : f32
    %294 = vector.broadcast %cst_185 : f32 to vector<2x128xf32>
    %295 = arith.maximumf %293, %294 : vector<2x128xf32>
    %c0_186 = arith.constant 0 : index
    %c0_187 = arith.constant 0 : index
    %c0_188 = arith.constant 0 : index
    %296 = vector.load %arg16[%c0_186, %c0_187, %c0_188] : memref<3x128x20xf32, #tpu.memory_space<vmem>>, vector<1x128x20xf32>
    %297 = vector.shape_cast %296 : vector<1x128x20xf32> to vector<128x20xf32>
    %cst_189 = arith.constant dense<0.000000e+00> : vector<2x20xf32>
    %298 = tpu.matmul %295, %297, %cst_189 {dimension_numbers = #tpu.dot_dimension_numbers<[1], [0], [0], [1], [0, 0, 1, 1], [], []>} : vector<2x128xf32>, vector<128x20xf32>, vector<2x20xf32> -> vector<2x20xf32>
    %c0_190 = arith.constant 0 : index
    %c0_191 = arith.constant 0 : index
    %c0_192 = arith.constant 0 : index
    %299 = vector.load %arg17[%c0_190, %c0_191, %c0_192] : memref<3x1x20xf32, #tpu.memory_space<vmem>>, vector<1x1x20xf32>
    %300 = vector.shape_cast %299 : vector<1x1x20xf32> to vector<1x20xf32>
    %301 = vector.broadcast %300 : vector<1x20xf32> to vector<2x20xf32>
    %302 = arith.addf %298, %301 : vector<2x20xf32>
    %c0_193 = arith.constant 0 : index
    %c0_194 = arith.constant 0 : index
    %c0_195 = arith.constant 0 : index
    %303 = vector.load %arg18[%c0_193, %c0_194, %c0_195] : memref<3x2x20xf32, #tpu.memory_space<vmem>>, vector<1x2x20xf32>
    %304 = vector.shape_cast %303 : vector<1x2x20xf32> to vector<2x20xf32>
    %cst_196 = arith.constant 5.000000e-01 : f32
    %305 = vector.broadcast %cst_196 : f32 to vector<2x20xf32>
    %306 = arith.mulf %305, %302 : vector<2x20xf32>
    %307 = math.exp %306 : vector<2x20xf32>
    %308 = arith.mulf %304, %307 : vector<2x20xf32>
    %309 = arith.addf %286, %308 : vector<2x20xf32>
    %cst_197 = arith.constant -5.000000e-01 : f32
    %310 = vector.broadcast %cst_197 : f32 to vector<2x20xf32>
    %311 = arith.mulf %310, %302 : vector<2x20xf32>
    %cst_198 = arith.constant 5.000000e-01 : f32
    %312 = vector.broadcast %cst_198 : f32 to vector<2x20xf32>
    %313 = arith.mulf %312, %304 : vector<2x20xf32>
    %314 = arith.mulf %313, %304 : vector<2x20xf32>
    %315 = arith.subf %311, %314 : vector<2x20xf32>
    %316 = arith.addf %1, %315 : vector<2x20xf32>
    %317 = math.tanh %309 : vector<2x20xf32>
    %318 = vector.extract_strided_slice %317 {offsets = [0, 0], sizes = [2, 5], strides = [1, 1]} : vector<2x20xf32> to vector<2x5xf32>
    %cst_199 = arith.constant dense<0xFF800000> : vector<2xf32>
    %319 = vector.multi_reduction <maximumf>, %318, %cst_199 [1] : vector<2x5xf32> to vector<2xf32>
    %320 = vector.shape_cast %319 : vector<2xf32> to vector<2x1xf32>
    %321 = vector.broadcast %320 : vector<2x1xf32> to vector<2x5xf32>
    %322 = arith.subf %318, %321 : vector<2x5xf32>
    %323 = math.exp %322 : vector<2x5xf32>
    %cst_200 = arith.constant dense<0.000000e+00> : vector<2xf32>
    %324 = vector.multi_reduction <add>, %323, %cst_200 [1] : vector<2x5xf32> to vector<2xf32>
    %325 = vector.shape_cast %324 : vector<2xf32> to vector<2x1xf32>
    %326 = vector.broadcast %325 : vector<2x1xf32> to vector<2x5xf32>
    %327 = arith.divf %323, %326 : vector<2x5xf32>
    %c0_201 = arith.constant 0 : index
    %c0_202 = arith.constant 0 : index
    %c0_203 = arith.constant 0 : index
    %328 = vector.load %arg19[%c0_201, %c0_202, %c0_203] : memref<3x2x20xf32, #tpu.memory_space<vmem>>, vector<1x2x5xf32>
    %329 = vector.shape_cast %328 : vector<1x2x5xf32> to vector<2x5xf32>
    %330 = vector.shape_cast %327 : vector<2x5xf32> to vector<1x2x5xf32>
    tpu.vector_store %arg19[%c0_201, %c0_202, %c0_203], %330 {strides = array<i32>} : memref<3x2x20xf32, #tpu.memory_space<vmem>>, vector<1x2x5xf32>,
    %331 = vector.extract_strided_slice %317 {offsets = [0, 5], sizes = [2, 5], strides = [1, 1]} : vector<2x20xf32> to vector<2x5xf32>
    %cst_204 = arith.constant dense<0xFF800000> : vector<2xf32>
    %332 = vector.multi_reduction <maximumf>, %331, %cst_204 [1] : vector<2x5xf32> to vector<2xf32>
    %333 = vector.shape_cast %332 : vector<2xf32> to vector<2x1xf32>
    %334 = vector.broadcast %333 : vector<2x1xf32> to vector<2x5xf32>
    %335 = arith.subf %331, %334 : vector<2x5xf32>
    %336 = math.exp %335 : vector<2x5xf32>
    %cst_205 = arith.constant dense<0.000000e+00> : vector<2xf32>
    %337 = vector.multi_reduction <add>, %336, %cst_205 [1] : vector<2x5xf32> to vector<2xf32>
    %338 = vector.shape_cast %337 : vector<2xf32> to vector<2x1xf32>
    %339 = vector.broadcast %338 : vector<2x1xf32> to vector<2x5xf32>
    %340 = arith.divf %336, %339 : vector<2x5xf32>
    %c0_206 = arith.constant 0 : index
    %c0_207 = arith.constant 0 : index
    %c5 = arith.constant 5 : index
    %341 = vector.load %arg19[%c0_206, %c0_207, %c5] : memref<3x2x20xf32, #tpu.memory_space<vmem>>, vector<1x2x5xf32>
    %342 = vector.shape_cast %341 : vector<1x2x5xf32> to vector<2x5xf32>
    %343 = vector.shape_cast %340 : vector<2x5xf32> to vector<1x2x5xf32>
    tpu.vector_store %arg19[%c0_206, %c0_207, %c5], %343 {strides = array<i32>} : memref<3x2x20xf32, #tpu.memory_space<vmem>>, vector<1x2x5xf32>,
    %344 = vector.extract_strided_slice %317 {offsets = [0, 10], sizes = [2, 5], strides = [1, 1]} : vector<2x20xf32> to vector<2x5xf32>
    %cst_208 = arith.constant dense<0xFF800000> : vector<2xf32>
    %345 = vector.multi_reduction <maximumf>, %344, %cst_208 [1] : vector<2x5xf32> to vector<2xf32>
    %346 = vector.shape_cast %345 : vector<2xf32> to vector<2x1xf32>
    %347 = vector.broadcast %346 : vector<2x1xf32> to vector<2x5xf32>
    %348 = arith.subf %344, %347 : vector<2x5xf32>
    %349 = math.exp %348 : vector<2x5xf32>
    %cst_209 = arith.constant dense<0.000000e+00> : vector<2xf32>
    %350 = vector.multi_reduction <add>, %349, %cst_209 [1] : vector<2x5xf32> to vector<2xf32>
    %351 = vector.shape_cast %350 : vector<2xf32> to vector<2x1xf32>
    %352 = vector.broadcast %351 : vector<2x1xf32> to vector<2x5xf32>
    %353 = arith.divf %349, %352 : vector<2x5xf32>
    %c0_210 = arith.constant 0 : index
    %c0_211 = arith.constant 0 : index
    %c10 = arith.constant 10 : index
    %354 = vector.load %arg19[%c0_210, %c0_211, %c10] : memref<3x2x20xf32, #tpu.memory_space<vmem>>, vector<1x2x5xf32>
    %355 = vector.shape_cast %354 : vector<1x2x5xf32> to vector<2x5xf32>
    %356 = vector.shape_cast %353 : vector<2x5xf32> to vector<1x2x5xf32>
    tpu.vector_store %arg19[%c0_210, %c0_211, %c10], %356 {strides = array<i32>} : memref<3x2x20xf32, #tpu.memory_space<vmem>>, vector<1x2x5xf32>,
    %357 = vector.extract_strided_slice %317 {offsets = [0, 15], sizes = [2, 5], strides = [1, 1]} : vector<2x20xf32> to vector<2x5xf32>
    %cst_212 = arith.constant dense<0xFF800000> : vector<2xf32>
    %358 = vector.multi_reduction <maximumf>, %357, %cst_212 [1] : vector<2x5xf32> to vector<2xf32>
    %359 = vector.shape_cast %358 : vector<2xf32> to vector<2x1xf32>
    %360 = vector.broadcast %359 : vector<2x1xf32> to vector<2x5xf32>
    %361 = arith.subf %357, %360 : vector<2x5xf32>
    %362 = math.exp %361 : vector<2x5xf32>
    %cst_213 = arith.constant dense<0.000000e+00> : vector<2xf32>
    %363 = vector.multi_reduction <add>, %362, %cst_213 [1] : vector<2x5xf32> to vector<2xf32>
    %364 = vector.shape_cast %363 : vector<2xf32> to vector<2x1xf32>
    %365 = vector.broadcast %364 : vector<2x1xf32> to vector<2x5xf32>
    %366 = arith.divf %362, %365 : vector<2x5xf32>
    %c0_214 = arith.constant 0 : index
    %c0_215 = arith.constant 0 : index
    %c15 = arith.constant 15 : index
    %367 = vector.load %arg19[%c0_214, %c0_215, %c15] : memref<3x2x20xf32, #tpu.memory_space<vmem>>, vector<1x2x5xf32>
    %368 = vector.shape_cast %367 : vector<1x2x5xf32> to vector<2x5xf32>
    %369 = vector.shape_cast %366 : vector<2x5xf32> to vector<1x2x5xf32>
    tpu.vector_store %arg19[%c0_214, %c0_215, %c15], %369 {strides = array<i32>} : memref<3x2x20xf32, #tpu.memory_space<vmem>>, vector<1x2x5xf32>,
    %c1_216 = arith.constant 1 : index
    %c0_217 = arith.constant 0 : index
    %c0_218 = arith.constant 0 : index
    %370 = vector.load %arg2[%c1_216, %c0_217, %c0_218] : memref<3x128x128xf32, #tpu.memory_space<vmem>>, vector<1x128x128xf32>
    %371 = vector.shape_cast %370 : vector<1x128x128xf32> to vector<128x128xf32>
    %cst_219 = arith.constant dense<0.000000e+00> : vector<2x128xf32>
    %372 = tpu.matmul %0, %371, %cst_219 {dimension_numbers = #tpu.dot_dimension_numbers<[1], [0], [0], [1], [0, 0, 1, 1], [], []>} : vector<2x128xf32>, vector<128x128xf32>, vector<2x128xf32> -> vector<2x128xf32>
    %c1_220 = arith.constant 1 : index
    %c0_221 = arith.constant 0 : index
    %c0_222 = arith.constant 0 : index
    %373 = vector.load %arg3[%c1_220, %c0_221, %c0_222] : memref<3x1x128xf32, #tpu.memory_space<vmem>>, vector<1x1x128xf32>
    %374 = vector.shape_cast %373 : vector<1x1x128xf32> to vector<1x128xf32>
    %375 = vector.broadcast %374 : vector<1x128xf32> to vector<2x128xf32>
    %376 = arith.addf %372, %375 : vector<2x128xf32>
    %cst_223 = arith.constant 0.000000e+00 : f32
    %377 = vector.broadcast %cst_223 : f32 to vector<2x128xf32>
    %378 = arith.maximumf %376, %377 : vector<2x128xf32>
    %c1_224 = arith.constant 1 : index
    %c0_225 = arith.constant 0 : index
    %c0_226 = arith.constant 0 : index
    %379 = vector.load %arg4[%c1_224, %c0_225, %c0_226] : memref<3x128x128xf32, #tpu.memory_space<vmem>>, vector<1x128x128xf32>
    %380 = vector.shape_cast %379 : vector<1x128x128xf32> to vector<128x128xf32>
    %cst_227 = arith.constant dense<0.000000e+00> : vector<2x128xf32>
    %381 = tpu.matmul %378, %380, %cst_227 {dimension_numbers = #tpu.dot_dimension_numbers<[1], [0], [0], [1], [0, 0, 1, 1], [], []>} : vector<2x128xf32>, vector<128x128xf32>, vector<2x128xf32> -> vector<2x128xf32>
    %c1_228 = arith.constant 1 : index
    %c0_229 = arith.constant 0 : index
    %c0_230 = arith.constant 0 : index
    %382 = vector.load %arg5[%c1_228, %c0_229, %c0_230] : memref<3x1x128xf32, #tpu.memory_space<vmem>>, vector<1x1x128xf32>
    %383 = vector.shape_cast %382 : vector<1x1x128xf32> to vector<1x128xf32>
    %384 = vector.broadcast %383 : vector<1x128xf32> to vector<2x128xf32>
    %385 = arith.addf %381, %384 : vector<2x128xf32>
    %c1_231 = arith.constant 1 : index
    %c0_232 = arith.constant 0 : index
    %c0_233 = arith.constant 0 : index
    %386 = vector.load %arg1[%c1_231, %c0_232, %c0_233] : memref<3x128x128xf32, #tpu.memory_space<vmem>>, vector<1x128x128xf32>
    %387 = vector.shape_cast %386 : vector<1x128x128xf32> to vector<128x128xf32>
    %cst_234 = arith.constant dense<0.000000e+00> : vector<2x128xf32>
    %388 = tpu.matmul %385, %387, %cst_234 {dimension_numbers = #tpu.dot_dimension_numbers<[1], [0], [0], [1], [0, 0, 1, 1], [], []>} : vector<2x128xf32>, vector<128x128xf32>, vector<2x128xf32> -> vector<2x128xf32>
    %c0_235 = arith.constant 0 : index
    %c0_236 = arith.constant 0 : index
    %389 = vector.load %arg6[%c0_235, %c0_236] : memref<128x128xf32, #tpu.memory_space<vmem>>, vector<128x128xf32>
    %cst_237 = arith.constant dense<0.000000e+00> : vector<2x128xf32>
    %390 = tpu.matmul %388, %389, %cst_237 {dimension_numbers = #tpu.dot_dimension_numbers<[1], [0], [0], [1], [0, 0, 1, 1], [], []>} : vector<2x128xf32>, vector<128x128xf32>, vector<2x128xf32> -> vector<2x128xf32>
    %c0_238 = arith.constant 0 : index
    %c0_239 = arith.constant 0 : index
    %391 = vector.load %arg7[%c0_238, %c0_239] : memref<128x128xf32, #tpu.memory_space<vmem>>, vector<128x128xf32>
    %cst_240 = arith.constant dense<0.000000e+00> : vector<2x128xf32>
    %392 = tpu.matmul %388, %391, %cst_240 {dimension_numbers = #tpu.dot_dimension_numbers<[1], [0], [0], [1], [0, 0, 1, 1], [], []>} : vector<2x128xf32>, vector<128x128xf32>, vector<2x128xf32> -> vector<2x128xf32>
    %c0_241 = arith.constant 0 : index
    %c0_242 = arith.constant 0 : index
    %393 = vector.load %arg8[%c0_241, %c0_242] : memref<128x128xf32, #tpu.memory_space<vmem>>, vector<128x128xf32>
    %cst_243 = arith.constant dense<0.000000e+00> : vector<2x128xf32>
    %394 = tpu.matmul %388, %393, %cst_243 {dimension_numbers = #tpu.dot_dimension_numbers<[1], [0], [0], [1], [0, 0, 1, 1], [], []>} : vector<2x128xf32>, vector<128x128xf32>, vector<2x128xf32> -> vector<2x128xf32>
    %395 = vector.extract_strided_slice %390 {offsets = [0, 0], sizes = [2, 32], strides = [1, 1]} : vector<2x128xf32> to vector<2x32xf32>
    %c0_244 = arith.constant 0 : index
    %c0_245 = arith.constant 0 : index
    %c0_246 = arith.constant 0 : index
    %396 = vector.load %arg21[%c0_244, %c0_245, %c0_246] : memref<2x4x32xf32, #tpu.memory_space<vmem>>, vector<2x1x32xf32>
    %397 = vector.shape_cast %396 : vector<2x1x32xf32> to vector<2x32xf32>
    %398 = vector.shape_cast %395 : vector<2x32xf32> to vector<2x1x32xf32>
    tpu.vector_store %arg21[%c0_244, %c0_245, %c0_246], %398 {strides = array<i32>} : memref<2x4x32xf32, #tpu.memory_space<vmem>>, vector<2x1x32xf32>,
    %399 = vector.extract_strided_slice %392 {offsets = [0, 0], sizes = [2, 32], strides = [1, 1]} : vector<2x128xf32> to vector<2x32xf32>
    %c0_247 = arith.constant 0 : index
    %c0_248 = arith.constant 0 : index
    %c0_249 = arith.constant 0 : index
    %400 = vector.load %arg22[%c0_247, %c0_248, %c0_249] : memref<2x4x32xf32, #tpu.memory_space<vmem>>, vector<2x1x32xf32>
    %401 = vector.shape_cast %400 : vector<2x1x32xf32> to vector<2x32xf32>
    %402 = vector.shape_cast %399 : vector<2x32xf32> to vector<2x1x32xf32>
    tpu.vector_store %arg22[%c0_247, %c0_248, %c0_249], %402 {strides = array<i32>} : memref<2x4x32xf32, #tpu.memory_space<vmem>>, vector<2x1x32xf32>,
    %403 = vector.extract_strided_slice %394 {offsets = [0, 0], sizes = [2, 32], strides = [1, 1]} : vector<2x128xf32> to vector<2x32xf32>
    %c0_250 = arith.constant 0 : index
    %c0_251 = arith.constant 0 : index
    %c0_252 = arith.constant 0 : index
    %404 = vector.load %arg23[%c0_250, %c0_251, %c0_252] : memref<2x4x32xf32, #tpu.memory_space<vmem>>, vector<2x1x32xf32>
    %405 = vector.shape_cast %404 : vector<2x1x32xf32> to vector<2x32xf32>
    %406 = vector.shape_cast %403 : vector<2x32xf32> to vector<2x1x32xf32>
    tpu.vector_store %arg23[%c0_250, %c0_251, %c0_252], %406 {strides = array<i32>} : memref<2x4x32xf32, #tpu.memory_space<vmem>>, vector<2x1x32xf32>,
    %407 = vector.extract_strided_slice %390 {offsets = [0, 32], sizes = [2, 32], strides = [1, 1]} : vector<2x128xf32> to vector<2x32xf32>
    %c0_253 = arith.constant 0 : index
    %c1_254 = arith.constant 1 : index
    %c0_255 = arith.constant 0 : index
    %408 = vector.load %arg21[%c0_253, %c1_254, %c0_255] : memref<2x4x32xf32, #tpu.memory_space<vmem>>, vector<2x1x32xf32>
    %409 = vector.shape_cast %408 : vector<2x1x32xf32> to vector<2x32xf32>
    %410 = vector.shape_cast %407 : vector<2x32xf32> to vector<2x1x32xf32>
    tpu.vector_store %arg21[%c0_253, %c1_254, %c0_255], %410 {strides = array<i32>} : memref<2x4x32xf32, #tpu.memory_space<vmem>>, vector<2x1x32xf32>,
    %411 = vector.extract_strided_slice %392 {offsets = [0, 32], sizes = [2, 32], strides = [1, 1]} : vector<2x128xf32> to vector<2x32xf32>
    %c0_256 = arith.constant 0 : index
    %c1_257 = arith.constant 1 : index
    %c0_258 = arith.constant 0 : index
    %412 = vector.load %arg22[%c0_256, %c1_257, %c0_258] : memref<2x4x32xf32, #tpu.memory_space<vmem>>, vector<2x1x32xf32>
    %413 = vector.shape_cast %412 : vector<2x1x32xf32> to vector<2x32xf32>
    %414 = vector.shape_cast %411 : vector<2x32xf32> to vector<2x1x32xf32>
    tpu.vector_store %arg22[%c0_256, %c1_257, %c0_258], %414 {strides = array<i32>} : memref<2x4x32xf32, #tpu.memory_space<vmem>>, vector<2x1x32xf32>,
    %415 = vector.extract_strided_slice %394 {offsets = [0, 32], sizes = [2, 32], strides = [1, 1]} : vector<2x128xf32> to vector<2x32xf32>
    %c0_259 = arith.constant 0 : index
    %c1_260 = arith.constant 1 : index
    %c0_261 = arith.constant 0 : index
    %416 = vector.load %arg23[%c0_259, %c1_260, %c0_261] : memref<2x4x32xf32, #tpu.memory_space<vmem>>, vector<2x1x32xf32>
    %417 = vector.shape_cast %416 : vector<2x1x32xf32> to vector<2x32xf32>
    %418 = vector.shape_cast %415 : vector<2x32xf32> to vector<2x1x32xf32>
    tpu.vector_store %arg23[%c0_259, %c1_260, %c0_261], %418 {strides = array<i32>} : memref<2x4x32xf32, #tpu.memory_space<vmem>>, vector<2x1x32xf32>,
    %419 = vector.extract_strided_slice %390 {offsets = [0, 64], sizes = [2, 32], strides = [1, 1]} : vector<2x128xf32> to vector<2x32xf32>
    %c0_262 = arith.constant 0 : index
    %c2_263 = arith.constant 2 : index
    %c0_264 = arith.constant 0 : index
    %420 = vector.load %arg21[%c0_262, %c2_263, %c0_264] : memref<2x4x32xf32, #tpu.memory_space<vmem>>, vector<2x1x32xf32>
    %421 = vector.shape_cast %420 : vector<2x1x32xf32> to vector<2x32xf32>
    %422 = vector.shape_cast %419 : vector<2x32xf32> to vector<2x1x32xf32>
    tpu.vector_store %arg21[%c0_262, %c2_263, %c0_264], %422 {strides = array<i32>} : memref<2x4x32xf32, #tpu.memory_space<vmem>>, vector<2x1x32xf32>,
    %423 = vector.extract_strided_slice %392 {offsets = [0, 64], sizes = [2, 32], strides = [1, 1]} : vector<2x128xf32> to vector<2x32xf32>
    %c0_265 = arith.constant 0 : index
    %c2_266 = arith.constant 2 : index
    %c0_267 = arith.constant 0 : index
    %424 = vector.load %arg22[%c0_265, %c2_266, %c0_267] : memref<2x4x32xf32, #tpu.memory_space<vmem>>, vector<2x1x32xf32>
    %425 = vector.shape_cast %424 : vector<2x1x32xf32> to vector<2x32xf32>
    %426 = vector.shape_cast %423 : vector<2x32xf32> to vector<2x1x32xf32>
    tpu.vector_store %arg22[%c0_265, %c2_266, %c0_267], %426 {strides = array<i32>} : memref<2x4x32xf32, #tpu.memory_space<vmem>>, vector<2x1x32xf32>,
    %427 = vector.extract_strided_slice %394 {offsets = [0, 64], sizes = [2, 32], strides = [1, 1]} : vector<2x128xf32> to vector<2x32xf32>
    %c0_268 = arith.constant 0 : index
    %c2_269 = arith.constant 2 : index
    %c0_270 = arith.constant 0 : index
    %428 = vector.load %arg23[%c0_268, %c2_269, %c0_270] : memref<2x4x32xf32, #tpu.memory_space<vmem>>, vector<2x1x32xf32>
    %429 = vector.shape_cast %428 : vector<2x1x32xf32> to vector<2x32xf32>
    %430 = vector.shape_cast %427 : vector<2x32xf32> to vector<2x1x32xf32>
    tpu.vector_store %arg23[%c0_268, %c2_269, %c0_270], %430 {strides = array<i32>} : memref<2x4x32xf32, #tpu.memory_space<vmem>>, vector<2x1x32xf32>,
    %431 = vector.extract_strided_slice %390 {offsets = [0, 96], sizes = [2, 32], strides = [1, 1]} : vector<2x128xf32> to vector<2x32xf32>
    %c0_271 = arith.constant 0 : index
    %c3_272 = arith.constant 3 : index
    %c0_273 = arith.constant 0 : index
    %432 = vector.load %arg21[%c0_271, %c3_272, %c0_273] : memref<2x4x32xf32, #tpu.memory_space<vmem>>, vector<2x1x32xf32>
    %433 = vector.shape_cast %432 : vector<2x1x32xf32> to vector<2x32xf32>
    %434 = vector.shape_cast %431 : vector<2x32xf32> to vector<2x1x32xf32>
    tpu.vector_store %arg21[%c0_271, %c3_272, %c0_273], %434 {strides = array<i32>} : memref<2x4x32xf32, #tpu.memory_space<vmem>>, vector<2x1x32xf32>,
    %435 = vector.extract_strided_slice %392 {offsets = [0, 96], sizes = [2, 32], strides = [1, 1]} : vector<2x128xf32> to vector<2x32xf32>
    %c0_274 = arith.constant 0 : index
    %c3_275 = arith.constant 3 : index
    %c0_276 = arith.constant 0 : index
    %436 = vector.load %arg22[%c0_274, %c3_275, %c0_276] : memref<2x4x32xf32, #tpu.memory_space<vmem>>, vector<2x1x32xf32>
    %437 = vector.shape_cast %436 : vector<2x1x32xf32> to vector<2x32xf32>
    %438 = vector.shape_cast %435 : vector<2x32xf32> to vector<2x1x32xf32>
    tpu.vector_store %arg22[%c0_274, %c3_275, %c0_276], %438 {strides = array<i32>} : memref<2x4x32xf32, #tpu.memory_space<vmem>>, vector<2x1x32xf32>,
    %439 = vector.extract_strided_slice %394 {offsets = [0, 96], sizes = [2, 32], strides = [1, 1]} : vector<2x128xf32> to vector<2x32xf32>
    %c0_277 = arith.constant 0 : index
    %c3_278 = arith.constant 3 : index
    %c0_279 = arith.constant 0 : index
    %440 = vector.load %arg23[%c0_277, %c3_278, %c0_279] : memref<2x4x32xf32, #tpu.memory_space<vmem>>, vector<2x1x32xf32>
    %441 = vector.shape_cast %440 : vector<2x1x32xf32> to vector<2x32xf32>
    %442 = vector.shape_cast %439 : vector<2x32xf32> to vector<2x1x32xf32>
    tpu.vector_store %arg23[%c0_277, %c3_278, %c0_279], %442 {strides = array<i32>} : memref<2x4x32xf32, #tpu.memory_space<vmem>>, vector<2x1x32xf32>,
    %c0_280 = arith.constant 0 : index
    %c0_281 = arith.constant 0 : index
    %c0_282 = arith.constant 0 : index
    %443 = vector.load %arg21[%c0_280, %c0_281, %c0_282] : memref<2x4x32xf32, #tpu.memory_space<vmem>>, vector<1x4x32xf32>
    %444 = vector.shape_cast %443 : vector<1x4x32xf32> to vector<4x32xf32>
    %c0_283 = arith.constant 0 : index
    %c0_284 = arith.constant 0 : index
    %c0_285 = arith.constant 0 : index
    %445 = vector.load %arg22[%c0_283, %c0_284, %c0_285] : memref<2x4x32xf32, #tpu.memory_space<vmem>>, vector<1x4x32xf32>
    %446 = vector.shape_cast %445 : vector<1x4x32xf32> to vector<4x32xf32>
    %c0_286 = arith.constant 0 : index
    %c0_287 = arith.constant 0 : index
    %c0_288 = arith.constant 0 : index
    %447 = vector.load %arg23[%c0_286, %c0_287, %c0_288] : memref<2x4x32xf32, #tpu.memory_space<vmem>>, vector<1x4x32xf32>
    %448 = vector.shape_cast %447 : vector<1x4x32xf32> to vector<4x32xf32>
    %449 = vector.extract_strided_slice %444 {offsets = [0, 0], sizes = [4, 8], strides = [1, 1]} : vector<4x32xf32> to vector<4x8xf32>
    %450 = vector.extract_strided_slice %446 {offsets = [0, 0], sizes = [4, 8], strides = [1, 1]} : vector<4x32xf32> to vector<4x8xf32>
    %451 = tpu.transpose %450, [1, 0] : vector<4x8xf32> -> vector<8x4xf32>
    %cst_289 = arith.constant dense<0.000000e+00> : vector<4x4xf32>
    %452 = tpu.matmul %449, %451, %cst_289 {dimension_numbers = #tpu.dot_dimension_numbers<[1], [0], [0], [1], [0, 0, 1, 1], [], []>} : vector<4x8xf32>, vector<8x4xf32>, vector<4x4xf32> -> vector<4x4xf32>
    %cst_290 = arith.constant 0.353553385 : f32
    %453 = vector.broadcast %cst_290 : f32 to vector<4x4xf32>
    %454 = arith.mulf %452, %453 : vector<4x4xf32>
    %cst_291 = arith.constant dense<0xFF800000> : vector<4xf32>
    %455 = vector.multi_reduction <maximumf>, %454, %cst_291 [1] : vector<4x4xf32> to vector<4xf32>
    %456 = vector.shape_cast %455 : vector<4xf32> to vector<4x1xf32>
    %457 = vector.broadcast %456 : vector<4x1xf32> to vector<4x4xf32>
    %458 = arith.subf %454, %457 : vector<4x4xf32>
    %459 = math.exp %458 : vector<4x4xf32>
    %cst_292 = arith.constant dense<0.000000e+00> : vector<4xf32>
    %460 = vector.multi_reduction <add>, %459, %cst_292 [1] : vector<4x4xf32> to vector<4xf32>
    %461 = vector.shape_cast %460 : vector<4xf32> to vector<4x1xf32>
    %462 = tpu.reciprocal %461 {approx = true} : vector<4x1xf32> -> vector<4x1xf32>
    %463 = vector.broadcast %462 : vector<4x1xf32> to vector<4x4xf32>
    %464 = arith.mulf %459, %463 : vector<4x4xf32>
    %465 = vector.extract_strided_slice %448 {offsets = [0, 0], sizes = [4, 8], strides = [1, 1]} : vector<4x32xf32> to vector<4x8xf32>
    %cst_293 = arith.constant dense<0.000000e+00> : vector<4x8xf32>
    %466 = tpu.matmul %464, %465, %cst_293 {dimension_numbers = #tpu.dot_dimension_numbers<[1], [0], [0], [1], [0, 0, 1, 1], [], []>} : vector<4x4xf32>, vector<4x8xf32>, vector<4x8xf32> -> vector<4x8xf32>
    %c0_294 = arith.constant 0 : index
    %c0_295 = arith.constant 0 : index
    %c0_296 = arith.constant 0 : index
    %467 = vector.load %arg24[%c0_294, %c0_295, %c0_296] : memref<2x4x32xf32, #tpu.memory_space<vmem>>, vector<1x4x8xf32>
    %468 = vector.shape_cast %467 : vector<1x4x8xf32> to vector<4x8xf32>
    %469 = vector.shape_cast %466 : vector<4x8xf32> to vector<1x4x8xf32>
    tpu.vector_store %arg24[%c0_294, %c0_295, %c0_296], %469 {strides = array<i32>} : memref<2x4x32xf32, #tpu.memory_space<vmem>>, vector<1x4x8xf32>,
    %470 = vector.extract_strided_slice %444 {offsets = [0, 8], sizes = [4, 8], strides = [1, 1]} : vector<4x32xf32> to vector<4x8xf32>
    %471 = vector.extract_strided_slice %446 {offsets = [0, 8], sizes = [4, 8], strides = [1, 1]} : vector<4x32xf32> to vector<4x8xf32>
    %472 = tpu.transpose %471, [1, 0] : vector<4x8xf32> -> vector<8x4xf32>
    %cst_297 = arith.constant dense<0.000000e+00> : vector<4x4xf32>
    %473 = tpu.matmul %470, %472, %cst_297 {dimension_numbers = #tpu.dot_dimension_numbers<[1], [0], [0], [1], [0, 0, 1, 1], [], []>} : vector<4x8xf32>, vector<8x4xf32>, vector<4x4xf32> -> vector<4x4xf32>
    %cst_298 = arith.constant 0.353553385 : f32
    %474 = vector.broadcast %cst_298 : f32 to vector<4x4xf32>
    %475 = arith.mulf %473, %474 : vector<4x4xf32>
    %cst_299 = arith.constant dense<0xFF800000> : vector<4xf32>
    %476 = vector.multi_reduction <maximumf>, %475, %cst_299 [1] : vector<4x4xf32> to vector<4xf32>
    %477 = vector.shape_cast %476 : vector<4xf32> to vector<4x1xf32>
    %478 = vector.broadcast %477 : vector<4x1xf32> to vector<4x4xf32>
    %479 = arith.subf %475, %478 : vector<4x4xf32>
    %480 = math.exp %479 : vector<4x4xf32>
    %cst_300 = arith.constant dense<0.000000e+00> : vector<4xf32>
    %481 = vector.multi_reduction <add>, %480, %cst_300 [1] : vector<4x4xf32> to vector<4xf32>
    %482 = vector.shape_cast %481 : vector<4xf32> to vector<4x1xf32>
    %483 = tpu.reciprocal %482 {approx = true} : vector<4x1xf32> -> vector<4x1xf32>
    %484 = vector.broadcast %483 : vector<4x1xf32> to vector<4x4xf32>
    %485 = arith.mulf %480, %484 : vector<4x4xf32>
    %486 = vector.extract_strided_slice %448 {offsets = [0, 8], sizes = [4, 8], strides = [1, 1]} : vector<4x32xf32> to vector<4x8xf32>
    %cst_301 = arith.constant dense<0.000000e+00> : vector<4x8xf32>
    %487 = tpu.matmul %485, %486, %cst_301 {dimension_numbers = #tpu.dot_dimension_numbers<[1], [0], [0], [1], [0, 0, 1, 1], [], []>} : vector<4x4xf32>, vector<4x8xf32>, vector<4x8xf32> -> vector<4x8xf32>
    %c0_302 = arith.constant 0 : index
    %c0_303 = arith.constant 0 : index
    %c8_304 = arith.constant 8 : index
    %488 = vector.load %arg24[%c0_302, %c0_303, %c8_304] : memref<2x4x32xf32, #tpu.memory_space<vmem>>, vector<1x4x8xf32>
    %489 = vector.shape_cast %488 : vector<1x4x8xf32> to vector<4x8xf32>
    %490 = vector.shape_cast %487 : vector<4x8xf32> to vector<1x4x8xf32>
    tpu.vector_store %arg24[%c0_302, %c0_303, %c8_304], %490 {strides = array<i32>} : memref<2x4x32xf32, #tpu.memory_space<vmem>>, vector<1x4x8xf32>,
    %491 = vector.extract_strided_slice %444 {offsets = [0, 16], sizes = [4, 8], strides = [1, 1]} : vector<4x32xf32> to vector<4x8xf32>
    %492 = vector.extract_strided_slice %446 {offsets = [0, 16], sizes = [4, 8], strides = [1, 1]} : vector<4x32xf32> to vector<4x8xf32>
    %493 = tpu.transpose %492, [1, 0] : vector<4x8xf32> -> vector<8x4xf32>
    %cst_305 = arith.constant dense<0.000000e+00> : vector<4x4xf32>
    %494 = tpu.matmul %491, %493, %cst_305 {dimension_numbers = #tpu.dot_dimension_numbers<[1], [0], [0], [1], [0, 0, 1, 1], [], []>} : vector<4x8xf32>, vector<8x4xf32>, vector<4x4xf32> -> vector<4x4xf32>
    %cst_306 = arith.constant 0.353553385 : f32
    %495 = vector.broadcast %cst_306 : f32 to vector<4x4xf32>
    %496 = arith.mulf %494, %495 : vector<4x4xf32>
    %cst_307 = arith.constant dense<0xFF800000> : vector<4xf32>
    %497 = vector.multi_reduction <maximumf>, %496, %cst_307 [1] : vector<4x4xf32> to vector<4xf32>
    %498 = vector.shape_cast %497 : vector<4xf32> to vector<4x1xf32>
    %499 = vector.broadcast %498 : vector<4x1xf32> to vector<4x4xf32>
    %500 = arith.subf %496, %499 : vector<4x4xf32>
    %501 = math.exp %500 : vector<4x4xf32>
    %cst_308 = arith.constant dense<0.000000e+00> : vector<4xf32>
    %502 = vector.multi_reduction <add>, %501, %cst_308 [1] : vector<4x4xf32> to vector<4xf32>
    %503 = vector.shape_cast %502 : vector<4xf32> to vector<4x1xf32>
    %504 = tpu.reciprocal %503 {approx = true} : vector<4x1xf32> -> vector<4x1xf32>
    %505 = vector.broadcast %504 : vector<4x1xf32> to vector<4x4xf32>
    %506 = arith.mulf %501, %505 : vector<4x4xf32>
    %507 = vector.extract_strided_slice %448 {offsets = [0, 16], sizes = [4, 8], strides = [1, 1]} : vector<4x32xf32> to vector<4x8xf32>
    %cst_309 = arith.constant dense<0.000000e+00> : vector<4x8xf32>
    %508 = tpu.matmul %506, %507, %cst_309 {dimension_numbers = #tpu.dot_dimension_numbers<[1], [0], [0], [1], [0, 0, 1, 1], [], []>} : vector<4x4xf32>, vector<4x8xf32>, vector<4x8xf32> -> vector<4x8xf32>
    %c0_310 = arith.constant 0 : index
    %c0_311 = arith.constant 0 : index
    %c16_312 = arith.constant 16 : index
    %509 = vector.load %arg24[%c0_310, %c0_311, %c16_312] : memref<2x4x32xf32, #tpu.memory_space<vmem>>, vector<1x4x8xf32>
    %510 = vector.shape_cast %509 : vector<1x4x8xf32> to vector<4x8xf32>
    %511 = vector.shape_cast %508 : vector<4x8xf32> to vector<1x4x8xf32>
    tpu.vector_store %arg24[%c0_310, %c0_311, %c16_312], %511 {strides = array<i32>} : memref<2x4x32xf32, #tpu.memory_space<vmem>>, vector<1x4x8xf32>,
    %512 = vector.extract_strided_slice %444 {offsets = [0, 24], sizes = [4, 8], strides = [1, 1]} : vector<4x32xf32> to vector<4x8xf32>
    %513 = vector.extract_strided_slice %446 {offsets = [0, 24], sizes = [4, 8], strides = [1, 1]} : vector<4x32xf32> to vector<4x8xf32>
    %514 = tpu.transpose %513, [1, 0] : vector<4x8xf32> -> vector<8x4xf32>
    %cst_313 = arith.constant dense<0.000000e+00> : vector<4x4xf32>
    %515 = tpu.matmul %512, %514, %cst_313 {dimension_numbers = #tpu.dot_dimension_numbers<[1], [0], [0], [1], [0, 0, 1, 1], [], []>} : vector<4x8xf32>, vector<8x4xf32>, vector<4x4xf32> -> vector<4x4xf32>
    %cst_314 = arith.constant 0.353553385 : f32
    %516 = vector.broadcast %cst_314 : f32 to vector<4x4xf32>
    %517 = arith.mulf %515, %516 : vector<4x4xf32>
    %cst_315 = arith.constant dense<0xFF800000> : vector<4xf32>
    %518 = vector.multi_reduction <maximumf>, %517, %cst_315 [1] : vector<4x4xf32> to vector<4xf32>
    %519 = vector.shape_cast %518 : vector<4xf32> to vector<4x1xf32>
    %520 = vector.broadcast %519 : vector<4x1xf32> to vector<4x4xf32>
    %521 = arith.subf %517, %520 : vector<4x4xf32>
    %522 = math.exp %521 : vector<4x4xf32>
    %cst_316 = arith.constant dense<0.000000e+00> : vector<4xf32>
    %523 = vector.multi_reduction <add>, %522, %cst_316 [1] : vector<4x4xf32> to vector<4xf32>
    %524 = vector.shape_cast %523 : vector<4xf32> to vector<4x1xf32>
    %525 = tpu.reciprocal %524 {approx = true} : vector<4x1xf32> -> vector<4x1xf32>
    %526 = vector.broadcast %525 : vector<4x1xf32> to vector<4x4xf32>
    %527 = arith.mulf %522, %526 : vector<4x4xf32>
    %528 = vector.extract_strided_slice %448 {offsets = [0, 24], sizes = [4, 8], strides = [1, 1]} : vector<4x32xf32> to vector<4x8xf32>
    %cst_317 = arith.constant dense<0.000000e+00> : vector<4x8xf32>
    %529 = tpu.matmul %527, %528, %cst_317 {dimension_numbers = #tpu.dot_dimension_numbers<[1], [0], [0], [1], [0, 0, 1, 1], [], []>} : vector<4x4xf32>, vector<4x8xf32>, vector<4x8xf32> -> vector<4x8xf32>
    %c0_318 = arith.constant 0 : index
    %c0_319 = arith.constant 0 : index
    %c24_320 = arith.constant 24 : index
    %530 = vector.load %arg24[%c0_318, %c0_319, %c24_320] : memref<2x4x32xf32, #tpu.memory_space<vmem>>, vector<1x4x8xf32>
    %531 = vector.shape_cast %530 : vector<1x4x8xf32> to vector<4x8xf32>
    %532 = vector.shape_cast %529 : vector<4x8xf32> to vector<1x4x8xf32>
    tpu.vector_store %arg24[%c0_318, %c0_319, %c24_320], %532 {strides = array<i32>} : memref<2x4x32xf32, #tpu.memory_space<vmem>>, vector<1x4x8xf32>,
    %c1_321 = arith.constant 1 : index
    %c0_322 = arith.constant 0 : index
    %c0_323 = arith.constant 0 : index
    %533 = vector.load %arg21[%c1_321, %c0_322, %c0_323] : memref<2x4x32xf32, #tpu.memory_space<vmem>>, vector<1x4x32xf32>
    %534 = vector.shape_cast %533 : vector<1x4x32xf32> to vector<4x32xf32>
    %c1_324 = arith.constant 1 : index
    %c0_325 = arith.constant 0 : index
    %c0_326 = arith.constant 0 : index
    %535 = vector.load %arg22[%c1_324, %c0_325, %c0_326] : memref<2x4x32xf32, #tpu.memory_space<vmem>>, vector<1x4x32xf32>
    %536 = vector.shape_cast %535 : vector<1x4x32xf32> to vector<4x32xf32>
    %c1_327 = arith.constant 1 : index
    %c0_328 = arith.constant 0 : index
    %c0_329 = arith.constant 0 : index
    %537 = vector.load %arg23[%c1_327, %c0_328, %c0_329] : memref<2x4x32xf32, #tpu.memory_space<vmem>>, vector<1x4x32xf32>
    %538 = vector.shape_cast %537 : vector<1x4x32xf32> to vector<4x32xf32>
    %539 = vector.extract_strided_slice %534 {offsets = [0, 0], sizes = [4, 8], strides = [1, 1]} : vector<4x32xf32> to vector<4x8xf32>
    %540 = vector.extract_strided_slice %536 {offsets = [0, 0], sizes = [4, 8], strides = [1, 1]} : vector<4x32xf32> to vector<4x8xf32>
    %541 = tpu.transpose %540, [1, 0] : vector<4x8xf32> -> vector<8x4xf32>
    %cst_330 = arith.constant dense<0.000000e+00> : vector<4x4xf32>
    %542 = tpu.matmul %539, %541, %cst_330 {dimension_numbers = #tpu.dot_dimension_numbers<[1], [0], [0], [1], [0, 0, 1, 1], [], []>} : vector<4x8xf32>, vector<8x4xf32>, vector<4x4xf32> -> vector<4x4xf32>
    %cst_331 = arith.constant 0.353553385 : f32
    %543 = vector.broadcast %cst_331 : f32 to vector<4x4xf32>
    %544 = arith.mulf %542, %543 : vector<4x4xf32>
    %cst_332 = arith.constant dense<0xFF800000> : vector<4xf32>
    %545 = vector.multi_reduction <maximumf>, %544, %cst_332 [1] : vector<4x4xf32> to vector<4xf32>
    %546 = vector.shape_cast %545 : vector<4xf32> to vector<4x1xf32>
    %547 = vector.broadcast %546 : vector<4x1xf32> to vector<4x4xf32>
    %548 = arith.subf %544, %547 : vector<4x4xf32>
    %549 = math.exp %548 : vector<4x4xf32>
    %cst_333 = arith.constant dense<0.000000e+00> : vector<4xf32>
    %550 = vector.multi_reduction <add>, %549, %cst_333 [1] : vector<4x4xf32> to vector<4xf32>
    %551 = vector.shape_cast %550 : vector<4xf32> to vector<4x1xf32>
    %552 = tpu.reciprocal %551 {approx = true} : vector<4x1xf32> -> vector<4x1xf32>
    %553 = vector.broadcast %552 : vector<4x1xf32> to vector<4x4xf32>
    %554 = arith.mulf %549, %553 : vector<4x4xf32>
    %555 = vector.extract_strided_slice %538 {offsets = [0, 0], sizes = [4, 8], strides = [1, 1]} : vector<4x32xf32> to vector<4x8xf32>
    %cst_334 = arith.constant dense<0.000000e+00> : vector<4x8xf32>
    %556 = tpu.matmul %554, %555, %cst_334 {dimension_numbers = #tpu.dot_dimension_numbers<[1], [0], [0], [1], [0, 0, 1, 1], [], []>} : vector<4x4xf32>, vector<4x8xf32>, vector<4x8xf32> -> vector<4x8xf32>
    %c1_335 = arith.constant 1 : index
    %c0_336 = arith.constant 0 : index
    %c0_337 = arith.constant 0 : index
    %557 = vector.load %arg24[%c1_335, %c0_336, %c0_337] : memref<2x4x32xf32, #tpu.memory_space<vmem>>, vector<1x4x8xf32>
    %558 = vector.shape_cast %557 : vector<1x4x8xf32> to vector<4x8xf32>
    %559 = vector.shape_cast %556 : vector<4x8xf32> to vector<1x4x8xf32>
    tpu.vector_store %arg24[%c1_335, %c0_336, %c0_337], %559 {strides = array<i32>} : memref<2x4x32xf32, #tpu.memory_space<vmem>>, vector<1x4x8xf32>,
    %560 = vector.extract_strided_slice %534 {offsets = [0, 8], sizes = [4, 8], strides = [1, 1]} : vector<4x32xf32> to vector<4x8xf32>
    %561 = vector.extract_strided_slice %536 {offsets = [0, 8], sizes = [4, 8], strides = [1, 1]} : vector<4x32xf32> to vector<4x8xf32>
    %562 = tpu.transpose %561, [1, 0] : vector<4x8xf32> -> vector<8x4xf32>
    %cst_338 = arith.constant dense<0.000000e+00> : vector<4x4xf32>
    %563 = tpu.matmul %560, %562, %cst_338 {dimension_numbers = #tpu.dot_dimension_numbers<[1], [0], [0], [1], [0, 0, 1, 1], [], []>} : vector<4x8xf32>, vector<8x4xf32>, vector<4x4xf32> -> vector<4x4xf32>
    %cst_339 = arith.constant 0.353553385 : f32
    %564 = vector.broadcast %cst_339 : f32 to vector<4x4xf32>
    %565 = arith.mulf %563, %564 : vector<4x4xf32>
    %cst_340 = arith.constant dense<0xFF800000> : vector<4xf32>
    %566 = vector.multi_reduction <maximumf>, %565, %cst_340 [1] : vector<4x4xf32> to vector<4xf32>
    %567 = vector.shape_cast %566 : vector<4xf32> to vector<4x1xf32>
    %568 = vector.broadcast %567 : vector<4x1xf32> to vector<4x4xf32>
    %569 = arith.subf %565, %568 : vector<4x4xf32>
    %570 = math.exp %569 : vector<4x4xf32>
    %cst_341 = arith.constant dense<0.000000e+00> : vector<4xf32>
    %571 = vector.multi_reduction <add>, %570, %cst_341 [1] : vector<4x4xf32> to vector<4xf32>
    %572 = vector.shape_cast %571 : vector<4xf32> to vector<4x1xf32>
    %573 = tpu.reciprocal %572 {approx = true} : vector<4x1xf32> -> vector<4x1xf32>
    %574 = vector.broadcast %573 : vector<4x1xf32> to vector<4x4xf32>
    %575 = arith.mulf %570, %574 : vector<4x4xf32>
    %576 = vector.extract_strided_slice %538 {offsets = [0, 8], sizes = [4, 8], strides = [1, 1]} : vector<4x32xf32> to vector<4x8xf32>
    %cst_342 = arith.constant dense<0.000000e+00> : vector<4x8xf32>
    %577 = tpu.matmul %575, %576, %cst_342 {dimension_numbers = #tpu.dot_dimension_numbers<[1], [0], [0], [1], [0, 0, 1, 1], [], []>} : vector<4x4xf32>, vector<4x8xf32>, vector<4x8xf32> -> vector<4x8xf32>
    %c1_343 = arith.constant 1 : index
    %c0_344 = arith.constant 0 : index
    %c8_345 = arith.constant 8 : index
    %578 = vector.load %arg24[%c1_343, %c0_344, %c8_345] : memref<2x4x32xf32, #tpu.memory_space<vmem>>, vector<1x4x8xf32>
    %579 = vector.shape_cast %578 : vector<1x4x8xf32> to vector<4x8xf32>
    %580 = vector.shape_cast %577 : vector<4x8xf32> to vector<1x4x8xf32>
    tpu.vector_store %arg24[%c1_343, %c0_344, %c8_345], %580 {strides = array<i32>} : memref<2x4x32xf32, #tpu.memory_space<vmem>>, vector<1x4x8xf32>,
    %581 = vector.extract_strided_slice %534 {offsets = [0, 16], sizes = [4, 8], strides = [1, 1]} : vector<4x32xf32> to vector<4x8xf32>
    %582 = vector.extract_strided_slice %536 {offsets = [0, 16], sizes = [4, 8], strides = [1, 1]} : vector<4x32xf32> to vector<4x8xf32>
    %583 = tpu.transpose %582, [1, 0] : vector<4x8xf32> -> vector<8x4xf32>
    %cst_346 = arith.constant dense<0.000000e+00> : vector<4x4xf32>
    %584 = tpu.matmul %581, %583, %cst_346 {dimension_numbers = #tpu.dot_dimension_numbers<[1], [0], [0], [1], [0, 0, 1, 1], [], []>} : vector<4x8xf32>, vector<8x4xf32>, vector<4x4xf32> -> vector<4x4xf32>
    %cst_347 = arith.constant 0.353553385 : f32
    %585 = vector.broadcast %cst_347 : f32 to vector<4x4xf32>
    %586 = arith.mulf %584, %585 : vector<4x4xf32>
    %cst_348 = arith.constant dense<0xFF800000> : vector<4xf32>
    %587 = vector.multi_reduction <maximumf>, %586, %cst_348 [1] : vector<4x4xf32> to vector<4xf32>
    %588 = vector.shape_cast %587 : vector<4xf32> to vector<4x1xf32>
    %589 = vector.broadcast %588 : vector<4x1xf32> to vector<4x4xf32>
    %590 = arith.subf %586, %589 : vector<4x4xf32>
    %591 = math.exp %590 : vector<4x4xf32>
    %cst_349 = arith.constant dense<0.000000e+00> : vector<4xf32>
    %592 = vector.multi_reduction <add>, %591, %cst_349 [1] : vector<4x4xf32> to vector<4xf32>
    %593 = vector.shape_cast %592 : vector<4xf32> to vector<4x1xf32>
    %594 = tpu.reciprocal %593 {approx = true} : vector<4x1xf32> -> vector<4x1xf32>
    %595 = vector.broadcast %594 : vector<4x1xf32> to vector<4x4xf32>
    %596 = arith.mulf %591, %595 : vector<4x4xf32>
    %597 = vector.extract_strided_slice %538 {offsets = [0, 16], sizes = [4, 8], strides = [1, 1]} : vector<4x32xf32> to vector<4x8xf32>
    %cst_350 = arith.constant dense<0.000000e+00> : vector<4x8xf32>
    %598 = tpu.matmul %596, %597, %cst_350 {dimension_numbers = #tpu.dot_dimension_numbers<[1], [0], [0], [1], [0, 0, 1, 1], [], []>} : vector<4x4xf32>, vector<4x8xf32>, vector<4x8xf32> -> vector<4x8xf32>
    %c1_351 = arith.constant 1 : index
    %c0_352 = arith.constant 0 : index
    %c16_353 = arith.constant 16 : index
    %599 = vector.load %arg24[%c1_351, %c0_352, %c16_353] : memref<2x4x32xf32, #tpu.memory_space<vmem>>, vector<1x4x8xf32>
    %600 = vector.shape_cast %599 : vector<1x4x8xf32> to vector<4x8xf32>
    %601 = vector.shape_cast %598 : vector<4x8xf32> to vector<1x4x8xf32>
    tpu.vector_store %arg24[%c1_351, %c0_352, %c16_353], %601 {strides = array<i32>} : memref<2x4x32xf32, #tpu.memory_space<vmem>>, vector<1x4x8xf32>,
    %602 = vector.extract_strided_slice %534 {offsets = [0, 24], sizes = [4, 8], strides = [1, 1]} : vector<4x32xf32> to vector<4x8xf32>
    %603 = vector.extract_strided_slice %536 {offsets = [0, 24], sizes = [4, 8], strides = [1, 1]} : vector<4x32xf32> to vector<4x8xf32>
    %604 = tpu.transpose %603, [1, 0] : vector<4x8xf32> -> vector<8x4xf32>
    %cst_354 = arith.constant dense<0.000000e+00> : vector<4x4xf32>
    %605 = tpu.matmul %602, %604, %cst_354 {dimension_numbers = #tpu.dot_dimension_numbers<[1], [0], [0], [1], [0, 0, 1, 1], [], []>} : vector<4x8xf32>, vector<8x4xf32>, vector<4x4xf32> -> vector<4x4xf32>
    %cst_355 = arith.constant 0.353553385 : f32
    %606 = vector.broadcast %cst_355 : f32 to vector<4x4xf32>
    %607 = arith.mulf %605, %606 : vector<4x4xf32>
    %cst_356 = arith.constant dense<0xFF800000> : vector<4xf32>
    %608 = vector.multi_reduction <maximumf>, %607, %cst_356 [1] : vector<4x4xf32> to vector<4xf32>
    %609 = vector.shape_cast %608 : vector<4xf32> to vector<4x1xf32>
    %610 = vector.broadcast %609 : vector<4x1xf32> to vector<4x4xf32>
    %611 = arith.subf %607, %610 : vector<4x4xf32>
    %612 = math.exp %611 : vector<4x4xf32>
    %cst_357 = arith.constant dense<0.000000e+00> : vector<4xf32>
    %613 = vector.multi_reduction <add>, %612, %cst_357 [1] : vector<4x4xf32> to vector<4xf32>
    %614 = vector.shape_cast %613 : vector<4xf32> to vector<4x1xf32>
    %615 = tpu.reciprocal %614 {approx = true} : vector<4x1xf32> -> vector<4x1xf32>
    %616 = vector.broadcast %615 : vector<4x1xf32> to vector<4x4xf32>
    %617 = arith.mulf %612, %616 : vector<4x4xf32>
    %618 = vector.extract_strided_slice %538 {offsets = [0, 24], sizes = [4, 8], strides = [1, 1]} : vector<4x32xf32> to vector<4x8xf32>
    %cst_358 = arith.constant dense<0.000000e+00> : vector<4x8xf32>
    %619 = tpu.matmul %617, %618, %cst_358 {dimension_numbers = #tpu.dot_dimension_numbers<[1], [0], [0], [1], [0, 0, 1, 1], [], []>} : vector<4x4xf32>, vector<4x8xf32>, vector<4x8xf32> -> vector<4x8xf32>
    %c1_359 = arith.constant 1 : index
    %c0_360 = arith.constant 0 : index
    %c24_361 = arith.constant 24 : index
    %620 = vector.load %arg24[%c1_359, %c0_360, %c24_361] : memref<2x4x32xf32, #tpu.memory_space<vmem>>, vector<1x4x8xf32>
    %621 = vector.shape_cast %620 : vector<1x4x8xf32> to vector<4x8xf32>
    %622 = vector.shape_cast %619 : vector<4x8xf32> to vector<1x4x8xf32>
    tpu.vector_store %arg24[%c1_359, %c0_360, %c24_361], %622 {strides = array<i32>} : memref<2x4x32xf32, #tpu.memory_space<vmem>>, vector<1x4x8xf32>,
    %c0_362 = arith.constant 0 : index
    %c0_363 = arith.constant 0 : index
    %c0_364 = arith.constant 0 : index
    %623 = vector.load %arg24[%c0_362, %c0_363, %c0_364] : memref<2x4x32xf32, #tpu.memory_space<vmem>>, vector<2x1x32xf32>
    %624 = vector.shape_cast %623 : vector<2x1x32xf32> to vector<2x32xf32>
    %c0_365 = arith.constant 0 : index
    %c0_366 = arith.constant 0 : index
    %625 = vector.load %arg25[%c0_365, %c0_366] : memref<2x128xf32, #tpu.memory_space<vmem>>, vector<2x32xf32>
    tpu.vector_store %arg25[%c0_365, %c0_366], %624 {strides = array<i32>} : memref<2x128xf32, #tpu.memory_space<vmem>>, vector<2x32xf32>,
    %c0_367 = arith.constant 0 : index
    %c1_368 = arith.constant 1 : index
    %c0_369 = arith.constant 0 : index
    %626 = vector.load %arg24[%c0_367, %c1_368, %c0_369] : memref<2x4x32xf32, #tpu.memory_space<vmem>>, vector<2x1x32xf32>
    %627 = vector.shape_cast %626 : vector<2x1x32xf32> to vector<2x32xf32>
    %c0_370 = arith.constant 0 : index
    %c32_371 = arith.constant 32 : index
    %628 = vector.load %arg25[%c0_370, %c32_371] : memref<2x128xf32, #tpu.memory_space<vmem>>, vector<2x32xf32>
    tpu.vector_store %arg25[%c0_370, %c32_371], %627 {strides = array<i32>} : memref<2x128xf32, #tpu.memory_space<vmem>>, vector<2x32xf32>,
    %c0_372 = arith.constant 0 : index
    %c2_373 = arith.constant 2 : index
    %c0_374 = arith.constant 0 : index
    %629 = vector.load %arg24[%c0_372, %c2_373, %c0_374] : memref<2x4x32xf32, #tpu.memory_space<vmem>>, vector<2x1x32xf32>
    %630 = vector.shape_cast %629 : vector<2x1x32xf32> to vector<2x32xf32>
    %c0_375 = arith.constant 0 : index
    %c64_376 = arith.constant 64 : index
    %631 = vector.load %arg25[%c0_375, %c64_376] : memref<2x128xf32, #tpu.memory_space<vmem>>, vector<2x32xf32>
    tpu.vector_store %arg25[%c0_375, %c64_376], %630 {strides = array<i32>} : memref<2x128xf32, #tpu.memory_space<vmem>>, vector<2x32xf32>,
    %c0_377 = arith.constant 0 : index
    %c3_378 = arith.constant 3 : index
    %c0_379 = arith.constant 0 : index
    %632 = vector.load %arg24[%c0_377, %c3_378, %c0_379] : memref<2x4x32xf32, #tpu.memory_space<vmem>>, vector<2x1x32xf32>
    %633 = vector.shape_cast %632 : vector<2x1x32xf32> to vector<2x32xf32>
    %c0_380 = arith.constant 0 : index
    %c96_381 = arith.constant 96 : index
    %634 = vector.load %arg25[%c0_380, %c96_381] : memref<2x128xf32, #tpu.memory_space<vmem>>, vector<2x32xf32>
    tpu.vector_store %arg25[%c0_380, %c96_381], %633 {strides = array<i32>} : memref<2x128xf32, #tpu.memory_space<vmem>>, vector<2x32xf32>,
    %c0_382 = arith.constant 0 : index
    %c0_383 = arith.constant 0 : index
    %635 = vector.load %arg25[%c0_382, %c0_383] : memref<2x128xf32, #tpu.memory_space<vmem>>, vector<2x128xf32>
    %c0_384 = arith.constant 0 : index
    %c0_385 = arith.constant 0 : index
    %636 = vector.load %arg9[%c0_384, %c0_385] : memref<128x128xf32, #tpu.memory_space<vmem>>, vector<128x128xf32>
    %cst_386 = arith.constant dense<0.000000e+00> : vector<2x128xf32>
    %637 = tpu.matmul %635, %636, %cst_386 {dimension_numbers = #tpu.dot_dimension_numbers<[1], [0], [0], [1], [0, 0, 1, 1], [], []>} : vector<2x128xf32>, vector<128x128xf32>, vector<2x128xf32> -> vector<2x128xf32>
    %638 = arith.addf %388, %637 : vector<2x128xf32>
    %c1_387 = arith.constant 1 : index
    %c0_388 = arith.constant 0 : index
    %c0_389 = arith.constant 0 : index
    %639 = vector.load %arg10[%c1_387, %c0_388, %c0_389] : memref<3x128x128xf32, #tpu.memory_space<vmem>>, vector<1x128x128xf32>
    %640 = vector.shape_cast %639 : vector<1x128x128xf32> to vector<128x128xf32>
    %cst_390 = arith.constant dense<0.000000e+00> : vector<2x128xf32>
    %641 = tpu.matmul %638, %640, %cst_390 {dimension_numbers = #tpu.dot_dimension_numbers<[1], [0], [0], [1], [0, 0, 1, 1], [], []>} : vector<2x128xf32>, vector<128x128xf32>, vector<2x128xf32> -> vector<2x128xf32>
    %c1_391 = arith.constant 1 : index
    %c0_392 = arith.constant 0 : index
    %c0_393 = arith.constant 0 : index
    %642 = vector.load %arg11[%c1_391, %c0_392, %c0_393] : memref<3x1x128xf32, #tpu.memory_space<vmem>>, vector<1x1x128xf32>
    %643 = vector.shape_cast %642 : vector<1x1x128xf32> to vector<1x128xf32>
    %644 = vector.broadcast %643 : vector<1x128xf32> to vector<2x128xf32>
    %645 = arith.addf %641, %644 : vector<2x128xf32>
    %cst_394 = arith.constant 0.000000e+00 : f32
    %646 = vector.broadcast %cst_394 : f32 to vector<2x128xf32>
    %647 = arith.maximumf %645, %646 : vector<2x128xf32>
    %c1_395 = arith.constant 1 : index
    %c0_396 = arith.constant 0 : index
    %c0_397 = arith.constant 0 : index
    %648 = vector.load %arg12[%c1_395, %c0_396, %c0_397] : memref<3x128x20xf32, #tpu.memory_space<vmem>>, vector<1x128x20xf32>
    %649 = vector.shape_cast %648 : vector<1x128x20xf32> to vector<128x20xf32>
    %cst_398 = arith.constant dense<0.000000e+00> : vector<2x20xf32>
    %650 = tpu.matmul %647, %649, %cst_398 {dimension_numbers = #tpu.dot_dimension_numbers<[1], [0], [0], [1], [0, 0, 1, 1], [], []>} : vector<2x128xf32>, vector<128x20xf32>, vector<2x20xf32> -> vector<2x20xf32>
    %c1_399 = arith.constant 1 : index
    %c0_400 = arith.constant 0 : index
    %c0_401 = arith.constant 0 : index
    %651 = vector.load %arg13[%c1_399, %c0_400, %c0_401] : memref<3x1x20xf32, #tpu.memory_space<vmem>>, vector<1x1x20xf32>
    %652 = vector.shape_cast %651 : vector<1x1x20xf32> to vector<1x20xf32>
    %653 = vector.broadcast %652 : vector<1x20xf32> to vector<2x20xf32>
    %654 = arith.addf %650, %653 : vector<2x20xf32>
    %c1_402 = arith.constant 1 : index
    %c0_403 = arith.constant 0 : index
    %c0_404 = arith.constant 0 : index
    %655 = vector.load %arg14[%c1_402, %c0_403, %c0_404] : memref<3x128x128xf32, #tpu.memory_space<vmem>>, vector<1x128x128xf32>
    %656 = vector.shape_cast %655 : vector<1x128x128xf32> to vector<128x128xf32>
    %cst_405 = arith.constant dense<0.000000e+00> : vector<2x128xf32>
    %657 = tpu.matmul %638, %656, %cst_405 {dimension_numbers = #tpu.dot_dimension_numbers<[1], [0], [0], [1], [0, 0, 1, 1], [], []>} : vector<2x128xf32>, vector<128x128xf32>, vector<2x128xf32> -> vector<2x128xf32>
    %c1_406 = arith.constant 1 : index
    %c0_407 = arith.constant 0 : index
    %c0_408 = arith.constant 0 : index
    %658 = vector.load %arg15[%c1_406, %c0_407, %c0_408] : memref<3x1x128xf32, #tpu.memory_space<vmem>>, vector<1x1x128xf32>
    %659 = vector.shape_cast %658 : vector<1x1x128xf32> to vector<1x128xf32>
    %660 = vector.broadcast %659 : vector<1x128xf32> to vector<2x128xf32>
    %661 = arith.addf %657, %660 : vector<2x128xf32>
    %cst_409 = arith.constant 0.000000e+00 : f32
    %662 = vector.broadcast %cst_409 : f32 to vector<2x128xf32>
    %663 = arith.maximumf %661, %662 : vector<2x128xf32>
    %c1_410 = arith.constant 1 : index
    %c0_411 = arith.constant 0 : index
    %c0_412 = arith.constant 0 : index
    %664 = vector.load %arg16[%c1_410, %c0_411, %c0_412] : memref<3x128x20xf32, #tpu.memory_space<vmem>>, vector<1x128x20xf32>
    %665 = vector.shape_cast %664 : vector<1x128x20xf32> to vector<128x20xf32>
    %cst_413 = arith.constant dense<0.000000e+00> : vector<2x20xf32>
    %666 = tpu.matmul %663, %665, %cst_413 {dimension_numbers = #tpu.dot_dimension_numbers<[1], [0], [0], [1], [0, 0, 1, 1], [], []>} : vector<2x128xf32>, vector<128x20xf32>, vector<2x20xf32> -> vector<2x20xf32>
    %c1_414 = arith.constant 1 : index
    %c0_415 = arith.constant 0 : index
    %c0_416 = arith.constant 0 : index
    %667 = vector.load %arg17[%c1_414, %c0_415, %c0_416] : memref<3x1x20xf32, #tpu.memory_space<vmem>>, vector<1x1x20xf32>
    %668 = vector.shape_cast %667 : vector<1x1x20xf32> to vector<1x20xf32>
    %669 = vector.broadcast %668 : vector<1x20xf32> to vector<2x20xf32>
    %670 = arith.addf %666, %669 : vector<2x20xf32>
    %c1_417 = arith.constant 1 : index
    %c0_418 = arith.constant 0 : index
    %c0_419 = arith.constant 0 : index
    %671 = vector.load %arg18[%c1_417, %c0_418, %c0_419] : memref<3x2x20xf32, #tpu.memory_space<vmem>>, vector<1x2x20xf32>
    %672 = vector.shape_cast %671 : vector<1x2x20xf32> to vector<2x20xf32>
    %cst_420 = arith.constant 5.000000e-01 : f32
    %673 = vector.broadcast %cst_420 : f32 to vector<2x20xf32>
    %674 = arith.mulf %673, %670 : vector<2x20xf32>
    %675 = math.exp %674 : vector<2x20xf32>
    %676 = arith.mulf %672, %675 : vector<2x20xf32>
    %677 = arith.addf %654, %676 : vector<2x20xf32>
    %cst_421 = arith.constant -5.000000e-01 : f32
    %678 = vector.broadcast %cst_421 : f32 to vector<2x20xf32>
    %679 = arith.mulf %678, %670 : vector<2x20xf32>
    %cst_422 = arith.constant 5.000000e-01 : f32
    %680 = vector.broadcast %cst_422 : f32 to vector<2x20xf32>
    %681 = arith.mulf %680, %672 : vector<2x20xf32>
    %682 = arith.mulf %681, %672 : vector<2x20xf32>
    %683 = arith.subf %679, %682 : vector<2x20xf32>
    %684 = arith.addf %316, %683 : vector<2x20xf32>
    %cst_423 = arith.constant 0.000000e+00 : f32
    %685 = vector.broadcast %cst_423 : f32 to vector<2x20xf32>
    %686 = arith.subf %685, %677 : vector<2x20xf32>
    %687 = math.exp %686 : vector<2x20xf32>
    %cst_424 = arith.constant 1.000000e+00 : f32
    %688 = vector.broadcast %cst_424 : f32 to vector<2x20xf32>
    %689 = arith.addf %688, %687 : vector<2x20xf32>
    %cst_425 = arith.constant 1.000000e+00 : f32
    %690 = vector.broadcast %cst_425 : f32 to vector<2x20xf32>
    %691 = arith.divf %690, %689 : vector<2x20xf32>
    %c1_426 = arith.constant 1 : index
    %c0_427 = arith.constant 0 : index
    %c0_428 = arith.constant 0 : index
    %692 = vector.load %arg19[%c1_426, %c0_427, %c0_428] : memref<3x2x20xf32, #tpu.memory_space<vmem>>, vector<1x2x20xf32>
    %693 = vector.shape_cast %692 : vector<1x2x20xf32> to vector<2x20xf32>
    %694 = vector.shape_cast %691 : vector<2x20xf32> to vector<1x2x20xf32>
    tpu.vector_store %arg19[%c1_426, %c0_427, %c0_428], %694 {strides = array<i32>} : memref<3x2x20xf32, #tpu.memory_space<vmem>>, vector<1x2x20xf32>,
    %c2_429 = arith.constant 2 : index
    %c0_430 = arith.constant 0 : index
    %c0_431 = arith.constant 0 : index
    %695 = vector.load %arg2[%c2_429, %c0_430, %c0_431] : memref<3x128x128xf32, #tpu.memory_space<vmem>>, vector<1x128x128xf32>
    %696 = vector.shape_cast %695 : vector<1x128x128xf32> to vector<128x128xf32>
    %cst_432 = arith.constant dense<0.000000e+00> : vector<2x128xf32>
    %697 = tpu.matmul %0, %696, %cst_432 {dimension_numbers = #tpu.dot_dimension_numbers<[1], [0], [0], [1], [0, 0, 1, 1], [], []>} : vector<2x128xf32>, vector<128x128xf32>, vector<2x128xf32> -> vector<2x128xf32>
    %c2_433 = arith.constant 2 : index
    %c0_434 = arith.constant 0 : index
    %c0_435 = arith.constant 0 : index
    %698 = vector.load %arg3[%c2_433, %c0_434, %c0_435] : memref<3x1x128xf32, #tpu.memory_space<vmem>>, vector<1x1x128xf32>
    %699 = vector.shape_cast %698 : vector<1x1x128xf32> to vector<1x128xf32>
    %700 = vector.broadcast %699 : vector<1x128xf32> to vector<2x128xf32>
    %701 = arith.addf %697, %700 : vector<2x128xf32>
    %cst_436 = arith.constant 0.000000e+00 : f32
    %702 = vector.broadcast %cst_436 : f32 to vector<2x128xf32>
    %703 = arith.maximumf %701, %702 : vector<2x128xf32>
    %c2_437 = arith.constant 2 : index
    %c0_438 = arith.constant 0 : index
    %c0_439 = arith.constant 0 : index
    %704 = vector.load %arg4[%c2_437, %c0_438, %c0_439] : memref<3x128x128xf32, #tpu.memory_space<vmem>>, vector<1x128x128xf32>
    %705 = vector.shape_cast %704 : vector<1x128x128xf32> to vector<128x128xf32>
    %cst_440 = arith.constant dense<0.000000e+00> : vector<2x128xf32>
    %706 = tpu.matmul %703, %705, %cst_440 {dimension_numbers = #tpu.dot_dimension_numbers<[1], [0], [0], [1], [0, 0, 1, 1], [], []>} : vector<2x128xf32>, vector<128x128xf32>, vector<2x128xf32> -> vector<2x128xf32>
    %c2_441 = arith.constant 2 : index
    %c0_442 = arith.constant 0 : index
    %c0_443 = arith.constant 0 : index
    %707 = vector.load %arg5[%c2_441, %c0_442, %c0_443] : memref<3x1x128xf32, #tpu.memory_space<vmem>>, vector<1x1x128xf32>
    %708 = vector.shape_cast %707 : vector<1x1x128xf32> to vector<1x128xf32>
    %709 = vector.broadcast %708 : vector<1x128xf32> to vector<2x128xf32>
    %710 = arith.addf %706, %709 : vector<2x128xf32>
    %c2_444 = arith.constant 2 : index
    %c0_445 = arith.constant 0 : index
    %c0_446 = arith.constant 0 : index
    %711 = vector.load %arg1[%c2_444, %c0_445, %c0_446] : memref<3x128x128xf32, #tpu.memory_space<vmem>>, vector<1x128x128xf32>
    %712 = vector.shape_cast %711 : vector<1x128x128xf32> to vector<128x128xf32>
    %cst_447 = arith.constant dense<0.000000e+00> : vector<2x128xf32>
    %713 = tpu.matmul %710, %712, %cst_447 {dimension_numbers = #tpu.dot_dimension_numbers<[1], [0], [0], [1], [0, 0, 1, 1], [], []>} : vector<2x128xf32>, vector<128x128xf32>, vector<2x128xf32> -> vector<2x128xf32>
    %c0_448 = arith.constant 0 : index
    %c0_449 = arith.constant 0 : index
    %714 = vector.load %arg6[%c0_448, %c0_449] : memref<128x128xf32, #tpu.memory_space<vmem>>, vector<128x128xf32>
    %cst_450 = arith.constant dense<0.000000e+00> : vector<2x128xf32>
    %715 = tpu.matmul %713, %714, %cst_450 {dimension_numbers = #tpu.dot_dimension_numbers<[1], [0], [0], [1], [0, 0, 1, 1], [], []>} : vector<2x128xf32>, vector<128x128xf32>, vector<2x128xf32> -> vector<2x128xf32>
    %c0_451 = arith.constant 0 : index
    %c0_452 = arith.constant 0 : index
    %716 = vector.load %arg7[%c0_451, %c0_452] : memref<128x128xf32, #tpu.memory_space<vmem>>, vector<128x128xf32>
    %cst_453 = arith.constant dense<0.000000e+00> : vector<2x128xf32>
    %717 = tpu.matmul %713, %716, %cst_453 {dimension_numbers = #tpu.dot_dimension_numbers<[1], [0], [0], [1], [0, 0, 1, 1], [], []>} : vector<2x128xf32>, vector<128x128xf32>, vector<2x128xf32> -> vector<2x128xf32>
    %c0_454 = arith.constant 0 : index
    %c0_455 = arith.constant 0 : index
    %718 = vector.load %arg8[%c0_454, %c0_455] : memref<128x128xf32, #tpu.memory_space<vmem>>, vector<128x128xf32>
    %cst_456 = arith.constant dense<0.000000e+00> : vector<2x128xf32>
    %719 = tpu.matmul %713, %718, %cst_456 {dimension_numbers = #tpu.dot_dimension_numbers<[1], [0], [0], [1], [0, 0, 1, 1], [], []>} : vector<2x128xf32>, vector<128x128xf32>, vector<2x128xf32> -> vector<2x128xf32>
    %720 = vector.extract_strided_slice %715 {offsets = [0, 0], sizes = [2, 32], strides = [1, 1]} : vector<2x128xf32> to vector<2x32xf32>
    %c0_457 = arith.constant 0 : index
    %c0_458 = arith.constant 0 : index
    %c0_459 = arith.constant 0 : index
    %721 = vector.load %arg21[%c0_457, %c0_458, %c0_459] : memref<2x4x32xf32, #tpu.memory_space<vmem>>, vector<2x1x32xf32>
    %722 = vector.shape_cast %721 : vector<2x1x32xf32> to vector<2x32xf32>
    %723 = vector.shape_cast %720 : vector<2x32xf32> to vector<2x1x32xf32>
    tpu.vector_store %arg21[%c0_457, %c0_458, %c0_459], %723 {strides = array<i32>} : memref<2x4x32xf32, #tpu.memory_space<vmem>>, vector<2x1x32xf32>,
    %724 = vector.extract_strided_slice %717 {offsets = [0, 0], sizes = [2, 32], strides = [1, 1]} : vector<2x128xf32> to vector<2x32xf32>
    %c0_460 = arith.constant 0 : index
    %c0_461 = arith.constant 0 : index
    %c0_462 = arith.constant 0 : index
    %725 = vector.load %arg22[%c0_460, %c0_461, %c0_462] : memref<2x4x32xf32, #tpu.memory_space<vmem>>, vector<2x1x32xf32>
    %726 = vector.shape_cast %725 : vector<2x1x32xf32> to vector<2x32xf32>
    %727 = vector.shape_cast %724 : vector<2x32xf32> to vector<2x1x32xf32>
    tpu.vector_store %arg22[%c0_460, %c0_461, %c0_462], %727 {strides = array<i32>} : memref<2x4x32xf32, #tpu.memory_space<vmem>>, vector<2x1x32xf32>,
    %728 = vector.extract_strided_slice %719 {offsets = [0, 0], sizes = [2, 32], strides = [1, 1]} : vector<2x128xf32> to vector<2x32xf32>
    %c0_463 = arith.constant 0 : index
    %c0_464 = arith.constant 0 : index
    %c0_465 = arith.constant 0 : index
    %729 = vector.load %arg23[%c0_463, %c0_464, %c0_465] : memref<2x4x32xf32, #tpu.memory_space<vmem>>, vector<2x1x32xf32>
    %730 = vector.shape_cast %729 : vector<2x1x32xf32> to vector<2x32xf32>
    %731 = vector.shape_cast %728 : vector<2x32xf32> to vector<2x1x32xf32>
    tpu.vector_store %arg23[%c0_463, %c0_464, %c0_465], %731 {strides = array<i32>} : memref<2x4x32xf32, #tpu.memory_space<vmem>>, vector<2x1x32xf32>,
    %732 = vector.extract_strided_slice %715 {offsets = [0, 32], sizes = [2, 32], strides = [1, 1]} : vector<2x128xf32> to vector<2x32xf32>
    %c0_466 = arith.constant 0 : index
    %c1_467 = arith.constant 1 : index
    %c0_468 = arith.constant 0 : index
    %733 = vector.load %arg21[%c0_466, %c1_467, %c0_468] : memref<2x4x32xf32, #tpu.memory_space<vmem>>, vector<2x1x32xf32>
    %734 = vector.shape_cast %733 : vector<2x1x32xf32> to vector<2x32xf32>
    %735 = vector.shape_cast %732 : vector<2x32xf32> to vector<2x1x32xf32>
    tpu.vector_store %arg21[%c0_466, %c1_467, %c0_468], %735 {strides = array<i32>} : memref<2x4x32xf32, #tpu.memory_space<vmem>>, vector<2x1x32xf32>,
    %736 = vector.extract_strided_slice %717 {offsets = [0, 32], sizes = [2, 32], strides = [1, 1]} : vector<2x128xf32> to vector<2x32xf32>
    %c0_469 = arith.constant 0 : index
    %c1_470 = arith.constant 1 : index
    %c0_471 = arith.constant 0 : index
    %737 = vector.load %arg22[%c0_469, %c1_470, %c0_471] : memref<2x4x32xf32, #tpu.memory_space<vmem>>, vector<2x1x32xf32>
    %738 = vector.shape_cast %737 : vector<2x1x32xf32> to vector<2x32xf32>
    %739 = vector.shape_cast %736 : vector<2x32xf32> to vector<2x1x32xf32>
    tpu.vector_store %arg22[%c0_469, %c1_470, %c0_471], %739 {strides = array<i32>} : memref<2x4x32xf32, #tpu.memory_space<vmem>>, vector<2x1x32xf32>,
    %740 = vector.extract_strided_slice %719 {offsets = [0, 32], sizes = [2, 32], strides = [1, 1]} : vector<2x128xf32> to vector<2x32xf32>
    %c0_472 = arith.constant 0 : index
    %c1_473 = arith.constant 1 : index
    %c0_474 = arith.constant 0 : index
    %741 = vector.load %arg23[%c0_472, %c1_473, %c0_474] : memref<2x4x32xf32, #tpu.memory_space<vmem>>, vector<2x1x32xf32>
    %742 = vector.shape_cast %741 : vector<2x1x32xf32> to vector<2x32xf32>
    %743 = vector.shape_cast %740 : vector<2x32xf32> to vector<2x1x32xf32>
    tpu.vector_store %arg23[%c0_472, %c1_473, %c0_474], %743 {strides = array<i32>} : memref<2x4x32xf32, #tpu.memory_space<vmem>>, vector<2x1x32xf32>,
    %744 = vector.extract_strided_slice %715 {offsets = [0, 64], sizes = [2, 32], strides = [1, 1]} : vector<2x128xf32> to vector<2x32xf32>
    %c0_475 = arith.constant 0 : index
    %c2_476 = arith.constant 2 : index
    %c0_477 = arith.constant 0 : index
    %745 = vector.load %arg21[%c0_475, %c2_476, %c0_477] : memref<2x4x32xf32, #tpu.memory_space<vmem>>, vector<2x1x32xf32>
    %746 = vector.shape_cast %745 : vector<2x1x32xf32> to vector<2x32xf32>
    %747 = vector.shape_cast %744 : vector<2x32xf32> to vector<2x1x32xf32>
    tpu.vector_store %arg21[%c0_475, %c2_476, %c0_477], %747 {strides = array<i32>} : memref<2x4x32xf32, #tpu.memory_space<vmem>>, vector<2x1x32xf32>,
    %748 = vector.extract_strided_slice %717 {offsets = [0, 64], sizes = [2, 32], strides = [1, 1]} : vector<2x128xf32> to vector<2x32xf32>
    %c0_478 = arith.constant 0 : index
    %c2_479 = arith.constant 2 : index
    %c0_480 = arith.constant 0 : index
    %749 = vector.load %arg22[%c0_478, %c2_479, %c0_480] : memref<2x4x32xf32, #tpu.memory_space<vmem>>, vector<2x1x32xf32>
    %750 = vector.shape_cast %749 : vector<2x1x32xf32> to vector<2x32xf32>
    %751 = vector.shape_cast %748 : vector<2x32xf32> to vector<2x1x32xf32>
    tpu.vector_store %arg22[%c0_478, %c2_479, %c0_480], %751 {strides = array<i32>} : memref<2x4x32xf32, #tpu.memory_space<vmem>>, vector<2x1x32xf32>,
    %752 = vector.extract_strided_slice %719 {offsets = [0, 64], sizes = [2, 32], strides = [1, 1]} : vector<2x128xf32> to vector<2x32xf32>
    %c0_481 = arith.constant 0 : index
    %c2_482 = arith.constant 2 : index
    %c0_483 = arith.constant 0 : index
    %753 = vector.load %arg23[%c0_481, %c2_482, %c0_483] : memref<2x4x32xf32, #tpu.memory_space<vmem>>, vector<2x1x32xf32>
    %754 = vector.shape_cast %753 : vector<2x1x32xf32> to vector<2x32xf32>
    %755 = vector.shape_cast %752 : vector<2x32xf32> to vector<2x1x32xf32>
    tpu.vector_store %arg23[%c0_481, %c2_482, %c0_483], %755 {strides = array<i32>} : memref<2x4x32xf32, #tpu.memory_space<vmem>>, vector<2x1x32xf32>,
    %756 = vector.extract_strided_slice %715 {offsets = [0, 96], sizes = [2, 32], strides = [1, 1]} : vector<2x128xf32> to vector<2x32xf32>
    %c0_484 = arith.constant 0 : index
    %c3_485 = arith.constant 3 : index
    %c0_486 = arith.constant 0 : index
    %757 = vector.load %arg21[%c0_484, %c3_485, %c0_486] : memref<2x4x32xf32, #tpu.memory_space<vmem>>, vector<2x1x32xf32>
    %758 = vector.shape_cast %757 : vector<2x1x32xf32> to vector<2x32xf32>
    %759 = vector.shape_cast %756 : vector<2x32xf32> to vector<2x1x32xf32>
    tpu.vector_store %arg21[%c0_484, %c3_485, %c0_486], %759 {strides = array<i32>} : memref<2x4x32xf32, #tpu.memory_space<vmem>>, vector<2x1x32xf32>,
    %760 = vector.extract_strided_slice %717 {offsets = [0, 96], sizes = [2, 32], strides = [1, 1]} : vector<2x128xf32> to vector<2x32xf32>
    %c0_487 = arith.constant 0 : index
    %c3_488 = arith.constant 3 : index
    %c0_489 = arith.constant 0 : index
    %761 = vector.load %arg22[%c0_487, %c3_488, %c0_489] : memref<2x4x32xf32, #tpu.memory_space<vmem>>, vector<2x1x32xf32>
    %762 = vector.shape_cast %761 : vector<2x1x32xf32> to vector<2x32xf32>
    %763 = vector.shape_cast %760 : vector<2x32xf32> to vector<2x1x32xf32>
    tpu.vector_store %arg22[%c0_487, %c3_488, %c0_489], %763 {strides = array<i32>} : memref<2x4x32xf32, #tpu.memory_space<vmem>>, vector<2x1x32xf32>,
    %764 = vector.extract_strided_slice %719 {offsets = [0, 96], sizes = [2, 32], strides = [1, 1]} : vector<2x128xf32> to vector<2x32xf32>
    %c0_490 = arith.constant 0 : index
    %c3_491 = arith.constant 3 : index
    %c0_492 = arith.constant 0 : index
    %765 = vector.load %arg23[%c0_490, %c3_491, %c0_492] : memref<2x4x32xf32, #tpu.memory_space<vmem>>, vector<2x1x32xf32>
    %766 = vector.shape_cast %765 : vector<2x1x32xf32> to vector<2x32xf32>
    %767 = vector.shape_cast %764 : vector<2x32xf32> to vector<2x1x32xf32>
    tpu.vector_store %arg23[%c0_490, %c3_491, %c0_492], %767 {strides = array<i32>} : memref<2x4x32xf32, #tpu.memory_space<vmem>>, vector<2x1x32xf32>,
    %c0_493 = arith.constant 0 : index
    %c0_494 = arith.constant 0 : index
    %c0_495 = arith.constant 0 : index
    %768 = vector.load %arg21[%c0_493, %c0_494, %c0_495] : memref<2x4x32xf32, #tpu.memory_space<vmem>>, vector<1x4x32xf32>
    %769 = vector.shape_cast %768 : vector<1x4x32xf32> to vector<4x32xf32>
    %c0_496 = arith.constant 0 : index
    %c0_497 = arith.constant 0 : index
    %c0_498 = arith.constant 0 : index
    %770 = vector.load %arg22[%c0_496, %c0_497, %c0_498] : memref<2x4x32xf32, #tpu.memory_space<vmem>>, vector<1x4x32xf32>
    %771 = vector.shape_cast %770 : vector<1x4x32xf32> to vector<4x32xf32>
    %c0_499 = arith.constant 0 : index
    %c0_500 = arith.constant 0 : index
    %c0_501 = arith.constant 0 : index
    %772 = vector.load %arg23[%c0_499, %c0_500, %c0_501] : memref<2x4x32xf32, #tpu.memory_space<vmem>>, vector<1x4x32xf32>
    %773 = vector.shape_cast %772 : vector<1x4x32xf32> to vector<4x32xf32>
    %774 = vector.extract_strided_slice %769 {offsets = [0, 0], sizes = [4, 8], strides = [1, 1]} : vector<4x32xf32> to vector<4x8xf32>
    %775 = vector.extract_strided_slice %771 {offsets = [0, 0], sizes = [4, 8], strides = [1, 1]} : vector<4x32xf32> to vector<4x8xf32>
    %776 = tpu.transpose %775, [1, 0] : vector<4x8xf32> -> vector<8x4xf32>
    %cst_502 = arith.constant dense<0.000000e+00> : vector<4x4xf32>
    %777 = tpu.matmul %774, %776, %cst_502 {dimension_numbers = #tpu.dot_dimension_numbers<[1], [0], [0], [1], [0, 0, 1, 1], [], []>} : vector<4x8xf32>, vector<8x4xf32>, vector<4x4xf32> -> vector<4x4xf32>
    %cst_503 = arith.constant 0.353553385 : f32
    %778 = vector.broadcast %cst_503 : f32 to vector<4x4xf32>
    %779 = arith.mulf %777, %778 : vector<4x4xf32>
    %cst_504 = arith.constant dense<0xFF800000> : vector<4xf32>
    %780 = vector.multi_reduction <maximumf>, %779, %cst_504 [1] : vector<4x4xf32> to vector<4xf32>
    %781 = vector.shape_cast %780 : vector<4xf32> to vector<4x1xf32>
    %782 = vector.broadcast %781 : vector<4x1xf32> to vector<4x4xf32>
    %783 = arith.subf %779, %782 : vector<4x4xf32>
    %784 = math.exp %783 : vector<4x4xf32>
    %cst_505 = arith.constant dense<0.000000e+00> : vector<4xf32>
    %785 = vector.multi_reduction <add>, %784, %cst_505 [1] : vector<4x4xf32> to vector<4xf32>
    %786 = vector.shape_cast %785 : vector<4xf32> to vector<4x1xf32>
    %787 = tpu.reciprocal %786 {approx = true} : vector<4x1xf32> -> vector<4x1xf32>
    %788 = vector.broadcast %787 : vector<4x1xf32> to vector<4x4xf32>
    %789 = arith.mulf %784, %788 : vector<4x4xf32>
    %790 = vector.extract_strided_slice %773 {offsets = [0, 0], sizes = [4, 8], strides = [1, 1]} : vector<4x32xf32> to vector<4x8xf32>
    %cst_506 = arith.constant dense<0.000000e+00> : vector<4x8xf32>
    %791 = tpu.matmul %789, %790, %cst_506 {dimension_numbers = #tpu.dot_dimension_numbers<[1], [0], [0], [1], [0, 0, 1, 1], [], []>} : vector<4x4xf32>, vector<4x8xf32>, vector<4x8xf32> -> vector<4x8xf32>
    %c0_507 = arith.constant 0 : index
    %c0_508 = arith.constant 0 : index
    %c0_509 = arith.constant 0 : index
    %792 = vector.load %arg24[%c0_507, %c0_508, %c0_509] : memref<2x4x32xf32, #tpu.memory_space<vmem>>, vector<1x4x8xf32>
    %793 = vector.shape_cast %792 : vector<1x4x8xf32> to vector<4x8xf32>
    %794 = vector.shape_cast %791 : vector<4x8xf32> to vector<1x4x8xf32>
    tpu.vector_store %arg24[%c0_507, %c0_508, %c0_509], %794 {strides = array<i32>} : memref<2x4x32xf32, #tpu.memory_space<vmem>>, vector<1x4x8xf32>,
    %795 = vector.extract_strided_slice %769 {offsets = [0, 8], sizes = [4, 8], strides = [1, 1]} : vector<4x32xf32> to vector<4x8xf32>
    %796 = vector.extract_strided_slice %771 {offsets = [0, 8], sizes = [4, 8], strides = [1, 1]} : vector<4x32xf32> to vector<4x8xf32>
    %797 = tpu.transpose %796, [1, 0] : vector<4x8xf32> -> vector<8x4xf32>
    %cst_510 = arith.constant dense<0.000000e+00> : vector<4x4xf32>
    %798 = tpu.matmul %795, %797, %cst_510 {dimension_numbers = #tpu.dot_dimension_numbers<[1], [0], [0], [1], [0, 0, 1, 1], [], []>} : vector<4x8xf32>, vector<8x4xf32>, vector<4x4xf32> -> vector<4x4xf32>
    %cst_511 = arith.constant 0.353553385 : f32
    %799 = vector.broadcast %cst_511 : f32 to vector<4x4xf32>
    %800 = arith.mulf %798, %799 : vector<4x4xf32>
    %cst_512 = arith.constant dense<0xFF800000> : vector<4xf32>
    %801 = vector.multi_reduction <maximumf>, %800, %cst_512 [1] : vector<4x4xf32> to vector<4xf32>
    %802 = vector.shape_cast %801 : vector<4xf32> to vector<4x1xf32>
    %803 = vector.broadcast %802 : vector<4x1xf32> to vector<4x4xf32>
    %804 = arith.subf %800, %803 : vector<4x4xf32>
    %805 = math.exp %804 : vector<4x4xf32>
    %cst_513 = arith.constant dense<0.000000e+00> : vector<4xf32>
    %806 = vector.multi_reduction <add>, %805, %cst_513 [1] : vector<4x4xf32> to vector<4xf32>
    %807 = vector.shape_cast %806 : vector<4xf32> to vector<4x1xf32>
    %808 = tpu.reciprocal %807 {approx = true} : vector<4x1xf32> -> vector<4x1xf32>
    %809 = vector.broadcast %808 : vector<4x1xf32> to vector<4x4xf32>
    %810 = arith.mulf %805, %809 : vector<4x4xf32>
    %811 = vector.extract_strided_slice %773 {offsets = [0, 8], sizes = [4, 8], strides = [1, 1]} : vector<4x32xf32> to vector<4x8xf32>
    %cst_514 = arith.constant dense<0.000000e+00> : vector<4x8xf32>
    %812 = tpu.matmul %810, %811, %cst_514 {dimension_numbers = #tpu.dot_dimension_numbers<[1], [0], [0], [1], [0, 0, 1, 1], [], []>} : vector<4x4xf32>, vector<4x8xf32>, vector<4x8xf32> -> vector<4x8xf32>
    %c0_515 = arith.constant 0 : index
    %c0_516 = arith.constant 0 : index
    %c8_517 = arith.constant 8 : index
    %813 = vector.load %arg24[%c0_515, %c0_516, %c8_517] : memref<2x4x32xf32, #tpu.memory_space<vmem>>, vector<1x4x8xf32>
    %814 = vector.shape_cast %813 : vector<1x4x8xf32> to vector<4x8xf32>
    %815 = vector.shape_cast %812 : vector<4x8xf32> to vector<1x4x8xf32>
    tpu.vector_store %arg24[%c0_515, %c0_516, %c8_517], %815 {strides = array<i32>} : memref<2x4x32xf32, #tpu.memory_space<vmem>>, vector<1x4x8xf32>,
    %816 = vector.extract_strided_slice %769 {offsets = [0, 16], sizes = [4, 8], strides = [1, 1]} : vector<4x32xf32> to vector<4x8xf32>
    %817 = vector.extract_strided_slice %771 {offsets = [0, 16], sizes = [4, 8], strides = [1, 1]} : vector<4x32xf32> to vector<4x8xf32>
    %818 = tpu.transpose %817, [1, 0] : vector<4x8xf32> -> vector<8x4xf32>
    %cst_518 = arith.constant dense<0.000000e+00> : vector<4x4xf32>
    %819 = tpu.matmul %816, %818, %cst_518 {dimension_numbers = #tpu.dot_dimension_numbers<[1], [0], [0], [1], [0, 0, 1, 1], [], []>} : vector<4x8xf32>, vector<8x4xf32>, vector<4x4xf32> -> vector<4x4xf32>
    %cst_519 = arith.constant 0.353553385 : f32
    %820 = vector.broadcast %cst_519 : f32 to vector<4x4xf32>
    %821 = arith.mulf %819, %820 : vector<4x4xf32>
    %cst_520 = arith.constant dense<0xFF800000> : vector<4xf32>
    %822 = vector.multi_reduction <maximumf>, %821, %cst_520 [1] : vector<4x4xf32> to vector<4xf32>
    %823 = vector.shape_cast %822 : vector<4xf32> to vector<4x1xf32>
    %824 = vector.broadcast %823 : vector<4x1xf32> to vector<4x4xf32>
    %825 = arith.subf %821, %824 : vector<4x4xf32>
    %826 = math.exp %825 : vector<4x4xf32>
    %cst_521 = arith.constant dense<0.000000e+00> : vector<4xf32>
    %827 = vector.multi_reduction <add>, %826, %cst_521 [1] : vector<4x4xf32> to vector<4xf32>
    %828 = vector.shape_cast %827 : vector<4xf32> to vector<4x1xf32>
    %829 = tpu.reciprocal %828 {approx = true} : vector<4x1xf32> -> vector<4x1xf32>
    %830 = vector.broadcast %829 : vector<4x1xf32> to vector<4x4xf32>
    %831 = arith.mulf %826, %830 : vector<4x4xf32>
    %832 = vector.extract_strided_slice %773 {offsets = [0, 16], sizes = [4, 8], strides = [1, 1]} : vector<4x32xf32> to vector<4x8xf32>
    %cst_522 = arith.constant dense<0.000000e+00> : vector<4x8xf32>
    %833 = tpu.matmul %831, %832, %cst_522 {dimension_numbers = #tpu.dot_dimension_numbers<[1], [0], [0], [1], [0, 0, 1, 1], [], []>} : vector<4x4xf32>, vector<4x8xf32>, vector<4x8xf32> -> vector<4x8xf32>
    %c0_523 = arith.constant 0 : index
    %c0_524 = arith.constant 0 : index
    %c16_525 = arith.constant 16 : index
    %834 = vector.load %arg24[%c0_523, %c0_524, %c16_525] : memref<2x4x32xf32, #tpu.memory_space<vmem>>, vector<1x4x8xf32>
    %835 = vector.shape_cast %834 : vector<1x4x8xf32> to vector<4x8xf32>
    %836 = vector.shape_cast %833 : vector<4x8xf32> to vector<1x4x8xf32>
    tpu.vector_store %arg24[%c0_523, %c0_524, %c16_525], %836 {strides = array<i32>} : memref<2x4x32xf32, #tpu.memory_space<vmem>>, vector<1x4x8xf32>,
    %837 = vector.extract_strided_slice %769 {offsets = [0, 24], sizes = [4, 8], strides = [1, 1]} : vector<4x32xf32> to vector<4x8xf32>
    %838 = vector.extract_strided_slice %771 {offsets = [0, 24], sizes = [4, 8], strides = [1, 1]} : vector<4x32xf32> to vector<4x8xf32>
    %839 = tpu.transpose %838, [1, 0] : vector<4x8xf32> -> vector<8x4xf32>
    %cst_526 = arith.constant dense<0.000000e+00> : vector<4x4xf32>
    %840 = tpu.matmul %837, %839, %cst_526 {dimension_numbers = #tpu.dot_dimension_numbers<[1], [0], [0], [1], [0, 0, 1, 1], [], []>} : vector<4x8xf32>, vector<8x4xf32>, vector<4x4xf32> -> vector<4x4xf32>
    %cst_527 = arith.constant 0.353553385 : f32
    %841 = vector.broadcast %cst_527 : f32 to vector<4x4xf32>
    %842 = arith.mulf %840, %841 : vector<4x4xf32>
    %cst_528 = arith.constant dense<0xFF800000> : vector<4xf32>
    %843 = vector.multi_reduction <maximumf>, %842, %cst_528 [1] : vector<4x4xf32> to vector<4xf32>
    %844 = vector.shape_cast %843 : vector<4xf32> to vector<4x1xf32>
    %845 = vector.broadcast %844 : vector<4x1xf32> to vector<4x4xf32>
    %846 = arith.subf %842, %845 : vector<4x4xf32>
    %847 = math.exp %846 : vector<4x4xf32>
    %cst_529 = arith.constant dense<0.000000e+00> : vector<4xf32>
    %848 = vector.multi_reduction <add>, %847, %cst_529 [1] : vector<4x4xf32> to vector<4xf32>
    %849 = vector.shape_cast %848 : vector<4xf32> to vector<4x1xf32>
    %850 = tpu.reciprocal %849 {approx = true} : vector<4x1xf32> -> vector<4x1xf32>
    %851 = vector.broadcast %850 : vector<4x1xf32> to vector<4x4xf32>
    %852 = arith.mulf %847, %851 : vector<4x4xf32>
    %853 = vector.extract_strided_slice %773 {offsets = [0, 24], sizes = [4, 8], strides = [1, 1]} : vector<4x32xf32> to vector<4x8xf32>
    %cst_530 = arith.constant dense<0.000000e+00> : vector<4x8xf32>
    %854 = tpu.matmul %852, %853, %cst_530 {dimension_numbers = #tpu.dot_dimension_numbers<[1], [0], [0], [1], [0, 0, 1, 1], [], []>} : vector<4x4xf32>, vector<4x8xf32>, vector<4x8xf32> -> vector<4x8xf32>
    %c0_531 = arith.constant 0 : index
    %c0_532 = arith.constant 0 : index
    %c24_533 = arith.constant 24 : index
    %855 = vector.load %arg24[%c0_531, %c0_532, %c24_533] : memref<2x4x32xf32, #tpu.memory_space<vmem>>, vector<1x4x8xf32>
    %856 = vector.shape_cast %855 : vector<1x4x8xf32> to vector<4x8xf32>
    %857 = vector.shape_cast %854 : vector<4x8xf32> to vector<1x4x8xf32>
    tpu.vector_store %arg24[%c0_531, %c0_532, %c24_533], %857 {strides = array<i32>} : memref<2x4x32xf32, #tpu.memory_space<vmem>>, vector<1x4x8xf32>,
    %c1_534 = arith.constant 1 : index
    %c0_535 = arith.constant 0 : index
    %c0_536 = arith.constant 0 : index
    %858 = vector.load %arg21[%c1_534, %c0_535, %c0_536] : memref<2x4x32xf32, #tpu.memory_space<vmem>>, vector<1x4x32xf32>
    %859 = vector.shape_cast %858 : vector<1x4x32xf32> to vector<4x32xf32>
    %c1_537 = arith.constant 1 : index
    %c0_538 = arith.constant 0 : index
    %c0_539 = arith.constant 0 : index
    %860 = vector.load %arg22[%c1_537, %c0_538, %c0_539] : memref<2x4x32xf32, #tpu.memory_space<vmem>>, vector<1x4x32xf32>
    %861 = vector.shape_cast %860 : vector<1x4x32xf32> to vector<4x32xf32>
    %c1_540 = arith.constant 1 : index
    %c0_541 = arith.constant 0 : index
    %c0_542 = arith.constant 0 : index
    %862 = vector.load %arg23[%c1_540, %c0_541, %c0_542] : memref<2x4x32xf32, #tpu.memory_space<vmem>>, vector<1x4x32xf32>
    %863 = vector.shape_cast %862 : vector<1x4x32xf32> to vector<4x32xf32>
    %864 = vector.extract_strided_slice %859 {offsets = [0, 0], sizes = [4, 8], strides = [1, 1]} : vector<4x32xf32> to vector<4x8xf32>
    %865 = vector.extract_strided_slice %861 {offsets = [0, 0], sizes = [4, 8], strides = [1, 1]} : vector<4x32xf32> to vector<4x8xf32>
    %866 = tpu.transpose %865, [1, 0] : vector<4x8xf32> -> vector<8x4xf32>
    %cst_543 = arith.constant dense<0.000000e+00> : vector<4x4xf32>
    %867 = tpu.matmul %864, %866, %cst_543 {dimension_numbers = #tpu.dot_dimension_numbers<[1], [0], [0], [1], [0, 0, 1, 1], [], []>} : vector<4x8xf32>, vector<8x4xf32>, vector<4x4xf32> -> vector<4x4xf32>
    %cst_544 = arith.constant 0.353553385 : f32
    %868 = vector.broadcast %cst_544 : f32 to vector<4x4xf32>
    %869 = arith.mulf %867, %868 : vector<4x4xf32>
    %cst_545 = arith.constant dense<0xFF800000> : vector<4xf32>
    %870 = vector.multi_reduction <maximumf>, %869, %cst_545 [1] : vector<4x4xf32> to vector<4xf32>
    %871 = vector.shape_cast %870 : vector<4xf32> to vector<4x1xf32>
    %872 = vector.broadcast %871 : vector<4x1xf32> to vector<4x4xf32>
    %873 = arith.subf %869, %872 : vector<4x4xf32>
    %874 = math.exp %873 : vector<4x4xf32>
    %cst_546 = arith.constant dense<0.000000e+00> : vector<4xf32>
    %875 = vector.multi_reduction <add>, %874, %cst_546 [1] : vector<4x4xf32> to vector<4xf32>
    %876 = vector.shape_cast %875 : vector<4xf32> to vector<4x1xf32>
    %877 = tpu.reciprocal %876 {approx = true} : vector<4x1xf32> -> vector<4x1xf32>
    %878 = vector.broadcast %877 : vector<4x1xf32> to vector<4x4xf32>
    %879 = arith.mulf %874, %878 : vector<4x4xf32>
    %880 = vector.extract_strided_slice %863 {offsets = [0, 0], sizes = [4, 8], strides = [1, 1]} : vector<4x32xf32> to vector<4x8xf32>
    %cst_547 = arith.constant dense<0.000000e+00> : vector<4x8xf32>
    %881 = tpu.matmul %879, %880, %cst_547 {dimension_numbers = #tpu.dot_dimension_numbers<[1], [0], [0], [1], [0, 0, 1, 1], [], []>} : vector<4x4xf32>, vector<4x8xf32>, vector<4x8xf32> -> vector<4x8xf32>
    %c1_548 = arith.constant 1 : index
    %c0_549 = arith.constant 0 : index
    %c0_550 = arith.constant 0 : index
    %882 = vector.load %arg24[%c1_548, %c0_549, %c0_550] : memref<2x4x32xf32, #tpu.memory_space<vmem>>, vector<1x4x8xf32>
    %883 = vector.shape_cast %882 : vector<1x4x8xf32> to vector<4x8xf32>
    %884 = vector.shape_cast %881 : vector<4x8xf32> to vector<1x4x8xf32>
    tpu.vector_store %arg24[%c1_548, %c0_549, %c0_550], %884 {strides = array<i32>} : memref<2x4x32xf32, #tpu.memory_space<vmem>>, vector<1x4x8xf32>,
    %885 = vector.extract_strided_slice %859 {offsets = [0, 8], sizes = [4, 8], strides = [1, 1]} : vector<4x32xf32> to vector<4x8xf32>
    %886 = vector.extract_strided_slice %861 {offsets = [0, 8], sizes = [4, 8], strides = [1, 1]} : vector<4x32xf32> to vector<4x8xf32>
    %887 = tpu.transpose %886, [1, 0] : vector<4x8xf32> -> vector<8x4xf32>
    %cst_551 = arith.constant dense<0.000000e+00> : vector<4x4xf32>
    %888 = tpu.matmul %885, %887, %cst_551 {dimension_numbers = #tpu.dot_dimension_numbers<[1], [0], [0], [1], [0, 0, 1, 1], [], []>} : vector<4x8xf32>, vector<8x4xf32>, vector<4x4xf32> -> vector<4x4xf32>
    %cst_552 = arith.constant 0.353553385 : f32
    %889 = vector.broadcast %cst_552 : f32 to vector<4x4xf32>
    %890 = arith.mulf %888, %889 : vector<4x4xf32>
    %cst_553 = arith.constant dense<0xFF800000> : vector<4xf32>
    %891 = vector.multi_reduction <maximumf>, %890, %cst_553 [1] : vector<4x4xf32> to vector<4xf32>
    %892 = vector.shape_cast %891 : vector<4xf32> to vector<4x1xf32>
    %893 = vector.broadcast %892 : vector<4x1xf32> to vector<4x4xf32>
    %894 = arith.subf %890, %893 : vector<4x4xf32>
    %895 = math.exp %894 : vector<4x4xf32>
    %cst_554 = arith.constant dense<0.000000e+00> : vector<4xf32>
    %896 = vector.multi_reduction <add>, %895, %cst_554 [1] : vector<4x4xf32> to vector<4xf32>
    %897 = vector.shape_cast %896 : vector<4xf32> to vector<4x1xf32>
    %898 = tpu.reciprocal %897 {approx = true} : vector<4x1xf32> -> vector<4x1xf32>
    %899 = vector.broadcast %898 : vector<4x1xf32> to vector<4x4xf32>
    %900 = arith.mulf %895, %899 : vector<4x4xf32>
    %901 = vector.extract_strided_slice %863 {offsets = [0, 8], sizes = [4, 8], strides = [1, 1]} : vector<4x32xf32> to vector<4x8xf32>
    %cst_555 = arith.constant dense<0.000000e+00> : vector<4x8xf32>
    %902 = tpu.matmul %900, %901, %cst_555 {dimension_numbers = #tpu.dot_dimension_numbers<[1], [0], [0], [1], [0, 0, 1, 1], [], []>} : vector<4x4xf32>, vector<4x8xf32>, vector<4x8xf32> -> vector<4x8xf32>
    %c1_556 = arith.constant 1 : index
    %c0_557 = arith.constant 0 : index
    %c8_558 = arith.constant 8 : index
    %903 = vector.load %arg24[%c1_556, %c0_557, %c8_558] : memref<2x4x32xf32, #tpu.memory_space<vmem>>, vector<1x4x8xf32>
    %904 = vector.shape_cast %903 : vector<1x4x8xf32> to vector<4x8xf32>
    %905 = vector.shape_cast %902 : vector<4x8xf32> to vector<1x4x8xf32>
    tpu.vector_store %arg24[%c1_556, %c0_557, %c8_558], %905 {strides = array<i32>} : memref<2x4x32xf32, #tpu.memory_space<vmem>>, vector<1x4x8xf32>,
    %906 = vector.extract_strided_slice %859 {offsets = [0, 16], sizes = [4, 8], strides = [1, 1]} : vector<4x32xf32> to vector<4x8xf32>
    %907 = vector.extract_strided_slice %861 {offsets = [0, 16], sizes = [4, 8], strides = [1, 1]} : vector<4x32xf32> to vector<4x8xf32>
    %908 = tpu.transpose %907, [1, 0] : vector<4x8xf32> -> vector<8x4xf32>
    %cst_559 = arith.constant dense<0.000000e+00> : vector<4x4xf32>
    %909 = tpu.matmul %906, %908, %cst_559 {dimension_numbers = #tpu.dot_dimension_numbers<[1], [0], [0], [1], [0, 0, 1, 1], [], []>} : vector<4x8xf32>, vector<8x4xf32>, vector<4x4xf32> -> vector<4x4xf32>
    %cst_560 = arith.constant 0.353553385 : f32
    %910 = vector.broadcast %cst_560 : f32 to vector<4x4xf32>
    %911 = arith.mulf %909, %910 : vector<4x4xf32>
    %cst_561 = arith.constant dense<0xFF800000> : vector<4xf32>
    %912 = vector.multi_reduction <maximumf>, %911, %cst_561 [1] : vector<4x4xf32> to vector<4xf32>
    %913 = vector.shape_cast %912 : vector<4xf32> to vector<4x1xf32>
    %914 = vector.broadcast %913 : vector<4x1xf32> to vector<4x4xf32>
    %915 = arith.subf %911, %914 : vector<4x4xf32>
    %916 = math.exp %915 : vector<4x4xf32>
    %cst_562 = arith.constant dense<0.000000e+00> : vector<4xf32>
    %917 = vector.multi_reduction <add>, %916, %cst_562 [1] : vector<4x4xf32> to vector<4xf32>
    %918 = vector.shape_cast %917 : vector<4xf32> to vector<4x1xf32>
    %919 = tpu.reciprocal %918 {approx = true} : vector<4x1xf32> -> vector<4x1xf32>
    %920 = vector.broadcast %919 : vector<4x1xf32> to vector<4x4xf32>
    %921 = arith.mulf %916, %920 : vector<4x4xf32>
    %922 = vector.extract_strided_slice %863 {offsets = [0, 16], sizes = [4, 8], strides = [1, 1]} : vector<4x32xf32> to vector<4x8xf32>
    %cst_563 = arith.constant dense<0.000000e+00> : vector<4x8xf32>
    %923 = tpu.matmul %921, %922, %cst_563 {dimension_numbers = #tpu.dot_dimension_numbers<[1], [0], [0], [1], [0, 0, 1, 1], [], []>} : vector<4x4xf32>, vector<4x8xf32>, vector<4x8xf32> -> vector<4x8xf32>
    %c1_564 = arith.constant 1 : index
    %c0_565 = arith.constant 0 : index
    %c16_566 = arith.constant 16 : index
    %924 = vector.load %arg24[%c1_564, %c0_565, %c16_566] : memref<2x4x32xf32, #tpu.memory_space<vmem>>, vector<1x4x8xf32>
    %925 = vector.shape_cast %924 : vector<1x4x8xf32> to vector<4x8xf32>
    %926 = vector.shape_cast %923 : vector<4x8xf32> to vector<1x4x8xf32>
    tpu.vector_store %arg24[%c1_564, %c0_565, %c16_566], %926 {strides = array<i32>} : memref<2x4x32xf32, #tpu.memory_space<vmem>>, vector<1x4x8xf32>,
    %927 = vector.extract_strided_slice %859 {offsets = [0, 24], sizes = [4, 8], strides = [1, 1]} : vector<4x32xf32> to vector<4x8xf32>
    %928 = vector.extract_strided_slice %861 {offsets = [0, 24], sizes = [4, 8], strides = [1, 1]} : vector<4x32xf32> to vector<4x8xf32>
    %929 = tpu.transpose %928, [1, 0] : vector<4x8xf32> -> vector<8x4xf32>
    %cst_567 = arith.constant dense<0.000000e+00> : vector<4x4xf32>
    %930 = tpu.matmul %927, %929, %cst_567 {dimension_numbers = #tpu.dot_dimension_numbers<[1], [0], [0], [1], [0, 0, 1, 1], [], []>} : vector<4x8xf32>, vector<8x4xf32>, vector<4x4xf32> -> vector<4x4xf32>
    %cst_568 = arith.constant 0.353553385 : f32
    %931 = vector.broadcast %cst_568 : f32 to vector<4x4xf32>
    %932 = arith.mulf %930, %931 : vector<4x4xf32>
    %cst_569 = arith.constant dense<0xFF800000> : vector<4xf32>
    %933 = vector.multi_reduction <maximumf>, %932, %cst_569 [1] : vector<4x4xf32> to vector<4xf32>
    %934 = vector.shape_cast %933 : vector<4xf32> to vector<4x1xf32>
    %935 = vector.broadcast %934 : vector<4x1xf32> to vector<4x4xf32>
    %936 = arith.subf %932, %935 : vector<4x4xf32>
    %937 = math.exp %936 : vector<4x4xf32>
    %cst_570 = arith.constant dense<0.000000e+00> : vector<4xf32>
    %938 = vector.multi_reduction <add>, %937, %cst_570 [1] : vector<4x4xf32> to vector<4xf32>
    %939 = vector.shape_cast %938 : vector<4xf32> to vector<4x1xf32>
    %940 = tpu.reciprocal %939 {approx = true} : vector<4x1xf32> -> vector<4x1xf32>
    %941 = vector.broadcast %940 : vector<4x1xf32> to vector<4x4xf32>
    %942 = arith.mulf %937, %941 : vector<4x4xf32>
    %943 = vector.extract_strided_slice %863 {offsets = [0, 24], sizes = [4, 8], strides = [1, 1]} : vector<4x32xf32> to vector<4x8xf32>
    %cst_571 = arith.constant dense<0.000000e+00> : vector<4x8xf32>
    %944 = tpu.matmul %942, %943, %cst_571 {dimension_numbers = #tpu.dot_dimension_numbers<[1], [0], [0], [1], [0, 0, 1, 1], [], []>} : vector<4x4xf32>, vector<4x8xf32>, vector<4x8xf32> -> vector<4x8xf32>
    %c1_572 = arith.constant 1 : index
    %c0_573 = arith.constant 0 : index
    %c24_574 = arith.constant 24 : index
    %945 = vector.load %arg24[%c1_572, %c0_573, %c24_574] : memref<2x4x32xf32, #tpu.memory_space<vmem>>, vector<1x4x8xf32>
    %946 = vector.shape_cast %945 : vector<1x4x8xf32> to vector<4x8xf32>
    %947 = vector.shape_cast %944 : vector<4x8xf32> to vector<1x4x8xf32>
    tpu.vector_store %arg24[%c1_572, %c0_573, %c24_574], %947 {strides = array<i32>} : memref<2x4x32xf32, #tpu.memory_space<vmem>>, vector<1x4x8xf32>,
    %c0_575 = arith.constant 0 : index
    %c0_576 = arith.constant 0 : index
    %c0_577 = arith.constant 0 : index
    %948 = vector.load %arg24[%c0_575, %c0_576, %c0_577] : memref<2x4x32xf32, #tpu.memory_space<vmem>>, vector<2x1x32xf32>
    %949 = vector.shape_cast %948 : vector<2x1x32xf32> to vector<2x32xf32>
    %c0_578 = arith.constant 0 : index
    %c0_579 = arith.constant 0 : index
    %950 = vector.load %arg25[%c0_578, %c0_579] : memref<2x128xf32, #tpu.memory_space<vmem>>, vector<2x32xf32>
    tpu.vector_store %arg25[%c0_578, %c0_579], %949 {strides = array<i32>} : memref<2x128xf32, #tpu.memory_space<vmem>>, vector<2x32xf32>,
    %c0_580 = arith.constant 0 : index
    %c1_581 = arith.constant 1 : index
    %c0_582 = arith.constant 0 : index
    %951 = vector.load %arg24[%c0_580, %c1_581, %c0_582] : memref<2x4x32xf32, #tpu.memory_space<vmem>>, vector<2x1x32xf32>
    %952 = vector.shape_cast %951 : vector<2x1x32xf32> to vector<2x32xf32>
    %c0_583 = arith.constant 0 : index
    %c32_584 = arith.constant 32 : index
    %953 = vector.load %arg25[%c0_583, %c32_584] : memref<2x128xf32, #tpu.memory_space<vmem>>, vector<2x32xf32>
    tpu.vector_store %arg25[%c0_583, %c32_584], %952 {strides = array<i32>} : memref<2x128xf32, #tpu.memory_space<vmem>>, vector<2x32xf32>,
    %c0_585 = arith.constant 0 : index
    %c2_586 = arith.constant 2 : index
    %c0_587 = arith.constant 0 : index
    %954 = vector.load %arg24[%c0_585, %c2_586, %c0_587] : memref<2x4x32xf32, #tpu.memory_space<vmem>>, vector<2x1x32xf32>
    %955 = vector.shape_cast %954 : vector<2x1x32xf32> to vector<2x32xf32>
    %c0_588 = arith.constant 0 : index
    %c64_589 = arith.constant 64 : index
    %956 = vector.load %arg25[%c0_588, %c64_589] : memref<2x128xf32, #tpu.memory_space<vmem>>, vector<2x32xf32>
    tpu.vector_store %arg25[%c0_588, %c64_589], %955 {strides = array<i32>} : memref<2x128xf32, #tpu.memory_space<vmem>>, vector<2x32xf32>,
    %c0_590 = arith.constant 0 : index
    %c3_591 = arith.constant 3 : index
    %c0_592 = arith.constant 0 : index
    %957 = vector.load %arg24[%c0_590, %c3_591, %c0_592] : memref<2x4x32xf32, #tpu.memory_space<vmem>>, vector<2x1x32xf32>
    %958 = vector.shape_cast %957 : vector<2x1x32xf32> to vector<2x32xf32>
    %c0_593 = arith.constant 0 : index
    %c96_594 = arith.constant 96 : index
    %959 = vector.load %arg25[%c0_593, %c96_594] : memref<2x128xf32, #tpu.memory_space<vmem>>, vector<2x32xf32>
    tpu.vector_store %arg25[%c0_593, %c96_594], %958 {strides = array<i32>} : memref<2x128xf32, #tpu.memory_space<vmem>>, vector<2x32xf32>,
    %c0_595 = arith.constant 0 : index
    %c0_596 = arith.constant 0 : index
    %960 = vector.load %arg25[%c0_595, %c0_596] : memref<2x128xf32, #tpu.memory_space<vmem>>, vector<2x128xf32>
    %c0_597 = arith.constant 0 : index
    %c0_598 = arith.constant 0 : index
    %961 = vector.load %arg9[%c0_597, %c0_598] : memref<128x128xf32, #tpu.memory_space<vmem>>, vector<128x128xf32>
    %cst_599 = arith.constant dense<0.000000e+00> : vector<2x128xf32>
    %962 = tpu.matmul %960, %961, %cst_599 {dimension_numbers = #tpu.dot_dimension_numbers<[1], [0], [0], [1], [0, 0, 1, 1], [], []>} : vector<2x128xf32>, vector<128x128xf32>, vector<2x128xf32> -> vector<2x128xf32>
    %963 = arith.addf %713, %962 : vector<2x128xf32>
    %c2_600 = arith.constant 2 : index
    %c0_601 = arith.constant 0 : index
    %c0_602 = arith.constant 0 : index
    %964 = vector.load %arg10[%c2_600, %c0_601, %c0_602] : memref<3x128x128xf32, #tpu.memory_space<vmem>>, vector<1x128x128xf32>
    %965 = vector.shape_cast %964 : vector<1x128x128xf32> to vector<128x128xf32>
    %cst_603 = arith.constant dense<0.000000e+00> : vector<2x128xf32>
    %966 = tpu.matmul %963, %965, %cst_603 {dimension_numbers = #tpu.dot_dimension_numbers<[1], [0], [0], [1], [0, 0, 1, 1], [], []>} : vector<2x128xf32>, vector<128x128xf32>, vector<2x128xf32> -> vector<2x128xf32>
    %c2_604 = arith.constant 2 : index
    %c0_605 = arith.constant 0 : index
    %c0_606 = arith.constant 0 : index
    %967 = vector.load %arg11[%c2_604, %c0_605, %c0_606] : memref<3x1x128xf32, #tpu.memory_space<vmem>>, vector<1x1x128xf32>
    %968 = vector.shape_cast %967 : vector<1x1x128xf32> to vector<1x128xf32>
    %969 = vector.broadcast %968 : vector<1x128xf32> to vector<2x128xf32>
    %970 = arith.addf %966, %969 : vector<2x128xf32>
    %cst_607 = arith.constant 0.000000e+00 : f32
    %971 = vector.broadcast %cst_607 : f32 to vector<2x128xf32>
    %972 = arith.maximumf %970, %971 : vector<2x128xf32>
    %c2_608 = arith.constant 2 : index
    %c0_609 = arith.constant 0 : index
    %c0_610 = arith.constant 0 : index
    %973 = vector.load %arg12[%c2_608, %c0_609, %c0_610] : memref<3x128x20xf32, #tpu.memory_space<vmem>>, vector<1x128x20xf32>
    %974 = vector.shape_cast %973 : vector<1x128x20xf32> to vector<128x20xf32>
    %cst_611 = arith.constant dense<0.000000e+00> : vector<2x20xf32>
    %975 = tpu.matmul %972, %974, %cst_611 {dimension_numbers = #tpu.dot_dimension_numbers<[1], [0], [0], [1], [0, 0, 1, 1], [], []>} : vector<2x128xf32>, vector<128x20xf32>, vector<2x20xf32> -> vector<2x20xf32>
    %c2_612 = arith.constant 2 : index
    %c0_613 = arith.constant 0 : index
    %c0_614 = arith.constant 0 : index
    %976 = vector.load %arg13[%c2_612, %c0_613, %c0_614] : memref<3x1x20xf32, #tpu.memory_space<vmem>>, vector<1x1x20xf32>
    %977 = vector.shape_cast %976 : vector<1x1x20xf32> to vector<1x20xf32>
    %978 = vector.broadcast %977 : vector<1x20xf32> to vector<2x20xf32>
    %979 = arith.addf %975, %978 : vector<2x20xf32>
    %c2_615 = arith.constant 2 : index
    %c0_616 = arith.constant 0 : index
    %c0_617 = arith.constant 0 : index
    %980 = vector.load %arg14[%c2_615, %c0_616, %c0_617] : memref<3x128x128xf32, #tpu.memory_space<vmem>>, vector<1x128x128xf32>
    %981 = vector.shape_cast %980 : vector<1x128x128xf32> to vector<128x128xf32>
    %cst_618 = arith.constant dense<0.000000e+00> : vector<2x128xf32>
    %982 = tpu.matmul %963, %981, %cst_618 {dimension_numbers = #tpu.dot_dimension_numbers<[1], [0], [0], [1], [0, 0, 1, 1], [], []>} : vector<2x128xf32>, vector<128x128xf32>, vector<2x128xf32> -> vector<2x128xf32>
    %c2_619 = arith.constant 2 : index
    %c0_620 = arith.constant 0 : index
    %c0_621 = arith.constant 0 : index
    %983 = vector.load %arg15[%c2_619, %c0_620, %c0_621] : memref<3x1x128xf32, #tpu.memory_space<vmem>>, vector<1x1x128xf32>
    %984 = vector.shape_cast %983 : vector<1x1x128xf32> to vector<1x128xf32>
    %985 = vector.broadcast %984 : vector<1x128xf32> to vector<2x128xf32>
    %986 = arith.addf %982, %985 : vector<2x128xf32>
    %cst_622 = arith.constant 0.000000e+00 : f32
    %987 = vector.broadcast %cst_622 : f32 to vector<2x128xf32>
    %988 = arith.maximumf %986, %987 : vector<2x128xf32>
    %c2_623 = arith.constant 2 : index
    %c0_624 = arith.constant 0 : index
    %c0_625 = arith.constant 0 : index
    %989 = vector.load %arg16[%c2_623, %c0_624, %c0_625] : memref<3x128x20xf32, #tpu.memory_space<vmem>>, vector<1x128x20xf32>
    %990 = vector.shape_cast %989 : vector<1x128x20xf32> to vector<128x20xf32>
    %cst_626 = arith.constant dense<0.000000e+00> : vector<2x20xf32>
    %991 = tpu.matmul %988, %990, %cst_626 {dimension_numbers = #tpu.dot_dimension_numbers<[1], [0], [0], [1], [0, 0, 1, 1], [], []>} : vector<2x128xf32>, vector<128x20xf32>, vector<2x20xf32> -> vector<2x20xf32>
    %c2_627 = arith.constant 2 : index
    %c0_628 = arith.constant 0 : index
    %c0_629 = arith.constant 0 : index
    %992 = vector.load %arg17[%c2_627, %c0_628, %c0_629] : memref<3x1x20xf32, #tpu.memory_space<vmem>>, vector<1x1x20xf32>
    %993 = vector.shape_cast %992 : vector<1x1x20xf32> to vector<1x20xf32>
    %994 = vector.broadcast %993 : vector<1x20xf32> to vector<2x20xf32>
    %995 = arith.addf %991, %994 : vector<2x20xf32>
    %c2_630 = arith.constant 2 : index
    %c0_631 = arith.constant 0 : index
    %c0_632 = arith.constant 0 : index
    %996 = vector.load %arg18[%c2_630, %c0_631, %c0_632] : memref<3x2x20xf32, #tpu.memory_space<vmem>>, vector<1x2x20xf32>
    %997 = vector.shape_cast %996 : vector<1x2x20xf32> to vector<2x20xf32>
    %cst_633 = arith.constant 5.000000e-01 : f32
    %998 = vector.broadcast %cst_633 : f32 to vector<2x20xf32>
    %999 = arith.mulf %998, %995 : vector<2x20xf32>
    %1000 = math.exp %999 : vector<2x20xf32>
    %1001 = arith.mulf %997, %1000 : vector<2x20xf32>
    %1002 = arith.addf %979, %1001 : vector<2x20xf32>
    %cst_634 = arith.constant -5.000000e-01 : f32
    %1003 = vector.broadcast %cst_634 : f32 to vector<2x20xf32>
    %1004 = arith.mulf %1003, %995 : vector<2x20xf32>
    %cst_635 = arith.constant 5.000000e-01 : f32
    %1005 = vector.broadcast %cst_635 : f32 to vector<2x20xf32>
    %1006 = arith.mulf %1005, %997 : vector<2x20xf32>
    %1007 = arith.mulf %1006, %997 : vector<2x20xf32>
    %1008 = arith.subf %1004, %1007 : vector<2x20xf32>
    %1009 = arith.addf %684, %1008 : vector<2x20xf32>
    %1010 = math.tanh %1002 : vector<2x20xf32>
    %c2_636 = arith.constant 2 : index
    %c0_637 = arith.constant 0 : index
    %c0_638 = arith.constant 0 : index
    %1011 = vector.load %arg19[%c2_636, %c0_637, %c0_638] : memref<3x2x20xf32, #tpu.memory_space<vmem>>, vector<1x2x20xf32>
    %1012 = vector.shape_cast %1011 : vector<1x2x20xf32> to vector<2x20xf32>
    %1013 = vector.shape_cast %1010 : vector<2x20xf32> to vector<1x2x20xf32>
    tpu.vector_store %arg19[%c2_636, %c0_637, %c0_638], %1013 {strides = array<i32>} : memref<3x2x20xf32, #tpu.memory_space<vmem>>, vector<1x2x20xf32>,
    %1014 = vector.extract_strided_slice %1009 {offsets = [0, 0], sizes = [2, 5], strides = [1, 1]} : vector<2x20xf32> to vector<2x5xf32>
    %cst_639 = arith.constant dense<0.000000e+00> : vector<2xf32>
    %1015 = vector.multi_reduction <add>, %1014, %cst_639 [1] : vector<2x5xf32> to vector<2xf32>
    %1016 = vector.shape_cast %1015 : vector<2xf32> to vector<2x1xf32>
    %c0_640 = arith.constant 0 : index
    %c0_641 = arith.constant 0 : index
    %1017 = vector.load %arg20[%c0_640, %c0_641] : memref<2x4xf32, #tpu.memory_space<vmem>>, vector<2x1xf32>
    tpu.vector_store %arg20[%c0_640, %c0_641], %1016 {strides = array<i32>} : memref<2x4xf32, #tpu.memory_space<vmem>>, vector<2x1xf32>,
    %1018 = vector.extract_strided_slice %1009 {offsets = [0, 5], sizes = [2, 5], strides = [1, 1]} : vector<2x20xf32> to vector<2x5xf32>
    %cst_642 = arith.constant dense<0.000000e+00> : vector<2xf32>
    %1019 = vector.multi_reduction <add>, %1018, %cst_642 [1] : vector<2x5xf32> to vector<2xf32>
    %1020 = vector.shape_cast %1019 : vector<2xf32> to vector<2x1xf32>
    %c0_643 = arith.constant 0 : index
    %c1_644 = arith.constant 1 : index
    %1021 = vector.load %arg20[%c0_643, %c1_644] : memref<2x4xf32, #tpu.memory_space<vmem>>, vector<2x1xf32>
    tpu.vector_store %arg20[%c0_643, %c1_644], %1020 {strides = array<i32>} : memref<2x4xf32, #tpu.memory_space<vmem>>, vector<2x1xf32>,
    %1022 = vector.extract_strided_slice %1009 {offsets = [0, 10], sizes = [2, 5], strides = [1, 1]} : vector<2x20xf32> to vector<2x5xf32>
    %cst_645 = arith.constant dense<0.000000e+00> : vector<2xf32>
    %1023 = vector.multi_reduction <add>, %1022, %cst_645 [1] : vector<2x5xf32> to vector<2xf32>
    %1024 = vector.shape_cast %1023 : vector<2xf32> to vector<2x1xf32>
    %c0_646 = arith.constant 0 : index
    %c2_647 = arith.constant 2 : index
    %1025 = vector.load %arg20[%c0_646, %c2_647] : memref<2x4xf32, #tpu.memory_space<vmem>>, vector<2x1xf32>
    tpu.vector_store %arg20[%c0_646, %c2_647], %1024 {strides = array<i32>} : memref<2x4xf32, #tpu.memory_space<vmem>>, vector<2x1xf32>,
    %1026 = vector.extract_strided_slice %1009 {offsets = [0, 15], sizes = [2, 5], strides = [1, 1]} : vector<2x20xf32> to vector<2x5xf32>
    %cst_648 = arith.constant dense<0.000000e+00> : vector<2xf32>
    %1027 = vector.multi_reduction <add>, %1026, %cst_648 [1] : vector<2x5xf32> to vector<2xf32>
    %1028 = vector.shape_cast %1027 : vector<2xf32> to vector<2x1xf32>
    %c0_649 = arith.constant 0 : index
    %c3_650 = arith.constant 3 : index
    %1029 = vector.load %arg20[%c0_649, %c3_650] : memref<2x4xf32, #tpu.memory_space<vmem>>, vector<2x1xf32>
    tpu.vector_store %arg20[%c0_649, %c3_650], %1028 {strides = array<i32>} : memref<2x4xf32, #tpu.memory_space<vmem>>, vector<2x1xf32>,
    return
  }
}

</mosaic_0001>

<llo_original>
// kernel: actor_forward.1
$region0: #{actor_forward.1}
  #allocation0 [shape = 'u32[]', space=smem, size = 0x4, offset = 0x4, fixed_abs, tag = 'smem constant byte address 0x4 - core index']
  #allocation1 [shape = 'u32[144,128]{1,0:T(1,128)}', space=vmem, size = 0x12000, scoped, tag = 'internal scratch']
  #allocation2 [shape = 'f32[2,4,32]{2,1,0:T(4,128)}', space=vmem, size = 0x1000, scoped, tag = 'scratch operand']
  #allocation3 [shape = 'f32[2,4,32]{2,1,0:T(4,128)}', space=vmem, size = 0x1000, scoped, tag = 'scratch operand']
  #allocation4 [shape = 'f32[2,4,32]{2,1,0:T(4,128)}', space=vmem, size = 0x1000, scoped, tag = 'scratch operand']
  #allocation5 [shape = 'f32[2,4,32]{2,1,0:T(4,128)}', space=vmem, size = 0x1000, scoped, tag = 'scratch operand']
  #allocation6 [shape = 'f32[2,128]{1,0:T(2,128)}', space=vmem, size = 0x400, scoped, tag = 'scratch operand']
  %s0 = inlined_call_operand.vmem [shape: f32[2,128], index: 0, kind: input, shape index: {}]
  %s1 = inlined_call_operand.vmem [shape: f32[3,128,128], index: 1, kind: input, shape index: {}]
  %s2 = inlined_call_operand.vmem [shape: f32[3,128,128], index: 2, kind: input, shape index: {}]
  %s3 = inlined_call_operand.vmem [shape: f32[3,1,128], index: 3, kind: input, shape index: {}]
  %s4 = inlined_call_operand.vmem [shape: f32[3,128,128], index: 4, kind: input, shape index: {}]
  %s5 = inlined_call_operand.vmem [shape: f32[3,1,128], index: 5, kind: input, shape index: {}]
  %s6 = inlined_call_operand.vmem [shape: f32[128,128], index: 6, kind: input, shape index: {}]
  %s7 = inlined_call_operand.vmem [shape: f32[128,128], index: 7, kind: input, shape index: {}]
  %s8 = inlined_call_operand.vmem [shape: f32[128,128], index: 8, kind: input, shape index: {}]
  %s9 = inlined_call_operand.vmem [shape: f32[128,128], index: 9, kind: input, shape index: {}]
  %s10 = inlined_call_operand.vmem [shape: f32[3,128,128], index: 10, kind: input, shape index: {}]
  %s11 = inlined_call_operand.vmem [shape: f32[3,1,128], index: 11, kind: input, shape index: {}]
  %s12 = inlined_call_operand.vmem [shape: f32[3,128,20], index: 12, kind: input, shape index: {}]
  %s13 = inlined_call_operand.vmem [shape: f32[3,1,20], index: 13, kind: input, shape index: {}]
  %s14 = inlined_call_operand.vmem [shape: f32[3,128,128], index: 14, kind: input, shape index: {}]
  %s15 = inlined_call_operand.vmem [shape: f32[3,1,128], index: 15, kind: input, shape index: {}]
  %s16 = inlined_call_operand.vmem [shape: f32[3,128,20], index: 16, kind: input, shape index: {}]
  %s17 = inlined_call_operand.vmem [shape: f32[3,1,20], index: 17, kind: input, shape index: {}]
  %s18 = inlined_call_operand.vmem [shape: f32[3,2,20], index: 18, kind: input, shape index: {}]
  %s19 = inlined_call_operand.vmem [shape: f32[3,2,20], index: 19, kind: output, shape index: {0}]
  %s20 = inlined_call_operand.hbm [shape: f32[2,4], index: 20, kind: output, shape index: {1}]
  %21 = xla_tuple %s19, %s20
  %s22 = sld [smem:[#allocation0]]
  $region94: #{actor_forward.1} parent=0
    _
  %s24 = ssub.s32 1, %s22
  %s25 = scalar_select 0, %s24, %s22
  $region1: #{actor_forward.1} parent=0
    #allocation7 [shape = 'u8[1024]{0}', space=vmem, size = 0x400, scoped, tag = 'output window, operand 1, single buffered']
    #allocation8 [shape = 's32[1]{0}', space=sflag, size = 0x4, scoped, tag = 'scoped memory for actor_forward.1']
    %26 = vsyncpa [#allocation8], 0
    // Predicated region
    $region2: #{actor_forward.1} parent=1 // pred_check
      _
    $region3: #{actor_forward.1} parent=1 // pred_check_branch
      %28 = sbr.rel (0) target = $region5
    $region4: #{actor_forward.1} parent=1 // pred_region
      _
    $region5: #{actor_forward.1} parent=1 // pred_fallthru
      _
    // Predicated region
    $region6: #{actor_forward.1} parent=1 // pred_check
      _
    $region7: #{actor_forward.1} parent=1 // pred_check_branch
      %30 = sbr.rel (0) target = $region9
    $region8: #{actor_forward.1} parent=1 // pred_region
      _
    $region9: #{actor_forward.1} parent=1 // pred_fallthru
      _
    // Predicated region
    $region10: #{actor_forward.1} parent=1 // pred_check
      _
    $region11: #{actor_forward.1} parent=1 // pred_check_branch
      %32 = sbr.rel (0) target = $region13
    $region12: #{actor_forward.1} parent=1 // pred_region
      _
    $region13: #{actor_forward.1} parent=1 // pred_fallthru
      _
    // Predicated region
    $region14: #{actor_forward.1} parent=1 // pred_check
      _
    $region15: #{actor_forward.1} parent=1 // pred_check_branch
      %34 = sbr.rel (0) target = $region17
    $region16: #{actor_forward.1} parent=1 // pred_region
      _
    $region17: #{actor_forward.1} parent=1 // pred_fallthru
      _
    // Predicated region
    $region18: #{actor_forward.1} parent=1 // pred_check
      _
    $region19: #{actor_forward.1} parent=1 // pred_check_branch
      %36 = sbr.rel (0) target = $region21
    $region20: #{actor_forward.1} parent=1 // pred_region
      _
    $region21: #{actor_forward.1} parent=1 // pred_fallthru
      _
    // Predicated region
    $region22: #{actor_forward.1} parent=1 // pred_check
      _
    $region23: #{actor_forward.1} parent=1 // pred_check_branch
      %38 = sbr.rel (0) target = $region25
    $region24: #{actor_forward.1} parent=1 // pred_region
      _
    $region25: #{actor_forward.1} parent=1 // pred_fallthru
      _
    // Predicated region
    $region26: #{actor_forward.1} parent=1 // pred_check
      _
    $region27: #{actor_forward.1} parent=1 // pred_check_branch
      %40 = sbr.rel (0) target = $region29
    $region28: #{actor_forward.1} parent=1 // pred_region
      _
    $region29: #{actor_forward.1} parent=1 // pred_fallthru
      _
    // Predicated region
    $region30: #{actor_forward.1} parent=1 // pred_check
      _
    $region31: #{actor_forward.1} parent=1 // pred_check_branch
      %42 = sbr.rel (0) target = $region33
    $region32: #{actor_forward.1} parent=1 // pred_region
      _
    $region33: #{actor_forward.1} parent=1 // pred_fallthru
      _
    // Predicated region
    $region34: #{actor_forward.1} parent=1 // pred_check
      _
    $region35: #{actor_forward.1} parent=1 // pred_check_branch
      %44 = sbr.rel (0) target = $region37
    $region36: #{actor_forward.1} parent=1 // pred_region
      _
    $region37: #{actor_forward.1} parent=1 // pred_fallthru
      _
    // Predicated region
    $region38: #{actor_forward.1} parent=1 // pred_check
      _
    $region39: #{actor_forward.1} parent=1 // pred_check_branch
      %46 = sbr.rel (0) target = $region41
    $region40: #{actor_forward.1} parent=1 // pred_region
      _
    $region41: #{actor_forward.1} parent=1 // pred_fallthru
      _
    // Predicated region
    $region42: #{actor_forward.1} parent=1 // pred_check
      _
    $region43: #{actor_forward.1} parent=1 // pred_check_branch
      %48 = sbr.rel (0) target = $region45
    $region44: #{actor_forward.1} parent=1 // pred_region
      _
    $region45: #{actor_forward.1} parent=1 // pred_fallthru
      _
    // Predicated region
    $region46: #{actor_forward.1} parent=1 // pred_check
      _
    $region47: #{actor_forward.1} parent=1 // pred_check_branch
      %50 = sbr.rel (0) target = $region49
    $region48: #{actor_forward.1} parent=1 // pred_region
      _
    $region49: #{actor_forward.1} parent=1 // pred_fallthru
      _
    // Predicated region
    $region50: #{actor_forward.1} parent=1 // pred_check
      _
    $region51: #{actor_forward.1} parent=1 // pred_check_branch
      %52 = sbr.rel (0) target = $region53
    $region52: #{actor_forward.1} parent=1 // pred_region
      _
    $region53: #{actor_forward.1} parent=1 // pred_fallthru
      _
    // Predicated region
    $region54: #{actor_forward.1} parent=1 // pred_check
      _
    $region55: #{actor_forward.1} parent=1 // pred_check_branch
      %54 = sbr.rel (0) target = $region57
    $region56: #{actor_forward.1} parent=1 // pred_region
      _
    $region57: #{actor_forward.1} parent=1 // pred_fallthru
      _
    // Predicated region
    $region58: #{actor_forward.1} parent=1 // pred_check
      _
    $region59: #{actor_forward.1} parent=1 // pred_check_branch
      %56 = sbr.rel (0) target = $region61
    $region60: #{actor_forward.1} parent=1 // pred_region
      _
    $region61: #{actor_forward.1} parent=1 // pred_fallthru
      _
    // Predicated region
    $region62: #{actor_forward.1} parent=1 // pred_check
      _
    $region63: #{actor_forward.1} parent=1 // pred_check_branch
      %58 = sbr.rel (0) target = $region65
    $region64: #{actor_forward.1} parent=1 // pred_region
      _
    $region65: #{actor_forward.1} parent=1 // pred_fallthru
      _
    // Predicated region
    $region66: #{actor_forward.1} parent=1 // pred_check
      _
    $region67: #{actor_forward.1} parent=1 // pred_check_branch
      %60 = sbr.rel (0) target = $region69
    $region68: #{actor_forward.1} parent=1 // pred_region
      _
    $region69: #{actor_forward.1} parent=1 // pred_fallthru
      _
    // Predicated region
    $region70: #{actor_forward.1} parent=1 // pred_check
      _
    $region71: #{actor_forward.1} parent=1 // pred_check_branch
      %62 = sbr.rel (0) target = $region73
    $region72: #{actor_forward.1} parent=1 // pred_region
      _
    $region73: #{actor_forward.1} parent=1 // pred_fallthru
      _
    // Predicated region
    $region74: #{actor_forward.1} parent=1 // pred_check
      _
    $region75: #{actor_forward.1} parent=1 // pred_check_branch
      %64 = sbr.rel (0) target = $region77
    $region76: #{actor_forward.1} parent=1 // pred_region
      _
    $region77: #{actor_forward.1} parent=1 // pred_fallthru
      _
    %v65 = vld [vmem:[%s0] sm:$0x3]
    %v66 = vld [vmem:[%s2] sm:$0xff]
    %v67 = vld [vmem:[%s2 + $0x8] sm:$0xff]
    %v68 = vld [vmem:[%s2 + $0x10] sm:$0xff]
    %v69 = vld [vmem:[%s2 + $0x18] sm:$0xff]
    %v70 = vld [vmem:[%s2 + $0x20] sm:$0xff]
    %v71 = vld [vmem:[%s2 + $0x28] sm:$0xff]
    %v72 = vld [vmem:[%s2 + $0x30] sm:$0xff]
    %v73 = vld [vmem:[%s2 + $0x38] sm:$0xff]
    %v74 = vld [vmem:[%s2 + $0x40] sm:$0xff]
    %v75 = vld [vmem:[%s2 + $0x48] sm:$0xff]
    %v76 = vld [vmem:[%s2 + $0x50] sm:$0xff]
    %v77 = vld [vmem:[%s2 + $0x58] sm:$0xff]
    %v78 = vld [vmem:[%s2 + $0x60] sm:$0xff]
    %v79 = vld [vmem:[%s2 + $0x68] sm:$0xff]
    %v80 = vld [vmem:[%s2 + $0x70] sm:$0xff]
    %v81 = vld [vmem:[%s2 + $0x78] sm:$0xff]
    %v82 = vld [vmem:[%s3] sm:$0x1]
    %v84 = vlaneseq
    %v85 = vshrl.u32 %v84, 7
    %v86 = vsub.s32 0, %v85
    %v87 = vrot.slane %v82, %v86
    %89 = vmatprep.subr.mxu0 0.0
    %90 = vmatpush1.msra.mxu0 %v66
    %91 = vmatprep.subr.mxu0 0.0
    %92 = vmatpush1.msra.mxu0 %v67
    %93 = vmatprep.subr.mxu0 0.0
    %94 = vmatpush1.msra.mxu0 %v68
    %95 = vmatprep.subr.mxu0 0.0
    %96 = vmatpush1.msra.mxu0 %v69
    %97 = vmatprep.subr.mxu0 0.0
    %98 = vmatpush1.msra.mxu0 %v70
    %99 = vmatprep.subr.mxu0 0.0
    %100 = vmatpush1.msra.mxu0 %v71
    %101 = vmatprep.subr.mxu0 0.0
    %102 = vmatpush1.msra.mxu0 %v72
    %103 = vmatprep.subr.mxu0 0.0
    %104 = vmatpush1.msra.mxu0 %v73
    %105 = vmatprep.subr.mxu0 0.0
    %106 = vmatpush1.msra.mxu0 %v74
    %107 = vmatprep.subr.mxu0 0.0
    %108 = vmatpush1.msra.mxu0 %v75
    %109 = vmatprep.subr.mxu0 0.0
    %110 = vmatpush1.msra.mxu0 %v76
    %111 = vmatprep.subr.mxu0 0.0
    %112 = vmatpush1.msra.mxu0 %v77
    %113 = vmatprep.subr.mxu0 0.0
    %114 = vmatpush1.msra.mxu0 %v78
    %115 = vmatprep.subr.mxu0 0.0
    %116 = vmatpush1.msra.mxu0 %v79
    %117 = vmatprep.subr.mxu0 0.0
    %118 = vmatpush1.msra.mxu0 %v80
    %119 = vmatprep.subr.mxu0 0.0
    %120 = vmatpush1.msra.mxu0 %v81
    %121 = vmatprep.subr.mxu0 0.0
    %122 = vmatpush1.msra.mxu0 0.0
    %123 = vmatprep.subr.mxu0 0.0
    %124 = vmatpush1.msra.mxu0 0.0
    %125 = vmatprep.subr.mxu0 0.0
    %126 = vmatpush1.msra.mxu0 0.0
    %127 = vmatprep.subr.mxu0 0.0
    %128 = vmatpush1.msra.mxu0 0.0
    %129 = vmatprep.subr.mxu0 0.0
    %130 = vmatpush1.msra.mxu0 0.0
    %131 = vmatprep.subr.mxu0 0.0
    %132 = vmatpush1.msra.mxu0 0.0
    %133 = vmatprep.subr.mxu0 0.0
    %134 = vmatpush1.msra.mxu0 0.0
    %135 = vmatprep.subr.mxu0 0.0
    %136 = vmatpush1.msra.mxu0 0.0
    %137 = vmatprep.subr.mxu0 0.0
    %138 = vmatpush1.msra.mxu0 0.0
    %139 = vmatprep.subr.mxu0 0.0
    %140 = vmatpush1.msra.mxu0 0.0
    %141 = vmatprep.subr.mxu0 0.0
    %142 = vmatpush1.msra.mxu0 0.0
    %143 = vmatprep.subr.mxu0 0.0
    %144 = vmatpush1.msra.mxu0 0.0
    %145 = vmatprep.subr.mxu0 0.0
    %146 = vmatpush1.msra.mxu0 0.0
    %147 = vmatprep.subr.mxu0 0.0
    %148 = vmatpush1.msra.mxu0 0.0
    %149 = vmatprep.subr.mxu0 0.0
    %150 = vmatpush1.msra.mxu0 0.0
    %151 = vmatprep.subr.mxu0 0.0
    %152 = vmatpush1.msra.mxu0 0.0
    %153 = vmatprep.mubr.f32.mxu0 0.0
    %154 = vmatmul.mubr.f32.gmra.mrb[0].mxu0 %v65
    %v155 = vpop.f32.mrb[0].mxu0
    %v156 = vadd.f32 %v87, %v155
    %v157 = vpop.f32.mrb[0].mxu0
    %158 = vdwg.mxu0
    %v159 = vmax.f32 %v156, 0.0
    %v160 = vld [vmem:[%s4] sm:$0xff]
    %v161 = vld [vmem:[%s4 + $0x8] sm:$0xff]
    %v162 = vld [vmem:[%s4 + $0x10] sm:$0xff]
    %v163 = vld [vmem:[%s4 + $0x18] sm:$0xff]
    %v164 = vld [vmem:[%s4 + $0x20] sm:$0xff]
    %v165 = vld [vmem:[%s4 + $0x28] sm:$0xff]
    %v166 = vld [vmem:[%s4 + $0x30] sm:$0xff]
    %v167 = vld [vmem:[%s4 + $0x38] sm:$0xff]
    %v168 = vld [vmem:[%s4 + $0x40] sm:$0xff]
    %v169 = vld [vmem:[%s4 + $0x48] sm:$0xff]
    %v170 = vld [vmem:[%s4 + $0x50] sm:$0xff]
    %v171 = vld [vmem:[%s4 + $0x58] sm:$0xff]
    %v172 = vld [vmem:[%s4 + $0x60] sm:$0xff]
    %v173 = vld [vmem:[%s4 + $0x68] sm:$0xff]
    %v174 = vld [vmem:[%s4 + $0x70] sm:$0xff]
    %v175 = vld [vmem:[%s4 + $0x78] sm:$0xff]
    %v176 = vld [vmem:[%s5] sm:$0x1]
    %v178 = vlaneseq
    %v179 = vshrl.u32 %v178, 7
    %v180 = vsub.s32 0, %v179
    %v181 = vrot.slane %v176, %v180
    %183 = vmatprep.subr.mxu0 0.0
    %184 = vmatpush1.msra.mxu0 %v160
    %185 = vmatprep.subr.mxu0 0.0
    %186 = vmatpush1.msra.mxu0 %v161
    %187 = vmatprep.subr.mxu0 0.0
    %188 = vmatpush1.msra.mxu0 %v162
    %189 = vmatprep.subr.mxu0 0.0
    %190 = vmatpush1.msra.mxu0 %v163
    %191 = vmatprep.subr.mxu0 0.0
    %192 = vmatpush1.msra.mxu0 %v164
    %193 = vmatprep.subr.mxu0 0.0
    %194 = vmatpush1.msra.mxu0 %v165
    %195 = vmatprep.subr.mxu0 0.0
    %196 = vmatpush1.msra.mxu0 %v166
    %197 = vmatprep.subr.mxu0 0.0
    %198 = vmatpush1.msra.mxu0 %v167
    %199 = vmatprep.subr.mxu0 0.0
    %200 = vmatpush1.msra.mxu0 %v168
    %201 = vmatprep.subr.mxu0 0.0
    %202 = vmatpush1.msra.mxu0 %v169
    %203 = vmatprep.subr.mxu0 0.0
    %204 = vmatpush1.msra.mxu0 %v170
    %205 = vmatprep.subr.mxu0 0.0
    %206 = vmatpush1.msra.mxu0 %v171
    %207 = vmatprep.subr.mxu0 0.0
    %208 = vmatpush1.msra.mxu0 %v172
    %209 = vmatprep.subr.mxu0 0.0
    %210 = vmatpush1.msra.mxu0 %v173
    %211 = vmatprep.subr.mxu0 0.0
    %212 = vmatpush1.msra.mxu0 %v174
    %213 = vmatprep.subr.mxu0 0.0
    %214 = vmatpush1.msra.mxu0 %v175
    %215 = vmatprep.subr.mxu0 0.0
    %216 = vmatpush1.msra.mxu0 0.0
    %217 = vmatprep.subr.mxu0 0.0
    %218 = vmatpush1.msra.mxu0 0.0
    %219 = vmatprep.subr.mxu0 0.0
    %220 = vmatpush1.msra.mxu0 0.0
    %221 = vmatprep.subr.mxu0 0.0
    %222 = vmatpush1.msra.mxu0 0.0
    %223 = vmatprep.subr.mxu0 0.0
    %224 = vmatpush1.msra.mxu0 0.0
    %225 = vmatprep.subr.mxu0 0.0
    %226 = vmatpush1.msra.mxu0 0.0
    %227 = vmatprep.subr.mxu0 0.0
    %228 = vmatpush1.msra.mxu0 0.0
    %229 = vmatprep.subr.mxu0 0.0
    %230 = vmatpush1.msra.mxu0 0.0
    %231 = vmatprep.subr.mxu0 0.0
    %232 = vmatpush1.msra.mxu0 0.0
    %233 = vmatprep.subr.mxu0 0.0
    %234 = vmatpush1.msra.mxu0 0.0
    %235 = vmatprep.subr.mxu0 0.0
    %236 = vmatpush1.msra.mxu0 0.0
    %237 = vmatprep.subr.mxu0 0.0
    %238 = vmatpush1.msra.mxu0 0.0
    %239 = vmatprep.subr.mxu0 0.0
    %240 = vmatpush1.msra.mxu0 0.0
    %241 = vmatprep.subr.mxu0 0.0
    %242 = vmatpush1.msra.mxu0 0.0
    %243 = vmatprep.subr.mxu0 0.0
    %244 = vmatpush1.msra.mxu0 0.0
    %245 = vmatprep.subr.mxu0 0.0
    %246 = vmatpush1.msra.mxu0 0.0
    %247 = vmatprep.mubr.f32.mxu0 0.0
    %248 = vmatmul.mubr.f32.gmra.mrb[0].mxu0 %v159
    %v249 = vpop.f32.mrb[0].mxu0
    %v250 = vadd.f32 %v181, %v249
    %v251 = vpop.f32.mrb[0].mxu0
    %252 = vdwg.mxu0
    %v253 = vld [vmem:[%s1] sm:$0xff]
    %v254 = vld [vmem:[%s1 + $0x8] sm:$0xff]
    %v255 = vld [vmem:[%s1 + $0x10] sm:$0xff]
    %v256 = vld [vmem:[%s1 + $0x18] sm:$0xff]
    %v257 = vld [vmem:[%s1 + $0x20] sm:$0xff]
    %v258 = vld [vmem:[%s1 + $0x28] sm:$0xff]
    %v259 = vld [vmem:[%s1 + $0x30] sm:$0xff]
    %v260 = vld [vmem:[%s1 + $0x38] sm:$0xff]
    %v261 = vld [vmem:[%s1 + $0x40] sm:$0xff]
    %v262 = vld [vmem:[%s1 + $0x48] sm:$0xff]
    %v263 = vld [vmem:[%s1 + $0x50] sm:$0xff]
    %v264 = vld [vmem:[%s1 + $0x58] sm:$0xff]
    %v265 = vld [vmem:[%s1 + $0x60] sm:$0xff]
    %v266 = vld [vmem:[%s1 + $0x68] sm:$0xff]
    %v267 = vld [vmem:[%s1 + $0x70] sm:$0xff]
    %v268 = vld [vmem:[%s1 + $0x78] sm:$0xff]
    %269 = vmatprep.subr.mxu0 0.0
    %270 = vmatpush1.msra.mxu0 %v253
    %271 = vmatprep.subr.mxu0 0.0
    %272 = vmatpush1.msra.mxu0 %v254
    %273 = vmatprep.subr.mxu0 0.0
    %274 = vmatpush1.msra.mxu0 %v255
    %275 = vmatprep.subr.mxu0 0.0
    %276 = vmatpush1.msra.mxu0 %v256
    %277 = vmatprep.subr.mxu0 0.0
    %278 = vmatpush1.msra.mxu0 %v257
    %279 = vmatprep.subr.mxu0 0.0
    %280 = vmatpush1.msra.mxu0 %v258
    %281 = vmatprep.subr.mxu0 0.0
    %282 = vmatpush1.msra.mxu0 %v259
    %283 = vmatprep.subr.mxu0 0.0
    %284 = vmatpush1.msra.mxu0 %v260
    %285 = vmatprep.subr.mxu0 0.0
    %286 = vmatpush1.msra.mxu0 %v261
    %287 = vmatprep.subr.mxu0 0.0
    %288 = vmatpush1.msra.mxu0 %v262
    %289 = vmatprep.subr.mxu0 0.0
    %290 = vmatpush1.msra.mxu0 %v263
    %291 = vmatprep.subr.mxu0 0.0
    %292 = vmatpush1.msra.mxu0 %v264
    %293 = vmatprep.subr.mxu0 0.0
    %294 = vmatpush1.msra.mxu0 %v265
    %295 = vmatprep.subr.mxu0 0.0
    %296 = vmatpush1.msra.mxu0 %v266
    %297 = vmatprep.subr.mxu0 0.0
    %298 = vmatpush1.msra.mxu0 %v267
    %299 = vmatprep.subr.mxu0 0.0
    %300 = vmatpush1.msra.mxu0 %v268
    %301 = vmatprep.subr.mxu0 0.0
    %302 = vmatpush1.msra.mxu0 0.0
    %303 = vmatprep.subr.mxu0 0.0
    %304 = vmatpush1.msra.mxu0 0.0
    %305 = vmatprep.subr.mxu0 0.0
    %306 = vmatpush1.msra.mxu0 0.0
    %307 = vmatprep.subr.mxu0 0.0
    %308 = vmatpush1.msra.mxu0 0.0
    %309 = vmatprep.subr.mxu0 0.0
    %310 = vmatpush1.msra.mxu0 0.0
    %311 = vmatprep.subr.mxu0 0.0
    %312 = vmatpush1.msra.mxu0 0.0
    %313 = vmatprep.subr.mxu0 0.0
    %314 = vmatpush1.msra.mxu0 0.0
    %315 = vmatprep.subr.mxu0 0.0
    %316 = vmatpush1.msra.mxu0 0.0
    %317 = vmatprep.subr.mxu0 0.0
    %318 = vmatpush1.msra.mxu0 0.0
    %319 = vmatprep.subr.mxu0 0.0
    %320 = vmatpush1.msra.mxu0 0.0
    %321 = vmatprep.subr.mxu0 0.0
    %322 = vmatpush1.msra.mxu0 0.0
    %323 = vmatprep.subr.mxu0 0.0
    %324 = vmatpush1.msra.mxu0 0.0
    %325 = vmatprep.subr.mxu0 0.0
    %326 = vmatpush1.msra.mxu0 0.0
    %327 = vmatprep.subr.mxu0 0.0
    %328 = vmatpush1.msra.mxu0 0.0
    %329 = vmatprep.subr.mxu0 0.0
    %330 = vmatpush1.msra.mxu0 0.0
    %331 = vmatprep.subr.mxu0 0.0
    %332 = vmatpush1.msra.mxu0 0.0
    %333 = vmatprep.mubr.f32.mxu0 0.0
    %334 = vmatmul.mubr.f32.gmra.mrb[0].mxu0 %v250
    %v335 = vpop.f32.mrb[0].mxu0
    %v336 = vadd.f32 0.0, %v335
    %v337 = vpop.f32.mrb[0].mxu0
    %338 = vdwg.mxu0
    %v339 = vld [vmem:[%s6] sm:$0xff]
    %v340 = vld [vmem:[%s6 + $0x8] sm:$0xff]
    %v341 = vld [vmem:[%s6 + $0x10] sm:$0xff]
    %v342 = vld [vmem:[%s6 + $0x18] sm:$0xff]
    %v343 = vld [vmem:[%s6 + $0x20] sm:$0xff]
    %v344 = vld [vmem:[%s6 + $0x28] sm:$0xff]
    %v345 = vld [vmem:[%s6 + $0x30] sm:$0xff]
    %v346 = vld [vmem:[%s6 + $0x38] sm:$0xff]
    %v347 = vld [vmem:[%s6 + $0x40] sm:$0xff]
    %v348 = vld [vmem:[%s6 + $0x48] sm:$0xff]
    %v349 = vld [vmem:[%s6 + $0x50] sm:$0xff]
    %v350 = vld [vmem:[%s6 + $0x58] sm:$0xff]
    %v351 = vld [vmem:[%s6 + $0x60] sm:$0xff]
    %v352 = vld [vmem:[%s6 + $0x68] sm:$0xff]
    %v353 = vld [vmem:[%s6 + $0x70] sm:$0xff]
    %v354 = vld [vmem:[%s6 + $0x78] sm:$0xff]
    %355 = vmatprep.subr.mxu0 0.0
    %356 = vmatpush1.msra.mxu0 %v339
    %357 = vmatprep.subr.mxu0 0.0
    %358 = vmatpush1.msra.mxu0 %v340
    %359 = vmatprep.subr.mxu0 0.0
    %360 = vmatpush1.msra.mxu0 %v341
    %361 = vmatprep.subr.mxu0 0.0
    %362 = vmatpush1.msra.mxu0 %v342
    %363 = vmatprep.subr.mxu0 0.0
    %364 = vmatpush1.msra.mxu0 %v343
    %365 = vmatprep.subr.mxu0 0.0
    %366 = vmatpush1.msra.mxu0 %v344
    %367 = vmatprep.subr.mxu0 0.0
    %368 = vmatpush1.msra.mxu0 %v345
    %369 = vmatprep.subr.mxu0 0.0
    %370 = vmatpush1.msra.mxu0 %v346
    %371 = vmatprep.subr.mxu0 0.0
    %372 = vmatpush1.msra.mxu0 %v347
    %373 = vmatprep.subr.mxu0 0.0
    %374 = vmatpush1.msra.mxu0 %v348
    %375 = vmatprep.subr.mxu0 0.0
    %376 = vmatpush1.msra.mxu0 %v349
    %377 = vmatprep.subr.mxu0 0.0
    %378 = vmatpush1.msra.mxu0 %v350
    %379 = vmatprep.subr.mxu0 0.0
    %380 = vmatpush1.msra.mxu0 %v351
    %381 = vmatprep.subr.mxu0 0.0
    %382 = vmatpush1.msra.mxu0 %v352
    %383 = vmatprep.subr.mxu0 0.0
    %384 = vmatpush1.msra.mxu0 %v353
    %385 = vmatprep.subr.mxu0 0.0
    %386 = vmatpush1.msra.mxu0 %v354
    %387 = vmatprep.subr.mxu0 0.0
    %388 = vmatpush1.msra.mxu0 0.0
    %389 = vmatprep.subr.mxu0 0.0
    %390 = vmatpush1.msra.mxu0 0.0
    %391 = vmatprep.subr.mxu0 0.0
    %392 = vmatpush1.msra.mxu0 0.0
    %393 = vmatprep.subr.mxu0 0.0
    %394 = vmatpush1.msra.mxu0 0.0
    %395 = vmatprep.subr.mxu0 0.0
    %396 = vmatpush1.msra.mxu0 0.0
    %397 = vmatprep.subr.mxu0 0.0
    %398 = vmatpush1.msra.mxu0 0.0
    %399 = vmatprep.subr.mxu0 0.0
    %400 = vmatpush1.msra.mxu0 0.0
    %401 = vmatprep.subr.mxu0 0.0
    %402 = vmatpush1.msra.mxu0 0.0
    %403 = vmatprep.subr.mxu0 0.0
    %404 = vmatpush1.msra.mxu0 0.0
    %405 = vmatprep.subr.mxu0 0.0
    %406 = vmatpush1.msra.mxu0 0.0
    %407 = vmatprep.subr.mxu0 0.0
    %408 = vmatpush1.msra.mxu0 0.0
    %409 = vmatprep.subr.mxu0 0.0
    %410 = vmatpush1.msra.mxu0 0.0
    %411 = vmatprep.subr.mxu0 0.0
    %412 = vmatpush1.msra.mxu0 0.0
    %413 = vmatprep.subr.mxu0 0.0
    %414 = vmatpush1.msra.mxu0 0.0
    %415 = vmatprep.subr.mxu0 0.0
    %416 = vmatpush1.msra.mxu0 0.0
    %417 = vmatprep.subr.mxu0 0.0
    %418 = vmatpush1.msra.mxu0 0.0
    %419 = vmatprep.mubr.f32.mxu0 0.0
    %420 = vmatmul.mubr.f32.gmra.mrb[0].mxu0 %v336
    %v421 = vpop.f32.mrb[0].mxu0
    %v422 = vadd.f32 0.0, %v421
    %v423 = vpop.f32.mrb[0].mxu0
    %424 = vdwg.mxu0
    %v425 = vld [vmem:[%s7] sm:$0xff]
    %v426 = vld [vmem:[%s7 + $0x8] sm:$0xff]
    %v427 = vld [vmem:[%s7 + $0x10] sm:$0xff]
    %v428 = vld [vmem:[%s7 + $0x18] sm:$0xff]
    %v429 = vld [vmem:[%s7 + $0x20] sm:$0xff]
    %v430 = vld [vmem:[%s7 + $0x28] sm:$0xff]
    %v431 = vld [vmem:[%s7 + $0x30] sm:$0xff]
    %v432 = vld [vmem:[%s7 + $0x38] sm:$0xff]
    %v433 = vld [vmem:[%s7 + $0x40] sm:$0xff]
    %v434 = vld [vmem:[%s7 + $0x48] sm:$0xff]
    %v435 = vld [vmem:[%s7 + $0x50] sm:$0xff]
    %v436 = vld [vmem:[%s7 + $0x58] sm:$0xff]
    %v437 = vld [vmem:[%s7 + $0x60] sm:$0xff]
    %v438 = vld [vmem:[%s7 + $0x68] sm:$0xff]
    %v439 = vld [vmem:[%s7 + $0x70] sm:$0xff]
    %v440 = vld [vmem:[%s7 + $0x78] sm:$0xff]
    %441 = vmatprep.subr.mxu0 0.0
    %442 = vmatpush1.msra.mxu0 %v425
    %443 = vmatprep.subr.mxu0 0.0
    %444 = vmatpush1.msra.mxu0 %v426
    %445 = vmatprep.subr.mxu0 0.0
    %446 = vmatpush1.msra.mxu0 %v427
    %447 = vmatprep.subr.mxu0 0.0
    %448 = vmatpush1.msra.mxu0 %v428
    %449 = vmatprep.subr.mxu0 0.0
    %450 = vmatpush1.msra.mxu0 %v429
    %451 = vmatprep.subr.mxu0 0.0
    %452 = vmatpush1.msra.mxu0 %v430
    %453 = vmatprep.subr.mxu0 0.0
    %454 = vmatpush1.msra.mxu0 %v431
    %455 = vmatprep.subr.mxu0 0.0
    %456 = vmatpush1.msra.mxu0 %v432
    %457 = vmatprep.subr.mxu0 0.0
    %458 = vmatpush1.msra.mxu0 %v433
    %459 = vmatprep.subr.mxu0 0.0
    %460 = vmatpush1.msra.mxu0 %v434
    %461 = vmatprep.subr.mxu0 0.0
    %462 = vmatpush1.msra.mxu0 %v435
    %463 = vmatprep.subr.mxu0 0.0
    %464 = vmatpush1.msra.mxu0 %v436
    %465 = vmatprep.subr.mxu0 0.0
    %466 = vmatpush1.msra.mxu0 %v437
    %467 = vmatprep.subr.mxu0 0.0
    %468 = vmatpush1.msra.mxu0 %v438
    %469 = vmatprep.subr.mxu0 0.0
    %470 = vmatpush1.msra.mxu0 %v439
    %471 = vmatprep.subr.mxu0 0.0
    %472 = vmatpush1.msra.mxu0 %v440
    %473 = vmatprep.subr.mxu0 0.0
    %474 = vmatpush1.msra.mxu0 0.0
    %475 = vmatprep.subr.mxu0 0.0
    %476 = vmatpush1.msra.mxu0 0.0
    %477 = vmatprep.subr.mxu0 0.0
    %478 = vmatpush1.msra.mxu0 0.0
    %479 = vmatprep.subr.mxu0 0.0
    %480 = vmatpush1.msra.mxu0 0.0
    %481 = vmatprep.subr.mxu0 0.0
    %482 = vmatpush1.msra.mxu0 0.0
    %483 = vmatprep.subr.mxu0 0.0
    %484 = vmatpush1.msra.mxu0 0.0
    %485 = vmatprep.subr.mxu0 0.0
    %486 = vmatpush1.msra.mxu0 0.0
    %487 = vmatprep.subr.mxu0 0.0
    %488 = vmatpush1.msra.mxu0 0.0
    %489 = vmatprep.subr.mxu0 0.0
    %490 = vmatpush1.msra.mxu0 0.0
    %491 = vmatprep.subr.mxu0 0.0
    %492 = vmatpush1.msra.mxu0 0.0
    %493 = vmatprep.subr.mxu0 0.0
    %494 = vmatpush1.msra.mxu0 0.0
    %495 = vmatprep.subr.mxu0 0.0
    %496 = vmatpush1.msra.mxu0 0.0
    %497 = vmatprep.subr.mxu0 0.0
    %498 = vmatpush1.msra.mxu0 0.0
    %499 = vmatprep.subr.mxu0 0.0
    %500 = vmatpush1.msra.mxu0 0.0
    %501 = vmatprep.subr.mxu0 0.0
    %502 = vmatpush1.msra.mxu0 0.0
    %503 = vmatprep.subr.mxu0 0.0
    %504 = vmatpush1.msra.mxu0 0.0
    %505 = vmatprep.mubr.f32.mxu0 0.0
    %506 = vmatmul.mubr.f32.gmra.mrb[0].mxu0 %v336
    %v507 = vpop.f32.mrb[0].mxu0
    %v508 = vadd.f32 0.0, %v507
    %v509 = vpop.f32.mrb[0].mxu0
    %510 = vdwg.mxu0
    %v511 = vld [vmem:[%s8] sm:$0xff]
    %v512 = vld [vmem:[%s8 + $0x8] sm:$0xff]
    %v513 = vld [vmem:[%s8 + $0x10] sm:$0xff]
    %v514 = vld [vmem:[%s8 + $0x18] sm:$0xff]
    %v515 = vld [vmem:[%s8 + $0x20] sm:$0xff]
    %v516 = vld [vmem:[%s8 + $0x28] sm:$0xff]
    %v517 = vld [vmem:[%s8 + $0x30] sm:$0xff]
    %v518 = vld [vmem:[%s8 + $0x38] sm:$0xff]
    %v519 = vld [vmem:[%s8 + $0x40] sm:$0xff]
    %v520 = vld [vmem:[%s8 + $0x48] sm:$0xff]
    %v521 = vld [vmem:[%s8 + $0x50] sm:$0xff]
    %v522 = vld [vmem:[%s8 + $0x58] sm:$0xff]
    %v523 = vld [vmem:[%s8 + $0x60] sm:$0xff]
    %v524 = vld [vmem:[%s8 + $0x68] sm:$0xff]
    %v525 = vld [vmem:[%s8 + $0x70] sm:$0xff]
    %v526 = vld [vmem:[%s8 + $0x78] sm:$0xff]
    %527 = vmatprep.subr.mxu0 0.0
    %528 = vmatpush1.msra.mxu0 %v511
    %529 = vmatprep.subr.mxu0 0.0
    %530 = vmatpush1.msra.mxu0 %v512
    %531 = vmatprep.subr.mxu0 0.0
    %532 = vmatpush1.msra.mxu0 %v513
    %533 = vmatprep.subr.mxu0 0.0
    %534 = vmatpush1.msra.mxu0 %v514
    %535 = vmatprep.subr.mxu0 0.0
    %536 = vmatpush1.msra.mxu0 %v515
    %537 = vmatprep.subr.mxu0 0.0
    %538 = vmatpush1.msra.mxu0 %v516
    %539 = vmatprep.subr.mxu0 0.0
    %540 = vmatpush1.msra.mxu0 %v517
    %541 = vmatprep.subr.mxu0 0.0
    %542 = vmatpush1.msra.mxu0 %v518
    %543 = vmatprep.subr.mxu0 0.0
    %544 = vmatpush1.msra.mxu0 %v519
    %545 = vmatprep.subr.mxu0 0.0
    %546 = vmatpush1.msra.mxu0 %v520
    %547 = vmatprep.subr.mxu0 0.0
    %548 = vmatpush1.msra.mxu0 %v521
    %549 = vmatprep.subr.mxu0 0.0
    %550 = vmatpush1.msra.mxu0 %v522
    %551 = vmatprep.subr.mxu0 0.0
    %552 = vmatpush1.msra.mxu0 %v523
    %553 = vmatprep.subr.mxu0 0.0
    %554 = vmatpush1.msra.mxu0 %v524
    %555 = vmatprep.subr.mxu0 0.0
    %556 = vmatpush1.msra.mxu0 %v525
    %557 = vmatprep.subr.mxu0 0.0
    %558 = vmatpush1.msra.mxu0 %v526
    %559 = vmatprep.subr.mxu0 0.0
    %560 = vmatpush1.msra.mxu0 0.0
    %561 = vmatprep.subr.mxu0 0.0
    %562 = vmatpush1.msra.mxu0 0.0
    %563 = vmatprep.subr.mxu0 0.0
    %564 = vmatpush1.msra.mxu0 0.0
    %565 = vmatprep.subr.mxu0 0.0
    %566 = vmatpush1.msra.mxu0 0.0
    %567 = vmatprep.subr.mxu0 0.0
    %568 = vmatpush1.msra.mxu0 0.0
    %569 = vmatprep.subr.mxu0 0.0
    %570 = vmatpush1.msra.mxu0 0.0
    %571 = vmatprep.subr.mxu0 0.0
    %572 = vmatpush1.msra.mxu0 0.0
    %573 = vmatprep.subr.mxu0 0.0
    %574 = vmatpush1.msra.mxu0 0.0
    %575 = vmatprep.subr.mxu0 0.0
    %576 = vmatpush1.msra.mxu0 0.0
    %577 = vmatprep.subr.mxu0 0.0
    %578 = vmatpush1.msra.mxu0 0.0
    %579 = vmatprep.subr.mxu0 0.0
    %580 = vmatpush1.msra.mxu0 0.0
    %581 = vmatprep.subr.mxu0 0.0
    %582 = vmatpush1.msra.mxu0 0.0
    %583 = vmatprep.subr.mxu0 0.0
    %584 = vmatpush1.msra.mxu0 0.0
    %585 = vmatprep.subr.mxu0 0.0
    %586 = vmatpush1.msra.mxu0 0.0
    %587 = vmatprep.subr.mxu0 0.0
    %588 = vmatpush1.msra.mxu0 0.0
    %589 = vmatprep.subr.mxu0 0.0
    %590 = vmatpush1.msra.mxu0 0.0
    %591 = vmatprep.mubr.f32.mxu0 0.0
    %592 = vmatmul.mubr.f32.gmra.mrb[0].mxu0 %v336
    %v593 = vpop.f32.mrb[0].mxu0
    %v594 = vadd.f32 0.0, %v593
    %v595 = vpop.f32.mrb[0].mxu0
    %596 = vdwg.mxu0
    %v599 = vunpack.c.l.s4 1966171168
    %v600 = vunpack.c.0.s8 %v599
    %v601 = vlaneseq
    %v602 = vshrl.u32 %v601, 7
    %v603 = vsub.s32 %v600, %v602
    %v604 = vrot.slane %v422, %v603
    %v605 = vcombine.high %v604, %v604
    %v607 = vunpack.c.l.s4 1966171168
    %v608 = vunpack.c.0.s8 %v607
    %v609 = vlaneseq
    %v610 = vshrl.u32 %v609, 7
    %v611 = vsub.s32 %v608, %v610
    %v612 = vrot.slane %v604, %v611
    %v614 = vunpack.c.l.s4 1966171168
    %v615 = vunpack.c.0.s8 %v614
    %v616 = vlaneseq
    %v617 = vshrl.u32 %v616, 7
    %v618 = vsub.s32 %v615, %v617
    %v619 = vrot.slane %v605, %v618
    %vm622 = vcmask 253952
    %623 = vst.msk [vmem:[#allocation2] sm:$0x1] %vm622, %v612
    %624 = vst.msk [vmem:[#allocation2 + $0x4] sm:$0x1] %vm622, %v619
    %v627 = vunpack.c.l.s4 1966171168
    %v628 = vunpack.c.0.s8 %v627
    %v629 = vlaneseq
    %v630 = vshrl.u32 %v629, 7
    %v631 = vsub.s32 %v628, %v630
    %v632 = vrot.slane %v508, %v631
    %v633 = vcombine.high %v632, %v632
    %v635 = vunpack.c.l.s4 1966171168
    %v636 = vunpack.c.0.s8 %v635
    %v637 = vlaneseq
    %v638 = vshrl.u32 %v637, 7
    %v639 = vsub.s32 %v636, %v638
    %v640 = vrot.slane %v632, %v639
    %v642 = vunpack.c.l.s4 1966171168
    %v643 = vunpack.c.0.s8 %v642
    %v644 = vlaneseq
    %v645 = vshrl.u32 %v644, 7
    %v646 = vsub.s32 %v643, %v645
    %v647 = vrot.slane %v633, %v646
    %650 = vst.msk [vmem:[#allocation3] sm:$0x1] %vm622, %v640
    %651 = vst.msk [vmem:[#allocation3 + $0x4] sm:$0x1] %vm622, %v647
    %v654 = vunpack.c.l.s4 1966171168
    %v655 = vunpack.c.0.s8 %v654
    %v656 = vlaneseq
    %v657 = vshrl.u32 %v656, 7
    %v658 = vsub.s32 %v655, %v657
    %v659 = vrot.slane %v594, %v658
    %v660 = vcombine.high %v659, %v659
    %v662 = vunpack.c.l.s4 1966171168
    %v663 = vunpack.c.0.s8 %v662
    %v664 = vlaneseq
    %v665 = vshrl.u32 %v664, 7
    %v666 = vsub.s32 %v663, %v665
    %v667 = vrot.slane %v659, %v666
    %v669 = vunpack.c.l.s4 1966171168
    %v670 = vunpack.c.0.s8 %v669
    %v671 = vlaneseq
    %v672 = vshrl.u32 %v671, 7
    %v673 = vsub.s32 %v670, %v672
    %v674 = vrot.slane %v660, %v673
    %677 = vst.msk [vmem:[#allocation4] sm:$0x1] %vm622, %v667
    %678 = vst.msk [vmem:[#allocation4 + $0x4] sm:$0x1] %vm622, %v674
    %v679 = vlaneseq
    %v680 = vshrl.u32 %v679, 7
    %v681 = vsub.s32 0, %v680
    %v682 = vrot.slane %v612, %v681
    %v683 = vlaneseq
    %v684 = vshrl.u32 %v683, 7
    %v685 = vsub.s32 0, %v684
    %v686 = vrot.slane %v619, %v685
    %687 = vrot.lane.b32.xlu0 %v682, 96
    %v688 = vpop.permute.xlu0 %687
    %689 = vrot.lane.b32.xlu0 %v686, 96
    %v690 = vpop.permute.xlu0 %689
    %693 = vst.msk [vmem:[#allocation2 + $0x1] sm:$0x1] %vm622, %v688
    %694 = vst.msk [vmem:[#allocation2 + $0x5] sm:$0x1] %vm622, %v690
    %v695 = vlaneseq
    %v696 = vshrl.u32 %v695, 7
    %v697 = vsub.s32 0, %v696
    %v698 = vrot.slane %v640, %v697
    %v699 = vlaneseq
    %v700 = vshrl.u32 %v699, 7
    %v701 = vsub.s32 0, %v700
    %v702 = vrot.slane %v647, %v701
    %703 = vrot.lane.b32.xlu0 %v698, 96
    %v704 = vpop.permute.xlu0 %703
    %705 = vrot.lane.b32.xlu0 %v702, 96
    %v706 = vpop.permute.xlu0 %705
    %709 = vst.msk [vmem:[#allocation3 + $0x1] sm:$0x1] %vm622, %v704
    %710 = vst.msk [vmem:[#allocation3 + $0x5] sm:$0x1] %vm622, %v706
    %v711 = vlaneseq
    %v712 = vshrl.u32 %v711, 7
    %v713 = vsub.s32 0, %v712
    %v714 = vrot.slane %v667, %v713
    %v715 = vlaneseq
    %v716 = vshrl.u32 %v715, 7
    %v717 = vsub.s32 0, %v716
    %v718 = vrot.slane %v674, %v717
    %719 = vrot.lane.b32.xlu0 %v714, 96
    %v720 = vpop.permute.xlu0 %719
    %721 = vrot.lane.b32.xlu0 %v718, 96
    %v722 = vpop.permute.xlu0 %721
    %725 = vst.msk [vmem:[#allocation4 + $0x1] sm:$0x1] %vm622, %v720
    %726 = vst.msk [vmem:[#allocation4 + $0x5] sm:$0x1] %vm622, %v722
    %727 = vrot.lane.b32.xlu0 %v682, 64
    %v728 = vpop.permute.xlu0 %727
    %729 = vrot.lane.b32.xlu0 %v686, 64
    %v730 = vpop.permute.xlu0 %729
    %733 = vst.msk [vmem:[#allocation2 + $0x2] sm:$0x1] %vm622, %v728
    %734 = vst.msk [vmem:[#allocation2 + $0x6] sm:$0x1] %vm622, %v730
    %735 = vrot.lane.b32.xlu0 %v698, 64
    %v736 = vpop.permute.xlu0 %735
    %737 = vrot.lane.b32.xlu0 %v702, 64
    %v738 = vpop.permute.xlu0 %737
    %741 = vst.msk [vmem:[#allocation3 + $0x2] sm:$0x1] %vm622, %v736
    %742 = vst.msk [vmem:[#allocation3 + $0x6] sm:$0x1] %vm622, %v738
    %743 = vrot.lane.b32.xlu0 %v714, 64
    %v744 = vpop.permute.xlu0 %743
    %745 = vrot.lane.b32.xlu0 %v718, 64
    %v746 = vpop.permute.xlu0 %745
    %749 = vst.msk [vmem:[#allocation4 + $0x2] sm:$0x1] %vm622, %v744
    %750 = vst.msk [vmem:[#allocation4 + $0x6] sm:$0x1] %vm622, %v746
    %751 = vrot.lane.b32.xlu0 %v682, 32
    %v752 = vpop.permute.xlu0 %751
    %753 = vrot.lane.b32.xlu0 %v686, 32
    %v754 = vpop.permute.xlu0 %753
    %757 = vst.msk [vmem:[#allocation2 + $0x3] sm:$0x1] %vm622, %v752
    %758 = vst.msk [vmem:[#allocation2 + $0x7] sm:$0x1] %vm622, %v754
    %759 = vrot.lane.b32.xlu0 %v698, 32
    %v760 = vpop.permute.xlu0 %759
    %761 = vrot.lane.b32.xlu0 %v702, 32
    %v762 = vpop.permute.xlu0 %761
    %765 = vst.msk [vmem:[#allocation3 + $0x3] sm:$0x1] %vm622, %v760
    %766 = vst.msk [vmem:[#allocation3 + $0x7] sm:$0x1] %vm622, %v762
    %767 = vrot.lane.b32.xlu0 %v714, 32
    %v768 = vpop.permute.xlu0 %767
    %769 = vrot.lane.b32.xlu0 %v718, 32
    %v770 = vpop.permute.xlu0 %769
    %773 = vst.msk [vmem:[#allocation4 + $0x3] sm:$0x1] %vm622, %v768
    %774 = vst.msk [vmem:[#allocation4 + $0x7] sm:$0x1] %vm622, %v770
    %v775 = vld [vmem:[#allocation2] sm:$0xf]
    %v776 = vld [vmem:[#allocation3] sm:$0xf]
    %v777 = vld [vmem:[#allocation4] sm:$0xf]
    %vm778 = vcmask 64512
    %v780 = vsel %vm778, %v775, 0
    %v783 = vsel %vm778, %v776, 0
    %785 = vmatprep.subr.mxu0 0.0
    %786 = vmatpush1.xpose.msra.mxu0 %v783
    %787 = vmatprep.subr.mxu0 0.0
    %788 = vmatpush1.xpose.msra.mxu0 0.0
    %789 = vmatprep.subr.mxu0 0.0
    %790 = vmatpush1.xpose.msra.mxu0 0.0
    %791 = vmatprep.subr.mxu0 0.0
    %792 = vmatpush1.xpose.msra.mxu0 0.0
    %793 = vmatprep.subr.mxu0 0.0
    %794 = vmatpush1.xpose.msra.mxu0 0.0
    %795 = vmatprep.subr.mxu0 0.0
    %796 = vmatpush1.xpose.msra.mxu0 0.0
    %797 = vmatprep.subr.mxu0 0.0
    %798 = vmatpush1.xpose.msra.mxu0 0.0
    %799 = vmatprep.subr.mxu0 0.0
    %800 = vmatpush1.xpose.msra.mxu0 0.0
    %801 = vmatprep.subr.mxu0 0.0
    %802 = vmatpush1.xpose.msra.mxu0 0.0
    %803 = vmatprep.subr.mxu0 0.0
    %804 = vmatpush1.xpose.msra.mxu0 0.0
    %805 = vmatprep.subr.mxu0 0.0
    %806 = vmatpush1.xpose.msra.mxu0 0.0
    %807 = vmatprep.subr.mxu0 0.0
    %808 = vmatpush1.xpose.msra.mxu0 0.0
    %809 = vmatprep.subr.mxu0 0.0
    %810 = vmatpush1.xpose.msra.mxu0 0.0
    %811 = vmatprep.subr.mxu0 0.0
    %812 = vmatpush1.xpose.msra.mxu0 0.0
    %813 = vmatprep.subr.mxu0 0.0
    %814 = vmatpush1.xpose.msra.mxu0 0.0
    %815 = vmatprep.subr.mxu0 0.0
    %816 = vmatpush1.xpose.msra.mxu0 0.0
    %817 = vmatprep.subr.mxu0 0.0
    %818 = vmatpush1.xpose.msra.mxu0 0.0
    %819 = vmatprep.subr.mxu0 0.0
    %820 = vmatpush1.xpose.msra.mxu0 0.0
    %821 = vmatprep.subr.mxu0 0.0
    %822 = vmatpush1.xpose.msra.mxu0 0.0
    %823 = vmatprep.subr.mxu0 0.0
    %824 = vmatpush1.xpose.msra.mxu0 0.0
    %825 = vmatprep.subr.mxu0 0.0
    %826 = vmatpush1.xpose.msra.mxu0 0.0
    %827 = vmatprep.subr.mxu0 0.0
    %828 = vmatpush1.xpose.msra.mxu0 0.0
    %829 = vmatprep.subr.mxu0 0.0
    %830 = vmatpush1.xpose.msra.mxu0 0.0
    %831 = vmatprep.subr.mxu0 0.0
    %832 = vmatpush1.xpose.msra.mxu0 0.0
    %833 = vmatprep.subr.mxu0 0.0
    %834 = vmatpush1.xpose.msra.mxu0 0.0
    %835 = vmatprep.subr.mxu0 0.0
    %836 = vmatpush1.xpose.msra.mxu0 0.0
    %837 = vmatprep.subr.mxu0 0.0
    %838 = vmatpush1.xpose.msra.mxu0 0.0
    %839 = vmatprep.subr.mxu0 0.0
    %840 = vmatpush1.xpose.msra.mxu0 0.0
    %841 = vmatprep.subr.mxu0 0.0
    %842 = vmatpush1.xpose.msra.mxu0 0.0
    %843 = vmatprep.subr.mxu0 0.0
    %844 = vmatpush1.xpose.msra.mxu0 0.0
    %845 = vmatprep.subr.mxu0 0.0
    %846 = vmatpush1.xpose.msra.mxu0 0.0
    %847 = vmatprep.subr.mxu0 0.0
    %848 = vmatpush1.xpose.msra.mxu0 0.0
    %849 = vmatprep.mubr.f32.mxu0 0.0
    %850 = vmatmul.mubr.f32.gmra.mrb[0].mxu0 %v780
    %v851 = vpop.f32.mrb[0].mxu0
    %v852 = vadd.f32 0.0, %v851
    %v853 = vpop.f32.mrb[0].mxu0
    %854 = vdwg.mxu0
    %v855 = vmul.f32 %v852, 0.35355338
    %vm856 = vcmask 27648
    %v857 = vsel %vm856, %v855, -inf
    %858 = vmax.xlane.f32.xlu0 %v857
    %v859 = vpop.xlane.xlu0 %858
    %v860 = vsub.f32 %v855, %v859
    %v861 = vmul.f32 %v860, 1.442695
    %v862 = vpow.pop %v861
    %v863 = vsel %vm856, %v862, 0.0
    %864 = vadd.xlane.f32.xlu0 %v863
    %v865 = vpop.xlane.xlu0 %864
    %v866 = vrcp.pop %v865
    %v867 = vmul.f32 %v862, %v866
    %vm868 = vcmask 31744
    %v870 = vsel %vm868, %v867, 0
    %vm872 = vcmask 1043456
    %v874 = vsel %vm872, %v777, 0
    %876 = vmatprep.subr.mxu0 0.0
    %877 = vmatpush1.msra.mxu0 %v874
    %878 = vmatprep.subr.mxu0 0.0
    %879 = vmatpush1.msra.mxu0 0.0
    %880 = vmatprep.subr.mxu0 0.0
    %881 = vmatpush1.msra.mxu0 0.0
    %882 = vmatprep.subr.mxu0 0.0
    %883 = vmatpush1.msra.mxu0 0.0
    %884 = vmatprep.subr.mxu0 0.0
    %885 = vmatpush1.msra.mxu0 0.0
    %886 = vmatprep.subr.mxu0 0.0
    %887 = vmatpush1.msra.mxu0 0.0
    %888 = vmatprep.subr.mxu0 0.0
    %889 = vmatpush1.msra.mxu0 0.0
    %890 = vmatprep.subr.mxu0 0.0
    %891 = vmatpush1.msra.mxu0 0.0
    %892 = vmatprep.subr.mxu0 0.0
    %893 = vmatpush1.msra.mxu0 0.0
    %894 = vmatprep.subr.mxu0 0.0
    %895 = vmatpush1.msra.mxu0 0.0
    %896 = vmatprep.subr.mxu0 0.0
    %897 = vmatpush1.msra.mxu0 0.0
    %898 = vmatprep.subr.mxu0 0.0
    %899 = vmatpush1.msra.mxu0 0.0
    %900 = vmatprep.subr.mxu0 0.0
    %901 = vmatpush1.msra.mxu0 0.0
    %902 = vmatprep.subr.mxu0 0.0
    %903 = vmatpush1.msra.mxu0 0.0
    %904 = vmatprep.subr.mxu0 0.0
    %905 = vmatpush1.msra.mxu0 0.0
    %906 = vmatprep.subr.mxu0 0.0
    %907 = vmatpush1.msra.mxu0 0.0
    %908 = vmatprep.subr.mxu0 0.0
    %909 = vmatpush1.msra.mxu0 0.0
    %910 = vmatprep.subr.mxu0 0.0
    %911 = vmatpush1.msra.mxu0 0.0
    %912 = vmatprep.subr.mxu0 0.0
    %913 = vmatpush1.msra.mxu0 0.0
    %914 = vmatprep.subr.mxu0 0.0
    %915 = vmatpush1.msra.mxu0 0.0
    %916 = vmatprep.subr.mxu0 0.0
    %917 = vmatpush1.msra.mxu0 0.0
    %918 = vmatprep.subr.mxu0 0.0
    %919 = vmatpush1.msra.mxu0 0.0
    %920 = vmatprep.subr.mxu0 0.0
    %921 = vmatpush1.msra.mxu0 0.0
    %922 = vmatprep.subr.mxu0 0.0
    %923 = vmatpush1.msra.mxu0 0.0
    %924 = vmatprep.subr.mxu0 0.0
    %925 = vmatpush1.msra.mxu0 0.0
    %926 = vmatprep.subr.mxu0 0.0
    %927 = vmatpush1.msra.mxu0 0.0
    %928 = vmatprep.subr.mxu0 0.0
    %929 = vmatpush1.msra.mxu0 0.0
    %930 = vmatprep.subr.mxu0 0.0
    %931 = vmatpush1.msra.mxu0 0.0
    %932 = vmatprep.subr.mxu0 0.0
    %933 = vmatpush1.msra.mxu0 0.0
    %934 = vmatprep.subr.mxu0 0.0
    %935 = vmatpush1.msra.mxu0 0.0
    %936 = vmatprep.subr.mxu0 0.0
    %937 = vmatpush1.msra.mxu0 0.0
    %938 = vmatprep.subr.mxu0 0.0
    %939 = vmatpush1.msra.mxu0 0.0
    %940 = vmatprep.mubr.f32.mxu0 0.0
    %941 = vmatmul.mubr.f32.gmra.mrb[0].mxu0 %v870
    %v942 = vpop.f32.mrb[0].mxu0
    %v943 = vadd.f32 0.0, %v942
    %v944 = vpop.f32.mrb[0].mxu0
    %945 = vdwg.mxu0
    %vm946 = vcmask 60416
    %947 = vst.msk [vmem:[#allocation5] sm:$0xf] %vm946, %v943
    %948 = vrot.lane.b32.xlu0 %v775, 120
    %v949 = vpop.permute.xlu0 %948
    %950 = vrot.lane.b32.xlu0 %v776, 120
    %v951 = vpop.permute.xlu0 %950
    %v952 = vsel %vm778, %v949, 0
    %v954 = vsel %vm778, %v951, 0
    %956 = vmatprep.subr.mxu0 0.0
    %957 = vmatpush1.xpose.msra.mxu0 %v954
    %958 = vmatprep.subr.mxu0 0.0
    %959 = vmatpush1.xpose.msra.mxu0 0.0
    %960 = vmatprep.subr.mxu0 0.0
    %961 = vmatpush1.xpose.msra.mxu0 0.0
    %962 = vmatprep.subr.mxu0 0.0
    %963 = vmatpush1.xpose.msra.mxu0 0.0
    %964 = vmatprep.subr.mxu0 0.0
    %965 = vmatpush1.xpose.msra.mxu0 0.0
    %966 = vmatprep.subr.mxu0 0.0
    %967 = vmatpush1.xpose.msra.mxu0 0.0
    %968 = vmatprep.subr.mxu0 0.0
    %969 = vmatpush1.xpose.msra.mxu0 0.0
    %970 = vmatprep.subr.mxu0 0.0
    %971 = vmatpush1.xpose.msra.mxu0 0.0
    %972 = vmatprep.subr.mxu0 0.0
    %973 = vmatpush1.xpose.msra.mxu0 0.0
    %974 = vmatprep.subr.mxu0 0.0
    %975 = vmatpush1.xpose.msra.mxu0 0.0
    %976 = vmatprep.subr.mxu0 0.0
    %977 = vmatpush1.xpose.msra.mxu0 0.0
    %978 = vmatprep.subr.mxu0 0.0
    %979 = vmatpush1.xpose.msra.mxu0 0.0
    %980 = vmatprep.subr.mxu0 0.0
    %981 = vmatpush1.xpose.msra.mxu0 0.0
    %982 = vmatprep.subr.mxu0 0.0
    %983 = vmatpush1.xpose.msra.mxu0 0.0
    %984 = vmatprep.subr.mxu0 0.0
    %985 = vmatpush1.xpose.msra.mxu0 0.0
    %986 = vmatprep.subr.mxu0 0.0
    %987 = vmatpush1.xpose.msra.mxu0 0.0
    %988 = vmatprep.subr.mxu0 0.0
    %989 = vmatpush1.xpose.msra.mxu0 0.0
    %990 = vmatprep.subr.mxu0 0.0
    %991 = vmatpush1.xpose.msra.mxu0 0.0
    %992 = vmatprep.subr.mxu0 0.0
    %993 = vmatpush1.xpose.msra.mxu0 0.0
    %994 = vmatprep.subr.mxu0 0.0
    %995 = vmatpush1.xpose.msra.mxu0 0.0
    %996 = vmatprep.subr.mxu0 0.0
    %997 = vmatpush1.xpose.msra.mxu0 0.0
    %998 = vmatprep.subr.mxu0 0.0
    %999 = vmatpush1.xpose.msra.mxu0 0.0
    %1000 = vmatprep.subr.mxu0 0.0
    %1001 = vmatpush1.xpose.msra.mxu0 0.0
    %1002 = vmatprep.subr.mxu0 0.0
    %1003 = vmatpush1.xpose.msra.mxu0 0.0
    %1004 = vmatprep.subr.mxu0 0.0
    %1005 = vmatpush1.xpose.msra.mxu0 0.0
    %1006 = vmatprep.subr.mxu0 0.0
    %1007 = vmatpush1.xpose.msra.mxu0 0.0
    %1008 = vmatprep.subr.mxu0 0.0
    %1009 = vmatpush1.xpose.msra.mxu0 0.0
    %1010 = vmatprep.subr.mxu0 0.0
    %1011 = vmatpush1.xpose.msra.mxu0 0.0
    %1012 = vmatprep.subr.mxu0 0.0
    %1013 = vmatpush1.xpose.msra.mxu0 0.0
    %1014 = vmatprep.subr.mxu0 0.0
    %1015 = vmatpush1.xpose.msra.mxu0 0.0
    %1016 = vmatprep.subr.mxu0 0.0
    %1017 = vmatpush1.xpose.msra.mxu0 0.0
    %1018 = vmatprep.subr.mxu0 0.0
    %1019 = vmatpush1.xpose.msra.mxu0 0.0
    %1020 = vmatprep.mubr.f32.mxu0 0.0
    %1021 = vmatmul.mubr.f32.gmra.mrb[0].mxu0 %v952
    %v1022 = vpop.f32.mrb[0].mxu0
    %v1023 = vadd.f32 0.0, %v1022
    %v1024 = vpop.f32.mrb[0].mxu0
    %1025 = vdwg.mxu0
    %v1026 = vmul.f32 %v1023, 0.35355338
    %v1027 = vsel %vm856, %v1026, -inf
    %1028 = vmax.xlane.f32.xlu0 %v1027
    %v1029 = vpop.xlane.xlu0 %1028
    %v1030 = vsub.f32 %v1026, %v1029
    %v1031 = vmul.f32 %v1030, 1.442695
    %v1032 = vpow.pop %v1031
    %v1033 = vsel %vm856, %v1032, 0.0
    %1034 = vadd.xlane.f32.xlu0 %v1033
    %v1035 = vpop.xlane.xlu0 %1034
    %v1036 = vrcp.pop %v1035
    %v1037 = vmul.f32 %v1032, %v1036
    %1038 = vrot.lane.b32.xlu0 %v777, 120
    %v1039 = vpop.permute.xlu0 %1038
    %v1041 = vsel %vm868, %v1037, 0
    %v1043 = vsel %vm872, %v1039, 0
    %1045 = vmatprep.subr.mxu0 0.0
    %1046 = vmatpush1.msra.mxu0 %v1043
    %1047 = vmatprep.subr.mxu0 0.0
    %1048 = vmatpush1.msra.mxu0 0.0
    %1049 = vmatprep.subr.mxu0 0.0
    %1050 = vmatpush1.msra.mxu0 0.0
    %1051 = vmatprep.subr.mxu0 0.0
    %1052 = vmatpush1.msra.mxu0 0.0
    %1053 = vmatprep.subr.mxu0 0.0
    %1054 = vmatpush1.msra.mxu0 0.0
    %1055 = vmatprep.subr.mxu0 0.0
    %1056 = vmatpush1.msra.mxu0 0.0
    %1057 = vmatprep.subr.mxu0 0.0
    %1058 = vmatpush1.msra.mxu0 0.0
    %1059 = vmatprep.subr.mxu0 0.0
    %1060 = vmatpush1.msra.mxu0 0.0
    %1061 = vmatprep.subr.mxu0 0.0
    %1062 = vmatpush1.msra.mxu0 0.0
    %1063 = vmatprep.subr.mxu0 0.0
    %1064 = vmatpush1.msra.mxu0 0.0
    %1065 = vmatprep.subr.mxu0 0.0
    %1066 = vmatpush1.msra.mxu0 0.0
    %1067 = vmatprep.subr.mxu0 0.0
    %1068 = vmatpush1.msra.mxu0 0.0
    %1069 = vmatprep.subr.mxu0 0.0
    %1070 = vmatpush1.msra.mxu0 0.0
    %1071 = vmatprep.subr.mxu0 0.0
    %1072 = vmatpush1.msra.mxu0 0.0
    %1073 = vmatprep.subr.mxu0 0.0
    %1074 = vmatpush1.msra.mxu0 0.0
    %1075 = vmatprep.subr.mxu0 0.0
    %1076 = vmatpush1.msra.mxu0 0.0
    %1077 = vmatprep.subr.mxu0 0.0
    %1078 = vmatpush1.msra.mxu0 0.0
    %1079 = vmatprep.subr.mxu0 0.0
    %1080 = vmatpush1.msra.mxu0 0.0
    %1081 = vmatprep.subr.mxu0 0.0
    %1082 = vmatpush1.msra.mxu0 0.0
    %1083 = vmatprep.subr.mxu0 0.0
    %1084 = vmatpush1.msra.mxu0 0.0
    %1085 = vmatprep.subr.mxu0 0.0
    %1086 = vmatpush1.msra.mxu0 0.0
    %1087 = vmatprep.subr.mxu0 0.0
    %1088 = vmatpush1.msra.mxu0 0.0
    %1089 = vmatprep.subr.mxu0 0.0
    %1090 = vmatpush1.msra.mxu0 0.0
    %1091 = vmatprep.subr.mxu0 0.0
    %1092 = vmatpush1.msra.mxu0 0.0
    %1093 = vmatprep.subr.mxu0 0.0
    %1094 = vmatpush1.msra.mxu0 0.0
    %1095 = vmatprep.subr.mxu0 0.0
    %1096 = vmatpush1.msra.mxu0 0.0
    %1097 = vmatprep.subr.mxu0 0.0
    %1098 = vmatpush1.msra.mxu0 0.0
    %1099 = vmatprep.subr.mxu0 0.0
    %1100 = vmatpush1.msra.mxu0 0.0
    %1101 = vmatprep.subr.mxu0 0.0
    %1102 = vmatpush1.msra.mxu0 0.0
    %1103 = vmatprep.subr.mxu0 0.0
    %1104 = vmatpush1.msra.mxu0 0.0
    %1105 = vmatprep.subr.mxu0 0.0
    %1106 = vmatpush1.msra.mxu0 0.0
    %1107 = vmatprep.subr.mxu0 0.0
    %1108 = vmatpush1.msra.mxu0 0.0
    %1109 = vmatprep.mubr.f32.mxu0 0.0
    %1110 = vmatmul.mubr.f32.gmra.mrb[0].mxu0 %v1041
    %v1111 = vpop.f32.mrb[0].mxu0
    %v1112 = vadd.f32 0.0, %v1111
    %v1113 = vpop.f32.mrb[0].mxu0
    %1114 = vdwg.mxu0
    %1116 = vrot.lane.b32.xlu0 %v1112, 8
    %v1117 = vpop.permute.xlu0 %1116
    %vm1119 = vcmask 126016
    %1120 = vst.msk [vmem:[#allocation5] sm:$0xf] %vm1119, %v1117
    %1121 = vrot.lane.b32.xlu0 %v775, 112
    %v1122 = vpop.permute.xlu0 %1121
    %1123 = vrot.lane.b32.xlu0 %v776, 112
    %v1124 = vpop.permute.xlu0 %1123
    %v1125 = vsel %vm778, %v1122, 0
    %v1127 = vsel %vm778, %v1124, 0
    %1129 = vmatprep.subr.mxu0 0.0
    %1130 = vmatpush1.xpose.msra.mxu0 %v1127
    %1131 = vmatprep.subr.mxu0 0.0
    %1132 = vmatpush1.xpose.msra.mxu0 0.0
    %1133 = vmatprep.subr.mxu0 0.0
    %1134 = vmatpush1.xpose.msra.mxu0 0.0
    %1135 = vmatprep.subr.mxu0 0.0
    %1136 = vmatpush1.xpose.msra.mxu0 0.0
    %1137 = vmatprep.subr.mxu0 0.0
    %1138 = vmatpush1.xpose.msra.mxu0 0.0
    %1139 = vmatprep.subr.mxu0 0.0
    %1140 = vmatpush1.xpose.msra.mxu0 0.0
    %1141 = vmatprep.subr.mxu0 0.0
    %1142 = vmatpush1.xpose.msra.mxu0 0.0
    %1143 = vmatprep.subr.mxu0 0.0
    %1144 = vmatpush1.xpose.msra.mxu0 0.0
    %1145 = vmatprep.subr.mxu0 0.0
    %1146 = vmatpush1.xpose.msra.mxu0 0.0
    %1147 = vmatprep.subr.mxu0 0.0
    %1148 = vmatpush1.xpose.msra.mxu0 0.0
    %1149 = vmatprep.subr.mxu0 0.0
    %1150 = vmatpush1.xpose.msra.mxu0 0.0
    %1151 = vmatprep.subr.mxu0 0.0
    %1152 = vmatpush1.xpose.msra.mxu0 0.0
    %1153 = vmatprep.subr.mxu0 0.0
    %1154 = vmatpush1.xpose.msra.mxu0 0.0
    %1155 = vmatprep.subr.mxu0 0.0
    %1156 = vmatpush1.xpose.msra.mxu0 0.0
    %1157 = vmatprep.subr.mxu0 0.0
    %1158 = vmatpush1.xpose.msra.mxu0 0.0
    %1159 = vmatprep.subr.mxu0 0.0
    %1160 = vmatpush1.xpose.msra.mxu0 0.0
    %1161 = vmatprep.subr.mxu0 0.0
    %1162 = vmatpush1.xpose.msra.mxu0 0.0
    %1163 = vmatprep.subr.mxu0 0.0
    %1164 = vmatpush1.xpose.msra.mxu0 0.0
    %1165 = vmatprep.subr.mxu0 0.0
    %1166 = vmatpush1.xpose.msra.mxu0 0.0
    %1167 = vmatprep.subr.mxu0 0.0
    %1168 = vmatpush1.xpose.msra.mxu0 0.0
    %1169 = vmatprep.subr.mxu0 0.0
    %1170 = vmatpush1.xpose.msra.mxu0 0.0
    %1171 = vmatprep.subr.mxu0 0.0
    %1172 = vmatpush1.xpose.msra.mxu0 0.0
    %1173 = vmatprep.subr.mxu0 0.0
    %1174 = vmatpush1.xpose.msra.mxu0 0.0
    %1175 = vmatprep.subr.mxu0 0.0
    %1176 = vmatpush1.xpose.msra.mxu0 0.0
    %1177 = vmatprep.subr.mxu0 0.0
    %1178 = vmatpush1.xpose.msra.mxu0 0.0
    %1179 = vmatprep.subr.mxu0 0.0
    %1180 = vmatpush1.xpose.msra.mxu0 0.0
    %1181 = vmatprep.subr.mxu0 0.0
    %1182 = vmatpush1.xpose.msra.mxu0 0.0
    %1183 = vmatprep.subr.mxu0 0.0
    %1184 = vmatpush1.xpose.msra.mxu0 0.0
    %1185 = vmatprep.subr.mxu0 0.0
    %1186 = vmatpush1.xpose.msra.mxu0 0.0
    %1187 = vmatprep.subr.mxu0 0.0
    %1188 = vmatpush1.xpose.msra.mxu0 0.0
    %1189 = vmatprep.subr.mxu0 0.0
    %1190 = vmatpush1.xpose.msra.mxu0 0.0
    %1191 = vmatprep.subr.mxu0 0.0
    %1192 = vmatpush1.xpose.msra.mxu0 0.0
    %1193 = vmatprep.mubr.f32.mxu0 0.0
    %1194 = vmatmul.mubr.f32.gmra.mrb[0].mxu0 %v1125
    %v1195 = vpop.f32.mrb[0].mxu0
    %v1196 = vadd.f32 0.0, %v1195
    %v1197 = vpop.f32.mrb[0].mxu0
    %1198 = vdwg.mxu0
    %v1199 = vmul.f32 %v1196, 0.35355338
    %v1200 = vsel %vm856, %v1199, -inf
    %1201 = vmax.xlane.f32.xlu0 %v1200
    %v1202 = vpop.xlane.xlu0 %1201
    %v1203 = vsub.f32 %v1199, %v1202
    %v1204 = vmul.f32 %v1203, 1.442695
    %v1205 = vpow.pop %v1204
    %v1206 = vsel %vm856, %v1205, 0.0
    %1207 = vadd.xlane.f32.xlu0 %v1206
    %v1208 = vpop.xlane.xlu0 %1207
    %v1209 = vrcp.pop %v1208
    %v1210 = vmul.f32 %v1205, %v1209
    %1211 = vrot.lane.b32.xlu0 %v777, 112
    %v1212 = vpop.permute.xlu0 %1211
    %v1214 = vsel %vm868, %v1210, 0
    %v1216 = vsel %vm872, %v1212, 0
    %1218 = vmatprep.subr.mxu0 0.0
    %1219 = vmatpush1.msra.mxu0 %v1216
    %1220 = vmatprep.subr.mxu0 0.0
    %1221 = vmatpush1.msra.mxu0 0.0
    %1222 = vmatprep.subr.mxu0 0.0
    %1223 = vmatpush1.msra.mxu0 0.0
    %1224 = vmatprep.subr.mxu0 0.0
    %1225 = vmatpush1.msra.mxu0 0.0
    %1226 = vmatprep.subr.mxu0 0.0
    %1227 = vmatpush1.msra.mxu0 0.0
    %1228 = vmatprep.subr.mxu0 0.0
    %1229 = vmatpush1.msra.mxu0 0.0
    %1230 = vmatprep.subr.mxu0 0.0
    %1231 = vmatpush1.msra.mxu0 0.0
    %1232 = vmatprep.subr.mxu0 0.0
    %1233 = vmatpush1.msra.mxu0 0.0
    %1234 = vmatprep.subr.mxu0 0.0
    %1235 = vmatpush1.msra.mxu0 0.0
    %1236 = vmatprep.subr.mxu0 0.0
    %1237 = vmatpush1.msra.mxu0 0.0
    %1238 = vmatprep.subr.mxu0 0.0
    %1239 = vmatpush1.msra.mxu0 0.0
    %1240 = vmatprep.subr.mxu0 0.0
    %1241 = vmatpush1.msra.mxu0 0.0
    %1242 = vmatprep.subr.mxu0 0.0
    %1243 = vmatpush1.msra.mxu0 0.0
    %1244 = vmatprep.subr.mxu0 0.0
    %1245 = vmatpush1.msra.mxu0 0.0
    %1246 = vmatprep.subr.mxu0 0.0
    %1247 = vmatpush1.msra.mxu0 0.0
    %1248 = vmatprep.subr.mxu0 0.0
    %1249 = vmatpush1.msra.mxu0 0.0
    %1250 = vmatprep.subr.mxu0 0.0
    %1251 = vmatpush1.msra.mxu0 0.0
    %1252 = vmatprep.subr.mxu0 0.0
    %1253 = vmatpush1.msra.mxu0 0.0
    %1254 = vmatprep.subr.mxu0 0.0
    %1255 = vmatpush1.msra.mxu0 0.0
    %1256 = vmatprep.subr.mxu0 0.0
    %1257 = vmatpush1.msra.mxu0 0.0
    %1258 = vmatprep.subr.mxu0 0.0
    %1259 = vmatpush1.msra.mxu0 0.0
    %1260 = vmatprep.subr.mxu0 0.0
    %1261 = vmatpush1.msra.mxu0 0.0
    %1262 = vmatprep.subr.mxu0 0.0
    %1263 = vmatpush1.msra.mxu0 0.0
    %1264 = vmatprep.subr.mxu0 0.0
    %1265 = vmatpush1.msra.mxu0 0.0
    %1266 = vmatprep.subr.mxu0 0.0
    %1267 = vmatpush1.msra.mxu0 0.0
    %1268 = vmatprep.subr.mxu0 0.0
    %1269 = vmatpush1.msra.mxu0 0.0
    %1270 = vmatprep.subr.mxu0 0.0
    %1271 = vmatpush1.msra.mxu0 0.0
    %1272 = vmatprep.subr.mxu0 0.0
    %1273 = vmatpush1.msra.mxu0 0.0
    %1274 = vmatprep.subr.mxu0 0.0
    %1275 = vmatpush1.msra.mxu0 0.0
    %1276 = vmatprep.subr.mxu0 0.0
    %1277 = vmatpush1.msra.mxu0 0.0
    %1278 = vmatprep.subr.mxu0 0.0
    %1279 = vmatpush1.msra.mxu0 0.0
    %1280 = vmatprep.subr.mxu0 0.0
    %1281 = vmatpush1.msra.mxu0 0.0
    %1282 = vmatprep.mubr.f32.mxu0 0.0
    %1283 = vmatmul.mubr.f32.gmra.mrb[0].mxu0 %v1214
    %v1284 = vpop.f32.mrb[0].mxu0
    %v1285 = vadd.f32 0.0, %v1284
    %v1286 = vpop.f32.mrb[0].mxu0
    %1287 = vdwg.mxu0
    %1289 = vrot.lane.b32.xlu0 %v1285, 16
    %v1290 = vpop.permute.xlu0 %1289
    %vm1292 = vcmask 191616
    %1293 = vst.msk [vmem:[#allocation5] sm:$0xf] %vm1292, %v1290
    %1294 = vrot.lane.b32.xlu0 %v775, 104
    %v1295 = vpop.permute.xlu0 %1294
    %1296 = vrot.lane.b32.xlu0 %v776, 104
    %v1297 = vpop.permute.xlu0 %1296
    %v1298 = vsel %vm778, %v1295, 0
    %v1300 = vsel %vm778, %v1297, 0
    %1302 = vmatprep.subr.mxu0 0.0
    %1303 = vmatpush1.xpose.msra.mxu0 %v1300
    %1304 = vmatprep.subr.mxu0 0.0
    %1305 = vmatpush1.xpose.msra.mxu0 0.0
    %1306 = vmatprep.subr.mxu0 0.0
    %1307 = vmatpush1.xpose.msra.mxu0 0.0
    %1308 = vmatprep.subr.mxu0 0.0
    %1309 = vmatpush1.xpose.msra.mxu0 0.0
    %1310 = vmatprep.subr.mxu0 0.0
    %1311 = vmatpush1.xpose.msra.mxu0 0.0
    %1312 = vmatprep.subr.mxu0 0.0
    %1313 = vmatpush1.xpose.msra.mxu0 0.0
    %1314 = vmatprep.subr.mxu0 0.0
    %1315 = vmatpush1.xpose.msra.mxu0 0.0
    %1316 = vmatprep.subr.mxu0 0.0
    %1317 = vmatpush1.xpose.msra.mxu0 0.0
    %1318 = vmatprep.subr.mxu0 0.0
    %1319 = vmatpush1.xpose.msra.mxu0 0.0
    %1320 = vmatprep.subr.mxu0 0.0
    %1321 = vmatpush1.xpose.msra.mxu0 0.0
    %1322 = vmatprep.subr.mxu0 0.0
    %1323 = vmatpush1.xpose.msra.mxu0 0.0
    %1324 = vmatprep.subr.mxu0 0.0
    %1325 = vmatpush1.xpose.msra.mxu0 0.0
    %1326 = vmatprep.subr.mxu0 0.0
    %1327 = vmatpush1.xpose.msra.mxu0 0.0
    %1328 = vmatprep.subr.mxu0 0.0
    %1329 = vmatpush1.xpose.msra.mxu0 0.0
    %1330 = vmatprep.subr.mxu0 0.0
    %1331 = vmatpush1.xpose.msra.mxu0 0.0
    %1332 = vmatprep.subr.mxu0 0.0
    %1333 = vmatpush1.xpose.msra.mxu0 0.0
    %1334 = vmatprep.subr.mxu0 0.0
    %1335 = vmatpush1.xpose.msra.mxu0 0.0
    %1336 = vmatprep.subr.mxu0 0.0
    %1337 = vmatpush1.xpose.msra.mxu0 0.0
    %1338 = vmatprep.subr.mxu0 0.0
    %1339 = vmatpush1.xpose.msra.mxu0 0.0
    %1340 = vmatprep.subr.mxu0 0.0
    %1341 = vmatpush1.xpose.msra.mxu0 0.0
    %1342 = vmatprep.subr.mxu0 0.0
    %1343 = vmatpush1.xpose.msra.mxu0 0.0
    %1344 = vmatprep.subr.mxu0 0.0
    %1345 = vmatpush1.xpose.msra.mxu0 0.0
    %1346 = vmatprep.subr.mxu0 0.0
    %1347 = vmatpush1.xpose.msra.mxu0 0.0
    %1348 = vmatprep.subr.mxu0 0.0
    %1349 = vmatpush1.xpose.msra.mxu0 0.0
    %1350 = vmatprep.subr.mxu0 0.0
    %1351 = vmatpush1.xpose.msra.mxu0 0.0
    %1352 = vmatprep.subr.mxu0 0.0
    %1353 = vmatpush1.xpose.msra.mxu0 0.0
    %1354 = vmatprep.subr.mxu0 0.0
    %1355 = vmatpush1.xpose.msra.mxu0 0.0
    %1356 = vmatprep.subr.mxu0 0.0
    %1357 = vmatpush1.xpose.msra.mxu0 0.0
    %1358 = vmatprep.subr.mxu0 0.0
    %1359 = vmatpush1.xpose.msra.mxu0 0.0
    %1360 = vmatprep.subr.mxu0 0.0
    %1361 = vmatpush1.xpose.msra.mxu0 0.0
    %1362 = vmatprep.subr.mxu0 0.0
    %1363 = vmatpush1.xpose.msra.mxu0 0.0
    %1364 = vmatprep.subr.mxu0 0.0
    %1365 = vmatpush1.xpose.msra.mxu0 0.0
    %1366 = vmatprep.mubr.f32.mxu0 0.0
    %1367 = vmatmul.mubr.f32.gmra.mrb[0].mxu0 %v1298
    %v1368 = vpop.f32.mrb[0].mxu0
    %v1369 = vadd.f32 0.0, %v1368
    %v1370 = vpop.f32.mrb[0].mxu0
    %1371 = vdwg.mxu0
    %v1372 = vmul.f32 %v1369, 0.35355338
    %v1373 = vsel %vm856, %v1372, -inf
    %1374 = vmax.xlane.f32.xlu0 %v1373
    %v1375 = vpop.xlane.xlu0 %1374
    %v1376 = vsub.f32 %v1372, %v1375
    %v1377 = vmul.f32 %v1376, 1.442695
    %v1378 = vpow.pop %v1377
    %v1379 = vsel %vm856, %v1378, 0.0
    %1380 = vadd.xlane.f32.xlu0 %v1379
    %v1381 = vpop.xlane.xlu0 %1380
    %v1382 = vrcp.pop %v1381
    %v1383 = vmul.f32 %v1378, %v1382
    %1384 = vrot.lane.b32.xlu0 %v777, 104
    %v1385 = vpop.permute.xlu0 %1384
    %v1387 = vsel %vm868, %v1383, 0
    %v1389 = vsel %vm872, %v1385, 0
    %1391 = vmatprep.subr.mxu0 0.0
    %1392 = vmatpush1.msra.mxu0 %v1389
    %1393 = vmatprep.subr.mxu0 0.0
    %1394 = vmatpush1.msra.mxu0 0.0
    %1395 = vmatprep.subr.mxu0 0.0
    %1396 = vmatpush1.msra.mxu0 0.0
    %1397 = vmatprep.subr.mxu0 0.0
    %1398 = vmatpush1.msra.mxu0 0.0
    %1399 = vmatprep.subr.mxu0 0.0
    %1400 = vmatpush1.msra.mxu0 0.0
    %1401 = vmatprep.subr.mxu0 0.0
    %1402 = vmatpush1.msra.mxu0 0.0
    %1403 = vmatprep.subr.mxu0 0.0
    %1404 = vmatpush1.msra.mxu0 0.0
    %1405 = vmatprep.subr.mxu0 0.0
    %1406 = vmatpush1.msra.mxu0 0.0
    %1407 = vmatprep.subr.mxu0 0.0
    %1408 = vmatpush1.msra.mxu0 0.0
    %1409 = vmatprep.subr.mxu0 0.0
    %1410 = vmatpush1.msra.mxu0 0.0
    %1411 = vmatprep.subr.mxu0 0.0
    %1412 = vmatpush1.msra.mxu0 0.0
    %1413 = vmatprep.subr.mxu0 0.0
    %1414 = vmatpush1.msra.mxu0 0.0
    %1415 = vmatprep.subr.mxu0 0.0
    %1416 = vmatpush1.msra.mxu0 0.0
    %1417 = vmatprep.subr.mxu0 0.0
    %1418 = vmatpush1.msra.mxu0 0.0
    %1419 = vmatprep.subr.mxu0 0.0
    %1420 = vmatpush1.msra.mxu0 0.0
    %1421 = vmatprep.subr.mxu0 0.0
    %1422 = vmatpush1.msra.mxu0 0.0
    %1423 = vmatprep.subr.mxu0 0.0
    %1424 = vmatpush1.msra.mxu0 0.0
    %1425 = vmatprep.subr.mxu0 0.0
    %1426 = vmatpush1.msra.mxu0 0.0
    %1427 = vmatprep.subr.mxu0 0.0
    %1428 = vmatpush1.msra.mxu0 0.0
    %1429 = vmatprep.subr.mxu0 0.0
    %1430 = vmatpush1.msra.mxu0 0.0
    %1431 = vmatprep.subr.mxu0 0.0
    %1432 = vmatpush1.msra.mxu0 0.0
    %1433 = vmatprep.subr.mxu0 0.0
    %1434 = vmatpush1.msra.mxu0 0.0
    %1435 = vmatprep.subr.mxu0 0.0
    %1436 = vmatpush1.msra.mxu0 0.0
    %1437 = vmatprep.subr.mxu0 0.0
    %1438 = vmatpush1.msra.mxu0 0.0
    %1439 = vmatprep.subr.mxu0 0.0
    %1440 = vmatpush1.msra.mxu0 0.0
    %1441 = vmatprep.subr.mxu0 0.0
    %1442 = vmatpush1.msra.mxu0 0.0
    %1443 = vmatprep.subr.mxu0 0.0
    %1444 = vmatpush1.msra.mxu0 0.0
    %1445 = vmatprep.subr.mxu0 0.0
    %1446 = vmatpush1.msra.mxu0 0.0
    %1447 = vmatprep.subr.mxu0 0.0
    %1448 = vmatpush1.msra.mxu0 0.0
    %1449 = vmatprep.subr.mxu0 0.0
    %1450 = vmatpush1.msra.mxu0 0.0
    %1451 = vmatprep.subr.mxu0 0.0
    %1452 = vmatpush1.msra.mxu0 0.0
    %1453 = vmatprep.subr.mxu0 0.0
    %1454 = vmatpush1.msra.mxu0 0.0
    %1455 = vmatprep.mubr.f32.mxu0 0.0
    %1456 = vmatmul.mubr.f32.gmra.mrb[0].mxu0 %v1387
    %v1457 = vpop.f32.mrb[0].mxu0
    %v1458 = vadd.f32 0.0, %v1457
    %v1459 = vpop.f32.mrb[0].mxu0
    %1460 = vdwg.mxu0
    %1462 = vrot.lane.b32.xlu0 %v1458, 24
    %v1463 = vpop.permute.xlu0 %1462
    %vm1465 = vcmask 257216
    %1466 = vst.msk [vmem:[#allocation5] sm:$0xf] %vm1465, %v1463
    %s1467 = scalar_lea.vmem [#allocation2], 4
    %v1468 = vld [vmem:[%s1467] sm:$0xf]
    %s1469 = scalar_lea.vmem [#allocation3], 4
    %v1470 = vld [vmem:[%s1469] sm:$0xf]
    %s1471 = scalar_lea.vmem [#allocation4], 4
    %v1472 = vld [vmem:[%s1471] sm:$0xf]
    %v1474 = vsel %vm778, %v1468, 0
    %v1477 = vsel %vm778, %v1470, 0
    %1479 = vmatprep.subr.mxu0 0.0
    %1480 = vmatpush1.xpose.msra.mxu0 %v1477
    %1481 = vmatprep.subr.mxu0 0.0
    %1482 = vmatpush1.xpose.msra.mxu0 0.0
    %1483 = vmatprep.subr.mxu0 0.0
    %1484 = vmatpush1.xpose.msra.mxu0 0.0
    %1485 = vmatprep.subr.mxu0 0.0
    %1486 = vmatpush1.xpose.msra.mxu0 0.0
    %1487 = vmatprep.subr.mxu0 0.0
    %1488 = vmatpush1.xpose.msra.mxu0 0.0
    %1489 = vmatprep.subr.mxu0 0.0
    %1490 = vmatpush1.xpose.msra.mxu0 0.0
    %1491 = vmatprep.subr.mxu0 0.0
    %1492 = vmatpush1.xpose.msra.mxu0 0.0
    %1493 = vmatprep.subr.mxu0 0.0
    %1494 = vmatpush1.xpose.msra.mxu0 0.0
    %1495 = vmatprep.subr.mxu0 0.0
    %1496 = vmatpush1.xpose.msra.mxu0 0.0
    %1497 = vmatprep.subr.mxu0 0.0
    %1498 = vmatpush1.xpose.msra.mxu0 0.0
    %1499 = vmatprep.subr.mxu0 0.0
    %1500 = vmatpush1.xpose.msra.mxu0 0.0
    %1501 = vmatprep.subr.mxu0 0.0
    %1502 = vmatpush1.xpose.msra.mxu0 0.0
    %1503 = vmatprep.subr.mxu0 0.0
    %1504 = vmatpush1.xpose.msra.mxu0 0.0
    %1505 = vmatprep.subr.mxu0 0.0
    %1506 = vmatpush1.xpose.msra.mxu0 0.0
    %1507 = vmatprep.subr.mxu0 0.0
    %1508 = vmatpush1.xpose.msra.mxu0 0.0
    %1509 = vmatprep.subr.mxu0 0.0
    %1510 = vmatpush1.xpose.msra.mxu0 0.0
    %1511 = vmatprep.subr.mxu0 0.0
    %1512 = vmatpush1.xpose.msra.mxu0 0.0
    %1513 = vmatprep.subr.mxu0 0.0
    %1514 = vmatpush1.xpose.msra.mxu0 0.0
    %1515 = vmatprep.subr.mxu0 0.0
    %1516 = vmatpush1.xpose.msra.mxu0 0.0
    %1517 = vmatprep.subr.mxu0 0.0
    %1518 = vmatpush1.xpose.msra.mxu0 0.0
    %1519 = vmatprep.subr.mxu0 0.0
    %1520 = vmatpush1.xpose.msra.mxu0 0.0
    %1521 = vmatprep.subr.mxu0 0.0
    %1522 = vmatpush1.xpose.msra.mxu0 0.0
    %1523 = vmatprep.subr.mxu0 0.0
    %1524 = vmatpush1.xpose.msra.mxu0 0.0
    %1525 = vmatprep.subr.mxu0 0.0
    %1526 = vmatpush1.xpose.msra.mxu0 0.0
    %1527 = vmatprep.subr.mxu0 0.0
    %1528 = vmatpush1.xpose.msra.mxu0 0.0
    %1529 = vmatprep.subr.mxu0 0.0
    %1530 = vmatpush1.xpose.msra.mxu0 0.0
    %1531 = vmatprep.subr.mxu0 0.0
    %1532 = vmatpush1.xpose.msra.mxu0 0.0
    %1533 = vmatprep.subr.mxu0 0.0
    %1534 = vmatpush1.xpose.msra.mxu0 0.0
    %1535 = vmatprep.subr.mxu0 0.0
    %1536 = vmatpush1.xpose.msra.mxu0 0.0
    %1537 = vmatprep.subr.mxu0 0.0
    %1538 = vmatpush1.xpose.msra.mxu0 0.0
    %1539 = vmatprep.subr.mxu0 0.0
    %1540 = vmatpush1.xpose.msra.mxu0 0.0
    %1541 = vmatprep.subr.mxu0 0.0
    %1542 = vmatpush1.xpose.msra.mxu0 0.0
    %1543 = vmatprep.mubr.f32.mxu0 0.0
    %1544 = vmatmul.mubr.f32.gmra.mrb[0].mxu0 %v1474
    %v1545 = vpop.f32.mrb[0].mxu0
    %v1546 = vadd.f32 0.0, %v1545
    %v1547 = vpop.f32.mrb[0].mxu0
    %1548 = vdwg.mxu0
    %v1549 = vmul.f32 %v1546, 0.35355338
    %v1550 = vsel %vm856, %v1549, -inf
    %1551 = vmax.xlane.f32.xlu0 %v1550
    %v1552 = vpop.xlane.xlu0 %1551
    %v1553 = vsub.f32 %v1549, %v1552
    %v1554 = vmul.f32 %v1553, 1.442695
    %v1555 = vpow.pop %v1554
    %v1556 = vsel %vm856, %v1555, 0.0
    %1557 = vadd.xlane.f32.xlu0 %v1556
    %v1558 = vpop.xlane.xlu0 %1557
    %v1559 = vrcp.pop %v1558
    %v1560 = vmul.f32 %v1555, %v1559
    %v1562 = vsel %vm868, %v1560, 0
    %v1565 = vsel %vm872, %v1472, 0
    %1567 = vmatprep.subr.mxu0 0.0
    %1568 = vmatpush1.msra.mxu0 %v1565
    %1569 = vmatprep.subr.mxu0 0.0
    %1570 = vmatpush1.msra.mxu0 0.0
    %1571 = vmatprep.subr.mxu0 0.0
    %1572 = vmatpush1.msra.mxu0 0.0
    %1573 = vmatprep.subr.mxu0 0.0
    %1574 = vmatpush1.msra.mxu0 0.0
    %1575 = vmatprep.subr.mxu0 0.0
    %1576 = vmatpush1.msra.mxu0 0.0
    %1577 = vmatprep.subr.mxu0 0.0
    %1578 = vmatpush1.msra.mxu0 0.0
    %1579 = vmatprep.subr.mxu0 0.0
    %1580 = vmatpush1.msra.mxu0 0.0
    %1581 = vmatprep.subr.mxu0 0.0
    %1582 = vmatpush1.msra.mxu0 0.0
    %1583 = vmatprep.subr.mxu0 0.0
    %1584 = vmatpush1.msra.mxu0 0.0
    %1585 = vmatprep.subr.mxu0 0.0
    %1586 = vmatpush1.msra.mxu0 0.0
    %1587 = vmatprep.subr.mxu0 0.0
    %1588 = vmatpush1.msra.mxu0 0.0
    %1589 = vmatprep.subr.mxu0 0.0
    %1590 = vmatpush1.msra.mxu0 0.0
    %1591 = vmatprep.subr.mxu0 0.0
    %1592 = vmatpush1.msra.mxu0 0.0
    %1593 = vmatprep.subr.mxu0 0.0
    %1594 = vmatpush1.msra.mxu0 0.0
    %1595 = vmatprep.subr.mxu0 0.0
    %1596 = vmatpush1.msra.mxu0 0.0
    %1597 = vmatprep.subr.mxu0 0.0
    %1598 = vmatpush1.msra.mxu0 0.0
    %1599 = vmatprep.subr.mxu0 0.0
    %1600 = vmatpush1.msra.mxu0 0.0
    %1601 = vmatprep.subr.mxu0 0.0
    %1602 = vmatpush1.msra.mxu0 0.0
    %1603 = vmatprep.subr.mxu0 0.0
    %1604 = vmatpush1.msra.mxu0 0.0
    %1605 = vmatprep.subr.mxu0 0.0
    %1606 = vmatpush1.msra.mxu0 0.0
    %1607 = vmatprep.subr.mxu0 0.0
    %1608 = vmatpush1.msra.mxu0 0.0
    %1609 = vmatprep.subr.mxu0 0.0
    %1610 = vmatpush1.msra.mxu0 0.0
    %1611 = vmatprep.subr.mxu0 0.0
    %1612 = vmatpush1.msra.mxu0 0.0
    %1613 = vmatprep.subr.mxu0 0.0
    %1614 = vmatpush1.msra.mxu0 0.0
    %1615 = vmatprep.subr.mxu0 0.0
    %1616 = vmatpush1.msra.mxu0 0.0
    %1617 = vmatprep.subr.mxu0 0.0
    %1618 = vmatpush1.msra.mxu0 0.0
    %1619 = vmatprep.subr.mxu0 0.0
    %1620 = vmatpush1.msra.mxu0 0.0
    %1621 = vmatprep.subr.mxu0 0.0
    %1622 = vmatpush1.msra.mxu0 0.0
    %1623 = vmatprep.subr.mxu0 0.0
    %1624 = vmatpush1.msra.mxu0 0.0
    %1625 = vmatprep.subr.mxu0 0.0
    %1626 = vmatpush1.msra.mxu0 0.0
    %1627 = vmatprep.subr.mxu0 0.0
    %1628 = vmatpush1.msra.mxu0 0.0
    %1629 = vmatprep.subr.mxu0 0.0
    %1630 = vmatpush1.msra.mxu0 0.0
    %1631 = vmatprep.mubr.f32.mxu0 0.0
    %1632 = vmatmul.mubr.f32.gmra.mrb[0].mxu0 %v1562
    %v1633 = vpop.f32.mrb[0].mxu0
    %v1634 = vadd.f32 0.0, %v1633
    %v1635 = vpop.f32.mrb[0].mxu0
    %1636 = vdwg.mxu0
    %s1637 = scalar_lea.vmem [#allocation5], 4
    %1638 = vst.msk [vmem:[%s1637] sm:$0xf] %vm946, %v1634
    %1639 = vrot.lane.b32.xlu0 %v1468, 120
    %v1640 = vpop.permute.xlu0 %1639
    %1641 = vrot.lane.b32.xlu0 %v1470, 120
    %v1642 = vpop.permute.xlu0 %1641
    %v1643 = vsel %vm778, %v1640, 0
    %v1645 = vsel %vm778, %v1642, 0
    %1647 = vmatprep.subr.mxu0 0.0
    %1648 = vmatpush1.xpose.msra.mxu0 %v1645
    %1649 = vmatprep.subr.mxu0 0.0
    %1650 = vmatpush1.xpose.msra.mxu0 0.0
    %1651 = vmatprep.subr.mxu0 0.0
    %1652 = vmatpush1.xpose.msra.mxu0 0.0
    %1653 = vmatprep.subr.mxu0 0.0
    %1654 = vmatpush1.xpose.msra.mxu0 0.0
    %1655 = vmatprep.subr.mxu0 0.0
    %1656 = vmatpush1.xpose.msra.mxu0 0.0
    %1657 = vmatprep.subr.mxu0 0.0
    %1658 = vmatpush1.xpose.msra.mxu0 0.0
    %1659 = vmatprep.subr.mxu0 0.0
    %1660 = vmatpush1.xpose.msra.mxu0 0.0
    %1661 = vmatprep.subr.mxu0 0.0
    %1662 = vmatpush1.xpose.msra.mxu0 0.0
    %1663 = vmatprep.subr.mxu0 0.0
    %1664 = vmatpush1.xpose.msra.mxu0 0.0
    %1665 = vmatprep.subr.mxu0 0.0
    %1666 = vmatpush1.xpose.msra.mxu0 0.0
    %1667 = vmatprep.subr.mxu0 0.0
    %1668 = vmatpush1.xpose.msra.mxu0 0.0
    %1669 = vmatprep.subr.mxu0 0.0
    %1670 = vmatpush1.xpose.msra.mxu0 0.0
    %1671 = vmatprep.subr.mxu0 0.0
    %1672 = vmatpush1.xpose.msra.mxu0 0.0
    %1673 = vmatprep.subr.mxu0 0.0
    %1674 = vmatpush1.xpose.msra.mxu0 0.0
    %1675 = vmatprep.subr.mxu0 0.0
    %1676 = vmatpush1.xpose.msra.mxu0 0.0
    %1677 = vmatprep.subr.mxu0 0.0
    %1678 = vmatpush1.xpose.msra.mxu0 0.0
    %1679 = vmatprep.subr.mxu0 0.0
    %1680 = vmatpush1.xpose.msra.mxu0 0.0
    %1681 = vmatprep.subr.mxu0 0.0
    %1682 = vmatpush1.xpose.msra.mxu0 0.0
    %1683 = vmatprep.subr.mxu0 0.0
    %1684 = vmatpush1.xpose.msra.mxu0 0.0
    %1685 = vmatprep.subr.mxu0 0.0
    %1686 = vmatpush1.xpose.msra.mxu0 0.0
    %1687 = vmatprep.subr.mxu0 0.0
    %1688 = vmatpush1.xpose.msra.mxu0 0.0
    %1689 = vmatprep.subr.mxu0 0.0
    %1690 = vmatpush1.xpose.msra.mxu0 0.0
    %1691 = vmatprep.subr.mxu0 0.0
    %1692 = vmatpush1.xpose.msra.mxu0 0.0
    %1693 = vmatprep.subr.mxu0 0.0
    %1694 = vmatpush1.xpose.msra.mxu0 0.0
    %1695 = vmatprep.subr.mxu0 0.0
    %1696 = vmatpush1.xpose.msra.mxu0 0.0
    %1697 = vmatprep.subr.mxu0 0.0
    %1698 = vmatpush1.xpose.msra.mxu0 0.0
    %1699 = vmatprep.subr.mxu0 0.0
    %1700 = vmatpush1.xpose.msra.mxu0 0.0
    %1701 = vmatprep.subr.mxu0 0.0
    %1702 = vmatpush1.xpose.msra.mxu0 0.0
    %1703 = vmatprep.subr.mxu0 0.0
    %1704 = vmatpush1.xpose.msra.mxu0 0.0
    %1705 = vmatprep.subr.mxu0 0.0
    %1706 = vmatpush1.xpose.msra.mxu0 0.0
    %1707 = vmatprep.subr.mxu0 0.0
    %1708 = vmatpush1.xpose.msra.mxu0 0.0
    %1709 = vmatprep.subr.mxu0 0.0
    %1710 = vmatpush1.xpose.msra.mxu0 0.0
    %1711 = vmatprep.mubr.f32.mxu0 0.0
    %1712 = vmatmul.mubr.f32.gmra.mrb[0].mxu0 %v1643
    %v1713 = vpop.f32.mrb[0].mxu0
    %v1714 = vadd.f32 0.0, %v1713
    %v1715 = vpop.f32.mrb[0].mxu0
    %1716 = vdwg.mxu0
    %v1717 = vmul.f32 %v1714, 0.35355338
    %v1718 = vsel %vm856, %v1717, -inf
    %1719 = vmax.xlane.f32.xlu0 %v1718
    %v1720 = vpop.xlane.xlu0 %1719
    %v1721 = vsub.f32 %v1717, %v1720
    %v1722 = vmul.f32 %v1721, 1.442695
    %v1723 = vpow.pop %v1722
    %v1724 = vsel %vm856, %v1723, 0.0
    %1725 = vadd.xlane.f32.xlu0 %v1724
    %v1726 = vpop.xlane.xlu0 %1725
    %v1727 = vrcp.pop %v1726
    %v1728 = vmul.f32 %v1723, %v1727
    %1729 = vrot.lane.b32.xlu0 %v1472, 120
    %v1730 = vpop.permute.xlu0 %1729
    %v1732 = vsel %vm868, %v1728, 0
    %v1734 = vsel %vm872, %v1730, 0
    %1736 = vmatprep.subr.mxu0 0.0
    %1737 = vmatpush1.msra.mxu0 %v1734
    %1738 = vmatprep.subr.mxu0 0.0
    %1739 = vmatpush1.msra.mxu0 0.0
    %1740 = vmatprep.subr.mxu0 0.0
    %1741 = vmatpush1.msra.mxu0 0.0
    %1742 = vmatprep.subr.mxu0 0.0
    %1743 = vmatpush1.msra.mxu0 0.0
    %1744 = vmatprep.subr.mxu0 0.0
    %1745 = vmatpush1.msra.mxu0 0.0
    %1746 = vmatprep.subr.mxu0 0.0
    %1747 = vmatpush1.msra.mxu0 0.0
    %1748 = vmatprep.subr.mxu0 0.0
    %1749 = vmatpush1.msra.mxu0 0.0
    %1750 = vmatprep.subr.mxu0 0.0
    %1751 = vmatpush1.msra.mxu0 0.0
    %1752 = vmatprep.subr.mxu0 0.0
    %1753 = vmatpush1.msra.mxu0 0.0
    %1754 = vmatprep.subr.mxu0 0.0
    %1755 = vmatpush1.msra.mxu0 0.0
    %1756 = vmatprep.subr.mxu0 0.0
    %1757 = vmatpush1.msra.mxu0 0.0
    %1758 = vmatprep.subr.mxu0 0.0
    %1759 = vmatpush1.msra.mxu0 0.0
    %1760 = vmatprep.subr.mxu0 0.0
    %1761 = vmatpush1.msra.mxu0 0.0
    %1762 = vmatprep.subr.mxu0 0.0
    %1763 = vmatpush1.msra.mxu0 0.0
    %1764 = vmatprep.subr.mxu0 0.0
    %1765 = vmatpush1.msra.mxu0 0.0
    %1766 = vmatprep.subr.mxu0 0.0
    %1767 = vmatpush1.msra.mxu0 0.0
    %1768 = vmatprep.subr.mxu0 0.0
    %1769 = vmatpush1.msra.mxu0 0.0
    %1770 = vmatprep.subr.mxu0 0.0
    %1771 = vmatpush1.msra.mxu0 0.0
    %1772 = vmatprep.subr.mxu0 0.0
    %1773 = vmatpush1.msra.mxu0 0.0
    %1774 = vmatprep.subr.mxu0 0.0
    %1775 = vmatpush1.msra.mxu0 0.0
    %1776 = vmatprep.subr.mxu0 0.0
    %1777 = vmatpush1.msra.mxu0 0.0
    %1778 = vmatprep.subr.mxu0 0.0
    %1779 = vmatpush1.msra.mxu0 0.0
    %1780 = vmatprep.subr.mxu0 0.0
    %1781 = vmatpush1.msra.mxu0 0.0
    %1782 = vmatprep.subr.mxu0 0.0
    %1783 = vmatpush1.msra.mxu0 0.0
    %1784 = vmatprep.subr.mxu0 0.0
    %1785 = vmatpush1.msra.mxu0 0.0
    %1786 = vmatprep.subr.mxu0 0.0
    %1787 = vmatpush1.msra.mxu0 0.0
    %1788 = vmatprep.subr.mxu0 0.0
    %1789 = vmatpush1.msra.mxu0 0.0
    %1790 = vmatprep.subr.mxu0 0.0
    %1791 = vmatpush1.msra.mxu0 0.0
    %1792 = vmatprep.subr.mxu0 0.0
    %1793 = vmatpush1.msra.mxu0 0.0
    %1794 = vmatprep.subr.mxu0 0.0
    %1795 = vmatpush1.msra.mxu0 0.0
    %1796 = vmatprep.subr.mxu0 0.0
    %1797 = vmatpush1.msra.mxu0 0.0
    %1798 = vmatprep.subr.mxu0 0.0
    %1799 = vmatpush1.msra.mxu0 0.0
    %1800 = vmatprep.mubr.f32.mxu0 0.0
    %1801 = vmatmul.mubr.f32.gmra.mrb[0].mxu0 %v1732
    %v1802 = vpop.f32.mrb[0].mxu0
    %v1803 = vadd.f32 0.0, %v1802
    %v1804 = vpop.f32.mrb[0].mxu0
    %1805 = vdwg.mxu0
    %1807 = vrot.lane.b32.xlu0 %v1803, 8
    %v1808 = vpop.permute.xlu0 %1807
    %1810 = vst.msk [vmem:[%s1637] sm:$0xf] %vm1119, %v1808
    %1811 = vrot.lane.b32.xlu0 %v1468, 112
    %v1812 = vpop.permute.xlu0 %1811
    %1813 = vrot.lane.b32.xlu0 %v1470, 112
    %v1814 = vpop.permute.xlu0 %1813
    %v1815 = vsel %vm778, %v1812, 0
    %v1817 = vsel %vm778, %v1814, 0
    %1819 = vmatprep.subr.mxu0 0.0
    %1820 = vmatpush1.xpose.msra.mxu0 %v1817
    %1821 = vmatprep.subr.mxu0 0.0
    %1822 = vmatpush1.xpose.msra.mxu0 0.0
    %1823 = vmatprep.subr.mxu0 0.0
    %1824 = vmatpush1.xpose.msra.mxu0 0.0
    %1825 = vmatprep.subr.mxu0 0.0
    %1826 = vmatpush1.xpose.msra.mxu0 0.0
    %1827 = vmatprep.subr.mxu0 0.0
    %1828 = vmatpush1.xpose.msra.mxu0 0.0
    %1829 = vmatprep.subr.mxu0 0.0
    %1830 = vmatpush1.xpose.msra.mxu0 0.0
    %1831 = vmatprep.subr.mxu0 0.0
    %1832 = vmatpush1.xpose.msra.mxu0 0.0
    %1833 = vmatprep.subr.mxu0 0.0
    %1834 = vmatpush1.xpose.msra.mxu0 0.0
    %1835 = vmatprep.subr.mxu0 0.0
    %1836 = vmatpush1.xpose.msra.mxu0 0.0
    %1837 = vmatprep.subr.mxu0 0.0
    %1838 = vmatpush1.xpose.msra.mxu0 0.0
    %1839 = vmatprep.subr.mxu0 0.0
    %1840 = vmatpush1.xpose.msra.mxu0 0.0
    %1841 = vmatprep.subr.mxu0 0.0
    %1842 = vmatpush1.xpose.msra.mxu0 0.0
    %1843 = vmatprep.subr.mxu0 0.0
    %1844 = vmatpush1.xpose.msra.mxu0 0.0
    %1845 = vmatprep.subr.mxu0 0.0
    %1846 = vmatpush1.xpose.msra.mxu0 0.0
    %1847 = vmatprep.subr.mxu0 0.0
    %1848 = vmatpush1.xpose.msra.mxu0 0.0
    %1849 = vmatprep.subr.mxu0 0.0
    %1850 = vmatpush1.xpose.msra.mxu0 0.0
    %1851 = vmatprep.subr.mxu0 0.0
    %1852 = vmatpush1.xpose.msra.mxu0 0.0
    %1853 = vmatprep.subr.mxu0 0.0
    %1854 = vmatpush1.xpose.msra.mxu0 0.0
    %1855 = vmatprep.subr.mxu0 0.0
    %1856 = vmatpush1.xpose.msra.mxu0 0.0
    %1857 = vmatprep.subr.mxu0 0.0
    %1858 = vmatpush1.xpose.msra.mxu0 0.0
    %1859 = vmatprep.subr.mxu0 0.0
    %1860 = vmatpush1.xpose.msra.mxu0 0.0
    %1861 = vmatprep.subr.mxu0 0.0
    %1862 = vmatpush1.xpose.msra.mxu0 0.0
    %1863 = vmatprep.subr.mxu0 0.0
    %1864 = vmatpush1.xpose.msra.mxu0 0.0
    %1865 = vmatprep.subr.mxu0 0.0
    %1866 = vmatpush1.xpose.msra.mxu0 0.0
    %1867 = vmatprep.subr.mxu0 0.0
    %1868 = vmatpush1.xpose.msra.mxu0 0.0
    %1869 = vmatprep.subr.mxu0 0.0
    %1870 = vmatpush1.xpose.msra.mxu0 0.0
    %1871 = vmatprep.subr.mxu0 0.0
    %1872 = vmatpush1.xpose.msra.mxu0 0.0
    %1873 = vmatprep.subr.mxu0 0.0
    %1874 = vmatpush1.xpose.msra.mxu0 0.0
    %1875 = vmatprep.subr.mxu0 0.0
    %1876 = vmatpush1.xpose.msra.mxu0 0.0
    %1877 = vmatprep.subr.mxu0 0.0
    %1878 = vmatpush1.xpose.msra.mxu0 0.0
    %1879 = vmatprep.subr.mxu0 0.0
    %1880 = vmatpush1.xpose.msra.mxu0 0.0
    %1881 = vmatprep.subr.mxu0 0.0
    %1882 = vmatpush1.xpose.msra.mxu0 0.0
    %1883 = vmatprep.mubr.f32.mxu0 0.0
    %1884 = vmatmul.mubr.f32.gmra.mrb[0].mxu0 %v1815
    %v1885 = vpop.f32.mrb[0].mxu0
    %v1886 = vadd.f32 0.0, %v1885
    %v1887 = vpop.f32.mrb[0].mxu0
    %1888 = vdwg.mxu0
    %v1889 = vmul.f32 %v1886, 0.35355338
    %v1890 = vsel %vm856, %v1889, -inf
    %1891 = vmax.xlane.f32.xlu0 %v1890
    %v1892 = vpop.xlane.xlu0 %1891
    %v1893 = vsub.f32 %v1889, %v1892
    %v1894 = vmul.f32 %v1893, 1.442695
    %v1895 = vpow.pop %v1894
    %v1896 = vsel %vm856, %v1895, 0.0
    %1897 = vadd.xlane.f32.xlu0 %v1896
    %v1898 = vpop.xlane.xlu0 %1897
    %v1899 = vrcp.pop %v1898
    %v1900 = vmul.f32 %v1895, %v1899
    %1901 = vrot.lane.b32.xlu0 %v1472, 112
    %v1902 = vpop.permute.xlu0 %1901
    %v1904 = vsel %vm868, %v1900, 0
    %v1906 = vsel %vm872, %v1902, 0
    %1908 = vmatprep.subr.mxu0 0.0
    %1909 = vmatpush1.msra.mxu0 %v1906
    %1910 = vmatprep.subr.mxu0 0.0
    %1911 = vmatpush1.msra.mxu0 0.0
    %1912 = vmatprep.subr.mxu0 0.0
    %1913 = vmatpush1.msra.mxu0 0.0
    %1914 = vmatprep.subr.mxu0 0.0
    %1915 = vmatpush1.msra.mxu0 0.0
    %1916 = vmatprep.subr.mxu0 0.0
    %1917 = vmatpush1.msra.mxu0 0.0
    %1918 = vmatprep.subr.mxu0 0.0
    %1919 = vmatpush1.msra.mxu0 0.0
    %1920 = vmatprep.subr.mxu0 0.0
    %1921 = vmatpush1.msra.mxu0 0.0
    %1922 = vmatprep.subr.mxu0 0.0
    %1923 = vmatpush1.msra.mxu0 0.0
    %1924 = vmatprep.subr.mxu0 0.0
    %1925 = vmatpush1.msra.mxu0 0.0
    %1926 = vmatprep.subr.mxu0 0.0
    %1927 = vmatpush1.msra.mxu0 0.0
    %1928 = vmatprep.subr.mxu0 0.0
    %1929 = vmatpush1.msra.mxu0 0.0
    %1930 = vmatprep.subr.mxu0 0.0
    %1931 = vmatpush1.msra.mxu0 0.0
    %1932 = vmatprep.subr.mxu0 0.0
    %1933 = vmatpush1.msra.mxu0 0.0
    %1934 = vmatprep.subr.mxu0 0.0
    %1935 = vmatpush1.msra.mxu0 0.0
    %1936 = vmatprep.subr.mxu0 0.0
    %1937 = vmatpush1.msra.mxu0 0.0
    %1938 = vmatprep.subr.mxu0 0.0
    %1939 = vmatpush1.msra.mxu0 0.0
    %1940 = vmatprep.subr.mxu0 0.0
    %1941 = vmatpush1.msra.mxu0 0.0
    %1942 = vmatprep.subr.mxu0 0.0
    %1943 = vmatpush1.msra.mxu0 0.0
    %1944 = vmatprep.subr.mxu0 0.0
    %1945 = vmatpush1.msra.mxu0 0.0
    %1946 = vmatprep.subr.mxu0 0.0
    %1947 = vmatpush1.msra.mxu0 0.0
    %1948 = vmatprep.subr.mxu0 0.0
    %1949 = vmatpush1.msra.mxu0 0.0
    %1950 = vmatprep.subr.mxu0 0.0
    %1951 = vmatpush1.msra.mxu0 0.0
    %1952 = vmatprep.subr.mxu0 0.0
    %1953 = vmatpush1.msra.mxu0 0.0
    %1954 = vmatprep.subr.mxu0 0.0
    %1955 = vmatpush1.msra.mxu0 0.0
    %1956 = vmatprep.subr.mxu0 0.0
    %1957 = vmatpush1.msra.mxu0 0.0
    %1958 = vmatprep.subr.mxu0 0.0
    %1959 = vmatpush1.msra.mxu0 0.0
    %1960 = vmatprep.subr.mxu0 0.0
    %1961 = vmatpush1.msra.mxu0 0.0
    %1962 = vmatprep.subr.mxu0 0.0
    %1963 = vmatpush1.msra.mxu0 0.0
    %1964 = vmatprep.subr.mxu0 0.0
    %1965 = vmatpush1.msra.mxu0 0.0
    %1966 = vmatprep.subr.mxu0 0.0
    %1967 = vmatpush1.msra.mxu0 0.0
    %1968 = vmatprep.subr.mxu0 0.0
    %1969 = vmatpush1.msra.mxu0 0.0
    %1970 = vmatprep.subr.mxu0 0.0
    %1971 = vmatpush1.msra.mxu0 0.0
    %1972 = vmatprep.mubr.f32.mxu0 0.0
    %1973 = vmatmul.mubr.f32.gmra.mrb[0].mxu0 %v1904
    %v1974 = vpop.f32.mrb[0].mxu0
    %v1975 = vadd.f32 0.0, %v1974
    %v1976 = vpop.f32.mrb[0].mxu0
    %1977 = vdwg.mxu0
    %1979 = vrot.lane.b32.xlu0 %v1975, 16
    %v1980 = vpop.permute.xlu0 %1979
    %1982 = vst.msk [vmem:[%s1637] sm:$0xf] %vm1292, %v1980
    %1983 = vrot.lane.b32.xlu0 %v1468, 104
    %v1984 = vpop.permute.xlu0 %1983
    %1985 = vrot.lane.b32.xlu0 %v1470, 104
    %v1986 = vpop.permute.xlu0 %1985
    %v1987 = vsel %vm778, %v1984, 0
    %v1989 = vsel %vm778, %v1986, 0
    %1991 = vmatprep.subr.mxu0 0.0
    %1992 = vmatpush1.xpose.msra.mxu0 %v1989
    %1993 = vmatprep.subr.mxu0 0.0
    %1994 = vmatpush1.xpose.msra.mxu0 0.0
    %1995 = vmatprep.subr.mxu0 0.0
    %1996 = vmatpush1.xpose.msra.mxu0 0.0
    %1997 = vmatprep.subr.mxu0 0.0
    %1998 = vmatpush1.xpose.msra.mxu0 0.0
    %1999 = vmatprep.subr.mxu0 0.0
    %2000 = vmatpush1.xpose.msra.mxu0 0.0
    %2001 = vmatprep.subr.mxu0 0.0
    %2002 = vmatpush1.xpose.msra.mxu0 0.0
    %2003 = vmatprep.subr.mxu0 0.0
    %2004 = vmatpush1.xpose.msra.mxu0 0.0
    %2005 = vmatprep.subr.mxu0 0.0
    %2006 = vmatpush1.xpose.msra.mxu0 0.0
    %2007 = vmatprep.subr.mxu0 0.0
    %2008 = vmatpush1.xpose.msra.mxu0 0.0
    %2009 = vmatprep.subr.mxu0 0.0
    %2010 = vmatpush1.xpose.msra.mxu0 0.0
    %2011 = vmatprep.subr.mxu0 0.0
    %2012 = vmatpush1.xpose.msra.mxu0 0.0
    %2013 = vmatprep.subr.mxu0 0.0
    %2014 = vmatpush1.xpose.msra.mxu0 0.0
    %2015 = vmatprep.subr.mxu0 0.0
    %2016 = vmatpush1.xpose.msra.mxu0 0.0
    %2017 = vmatprep.subr.mxu0 0.0
    %2018 = vmatpush1.xpose.msra.mxu0 0.0
    %2019 = vmatprep.subr.mxu0 0.0
    %2020 = vmatpush1.xpose.msra.mxu0 0.0
    %2021 = vmatprep.subr.mxu0 0.0
    %2022 = vmatpush1.xpose.msra.mxu0 0.0
    %2023 = vmatprep.subr.mxu0 0.0
    %2024 = vmatpush1.xpose.msra.mxu0 0.0
    %2025 = vmatprep.subr.mxu0 0.0
    %2026 = vmatpush1.xpose.msra.mxu0 0.0
    %2027 = vmatprep.subr.mxu0 0.0
    %2028 = vmatpush1.xpose.msra.mxu0 0.0
    %2029 = vmatprep.subr.mxu0 0.0
    %2030 = vmatpush1.xpose.msra.mxu0 0.0
    %2031 = vmatprep.subr.mxu0 0.0
    %2032 = vmatpush1.xpose.msra.mxu0 0.0
    %2033 = vmatprep.subr.mxu0 0.0
    %2034 = vmatpush1.xpose.msra.mxu0 0.0
    %2035 = vmatprep.subr.mxu0 0.0
    %2036 = vmatpush1.xpose.msra.mxu0 0.0
    %2037 = vmatprep.subr.mxu0 0.0
    %2038 = vmatpush1.xpose.msra.mxu0 0.0
    %2039 = vmatprep.subr.mxu0 0.0
    %2040 = vmatpush1.xpose.msra.mxu0 0.0
    %2041 = vmatprep.subr.mxu0 0.0
    %2042 = vmatpush1.xpose.msra.mxu0 0.0
    %2043 = vmatprep.subr.mxu0 0.0
    %2044 = vmatpush1.xpose.msra.mxu0 0.0
    %2045 = vmatprep.subr.mxu0 0.0
    %2046 = vmatpush1.xpose.msra.mxu0 0.0
    %2047 = vmatprep.subr.mxu0 0.0
    %2048 = vmatpush1.xpose.msra.mxu0 0.0
    %2049 = vmatprep.subr.mxu0 0.0
    %2050 = vmatpush1.xpose.msra.mxu0 0.0
    %2051 = vmatprep.subr.mxu0 0.0
    %2052 = vmatpush1.xpose.msra.mxu0 0.0
    %2053 = vmatprep.subr.mxu0 0.0
    %2054 = vmatpush1.xpose.msra.mxu0 0.0
    %2055 = vmatprep.mubr.f32.mxu0 0.0
    %2056 = vmatmul.mubr.f32.gmra.mrb[0].mxu0 %v1987
    %v2057 = vpop.f32.mrb[0].mxu0
    %v2058 = vadd.f32 0.0, %v2057
    %v2059 = vpop.f32.mrb[0].mxu0
    %2060 = vdwg.mxu0
    %v2061 = vmul.f32 %v2058, 0.35355338
    %v2062 = vsel %vm856, %v2061, -inf
    %2063 = vmax.xlane.f32.xlu0 %v2062
    %v2064 = vpop.xlane.xlu0 %2063
    %v2065 = vsub.f32 %v2061, %v2064
    %v2066 = vmul.f32 %v2065, 1.442695
    %v2067 = vpow.pop %v2066
    %v2068 = vsel %vm856, %v2067, 0.0
    %2069 = vadd.xlane.f32.xlu0 %v2068
    %v2070 = vpop.xlane.xlu0 %2069
    %v2071 = vrcp.pop %v2070
    %v2072 = vmul.f32 %v2067, %v2071
    %2073 = vrot.lane.b32.xlu0 %v1472, 104
    %v2074 = vpop.permute.xlu0 %2073
    %v2076 = vsel %vm868, %v2072, 0
    %v2078 = vsel %vm872, %v2074, 0
    %2080 = vmatprep.subr.mxu0 0.0
    %2081 = vmatpush1.msra.mxu0 %v2078
    %2082 = vmatprep.subr.mxu0 0.0
    %2083 = vmatpush1.msra.mxu0 0.0
    %2084 = vmatprep.subr.mxu0 0.0
    %2085 = vmatpush1.msra.mxu0 0.0
    %2086 = vmatprep.subr.mxu0 0.0
    %2087 = vmatpush1.msra.mxu0 0.0
    %2088 = vmatprep.subr.mxu0 0.0
    %2089 = vmatpush1.msra.mxu0 0.0
    %2090 = vmatprep.subr.mxu0 0.0
    %2091 = vmatpush1.msra.mxu0 0.0
    %2092 = vmatprep.subr.mxu0 0.0
    %2093 = vmatpush1.msra.mxu0 0.0
    %2094 = vmatprep.subr.mxu0 0.0
    %2095 = vmatpush1.msra.mxu0 0.0
    %2096 = vmatprep.subr.mxu0 0.0
    %2097 = vmatpush1.msra.mxu0 0.0
    %2098 = vmatprep.subr.mxu0 0.0
    %2099 = vmatpush1.msra.mxu0 0.0
    %2100 = vmatprep.subr.mxu0 0.0
    %2101 = vmatpush1.msra.mxu0 0.0
    %2102 = vmatprep.subr.mxu0 0.0
    %2103 = vmatpush1.msra.mxu0 0.0
    %2104 = vmatprep.subr.mxu0 0.0
    %2105 = vmatpush1.msra.mxu0 0.0
    %2106 = vmatprep.subr.mxu0 0.0
    %2107 = vmatpush1.msra.mxu0 0.0
    %2108 = vmatprep.subr.mxu0 0.0
    %2109 = vmatpush1.msra.mxu0 0.0
    %2110 = vmatprep.subr.mxu0 0.0
    %2111 = vmatpush1.msra.mxu0 0.0
    %2112 = vmatprep.subr.mxu0 0.0
    %2113 = vmatpush1.msra.mxu0 0.0
    %2114 = vmatprep.subr.mxu0 0.0
    %2115 = vmatpush1.msra.mxu0 0.0
    %2116 = vmatprep.subr.mxu0 0.0
    %2117 = vmatpush1.msra.mxu0 0.0
    %2118 = vmatprep.subr.mxu0 0.0
    %2119 = vmatpush1.msra.mxu0 0.0
    %2120 = vmatprep.subr.mxu0 0.0
    %2121 = vmatpush1.msra.mxu0 0.0
    %2122 = vmatprep.subr.mxu0 0.0
    %2123 = vmatpush1.msra.mxu0 0.0
    %2124 = vmatprep.subr.mxu0 0.0
    %2125 = vmatpush1.msra.mxu0 0.0
    %2126 = vmatprep.subr.mxu0 0.0
    %2127 = vmatpush1.msra.mxu0 0.0
    %2128 = vmatprep.subr.mxu0 0.0
    %2129 = vmatpush1.msra.mxu0 0.0
    %2130 = vmatprep.subr.mxu0 0.0
    %2131 = vmatpush1.msra.mxu0 0.0
    %2132 = vmatprep.subr.mxu0 0.0
    %2133 = vmatpush1.msra.mxu0 0.0
    %2134 = vmatprep.subr.mxu0 0.0
    %2135 = vmatpush1.msra.mxu0 0.0
    %2136 = vmatprep.subr.mxu0 0.0
    %2137 = vmatpush1.msra.mxu0 0.0
    %2138 = vmatprep.subr.mxu0 0.0
    %2139 = vmatpush1.msra.mxu0 0.0
    %2140 = vmatprep.subr.mxu0 0.0
    %2141 = vmatpush1.msra.mxu0 0.0
    %2142 = vmatprep.subr.mxu0 0.0
    %2143 = vmatpush1.msra.mxu0 0.0
    %2144 = vmatprep.mubr.f32.mxu0 0.0
    %2145 = vmatmul.mubr.f32.gmra.mrb[0].mxu0 %v2076
    %v2146 = vpop.f32.mrb[0].mxu0
    %v2147 = vadd.f32 0.0, %v2146
    %v2148 = vpop.f32.mrb[0].mxu0
    %2149 = vdwg.mxu0
    %2151 = vrot.lane.b32.xlu0 %v2147, 24
    %v2152 = vpop.permute.xlu0 %2151
    %2154 = vst.msk [vmem:[%s1637] sm:$0xf] %vm1465, %v2152
    %v2155 = vld [vmem:[#allocation5] sm:$0x1]
    %v2156 = vld [vmem:[#allocation5 + $0x4] sm:$0x1]
    %v2159 = vrot.slane %v2156, 7
    %vm2160 = vcmask 1041409
    %v2161 = vsel %vm2160, %v2159, %v2155
    %vm2163 = vcmask 254976
    %2164 = vst.msk [vmem:[#allocation6] sm:$0x3] %vm2163, %v2161
    %v2165 = vld [vmem:[#allocation5 + $0x1] sm:$0x1]
    %v2166 = vld [vmem:[#allocation5 + $0x5] sm:$0x1]
    %v2169 = vrot.slane %v2166, 7
    %v2170 = vsel %vm2160, %v2169, %v2165
    %2171 = vrot.lane.b32.xlu0 %v2170, 32
    %v2172 = vpop.permute.xlu0 %2171
    %vm2174 = vcmask 517376
    %2175 = vst.msk [vmem:[#allocation6] sm:$0x3] %vm2174, %v2172
    %v2176 = vld [vmem:[#allocation5 + $0x2] sm:$0x1]
    %v2177 = vld [vmem:[#allocation5 + $0x6] sm:$0x1]
    %v2180 = vrot.slane %v2177, 7
    %v2181 = vsel %vm2160, %v2180, %v2176
    %2182 = vrot.lane.b32.xlu0 %v2181, 64
    %v2183 = vpop.permute.xlu0 %2182
    %vm2185 = vcmask 779776
    %2186 = vst.msk [vmem:[#allocation6] sm:$0x3] %vm2185, %v2183
    %v2187 = vld [vmem:[#allocation5 + $0x3] sm:$0x1]
    %v2188 = vld [vmem:[#allocation5 + $0x7] sm:$0x1]
    %v2191 = vrot.slane %v2188, 7
    %v2192 = vsel %vm2160, %v2191, %v2187
    %2193 = vrot.lane.b32.xlu0 %v2192, 96
    %v2194 = vpop.permute.xlu0 %2193
    %vm2196 = vcmask 1042176
    %2197 = vst.msk [vmem:[#allocation6] sm:$0x3] %vm2196, %v2194
    %v2198 = vld [vmem:[#allocation6] sm:$0x3]
    %v2199 = vld [vmem:[%s9] sm:$0xff]
    %v2200 = vld [vmem:[%s9 + $0x8] sm:$0xff]
    %v2201 = vld [vmem:[%s9 + $0x10] sm:$0xff]
    %v2202 = vld [vmem:[%s9 + $0x18] sm:$0xff]
    %v2203 = vld [vmem:[%s9 + $0x20] sm:$0xff]
    %v2204 = vld [vmem:[%s9 + $0x28] sm:$0xff]
    %v2205 = vld [vmem:[%s9 + $0x30] sm:$0xff]
    %v2206 = vld [vmem:[%s9 + $0x38] sm:$0xff]
    %v2207 = vld [vmem:[%s9 + $0x40] sm:$0xff]
    %v2208 = vld [vmem:[%s9 + $0x48] sm:$0xff]
    %v2209 = vld [vmem:[%s9 + $0x50] sm:$0xff]
    %v2210 = vld [vmem:[%s9 + $0x58] sm:$0xff]
    %v2211 = vld [vmem:[%s9 + $0x60] sm:$0xff]
    %v2212 = vld [vmem:[%s9 + $0x68] sm:$0xff]
    %v2213 = vld [vmem:[%s9 + $0x70] sm:$0xff]
    %v2214 = vld [vmem:[%s9 + $0x78] sm:$0xff]
    %2215 = vmatprep.subr.mxu0 0.0
    %2216 = vmatpush1.msra.mxu0 %v2199
    %2217 = vmatprep.subr.mxu0 0.0
    %2218 = vmatpush1.msra.mxu0 %v2200
    %2219 = vmatprep.subr.mxu0 0.0
    %2220 = vmatpush1.msra.mxu0 %v2201
    %2221 = vmatprep.subr.mxu0 0.0
    %2222 = vmatpush1.msra.mxu0 %v2202
    %2223 = vmatprep.subr.mxu0 0.0
    %2224 = vmatpush1.msra.mxu0 %v2203
    %2225 = vmatprep.subr.mxu0 0.0
    %2226 = vmatpush1.msra.mxu0 %v2204
    %2227 = vmatprep.subr.mxu0 0.0
    %2228 = vmatpush1.msra.mxu0 %v2205
    %2229 = vmatprep.subr.mxu0 0.0
    %2230 = vmatpush1.msra.mxu0 %v2206
    %2231 = vmatprep.subr.mxu0 0.0
    %2232 = vmatpush1.msra.mxu0 %v2207
    %2233 = vmatprep.subr.mxu0 0.0
    %2234 = vmatpush1.msra.mxu0 %v2208
    %2235 = vmatprep.subr.mxu0 0.0
    %2236 = vmatpush1.msra.mxu0 %v2209
    %2237 = vmatprep.subr.mxu0 0.0
    %2238 = vmatpush1.msra.mxu0 %v2210
    %2239 = vmatprep.subr.mxu0 0.0
    %2240 = vmatpush1.msra.mxu0 %v2211
    %2241 = vmatprep.subr.mxu0 0.0
    %2242 = vmatpush1.msra.mxu0 %v2212
    %2243 = vmatprep.subr.mxu0 0.0
    %2244 = vmatpush1.msra.mxu0 %v2213
    %2245 = vmatprep.subr.mxu0 0.0
    %2246 = vmatpush1.msra.mxu0 %v2214
    %2247 = vmatprep.subr.mxu0 0.0
    %2248 = vmatpush1.msra.mxu0 0.0
    %2249 = vmatprep.subr.mxu0 0.0
    %2250 = vmatpush1.msra.mxu0 0.0
    %2251 = vmatprep.subr.mxu0 0.0
    %2252 = vmatpush1.msra.mxu0 0.0
    %2253 = vmatprep.subr.mxu0 0.0
    %2254 = vmatpush1.msra.mxu0 0.0
    %2255 = vmatprep.subr.mxu0 0.0
    %2256 = vmatpush1.msra.mxu0 0.0
    %2257 = vmatprep.subr.mxu0 0.0
    %2258 = vmatpush1.msra.mxu0 0.0
    %2259 = vmatprep.subr.mxu0 0.0
    %2260 = vmatpush1.msra.mxu0 0.0
    %2261 = vmatprep.subr.mxu0 0.0
    %2262 = vmatpush1.msra.mxu0 0.0
    %2263 = vmatprep.subr.mxu0 0.0
    %2264 = vmatpush1.msra.mxu0 0.0
    %2265 = vmatprep.subr.mxu0 0.0
    %2266 = vmatpush1.msra.mxu0 0.0
    %2267 = vmatprep.subr.mxu0 0.0
    %2268 = vmatpush1.msra.mxu0 0.0
    %2269 = vmatprep.subr.mxu0 0.0
    %2270 = vmatpush1.msra.mxu0 0.0
    %2271 = vmatprep.subr.mxu0 0.0
    %2272 = vmatpush1.msra.mxu0 0.0
    %2273 = vmatprep.subr.mxu0 0.0
    %2274 = vmatpush1.msra.mxu0 0.0
    %2275 = vmatprep.subr.mxu0 0.0
    %2276 = vmatpush1.msra.mxu0 0.0
    %2277 = vmatprep.subr.mxu0 0.0
    %2278 = vmatpush1.msra.mxu0 0.0
    %2279 = vmatprep.mubr.f32.mxu0 0.0
    %2280 = vmatmul.mubr.f32.gmra.mrb[0].mxu0 %v2198
    %v2281 = vpop.f32.mrb[0].mxu0
    %v2282 = vadd.f32 0.0, %v2281
    %v2283 = vpop.f32.mrb[0].mxu0
    %2284 = vdwg.mxu0
    %v2285 = vadd.f32 %v336, %v2282
    %v2286 = vld [vmem:[%s10] sm:$0xff]
    %v2287 = vld [vmem:[%s10 + $0x8] sm:$0xff]
    %v2288 = vld [vmem:[%s10 + $0x10] sm:$0xff]
    %v2289 = vld [vmem:[%s10 + $0x18] sm:$0xff]
    %v2290 = vld [vmem:[%s10 + $0x20] sm:$0xff]
    %v2291 = vld [vmem:[%s10 + $0x28] sm:$0xff]
    %v2292 = vld [vmem:[%s10 + $0x30] sm:$0xff]
    %v2293 = vld [vmem:[%s10 + $0x38] sm:$0xff]
    %v2294 = vld [vmem:[%s10 + $0x40] sm:$0xff]
    %v2295 = vld [vmem:[%s10 + $0x48] sm:$0xff]
    %v2296 = vld [vmem:[%s10 + $0x50] sm:$0xff]
    %v2297 = vld [vmem:[%s10 + $0x58] sm:$0xff]
    %v2298 = vld [vmem:[%s10 + $0x60] sm:$0xff]
    %v2299 = vld [vmem:[%s10 + $0x68] sm:$0xff]
    %v2300 = vld [vmem:[%s10 + $0x70] sm:$0xff]
    %v2301 = vld [vmem:[%s10 + $0x78] sm:$0xff]
    %v2302 = vld [vmem:[%s11] sm:$0x1]
    %v2304 = vlaneseq
    %v2305 = vshrl.u32 %v2304, 7
    %v2306 = vsub.s32 0, %v2305
    %v2307 = vrot.slane %v2302, %v2306
    %2309 = vmatprep.subr.mxu0 0.0
    %2310 = vmatpush1.msra.mxu0 %v2286
    %2311 = vmatprep.subr.mxu0 0.0
    %2312 = vmatpush1.msra.mxu0 %v2287
    %2313 = vmatprep.subr.mxu0 0.0
    %2314 = vmatpush1.msra.mxu0 %v2288
    %2315 = vmatprep.subr.mxu0 0.0
    %2316 = vmatpush1.msra.mxu0 %v2289
    %2317 = vmatprep.subr.mxu0 0.0
    %2318 = vmatpush1.msra.mxu0 %v2290
    %2319 = vmatprep.subr.mxu0 0.0
    %2320 = vmatpush1.msra.mxu0 %v2291
    %2321 = vmatprep.subr.mxu0 0.0
    %2322 = vmatpush1.msra.mxu0 %v2292
    %2323 = vmatprep.subr.mxu0 0.0
    %2324 = vmatpush1.msra.mxu0 %v2293
    %2325 = vmatprep.subr.mxu0 0.0
    %2326 = vmatpush1.msra.mxu0 %v2294
    %2327 = vmatprep.subr.mxu0 0.0
    %2328 = vmatpush1.msra.mxu0 %v2295
    %2329 = vmatprep.subr.mxu0 0.0
    %2330 = vmatpush1.msra.mxu0 %v2296
    %2331 = vmatprep.subr.mxu0 0.0
    %2332 = vmatpush1.msra.mxu0 %v2297
    %2333 = vmatprep.subr.mxu0 0.0
    %2334 = vmatpush1.msra.mxu0 %v2298
    %2335 = vmatprep.subr.mxu0 0.0
    %2336 = vmatpush1.msra.mxu0 %v2299
    %2337 = vmatprep.subr.mxu0 0.0
    %2338 = vmatpush1.msra.mxu0 %v2300
    %2339 = vmatprep.subr.mxu0 0.0
    %2340 = vmatpush1.msra.mxu0 %v2301
    %2341 = vmatprep.subr.mxu0 0.0
    %2342 = vmatpush1.msra.mxu0 0.0
    %2343 = vmatprep.subr.mxu0 0.0
    %2344 = vmatpush1.msra.mxu0 0.0
    %2345 = vmatprep.subr.mxu0 0.0
    %2346 = vmatpush1.msra.mxu0 0.0
    %2347 = vmatprep.subr.mxu0 0.0
    %2348 = vmatpush1.msra.mxu0 0.0
    %2349 = vmatprep.subr.mxu0 0.0
    %2350 = vmatpush1.msra.mxu0 0.0
    %2351 = vmatprep.subr.mxu0 0.0
    %2352 = vmatpush1.msra.mxu0 0.0
    %2353 = vmatprep.subr.mxu0 0.0
    %2354 = vmatpush1.msra.mxu0 0.0
    %2355 = vmatprep.subr.mxu0 0.0
    %2356 = vmatpush1.msra.mxu0 0.0
    %2357 = vmatprep.subr.mxu0 0.0
    %2358 = vmatpush1.msra.mxu0 0.0
    %2359 = vmatprep.subr.mxu0 0.0
    %2360 = vmatpush1.msra.mxu0 0.0
    %2361 = vmatprep.subr.mxu0 0.0
    %2362 = vmatpush1.msra.mxu0 0.0
    %2363 = vmatprep.subr.mxu0 0.0
    %2364 = vmatpush1.msra.mxu0 0.0
    %2365 = vmatprep.subr.mxu0 0.0
    %2366 = vmatpush1.msra.mxu0 0.0
    %2367 = vmatprep.subr.mxu0 0.0
    %2368 = vmatpush1.msra.mxu0 0.0
    %2369 = vmatprep.subr.mxu0 0.0
    %2370 = vmatpush1.msra.mxu0 0.0
    %2371 = vmatprep.subr.mxu0 0.0
    %2372 = vmatpush1.msra.mxu0 0.0
    %2373 = vmatprep.mubr.f32.mxu0 0.0
    %2374 = vmatmul.mubr.f32.gmra.mrb[0].mxu0 %v2285
    %v2375 = vpop.f32.mrb[0].mxu0
    %v2376 = vadd.f32 %v2307, %v2375
    %v2377 = vpop.f32.mrb[0].mxu0
    %2378 = vdwg.mxu0
    %v2379 = vmax.f32 %v2376, 0.0
    %v2380 = vld [vmem:[%s12] sm:$0xff]
    %v2381 = vld [vmem:[%s12 + $0x8] sm:$0xff]
    %v2382 = vld [vmem:[%s12 + $0x10] sm:$0xff]
    %v2383 = vld [vmem:[%s12 + $0x18] sm:$0xff]
    %v2384 = vld [vmem:[%s12 + $0x20] sm:$0xff]
    %v2385 = vld [vmem:[%s12 + $0x28] sm:$0xff]
    %v2386 = vld [vmem:[%s12 + $0x30] sm:$0xff]
    %v2387 = vld [vmem:[%s12 + $0x38] sm:$0xff]
    %v2388 = vld [vmem:[%s12 + $0x40] sm:$0xff]
    %v2389 = vld [vmem:[%s12 + $0x48] sm:$0xff]
    %v2390 = vld [vmem:[%s12 + $0x50] sm:$0xff]
    %v2391 = vld [vmem:[%s12 + $0x58] sm:$0xff]
    %v2392 = vld [vmem:[%s12 + $0x60] sm:$0xff]
    %v2393 = vld [vmem:[%s12 + $0x68] sm:$0xff]
    %v2394 = vld [vmem:[%s12 + $0x70] sm:$0xff]
    %v2395 = vld [vmem:[%s12 + $0x78] sm:$0xff]
    %v2396 = vld [vmem:[%s13] sm:$0x1]
    %v2398 = vlaneseq
    %v2399 = vshrl.u32 %v2398, 7
    %v2400 = vsub.s32 0, %v2399
    %v2401 = vrot.slane %v2396, %v2400
    %2403 = vmatprep.subr.mxu0 0.0
    %2404 = vmatpush1.msra.mxu0 %v2380
    %2405 = vmatprep.subr.mxu0 0.0
    %2406 = vmatpush1.msra.mxu0 %v2381
    %2407 = vmatprep.subr.mxu0 0.0
    %2408 = vmatpush1.msra.mxu0 %v2382
    %2409 = vmatprep.subr.mxu0 0.0
    %2410 = vmatpush1.msra.mxu0 %v2383
    %2411 = vmatprep.subr.mxu0 0.0
    %2412 = vmatpush1.msra.mxu0 %v2384
    %2413 = vmatprep.subr.mxu0 0.0
    %2414 = vmatpush1.msra.mxu0 %v2385
    %2415 = vmatprep.subr.mxu0 0.0
    %2416 = vmatpush1.msra.mxu0 %v2386
    %2417 = vmatprep.subr.mxu0 0.0
    %2418 = vmatpush1.msra.mxu0 %v2387
    %2419 = vmatprep.subr.mxu0 0.0
    %2420 = vmatpush1.msra.mxu0 %v2388
    %2421 = vmatprep.subr.mxu0 0.0
    %2422 = vmatpush1.msra.mxu0 %v2389
    %2423 = vmatprep.subr.mxu0 0.0
    %2424 = vmatpush1.msra.mxu0 %v2390
    %2425 = vmatprep.subr.mxu0 0.0
    %2426 = vmatpush1.msra.mxu0 %v2391
    %2427 = vmatprep.subr.mxu0 0.0
    %2428 = vmatpush1.msra.mxu0 %v2392
    %2429 = vmatprep.subr.mxu0 0.0
    %2430 = vmatpush1.msra.mxu0 %v2393
    %2431 = vmatprep.subr.mxu0 0.0
    %2432 = vmatpush1.msra.mxu0 %v2394
    %2433 = vmatprep.subr.mxu0 0.0
    %2434 = vmatpush1.msra.mxu0 %v2395
    %2435 = vmatprep.subr.mxu0 0.0
    %2436 = vmatpush1.msra.mxu0 0.0
    %2437 = vmatprep.subr.mxu0 0.0
    %2438 = vmatpush1.msra.mxu0 0.0
    %2439 = vmatprep.subr.mxu0 0.0
    %2440 = vmatpush1.msra.mxu0 0.0
    %2441 = vmatprep.subr.mxu0 0.0
    %2442 = vmatpush1.msra.mxu0 0.0
    %2443 = vmatprep.subr.mxu0 0.0
    %2444 = vmatpush1.msra.mxu0 0.0
    %2445 = vmatprep.subr.mxu0 0.0
    %2446 = vmatpush1.msra.mxu0 0.0
    %2447 = vmatprep.subr.mxu0 0.0
    %2448 = vmatpush1.msra.mxu0 0.0
    %2449 = vmatprep.subr.mxu0 0.0
    %2450 = vmatpush1.msra.mxu0 0.0
    %2451 = vmatprep.subr.mxu0 0.0
    %2452 = vmatpush1.msra.mxu0 0.0
    %2453 = vmatprep.subr.mxu0 0.0
    %2454 = vmatpush1.msra.mxu0 0.0
    %2455 = vmatprep.subr.mxu0 0.0
    %2456 = vmatpush1.msra.mxu0 0.0
    %2457 = vmatprep.subr.mxu0 0.0
    %2458 = vmatpush1.msra.mxu0 0.0
    %2459 = vmatprep.subr.mxu0 0.0
    %2460 = vmatpush1.msra.mxu0 0.0
    %2461 = vmatprep.subr.mxu0 0.0
    %2462 = vmatpush1.msra.mxu0 0.0
    %2463 = vmatprep.subr.mxu0 0.0
    %2464 = vmatpush1.msra.mxu0 0.0
    %2465 = vmatprep.subr.mxu0 0.0
    %2466 = vmatpush1.msra.mxu0 0.0
    %2467 = vmatprep.mubr.f32.mxu0 0.0
    %2468 = vmatmul.mubr.f32.gmra.mrb[0].mxu0 %v2379
    %v2469 = vpop.f32.mrb[0].mxu0
    %v2470 = vadd.f32 %v2401, %v2469
    %v2471 = vpop.f32.mrb[0].mxu0
    %2472 = vdwg.mxu0
    %v2473 = vld [vmem:[%s14] sm:$0xff]
    %v2474 = vld [vmem:[%s14 + $0x8] sm:$0xff]
    %v2475 = vld [vmem:[%s14 + $0x10] sm:$0xff]
    %v2476 = vld [vmem:[%s14 + $0x18] sm:$0xff]
    %v2477 = vld [vmem:[%s14 + $0x20] sm:$0xff]
    %v2478 = vld [vmem:[%s14 + $0x28] sm:$0xff]
    %v2479 = vld [vmem:[%s14 + $0x30] sm:$0xff]
    %v2480 = vld [vmem:[%s14 + $0x38] sm:$0xff]
    %v2481 = vld [vmem:[%s14 + $0x40] sm:$0xff]
    %v2482 = vld [vmem:[%s14 + $0x48] sm:$0xff]
    %v2483 = vld [vmem:[%s14 + $0x50] sm:$0xff]
    %v2484 = vld [vmem:[%s14 + $0x58] sm:$0xff]
    %v2485 = vld [vmem:[%s14 + $0x60] sm:$0xff]
    %v2486 = vld [vmem:[%s14 + $0x68] sm:$0xff]
    %v2487 = vld [vmem:[%s14 + $0x70] sm:$0xff]
    %v2488 = vld [vmem:[%s14 + $0x78] sm:$0xff]
    %v2489 = vld [vmem:[%s15] sm:$0x1]
    %v2491 = vlaneseq
    %v2492 = vshrl.u32 %v2491, 7
    %v2493 = vsub.s32 0, %v2492
    %v2494 = vrot.slane %v2489, %v2493
    %2496 = vmatprep.subr.mxu0 0.0
    %2497 = vmatpush1.msra.mxu0 %v2473
    %2498 = vmatprep.subr.mxu0 0.0
    %2499 = vmatpush1.msra.mxu0 %v2474
    %2500 = vmatprep.subr.mxu0 0.0
    %2501 = vmatpush1.msra.mxu0 %v2475
    %2502 = vmatprep.subr.mxu0 0.0
    %2503 = vmatpush1.msra.mxu0 %v2476
    %2504 = vmatprep.subr.mxu0 0.0
    %2505 = vmatpush1.msra.mxu0 %v2477
    %2506 = vmatprep.subr.mxu0 0.0
    %2507 = vmatpush1.msra.mxu0 %v2478
    %2508 = vmatprep.subr.mxu0 0.0
    %2509 = vmatpush1.msra.mxu0 %v2479
    %2510 = vmatprep.subr.mxu0 0.0
    %2511 = vmatpush1.msra.mxu0 %v2480
    %2512 = vmatprep.subr.mxu0 0.0
    %2513 = vmatpush1.msra.mxu0 %v2481
    %2514 = vmatprep.subr.mxu0 0.0
    %2515 = vmatpush1.msra.mxu0 %v2482
    %2516 = vmatprep.subr.mxu0 0.0
    %2517 = vmatpush1.msra.mxu0 %v2483
    %2518 = vmatprep.subr.mxu0 0.0
    %2519 = vmatpush1.msra.mxu0 %v2484
    %2520 = vmatprep.subr.mxu0 0.0
    %2521 = vmatpush1.msra.mxu0 %v2485
    %2522 = vmatprep.subr.mxu0 0.0
    %2523 = vmatpush1.msra.mxu0 %v2486
    %2524 = vmatprep.subr.mxu0 0.0
    %2525 = vmatpush1.msra.mxu0 %v2487
    %2526 = vmatprep.subr.mxu0 0.0
    %2527 = vmatpush1.msra.mxu0 %v2488
    %2528 = vmatprep.subr.mxu0 0.0
    %2529 = vmatpush1.msra.mxu0 0.0
    %2530 = vmatprep.subr.mxu0 0.0
    %2531 = vmatpush1.msra.mxu0 0.0
    %2532 = vmatprep.subr.mxu0 0.0
    %2533 = vmatpush1.msra.mxu0 0.0
    %2534 = vmatprep.subr.mxu0 0.0
    %2535 = vmatpush1.msra.mxu0 0.0
    %2536 = vmatprep.subr.mxu0 0.0
    %2537 = vmatpush1.msra.mxu0 0.0
    %2538 = vmatprep.subr.mxu0 0.0
    %2539 = vmatpush1.msra.mxu0 0.0
    %2540 = vmatprep.subr.mxu0 0.0
    %2541 = vmatpush1.msra.mxu0 0.0
    %2542 = vmatprep.subr.mxu0 0.0
    %2543 = vmatpush1.msra.mxu0 0.0
    %2544 = vmatprep.subr.mxu0 0.0
    %2545 = vmatpush1.msra.mxu0 0.0
    %2546 = vmatprep.subr.mxu0 0.0
    %2547 = vmatpush1.msra.mxu0 0.0
    %2548 = vmatprep.subr.mxu0 0.0
    %2549 = vmatpush1.msra.mxu0 0.0
    %2550 = vmatprep.subr.mxu0 0.0
    %2551 = vmatpush1.msra.mxu0 0.0
    %2552 = vmatprep.subr.mxu0 0.0
    %2553 = vmatpush1.msra.mxu0 0.0
    %2554 = vmatprep.subr.mxu0 0.0
    %2555 = vmatpush1.msra.mxu0 0.0
    %2556 = vmatprep.subr.mxu0 0.0
    %2557 = vmatpush1.msra.mxu0 0.0
    %2558 = vmatprep.subr.mxu0 0.0
    %2559 = vmatpush1.msra.mxu0 0.0
    %2560 = vmatprep.mubr.f32.mxu0 0.0
    %2561 = vmatmul.mubr.f32.gmra.mrb[0].mxu0 %v2285
    %v2562 = vpop.f32.mrb[0].mxu0
    %v2563 = vadd.f32 %v2494, %v2562
    %v2564 = vpop.f32.mrb[0].mxu0
    %2565 = vdwg.mxu0
    %v2566 = vmax.f32 %v2563, 0.0
    %v2567 = vld [vmem:[%s16] sm:$0xff]
    %v2568 = vld [vmem:[%s16 + $0x8] sm:$0xff]
    %v2569 = vld [vmem:[%s16 + $0x10] sm:$0xff]
    %v2570 = vld [vmem:[%s16 + $0x18] sm:$0xff]
    %v2571 = vld [vmem:[%s16 + $0x20] sm:$0xff]
    %v2572 = vld [vmem:[%s16 + $0x28] sm:$0xff]
    %v2573 = vld [vmem:[%s16 + $0x30] sm:$0xff]
    %v2574 = vld [vmem:[%s16 + $0x38] sm:$0xff]
    %v2575 = vld [vmem:[%s16 + $0x40] sm:$0xff]
    %v2576 = vld [vmem:[%s16 + $0x48] sm:$0xff]
    %v2577 = vld [vmem:[%s16 + $0x50] sm:$0xff]
    %v2578 = vld [vmem:[%s16 + $0x58] sm:$0xff]
    %v2579 = vld [vmem:[%s16 + $0x60] sm:$0xff]
    %v2580 = vld [vmem:[%s16 + $0x68] sm:$0xff]
    %v2581 = vld [vmem:[%s16 + $0x70] sm:$0xff]
    %v2582 = vld [vmem:[%s16 + $0x78] sm:$0xff]
    %v2583 = vld [vmem:[%s17] sm:$0x1]
    %v2585 = vlaneseq
    %v2586 = vshrl.u32 %v2585, 7
    %v2587 = vsub.s32 0, %v2586
    %v2588 = vrot.slane %v2583, %v2587
    %2590 = vmatprep.subr.mxu0 0.0
    %2591 = vmatpush1.msra.mxu0 %v2567
    %2592 = vmatprep.subr.mxu0 0.0
    %2593 = vmatpush1.msra.mxu0 %v2568
    %2594 = vmatprep.subr.mxu0 0.0
    %2595 = vmatpush1.msra.mxu0 %v2569
    %2596 = vmatprep.subr.mxu0 0.0
    %2597 = vmatpush1.msra.mxu0 %v2570
    %2598 = vmatprep.subr.mxu0 0.0
    %2599 = vmatpush1.msra.mxu0 %v2571
    %2600 = vmatprep.subr.mxu0 0.0
    %2601 = vmatpush1.msra.mxu0 %v2572
    %2602 = vmatprep.subr.mxu0 0.0
    %2603 = vmatpush1.msra.mxu0 %v2573
    %2604 = vmatprep.subr.mxu0 0.0
    %2605 = vmatpush1.msra.mxu0 %v2574
    %2606 = vmatprep.subr.mxu0 0.0
    %2607 = vmatpush1.msra.mxu0 %v2575
    %2608 = vmatprep.subr.mxu0 0.0
    %2609 = vmatpush1.msra.mxu0 %v2576
    %2610 = vmatprep.subr.mxu0 0.0
    %2611 = vmatpush1.msra.mxu0 %v2577
    %2612 = vmatprep.subr.mxu0 0.0
    %2613 = vmatpush1.msra.mxu0 %v2578
    %2614 = vmatprep.subr.mxu0 0.0
    %2615 = vmatpush1.msra.mxu0 %v2579
    %2616 = vmatprep.subr.mxu0 0.0
    %2617 = vmatpush1.msra.mxu0 %v2580
    %2618 = vmatprep.subr.mxu0 0.0
    %2619 = vmatpush1.msra.mxu0 %v2581
    %2620 = vmatprep.subr.mxu0 0.0
    %2621 = vmatpush1.msra.mxu0 %v2582
    %2622 = vmatprep.subr.mxu0 0.0
    %2623 = vmatpush1.msra.mxu0 0.0
    %2624 = vmatprep.subr.mxu0 0.0
    %2625 = vmatpush1.msra.mxu0 0.0
    %2626 = vmatprep.subr.mxu0 0.0
    %2627 = vmatpush1.msra.mxu0 0.0
    %2628 = vmatprep.subr.mxu0 0.0
    %2629 = vmatpush1.msra.mxu0 0.0
    %2630 = vmatprep.subr.mxu0 0.0
    %2631 = vmatpush1.msra.mxu0 0.0
    %2632 = vmatprep.subr.mxu0 0.0
    %2633 = vmatpush1.msra.mxu0 0.0
    %2634 = vmatprep.subr.mxu0 0.0
    %2635 = vmatpush1.msra.mxu0 0.0
    %2636 = vmatprep.subr.mxu0 0.0
    %2637 = vmatpush1.msra.mxu0 0.0
    %2638 = vmatprep.subr.mxu0 0.0
    %2639 = vmatpush1.msra.mxu0 0.0
    %2640 = vmatprep.subr.mxu0 0.0
    %2641 = vmatpush1.msra.mxu0 0.0
    %2642 = vmatprep.subr.mxu0 0.0
    %2643 = vmatpush1.msra.mxu0 0.0
    %2644 = vmatprep.subr.mxu0 0.0
    %2645 = vmatpush1.msra.mxu0 0.0
    %2646 = vmatprep.subr.mxu0 0.0
    %2647 = vmatpush1.msra.mxu0 0.0
    %2648 = vmatprep.subr.mxu0 0.0
    %2649 = vmatpush1.msra.mxu0 0.0
    %2650 = vmatprep.subr.mxu0 0.0
    %2651 = vmatpush1.msra.mxu0 0.0
    %2652 = vmatprep.subr.mxu0 0.0
    %2653 = vmatpush1.msra.mxu0 0.0
    %2654 = vmatprep.mubr.f32.mxu0 0.0
    %2655 = vmatmul.mubr.f32.gmra.mrb[0].mxu0 %v2566
    %v2656 = vpop.f32.mrb[0].mxu0
    %v2657 = vadd.f32 %v2588, %v2656
    %v2658 = vpop.f32.mrb[0].mxu0
    %2659 = vdwg.mxu0
    %v2660 = vld [vmem:[%s18] sm:$0x3]
    %v2661 = vmul.f32 %v2657, 0.5
    %v2662 = vmul.f32 %v2661, 1.442695
    %v2663 = vpow.pop %v2662
    %v2664 = vmul.f32 %v2660, %v2663
    %v2665 = vadd.f32 %v2470, %v2664
    %v2666 = vmul.f32 %v2657, -0.5
    %v2667 = vmul.f32 %v2660, 0.5
    %v2668 = vmul.f32 %v2667, %v2660
    %v2669 = vsub.f32 %v2666, %v2668
    %v2670 = vadd.f32 %v2669, 0.0
    %v2671 = vtanh.pop %v2665
    %vm2672 = vcmask 33792
    %v2673 = vsel %vm2672, %v2671, -inf
    %2674 = vmax.xlane.f32.xlu0 %v2673
    %v2675 = vpop.xlane.xlu0 %2674
    %v2676 = vsub.f32 %v2671, %v2675
    %v2677 = vmul.f32 %v2676, 1.442695
    %v2678 = vpow.pop %v2677
    %v2679 = vsel %vm2672, %v2678, 0.0
    %2680 = vadd.xlane.f32.xlu0 %v2679
    %v2681 = vpop.xlane.xlu0 %2680
    %v2682 = vrcp.pop %v2681
    %v2683 = vmul.f32 %v2678, %v2682
    %2684 = vst.msk [vmem:[%s19] sm:$0x3] %vm2672, %v2683
    %vm2685 = vcmask 74792
    %v2686 = vsel %vm2685, %v2671, -inf
    %2687 = vmax.xlane.f32.xlu0 %v2686
    %v2688 = vpop.xlane.xlu0 %2687
    %v2689 = vsub.f32 %v2671, %v2688
    %v2690 = vmul.f32 %v2689, 1.442695
    %v2691 = vpow.pop %v2690
    %2693 = vrot.lane.b32.xlu0 %v2691, 123
    %v2694 = vpop.permute.xlu0 %2693
    %v2696 = vsel %vm2672, %v2694, 0.0
    %2697 = vadd.xlane.f32.xlu0 %v2696
    %v2698 = vpop.xlane.xlu0 %2697
    %v2699 = vrcp.pop %v2698
    %v2700 = vmul.f32 %v2691, %v2699
    %2701 = vst.msk [vmem:[%s19] sm:$0x3] %vm2685, %v2700
    %vm2702 = vcmask 115792
    %v2703 = vsel %vm2702, %v2671, -inf
    %2704 = vmax.xlane.f32.xlu0 %v2703
    %v2705 = vpop.xlane.xlu0 %2704
    %v2706 = vsub.f32 %v2671, %v2705
    %v2707 = vmul.f32 %v2706, 1.442695
    %v2708 = vpow.pop %v2707
    %2710 = vrot.lane.b32.xlu0 %v2708, 118
    %v2711 = vpop.permute.xlu0 %2710
    %v2713 = vsel %vm2672, %v2711, 0.0
    %2714 = vadd.xlane.f32.xlu0 %v2713
    %v2715 = vpop.xlane.xlu0 %2714
    %v2716 = vrcp.pop %v2715
    %v2717 = vmul.f32 %v2708, %v2716
    %2718 = vst.msk [vmem:[%s19] sm:$0x3] %vm2702, %v2717
    %vm2719 = vcmask 156792
    %v2720 = vsel %vm2719, %v2671, -inf
    %2721 = vmax.xlane.f32.xlu0 %v2720
    %v2722 = vpop.xlane.xlu0 %2721
    %v2723 = vsub.f32 %v2671, %v2722
    %v2724 = vmul.f32 %v2723, 1.442695
    %v2725 = vpow.pop %v2724
    %2727 = vrot.lane.b32.xlu0 %v2725, 113
    %v2728 = vpop.permute.xlu0 %2727
    %v2730 = vsel %vm2672, %v2728, 0.0
    %2731 = vadd.xlane.f32.xlu0 %v2730
    %v2732 = vpop.xlane.xlu0 %2731
    %v2733 = vrcp.pop %v2732
    %v2734 = vmul.f32 %v2725, %v2733
    %2735 = vst.msk [vmem:[%s19] sm:$0x3] %vm2719, %v2734
    %s2736 = scalar_lea.vmem %s2, 128
    %v2737 = vld [vmem:[%s2736] sm:$0xff]
    %v2738 = vld [vmem:[%s2736 + $0x8] sm:$0xff]
    %v2739 = vld [vmem:[%s2736 + $0x10] sm:$0xff]
    %v2740 = vld [vmem:[%s2736 + $0x18] sm:$0xff]
    %v2741 = vld [vmem:[%s2736 + $0x20] sm:$0xff]
    %v2742 = vld [vmem:[%s2736 + $0x28] sm:$0xff]
    %v2743 = vld [vmem:[%s2736 + $0x30] sm:$0xff]
    %v2744 = vld [vmem:[%s2736 + $0x38] sm:$0xff]
    %v2745 = vld [vmem:[%s2736 + $0x40] sm:$0xff]
    %v2746 = vld [vmem:[%s2736 + $0x48] sm:$0xff]
    %v2747 = vld [vmem:[%s2736 + $0x50] sm:$0xff]
    %v2748 = vld [vmem:[%s2736 + $0x58] sm:$0xff]
    %v2749 = vld [vmem:[%s2736 + $0x60] sm:$0xff]
    %v2750 = vld [vmem:[%s2736 + $0x68] sm:$0xff]
    %v2751 = vld [vmem:[%s2736 + $0x70] sm:$0xff]
    %v2752 = vld [vmem:[%s2736 + $0x78] sm:$0xff]
    %s2753 = scalar_lea.vmem %s3, 1
    %v2754 = vld [vmem:[%s2753] sm:$0x1]
    %v2756 = vlaneseq
    %v2757 = vshrl.u32 %v2756, 7
    %v2758 = vsub.s32 0, %v2757
    %v2759 = vrot.slane %v2754, %v2758
    %2761 = vmatprep.subr.mxu0 0.0
    %2762 = vmatpush1.msra.mxu0 %v2737
    %2763 = vmatprep.subr.mxu0 0.0
    %2764 = vmatpush1.msra.mxu0 %v2738
    %2765 = vmatprep.subr.mxu0 0.0
    %2766 = vmatpush1.msra.mxu0 %v2739
    %2767 = vmatprep.subr.mxu0 0.0
    %2768 = vmatpush1.msra.mxu0 %v2740
    %2769 = vmatprep.subr.mxu0 0.0
    %2770 = vmatpush1.msra.mxu0 %v2741
    %2771 = vmatprep.subr.mxu0 0.0
    %2772 = vmatpush1.msra.mxu0 %v2742
    %2773 = vmatprep.subr.mxu0 0.0
    %2774 = vmatpush1.msra.mxu0 %v2743
    %2775 = vmatprep.subr.mxu0 0.0
    %2776 = vmatpush1.msra.mxu0 %v2744
    %2777 = vmatprep.subr.mxu0 0.0
    %2778 = vmatpush1.msra.mxu0 %v2745
    %2779 = vmatprep.subr.mxu0 0.0
    %2780 = vmatpush1.msra.mxu0 %v2746
    %2781 = vmatprep.subr.mxu0 0.0
    %2782 = vmatpush1.msra.mxu0 %v2747
    %2783 = vmatprep.subr.mxu0 0.0
    %2784 = vmatpush1.msra.mxu0 %v2748
    %2785 = vmatprep.subr.mxu0 0.0
    %2786 = vmatpush1.msra.mxu0 %v2749
    %2787 = vmatprep.subr.mxu0 0.0
    %2788 = vmatpush1.msra.mxu0 %v2750
    %2789 = vmatprep.subr.mxu0 0.0
    %2790 = vmatpush1.msra.mxu0 %v2751
    %2791 = vmatprep.subr.mxu0 0.0
    %2792 = vmatpush1.msra.mxu0 %v2752
    %2793 = vmatprep.subr.mxu0 0.0
    %2794 = vmatpush1.msra.mxu0 0.0
    %2795 = vmatprep.subr.mxu0 0.0
    %2796 = vmatpush1.msra.mxu0 0.0
    %2797 = vmatprep.subr.mxu0 0.0
    %2798 = vmatpush1.msra.mxu0 0.0
    %2799 = vmatprep.subr.mxu0 0.0
    %2800 = vmatpush1.msra.mxu0 0.0
    %2801 = vmatprep.subr.mxu0 0.0
    %2802 = vmatpush1.msra.mxu0 0.0
    %2803 = vmatprep.subr.mxu0 0.0
    %2804 = vmatpush1.msra.mxu0 0.0
    %2805 = vmatprep.subr.mxu0 0.0
    %2806 = vmatpush1.msra.mxu0 0.0
    %2807 = vmatprep.subr.mxu0 0.0
    %2808 = vmatpush1.msra.mxu0 0.0
    %2809 = vmatprep.subr.mxu0 0.0
    %2810 = vmatpush1.msra.mxu0 0.0
    %2811 = vmatprep.subr.mxu0 0.0
    %2812 = vmatpush1.msra.mxu0 0.0
    %2813 = vmatprep.subr.mxu0 0.0
    %2814 = vmatpush1.msra.mxu0 0.0
    %2815 = vmatprep.subr.mxu0 0.0
    %2816 = vmatpush1.msra.mxu0 0.0
    %2817 = vmatprep.subr.mxu0 0.0
    %2818 = vmatpush1.msra.mxu0 0.0
    %2819 = vmatprep.subr.mxu0 0.0
    %2820 = vmatpush1.msra.mxu0 0.0
    %2821 = vmatprep.subr.mxu0 0.0
    %2822 = vmatpush1.msra.mxu0 0.0
    %2823 = vmatprep.subr.mxu0 0.0
    %2824 = vmatpush1.msra.mxu0 0.0
    %2825 = vmatprep.mubr.f32.mxu0 0.0
    %2826 = vmatmul.mubr.f32.gmra.mrb[0].mxu0 %v65
    %v2827 = vpop.f32.mrb[0].mxu0
    %v2828 = vadd.f32 %v2759, %v2827
    %v2829 = vpop.f32.mrb[0].mxu0
    %2830 = vdwg.mxu0
    %v2831 = vmax.f32 %v2828, 0.0
    %s2832 = scalar_lea.vmem %s4, 128
    %v2833 = vld [vmem:[%s2832] sm:$0xff]
    %v2834 = vld [vmem:[%s2832 + $0x8] sm:$0xff]
    %v2835 = vld [vmem:[%s2832 + $0x10] sm:$0xff]
    %v2836 = vld [vmem:[%s2832 + $0x18] sm:$0xff]
    %v2837 = vld [vmem:[%s2832 + $0x20] sm:$0xff]
    %v2838 = vld [vmem:[%s2832 + $0x28] sm:$0xff]
    %v2839 = vld [vmem:[%s2832 + $0x30] sm:$0xff]
    %v2840 = vld [vmem:[%s2832 + $0x38] sm:$0xff]
    %v2841 = vld [vmem:[%s2832 + $0x40] sm:$0xff]
    %v2842 = vld [vmem:[%s2832 + $0x48] sm:$0xff]
    %v2843 = vld [vmem:[%s2832 + $0x50] sm:$0xff]
    %v2844 = vld [vmem:[%s2832 + $0x58] sm:$0xff]
    %v2845 = vld [vmem:[%s2832 + $0x60] sm:$0xff]
    %v2846 = vld [vmem:[%s2832 + $0x68] sm:$0xff]
    %v2847 = vld [vmem:[%s2832 + $0x70] sm:$0xff]
    %v2848 = vld [vmem:[%s2832 + $0x78] sm:$0xff]
    %s2849 = scalar_lea.vmem %s5, 1
    %v2850 = vld [vmem:[%s2849] sm:$0x1]
    %v2852 = vlaneseq
    %v2853 = vshrl.u32 %v2852, 7
    %v2854 = vsub.s32 0, %v2853
    %v2855 = vrot.slane %v2850, %v2854
    %2857 = vmatprep.subr.mxu0 0.0
    %2858 = vmatpush1.msra.mxu0 %v2833
    %2859 = vmatprep.subr.mxu0 0.0
    %2860 = vmatpush1.msra.mxu0 %v2834
    %2861 = vmatprep.subr.mxu0 0.0
    %2862 = vmatpush1.msra.mxu0 %v2835
    %2863 = vmatprep.subr.mxu0 0.0
    %2864 = vmatpush1.msra.mxu0 %v2836
    %2865 = vmatprep.subr.mxu0 0.0
    %2866 = vmatpush1.msra.mxu0 %v2837
    %2867 = vmatprep.subr.mxu0 0.0
    %2868 = vmatpush1.msra.mxu0 %v2838
    %2869 = vmatprep.subr.mxu0 0.0
    %2870 = vmatpush1.msra.mxu0 %v2839
    %2871 = vmatprep.subr.mxu0 0.0
    %2872 = vmatpush1.msra.mxu0 %v2840
    %2873 = vmatprep.subr.mxu0 0.0
    %2874 = vmatpush1.msra.mxu0 %v2841
    %2875 = vmatprep.subr.mxu0 0.0
    %2876 = vmatpush1.msra.mxu0 %v2842
    %2877 = vmatprep.subr.mxu0 0.0
    %2878 = vmatpush1.msra.mxu0 %v2843
    %2879 = vmatprep.subr.mxu0 0.0
    %2880 = vmatpush1.msra.mxu0 %v2844
    %2881 = vmatprep.subr.mxu0 0.0
    %2882 = vmatpush1.msra.mxu0 %v2845
    %2883 = vmatprep.subr.mxu0 0.0
    %2884 = vmatpush1.msra.mxu0 %v2846
    %2885 = vmatprep.subr.mxu0 0.0
    %2886 = vmatpush1.msra.mxu0 %v2847
    %2887 = vmatprep.subr.mxu0 0.0
    %2888 = vmatpush1.msra.mxu0 %v2848
    %2889 = vmatprep.subr.mxu0 0.0
    %2890 = vmatpush1.msra.mxu0 0.0
    %2891 = vmatprep.subr.mxu0 0.0
    %2892 = vmatpush1.msra.mxu0 0.0
    %2893 = vmatprep.subr.mxu0 0.0
    %2894 = vmatpush1.msra.mxu0 0.0
    %2895 = vmatprep.subr.mxu0 0.0
    %2896 = vmatpush1.msra.mxu0 0.0
    %2897 = vmatprep.subr.mxu0 0.0
    %2898 = vmatpush1.msra.mxu0 0.0
    %2899 = vmatprep.subr.mxu0 0.0
    %2900 = vmatpush1.msra.mxu0 0.0
    %2901 = vmatprep.subr.mxu0 0.0
    %2902 = vmatpush1.msra.mxu0 0.0
    %2903 = vmatprep.subr.mxu0 0.0
    %2904 = vmatpush1.msra.mxu0 0.0
    %2905 = vmatprep.subr.mxu0 0.0
    %2906 = vmatpush1.msra.mxu0 0.0
    %2907 = vmatprep.subr.mxu0 0.0
    %2908 = vmatpush1.msra.mxu0 0.0
    %2909 = vmatprep.subr.mxu0 0.0
    %2910 = vmatpush1.msra.mxu0 0.0
    %2911 = vmatprep.subr.mxu0 0.0
    %2912 = vmatpush1.msra.mxu0 0.0
    %2913 = vmatprep.subr.mxu0 0.0
    %2914 = vmatpush1.msra.mxu0 0.0
    %2915 = vmatprep.subr.mxu0 0.0
    %2916 = vmatpush1.msra.mxu0 0.0
    %2917 = vmatprep.subr.mxu0 0.0
    %2918 = vmatpush1.msra.mxu0 0.0
    %2919 = vmatprep.subr.mxu0 0.0
    %2920 = vmatpush1.msra.mxu0 0.0
    %2921 = vmatprep.mubr.f32.mxu0 0.0
    %2922 = vmatmul.mubr.f32.gmra.mrb[0].mxu0 %v2831
    %v2923 = vpop.f32.mrb[0].mxu0
    %v2924 = vadd.f32 %v2855, %v2923
    %v2925 = vpop.f32.mrb[0].mxu0
    %2926 = vdwg.mxu0
    %s2927 = scalar_lea.vmem %s1, 128
    %v2928 = vld [vmem:[%s2927] sm:$0xff]
    %v2929 = vld [vmem:[%s2927 + $0x8] sm:$0xff]
    %v2930 = vld [vmem:[%s2927 + $0x10] sm:$0xff]
    %v2931 = vld [vmem:[%s2927 + $0x18] sm:$0xff]
    %v2932 = vld [vmem:[%s2927 + $0x20] sm:$0xff]
    %v2933 = vld [vmem:[%s2927 + $0x28] sm:$0xff]
    %v2934 = vld [vmem:[%s2927 + $0x30] sm:$0xff]
    %v2935 = vld [vmem:[%s2927 + $0x38] sm:$0xff]
    %v2936 = vld [vmem:[%s2927 + $0x40] sm:$0xff]
    %v2937 = vld [vmem:[%s2927 + $0x48] sm:$0xff]
    %v2938 = vld [vmem:[%s2927 + $0x50] sm:$0xff]
    %v2939 = vld [vmem:[%s2927 + $0x58] sm:$0xff]
    %v2940 = vld [vmem:[%s2927 + $0x60] sm:$0xff]
    %v2941 = vld [vmem:[%s2927 + $0x68] sm:$0xff]
    %v2942 = vld [vmem:[%s2927 + $0x70] sm:$0xff]
    %v2943 = vld [vmem:[%s2927 + $0x78] sm:$0xff]
    %2944 = vmatprep.subr.mxu0 0.0
    %2945 = vmatpush1.msra.mxu0 %v2928
    %2946 = vmatprep.subr.mxu0 0.0
    %2947 = vmatpush1.msra.mxu0 %v2929
    %2948 = vmatprep.subr.mxu0 0.0
    %2949 = vmatpush1.msra.mxu0 %v2930
    %2950 = vmatprep.subr.mxu0 0.0
    %2951 = vmatpush1.msra.mxu0 %v2931
    %2952 = vmatprep.subr.mxu0 0.0
    %2953 = vmatpush1.msra.mxu0 %v2932
    %2954 = vmatprep.subr.mxu0 0.0
    %2955 = vmatpush1.msra.mxu0 %v2933
    %2956 = vmatprep.subr.mxu0 0.0
    %2957 = vmatpush1.msra.mxu0 %v2934
    %2958 = vmatprep.subr.mxu0 0.0
    %2959 = vmatpush1.msra.mxu0 %v2935
    %2960 = vmatprep.subr.mxu0 0.0
    %2961 = vmatpush1.msra.mxu0 %v2936
    %2962 = vmatprep.subr.mxu0 0.0
    %2963 = vmatpush1.msra.mxu0 %v2937
    %2964 = vmatprep.subr.mxu0 0.0
    %2965 = vmatpush1.msra.mxu0 %v2938
    %2966 = vmatprep.subr.mxu0 0.0
    %2967 = vmatpush1.msra.mxu0 %v2939
    %2968 = vmatprep.subr.mxu0 0.0
    %2969 = vmatpush1.msra.mxu0 %v2940
    %2970 = vmatprep.subr.mxu0 0.0
    %2971 = vmatpush1.msra.mxu0 %v2941
    %2972 = vmatprep.subr.mxu0 0.0
    %2973 = vmatpush1.msra.mxu0 %v2942
    %2974 = vmatprep.subr.mxu0 0.0
    %2975 = vmatpush1.msra.mxu0 %v2943
    %2976 = vmatprep.subr.mxu0 0.0
    %2977 = vmatpush1.msra.mxu0 0.0
    %2978 = vmatprep.subr.mxu0 0.0
    %2979 = vmatpush1.msra.mxu0 0.0
    %2980 = vmatprep.subr.mxu0 0.0
    %2981 = vmatpush1.msra.mxu0 0.0
    %2982 = vmatprep.subr.mxu0 0.0
    %2983 = vmatpush1.msra.mxu0 0.0
    %2984 = vmatprep.subr.mxu0 0.0
    %2985 = vmatpush1.msra.mxu0 0.0
    %2986 = vmatprep.subr.mxu0 0.0
    %2987 = vmatpush1.msra.mxu0 0.0
    %2988 = vmatprep.subr.mxu0 0.0
    %2989 = vmatpush1.msra.mxu0 0.0
    %2990 = vmatprep.subr.mxu0 0.0
    %2991 = vmatpush1.msra.mxu0 0.0
    %2992 = vmatprep.subr.mxu0 0.0
    %2993 = vmatpush1.msra.mxu0 0.0
    %2994 = vmatprep.subr.mxu0 0.0
    %2995 = vmatpush1.msra.mxu0 0.0
    %2996 = vmatprep.subr.mxu0 0.0
    %2997 = vmatpush1.msra.mxu0 0.0
    %2998 = vmatprep.subr.mxu0 0.0
    %2999 = vmatpush1.msra.mxu0 0.0
    %3000 = vmatprep.subr.mxu0 0.0
    %3001 = vmatpush1.msra.mxu0 0.0
    %3002 = vmatprep.subr.mxu0 0.0
    %3003 = vmatpush1.msra.mxu0 0.0
    %3004 = vmatprep.subr.mxu0 0.0
    %3005 = vmatpush1.msra.mxu0 0.0
    %3006 = vmatprep.subr.mxu0 0.0
    %3007 = vmatpush1.msra.mxu0 0.0
    %3008 = vmatprep.mubr.f32.mxu0 0.0
    %3009 = vmatmul.mubr.f32.gmra.mrb[0].mxu0 %v2924
    %v3010 = vpop.f32.mrb[0].mxu0
    %v3011 = vadd.f32 0.0, %v3010
    %v3012 = vpop.f32.mrb[0].mxu0
    %3013 = vdwg.mxu0
    %v3014 = vld [vmem:[%s6] sm:$0xff]
    %v3015 = vld [vmem:[%s6 + $0x8] sm:$0xff]
    %v3016 = vld [vmem:[%s6 + $0x10] sm:$0xff]
    %v3017 = vld [vmem:[%s6 + $0x18] sm:$0xff]
    %v3018 = vld [vmem:[%s6 + $0x20] sm:$0xff]
    %v3019 = vld [vmem:[%s6 + $0x28] sm:$0xff]
    %v3020 = vld [vmem:[%s6 + $0x30] sm:$0xff]
    %v3021 = vld [vmem:[%s6 + $0x38] sm:$0xff]
    %v3022 = vld [vmem:[%s6 + $0x40] sm:$0xff]
    %v3023 = vld [vmem:[%s6 + $0x48] sm:$0xff]
    %v3024 = vld [vmem:[%s6 + $0x50] sm:$0xff]
    %v3025 = vld [vmem:[%s6 + $0x58] sm:$0xff]
    %v3026 = vld [vmem:[%s6 + $0x60] sm:$0xff]
    %v3027 = vld [vmem:[%s6 + $0x68] sm:$0xff]
    %v3028 = vld [vmem:[%s6 + $0x70] sm:$0xff]
    %v3029 = vld [vmem:[%s6 + $0x78] sm:$0xff]
    %3030 = vmatprep.subr.mxu0 0.0
    %3031 = vmatpush1.msra.mxu0 %v3014
    %3032 = vmatprep.subr.mxu0 0.0
    %3033 = vmatpush1.msra.mxu0 %v3015
    %3034 = vmatprep.subr.mxu0 0.0
    %3035 = vmatpush1.msra.mxu0 %v3016
    %3036 = vmatprep.subr.mxu0 0.0
    %3037 = vmatpush1.msra.mxu0 %v3017
    %3038 = vmatprep.subr.mxu0 0.0
    %3039 = vmatpush1.msra.mxu0 %v3018
    %3040 = vmatprep.subr.mxu0 0.0
    %3041 = vmatpush1.msra.mxu0 %v3019
    %3042 = vmatprep.subr.mxu0 0.0
    %3043 = vmatpush1.msra.mxu0 %v3020
    %3044 = vmatprep.subr.mxu0 0.0
    %3045 = vmatpush1.msra.mxu0 %v3021
    %3046 = vmatprep.subr.mxu0 0.0
    %3047 = vmatpush1.msra.mxu0 %v3022
    %3048 = vmatprep.subr.mxu0 0.0
    %3049 = vmatpush1.msra.mxu0 %v3023
    %3050 = vmatprep.subr.mxu0 0.0
    %3051 = vmatpush1.msra.mxu0 %v3024
    %3052 = vmatprep.subr.mxu0 0.0
    %3053 = vmatpush1.msra.mxu0 %v3025
    %3054 = vmatprep.subr.mxu0 0.0
    %3055 = vmatpush1.msra.mxu0 %v3026
    %3056 = vmatprep.subr.mxu0 0.0
    %3057 = vmatpush1.msra.mxu0 %v3027
    %3058 = vmatprep.subr.mxu0 0.0
    %3059 = vmatpush1.msra.mxu0 %v3028
    %3060 = vmatprep.subr.mxu0 0.0
    %3061 = vmatpush1.msra.mxu0 %v3029
    %3062 = vmatprep.subr.mxu0 0.0
    %3063 = vmatpush1.msra.mxu0 0.0
    %3064 = vmatprep.subr.mxu0 0.0
    %3065 = vmatpush1.msra.mxu0 0.0
    %3066 = vmatprep.subr.mxu0 0.0
    %3067 = vmatpush1.msra.mxu0 0.0
    %3068 = vmatprep.subr.mxu0 0.0
    %3069 = vmatpush1.msra.mxu0 0.0
    %3070 = vmatprep.subr.mxu0 0.0
    %3071 = vmatpush1.msra.mxu0 0.0
    %3072 = vmatprep.subr.mxu0 0.0
    %3073 = vmatpush1.msra.mxu0 0.0
    %3074 = vmatprep.subr.mxu0 0.0
    %3075 = vmatpush1.msra.mxu0 0.0
    %3076 = vmatprep.subr.mxu0 0.0
    %3077 = vmatpush1.msra.mxu0 0.0
    %3078 = vmatprep.subr.mxu0 0.0
    %3079 = vmatpush1.msra.mxu0 0.0
    %3080 = vmatprep.subr.mxu0 0.0
    %3081 = vmatpush1.msra.mxu0 0.0
    %3082 = vmatprep.subr.mxu0 0.0
    %3083 = vmatpush1.msra.mxu0 0.0
    %3084 = vmatprep.subr.mxu0 0.0
    %3085 = vmatpush1.msra.mxu0 0.0
    %3086 = vmatprep.subr.mxu0 0.0
    %3087 = vmatpush1.msra.mxu0 0.0
    %3088 = vmatprep.subr.mxu0 0.0
    %3089 = vmatpush1.msra.mxu0 0.0
    %3090 = vmatprep.subr.mxu0 0.0
    %3091 = vmatpush1.msra.mxu0 0.0
    %3092 = vmatprep.subr.mxu0 0.0
    %3093 = vmatpush1.msra.mxu0 0.0
    %3094 = vmatprep.mubr.f32.mxu0 0.0
    %3095 = vmatmul.mubr.f32.gmra.mrb[0].mxu0 %v3011
    %v3096 = vpop.f32.mrb[0].mxu0
    %v3097 = vadd.f32 0.0, %v3096
    %v3098 = vpop.f32.mrb[0].mxu0
    %3099 = vdwg.mxu0
    %v3100 = vld [vmem:[%s7] sm:$0xff]
    %v3101 = vld [vmem:[%s7 + $0x8] sm:$0xff]
    %v3102 = vld [vmem:[%s7 + $0x10] sm:$0xff]
    %v3103 = vld [vmem:[%s7 + $0x18] sm:$0xff]
    %v3104 = vld [vmem:[%s7 + $0x20] sm:$0xff]
    %v3105 = vld [vmem:[%s7 + $0x28] sm:$0xff]
    %v3106 = vld [vmem:[%s7 + $0x30] sm:$0xff]
    %v3107 = vld [vmem:[%s7 + $0x38] sm:$0xff]
    %v3108 = vld [vmem:[%s7 + $0x40] sm:$0xff]
    %v3109 = vld [vmem:[%s7 + $0x48] sm:$0xff]
    %v3110 = vld [vmem:[%s7 + $0x50] sm:$0xff]
    %v3111 = vld [vmem:[%s7 + $0x58] sm:$0xff]
    %v3112 = vld [vmem:[%s7 + $0x60] sm:$0xff]
    %v3113 = vld [vmem:[%s7 + $0x68] sm:$0xff]
    %v3114 = vld [vmem:[%s7 + $0x70] sm:$0xff]
    %v3115 = vld [vmem:[%s7 + $0x78] sm:$0xff]
    %3116 = vmatprep.subr.mxu0 0.0
    %3117 = vmatpush1.msra.mxu0 %v3100
    %3118 = vmatprep.subr.mxu0 0.0
    %3119 = vmatpush1.msra.mxu0 %v3101
    %3120 = vmatprep.subr.mxu0 0.0
    %3121 = vmatpush1.msra.mxu0 %v3102
    %3122 = vmatprep.subr.mxu0 0.0
    %3123 = vmatpush1.msra.mxu0 %v3103
    %3124 = vmatprep.subr.mxu0 0.0
    %3125 = vmatpush1.msra.mxu0 %v3104
    %3126 = vmatprep.subr.mxu0 0.0
    %3127 = vmatpush1.msra.mxu0 %v3105
    %3128 = vmatprep.subr.mxu0 0.0
    %3129 = vmatpush1.msra.mxu0 %v3106
    %3130 = vmatprep.subr.mxu0 0.0
    %3131 = vmatpush1.msra.mxu0 %v3107
    %3132 = vmatprep.subr.mxu0 0.0
    %3133 = vmatpush1.msra.mxu0 %v3108
    %3134 = vmatprep.subr.mxu0 0.0
    %3135 = vmatpush1.msra.mxu0 %v3109
    %3136 = vmatprep.subr.mxu0 0.0
    %3137 = vmatpush1.msra.mxu0 %v3110
    %3138 = vmatprep.subr.mxu0 0.0
    %3139 = vmatpush1.msra.mxu0 %v3111
    %3140 = vmatprep.subr.mxu0 0.0
    %3141 = vmatpush1.msra.mxu0 %v3112
    %3142 = vmatprep.subr.mxu0 0.0
    %3143 = vmatpush1.msra.mxu0 %v3113
    %3144 = vmatprep.subr.mxu0 0.0
    %3145 = vmatpush1.msra.mxu0 %v3114
    %3146 = vmatprep.subr.mxu0 0.0
    %3147 = vmatpush1.msra.mxu0 %v3115
    %3148 = vmatprep.subr.mxu0 0.0
    %3149 = vmatpush1.msra.mxu0 0.0
    %3150 = vmatprep.subr.mxu0 0.0
    %3151 = vmatpush1.msra.mxu0 0.0
    %3152 = vmatprep.subr.mxu0 0.0
    %3153 = vmatpush1.msra.mxu0 0.0
    %3154 = vmatprep.subr.mxu0 0.0
    %3155 = vmatpush1.msra.mxu0 0.0
    %3156 = vmatprep.subr.mxu0 0.0
    %3157 = vmatpush1.msra.mxu0 0.0
    %3158 = vmatprep.subr.mxu0 0.0
    %3159 = vmatpush1.msra.mxu0 0.0
    %3160 = vmatprep.subr.mxu0 0.0
    %3161 = vmatpush1.msra.mxu0 0.0
    %3162 = vmatprep.subr.mxu0 0.0
    %3163 = vmatpush1.msra.mxu0 0.0
    %3164 = vmatprep.subr.mxu0 0.0
    %3165 = vmatpush1.msra.mxu0 0.0
    %3166 = vmatprep.subr.mxu0 0.0
    %3167 = vmatpush1.msra.mxu0 0.0
    %3168 = vmatprep.subr.mxu0 0.0
    %3169 = vmatpush1.msra.mxu0 0.0
    %3170 = vmatprep.subr.mxu0 0.0
    %3171 = vmatpush1.msra.mxu0 0.0
    %3172 = vmatprep.subr.mxu0 0.0
    %3173 = vmatpush1.msra.mxu0 0.0
    %3174 = vmatprep.subr.mxu0 0.0
    %3175 = vmatpush1.msra.mxu0 0.0
    %3176 = vmatprep.subr.mxu0 0.0
    %3177 = vmatpush1.msra.mxu0 0.0
    %3178 = vmatprep.subr.mxu0 0.0
    %3179 = vmatpush1.msra.mxu0 0.0
    %3180 = vmatprep.mubr.f32.mxu0 0.0
    %3181 = vmatmul.mubr.f32.gmra.mrb[0].mxu0 %v3011
    %v3182 = vpop.f32.mrb[0].mxu0
    %v3183 = vadd.f32 0.0, %v3182
    %v3184 = vpop.f32.mrb[0].mxu0
    %3185 = vdwg.mxu0
    %v3186 = vld [vmem:[%s8] sm:$0xff]
    %v3187 = vld [vmem:[%s8 + $0x8] sm:$0xff]
    %v3188 = vld [vmem:[%s8 + $0x10] sm:$0xff]
    %v3189 = vld [vmem:[%s8 + $0x18] sm:$0xff]
    %v3190 = vld [vmem:[%s8 + $0x20] sm:$0xff]
    %v3191 = vld [vmem:[%s8 + $0x28] sm:$0xff]
    %v3192 = vld [vmem:[%s8 + $0x30] sm:$0xff]
    %v3193 = vld [vmem:[%s8 + $0x38] sm:$0xff]
    %v3194 = vld [vmem:[%s8 + $0x40] sm:$0xff]
    %v3195 = vld [vmem:[%s8 + $0x48] sm:$0xff]
    %v3196 = vld [vmem:[%s8 + $0x50] sm:$0xff]
    %v3197 = vld [vmem:[%s8 + $0x58] sm:$0xff]
    %v3198 = vld [vmem:[%s8 + $0x60] sm:$0xff]
    %v3199 = vld [vmem:[%s8 + $0x68] sm:$0xff]
    %v3200 = vld [vmem:[%s8 + $0x70] sm:$0xff]
    %v3201 = vld [vmem:[%s8 + $0x78] sm:$0xff]
    %3202 = vmatprep.subr.mxu0 0.0
    %3203 = vmatpush1.msra.mxu0 %v3186
    %3204 = vmatprep.subr.mxu0 0.0
    %3205 = vmatpush1.msra.mxu0 %v3187
    %3206 = vmatprep.subr.mxu0 0.0
    %3207 = vmatpush1.msra.mxu0 %v3188
    %3208 = vmatprep.subr.mxu0 0.0
    %3209 = vmatpush1.msra.mxu0 %v3189
    %3210 = vmatprep.subr.mxu0 0.0
    %3211 = vmatpush1.msra.mxu0 %v3190
    %3212 = vmatprep.subr.mxu0 0.0
    %3213 = vmatpush1.msra.mxu0 %v3191
    %3214 = vmatprep.subr.mxu0 0.0
    %3215 = vmatpush1.msra.mxu0 %v3192
    %3216 = vmatprep.subr.mxu0 0.0
    %3217 = vmatpush1.msra.mxu0 %v3193
    %3218 = vmatprep.subr.mxu0 0.0
    %3219 = vmatpush1.msra.mxu0 %v3194
    %3220 = vmatprep.subr.mxu0 0.0
    %3221 = vmatpush1.msra.mxu0 %v3195
    %3222 = vmatprep.subr.mxu0 0.0
    %3223 = vmatpush1.msra.mxu0 %v3196
    %3224 = vmatprep.subr.mxu0 0.0
    %3225 = vmatpush1.msra.mxu0 %v3197
    %3226 = vmatprep.subr.mxu0 0.0
    %3227 = vmatpush1.msra.mxu0 %v3198
    %3228 = vmatprep.subr.mxu0 0.0
    %3229 = vmatpush1.msra.mxu0 %v3199
    %3230 = vmatprep.subr.mxu0 0.0
    %3231 = vmatpush1.msra.mxu0 %v3200
    %3232 = vmatprep.subr.mxu0 0.0
    %3233 = vmatpush1.msra.mxu0 %v3201
    %3234 = vmatprep.subr.mxu0 0.0
    %3235 = vmatpush1.msra.mxu0 0.0
    %3236 = vmatprep.subr.mxu0 0.0
    %3237 = vmatpush1.msra.mxu0 0.0
    %3238 = vmatprep.subr.mxu0 0.0
    %3239 = vmatpush1.msra.mxu0 0.0
    %3240 = vmatprep.subr.mxu0 0.0
    %3241 = vmatpush1.msra.mxu0 0.0
    %3242 = vmatprep.subr.mxu0 0.0
    %3243 = vmatpush1.msra.mxu0 0.0
    %3244 = vmatprep.subr.mxu0 0.0
    %3245 = vmatpush1.msra.mxu0 0.0
    %3246 = vmatprep.subr.mxu0 0.0
    %3247 = vmatpush1.msra.mxu0 0.0
    %3248 = vmatprep.subr.mxu0 0.0
    %3249 = vmatpush1.msra.mxu0 0.0
    %3250 = vmatprep.subr.mxu0 0.0
    %3251 = vmatpush1.msra.mxu0 0.0
    %3252 = vmatprep.subr.mxu0 0.0
    %3253 = vmatpush1.msra.mxu0 0.0
    %3254 = vmatprep.subr.mxu0 0.0
    %3255 = vmatpush1.msra.mxu0 0.0
    %3256 = vmatprep.subr.mxu0 0.0
    %3257 = vmatpush1.msra.mxu0 0.0
    %3258 = vmatprep.subr.mxu0 0.0
    %3259 = vmatpush1.msra.mxu0 0.0
    %3260 = vmatprep.subr.mxu0 0.0
    %3261 = vmatpush1.msra.mxu0 0.0
    %3262 = vmatprep.subr.mxu0 0.0
    %3263 = vmatpush1.msra.mxu0 0.0
    %3264 = vmatprep.subr.mxu0 0.0
    %3265 = vmatpush1.msra.mxu0 0.0
    %3266 = vmatprep.mubr.f32.mxu0 0.0
    %3267 = vmatmul.mubr.f32.gmra.mrb[0].mxu0 %v3011
    %v3268 = vpop.f32.mrb[0].mxu0
    %v3269 = vadd.f32 0.0, %v3268
    %v3270 = vpop.f32.mrb[0].mxu0
    %3271 = vdwg.mxu0
    %v3274 = vunpack.c.l.s4 1966171168
    %v3275 = vunpack.c.0.s8 %v3274
    %v3276 = vlaneseq
    %v3277 = vshrl.u32 %v3276, 7
    %v3278 = vsub.s32 %v3275, %v3277
    %v3279 = vrot.slane %v3097, %v3278
    %v3280 = vcombine.high %v3279, %v3279
    %v3282 = vunpack.c.l.s4 1966171168
    %v3283 = vunpack.c.0.s8 %v3282
    %v3284 = vlaneseq
    %v3285 = vshrl.u32 %v3284, 7
    %v3286 = vsub.s32 %v3283, %v3285
    %v3287 = vrot.slane %v3279, %v3286
    %v3289 = vunpack.c.l.s4 1966171168
    %v3290 = vunpack.c.0.s8 %v3289
    %v3291 = vlaneseq
    %v3292 = vshrl.u32 %v3291, 7
    %v3293 = vsub.s32 %v3290, %v3292
    %v3294 = vrot.slane %v3280, %v3293
    %3297 = vst.msk [vmem:[#allocation2] sm:$0x1] %vm622, %v3287
    %3298 = vst.msk [vmem:[#allocation2 + $0x4] sm:$0x1] %vm622, %v3294
    %v3301 = vunpack.c.l.s4 1966171168
    %v3302 = vunpack.c.0.s8 %v3301
    %v3303 = vlaneseq
    %v3304 = vshrl.u32 %v3303, 7
    %v3305 = vsub.s32 %v3302, %v3304
    %v3306 = vrot.slane %v3183, %v3305
    %v3307 = vcombine.high %v3306, %v3306
    %v3309 = vunpack.c.l.s4 1966171168
    %v3310 = vunpack.c.0.s8 %v3309
    %v3311 = vlaneseq
    %v3312 = vshrl.u32 %v3311, 7
    %v3313 = vsub.s32 %v3310, %v3312
    %v3314 = vrot.slane %v3306, %v3313
    %v3316 = vunpack.c.l.s4 1966171168
    %v3317 = vunpack.c.0.s8 %v3316
    %v3318 = vlaneseq
    %v3319 = vshrl.u32 %v3318, 7
    %v3320 = vsub.s32 %v3317, %v3319
    %v3321 = vrot.slane %v3307, %v3320
    %3324 = vst.msk [vmem:[#allocation3] sm:$0x1] %vm622, %v3314
    %3325 = vst.msk [vmem:[#allocation3 + $0x4] sm:$0x1] %vm622, %v3321
    %v3328 = vunpack.c.l.s4 1966171168
    %v3329 = vunpack.c.0.s8 %v3328
    %v3330 = vlaneseq
    %v3331 = vshrl.u32 %v3330, 7
    %v3332 = vsub.s32 %v3329, %v3331
    %v3333 = vrot.slane %v3269, %v3332
    %v3334 = vcombine.high %v3333, %v3333
    %v3336 = vunpack.c.l.s4 1966171168
    %v3337 = vunpack.c.0.s8 %v3336
    %v3338 = vlaneseq
    %v3339 = vshrl.u32 %v3338, 7
    %v3340 = vsub.s32 %v3337, %v3339
    %v3341 = vrot.slane %v3333, %v3340
    %v3343 = vunpack.c.l.s4 1966171168
    %v3344 = vunpack.c.0.s8 %v3343
    %v3345 = vlaneseq
    %v3346 = vshrl.u32 %v3345, 7
    %v3347 = vsub.s32 %v3344, %v3346
    %v3348 = vrot.slane %v3334, %v3347
    %3351 = vst.msk [vmem:[#allocation4] sm:$0x1] %vm622, %v3341
    %3352 = vst.msk [vmem:[#allocation4 + $0x4] sm:$0x1] %vm622, %v3348
    %v3353 = vlaneseq
    %v3354 = vshrl.u32 %v3353, 7
    %v3355 = vsub.s32 0, %v3354
    %v3356 = vrot.slane %v3287, %v3355
    %v3357 = vlaneseq
    %v3358 = vshrl.u32 %v3357, 7
    %v3359 = vsub.s32 0, %v3358
    %v3360 = vrot.slane %v3294, %v3359
    %3361 = vrot.lane.b32.xlu0 %v3356, 96
    %v3362 = vpop.permute.xlu0 %3361
    %3363 = vrot.lane.b32.xlu0 %v3360, 96
    %v3364 = vpop.permute.xlu0 %3363
    %3367 = vst.msk [vmem:[#allocation2 + $0x1] sm:$0x1] %vm622, %v3362
    %3368 = vst.msk [vmem:[#allocation2 + $0x5] sm:$0x1] %vm622, %v3364
    %v3369 = vlaneseq
    %v3370 = vshrl.u32 %v3369, 7
    %v3371 = vsub.s32 0, %v3370
    %v3372 = vrot.slane %v3314, %v3371
    %v3373 = vlaneseq
    %v3374 = vshrl.u32 %v3373, 7
    %v3375 = vsub.s32 0, %v3374
    %v3376 = vrot.slane %v3321, %v3375
    %3377 = vrot.lane.b32.xlu0 %v3372, 96
    %v3378 = vpop.permute.xlu0 %3377
    %3379 = vrot.lane.b32.xlu0 %v3376, 96
    %v3380 = vpop.permute.xlu0 %3379
    %3383 = vst.msk [vmem:[#allocation3 + $0x1] sm:$0x1] %vm622, %v3378
    %3384 = vst.msk [vmem:[#allocation3 + $0x5] sm:$0x1] %vm622, %v3380
    %v3385 = vlaneseq
    %v3386 = vshrl.u32 %v3385, 7
    %v3387 = vsub.s32 0, %v3386
    %v3388 = vrot.slane %v3341, %v3387
    %v3389 = vlaneseq
    %v3390 = vshrl.u32 %v3389, 7
    %v3391 = vsub.s32 0, %v3390
    %v3392 = vrot.slane %v3348, %v3391
    %3393 = vrot.lane.b32.xlu0 %v3388, 96
    %v3394 = vpop.permute.xlu0 %3393
    %3395 = vrot.lane.b32.xlu0 %v3392, 96
    %v3396 = vpop.permute.xlu0 %3395
    %3399 = vst.msk [vmem:[#allocation4 + $0x1] sm:$0x1] %vm622, %v3394
    %3400 = vst.msk [vmem:[#allocation4 + $0x5] sm:$0x1] %vm622, %v3396
    %3401 = vrot.lane.b32.xlu0 %v3356, 64
    %v3402 = vpop.permute.xlu0 %3401
    %3403 = vrot.lane.b32.xlu0 %v3360, 64
    %v3404 = vpop.permute.xlu0 %3403
    %3407 = vst.msk [vmem:[#allocation2 + $0x2] sm:$0x1] %vm622, %v3402
    %3408 = vst.msk [vmem:[#allocation2 + $0x6] sm:$0x1] %vm622, %v3404
    %3409 = vrot.lane.b32.xlu0 %v3372, 64
    %v3410 = vpop.permute.xlu0 %3409
    %3411 = vrot.lane.b32.xlu0 %v3376, 64
    %v3412 = vpop.permute.xlu0 %3411
    %3415 = vst.msk [vmem:[#allocation3 + $0x2] sm:$0x1] %vm622, %v3410
    %3416 = vst.msk [vmem:[#allocation3 + $0x6] sm:$0x1] %vm622, %v3412
    %3417 = vrot.lane.b32.xlu0 %v3388, 64
    %v3418 = vpop.permute.xlu0 %3417
    %3419 = vrot.lane.b32.xlu0 %v3392, 64
    %v3420 = vpop.permute.xlu0 %3419
    %3423 = vst.msk [vmem:[#allocation4 + $0x2] sm:$0x1] %vm622, %v3418
    %3424 = vst.msk [vmem:[#allocation4 + $0x6] sm:$0x1] %vm622, %v3420
    %3425 = vrot.lane.b32.xlu0 %v3356, 32
    %v3426 = vpop.permute.xlu0 %3425
    %3427 = vrot.lane.b32.xlu0 %v3360, 32
    %v3428 = vpop.permute.xlu0 %3427
    %3431 = vst.msk [vmem:[#allocation2 + $0x3] sm:$0x1] %vm622, %v3426
    %3432 = vst.msk [vmem:[#allocation2 + $0x7] sm:$0x1] %vm622, %v3428
    %3433 = vrot.lane.b32.xlu0 %v3372, 32
    %v3434 = vpop.permute.xlu0 %3433
    %3435 = vrot.lane.b32.xlu0 %v3376, 32
    %v3436 = vpop.permute.xlu0 %3435
    %3439 = vst.msk [vmem:[#allocation3 + $0x3] sm:$0x1] %vm622, %v3434
    %3440 = vst.msk [vmem:[#allocation3 + $0x7] sm:$0x1] %vm622, %v3436
    %3441 = vrot.lane.b32.xlu0 %v3388, 32
    %v3442 = vpop.permute.xlu0 %3441
    %3443 = vrot.lane.b32.xlu0 %v3392, 32
    %v3444 = vpop.permute.xlu0 %3443
    %3447 = vst.msk [vmem:[#allocation4 + $0x3] sm:$0x1] %vm622, %v3442
    %3448 = vst.msk [vmem:[#allocation4 + $0x7] sm:$0x1] %vm622, %v3444
    %v3449 = vld [vmem:[#allocation2] sm:$0xf]
    %v3450 = vld [vmem:[#allocation3] sm:$0xf]
    %v3451 = vld [vmem:[#allocation4] sm:$0xf]
    %v3453 = vsel %vm778, %v3449, 0
    %v3456 = vsel %vm778, %v3450, 0
    %3458 = vmatprep.subr.mxu0 0.0
    %3459 = vmatpush1.xpose.msra.mxu0 %v3456
    %3460 = vmatprep.subr.mxu0 0.0
    %3461 = vmatpush1.xpose.msra.mxu0 0.0
    %3462 = vmatprep.subr.mxu0 0.0
    %3463 = vmatpush1.xpose.msra.mxu0 0.0
    %3464 = vmatprep.subr.mxu0 0.0
    %3465 = vmatpush1.xpose.msra.mxu0 0.0
    %3466 = vmatprep.subr.mxu0 0.0
    %3467 = vmatpush1.xpose.msra.mxu0 0.0
    %3468 = vmatprep.subr.mxu0 0.0
    %3469 = vmatpush1.xpose.msra.mxu0 0.0
    %3470 = vmatprep.subr.mxu0 0.0
    %3471 = vmatpush1.xpose.msra.mxu0 0.0
    %3472 = vmatprep.subr.mxu0 0.0
    %3473 = vmatpush1.xpose.msra.mxu0 0.0
    %3474 = vmatprep.subr.mxu0 0.0
    %3475 = vmatpush1.xpose.msra.mxu0 0.0
    %3476 = vmatprep.subr.mxu0 0.0
    %3477 = vmatpush1.xpose.msra.mxu0 0.0
    %3478 = vmatprep.subr.mxu0 0.0
    %3479 = vmatpush1.xpose.msra.mxu0 0.0
    %3480 = vmatprep.subr.mxu0 0.0
    %3481 = vmatpush1.xpose.msra.mxu0 0.0
    %3482 = vmatprep.subr.mxu0 0.0
    %3483 = vmatpush1.xpose.msra.mxu0 0.0
    %3484 = vmatprep.subr.mxu0 0.0
    %3485 = vmatpush1.xpose.msra.mxu0 0.0
    %3486 = vmatprep.subr.mxu0 0.0
    %3487 = vmatpush1.xpose.msra.mxu0 0.0
    %3488 = vmatprep.subr.mxu0 0.0
    %3489 = vmatpush1.xpose.msra.mxu0 0.0
    %3490 = vmatprep.subr.mxu0 0.0
    %3491 = vmatpush1.xpose.msra.mxu0 0.0
    %3492 = vmatprep.subr.mxu0 0.0
    %3493 = vmatpush1.xpose.msra.mxu0 0.0
    %3494 = vmatprep.subr.mxu0 0.0
    %3495 = vmatpush1.xpose.msra.mxu0 0.0
    %3496 = vmatprep.subr.mxu0 0.0
    %3497 = vmatpush1.xpose.msra.mxu0 0.0
    %3498 = vmatprep.subr.mxu0 0.0
    %3499 = vmatpush1.xpose.msra.mxu0 0.0
    %3500 = vmatprep.subr.mxu0 0.0
    %3501 = vmatpush1.xpose.msra.mxu0 0.0
    %3502 = vmatprep.subr.mxu0 0.0
    %3503 = vmatpush1.xpose.msra.mxu0 0.0
    %3504 = vmatprep.subr.mxu0 0.0
    %3505 = vmatpush1.xpose.msra.mxu0 0.0
    %3506 = vmatprep.subr.mxu0 0.0
    %3507 = vmatpush1.xpose.msra.mxu0 0.0
    %3508 = vmatprep.subr.mxu0 0.0
    %3509 = vmatpush1.xpose.msra.mxu0 0.0
    %3510 = vmatprep.subr.mxu0 0.0
    %3511 = vmatpush1.xpose.msra.mxu0 0.0
    %3512 = vmatprep.subr.mxu0 0.0
    %3513 = vmatpush1.xpose.msra.mxu0 0.0
    %3514 = vmatprep.subr.mxu0 0.0
    %3515 = vmatpush1.xpose.msra.mxu0 0.0
    %3516 = vmatprep.subr.mxu0 0.0
    %3517 = vmatpush1.xpose.msra.mxu0 0.0
    %3518 = vmatprep.subr.mxu0 0.0
    %3519 = vmatpush1.xpose.msra.mxu0 0.0
    %3520 = vmatprep.subr.mxu0 0.0
    %3521 = vmatpush1.xpose.msra.mxu0 0.0
    %3522 = vmatprep.mubr.f32.mxu0 0.0
    %3523 = vmatmul.mubr.f32.gmra.mrb[0].mxu0 %v3453
    %v3524 = vpop.f32.mrb[0].mxu0
    %v3525 = vadd.f32 0.0, %v3524
    %v3526 = vpop.f32.mrb[0].mxu0
    %3527 = vdwg.mxu0
    %v3528 = vmul.f32 %v3525, 0.35355338
    %v3529 = vsel %vm856, %v3528, -inf
    %3530 = vmax.xlane.f32.xlu0 %v3529
    %v3531 = vpop.xlane.xlu0 %3530
    %v3532 = vsub.f32 %v3528, %v3531
    %v3533 = vmul.f32 %v3532, 1.442695
    %v3534 = vpow.pop %v3533
    %v3535 = vsel %vm856, %v3534, 0.0
    %3536 = vadd.xlane.f32.xlu0 %v3535
    %v3537 = vpop.xlane.xlu0 %3536
    %v3538 = vrcp.pop %v3537
    %v3539 = vmul.f32 %v3534, %v3538
    %v3541 = vsel %vm868, %v3539, 0
    %v3544 = vsel %vm872, %v3451, 0
    %3546 = vmatprep.subr.mxu0 0.0
    %3547 = vmatpush1.msra.mxu0 %v3544
    %3548 = vmatprep.subr.mxu0 0.0
    %3549 = vmatpush1.msra.mxu0 0.0
    %3550 = vmatprep.subr.mxu0 0.0
    %3551 = vmatpush1.msra.mxu0 0.0
    %3552 = vmatprep.subr.mxu0 0.0
    %3553 = vmatpush1.msra.mxu0 0.0
    %3554 = vmatprep.subr.mxu0 0.0
    %3555 = vmatpush1.msra.mxu0 0.0
    %3556 = vmatprep.subr.mxu0 0.0
    %3557 = vmatpush1.msra.mxu0 0.0
    %3558 = vmatprep.subr.mxu0 0.0
    %3559 = vmatpush1.msra.mxu0 0.0
    %3560 = vmatprep.subr.mxu0 0.0
    %3561 = vmatpush1.msra.mxu0 0.0
    %3562 = vmatprep.subr.mxu0 0.0
    %3563 = vmatpush1.msra.mxu0 0.0
    %3564 = vmatprep.subr.mxu0 0.0
    %3565 = vmatpush1.msra.mxu0 0.0
    %3566 = vmatprep.subr.mxu0 0.0
    %3567 = vmatpush1.msra.mxu0 0.0
    %3568 = vmatprep.subr.mxu0 0.0
    %3569 = vmatpush1.msra.mxu0 0.0
    %3570 = vmatprep.subr.mxu0 0.0
    %3571 = vmatpush1.msra.mxu0 0.0
    %3572 = vmatprep.subr.mxu0 0.0
    %3573 = vmatpush1.msra.mxu0 0.0
    %3574 = vmatprep.subr.mxu0 0.0
    %3575 = vmatpush1.msra.mxu0 0.0
    %3576 = vmatprep.subr.mxu0 0.0
    %3577 = vmatpush1.msra.mxu0 0.0
    %3578 = vmatprep.subr.mxu0 0.0
    %3579 = vmatpush1.msra.mxu0 0.0
    %3580 = vmatprep.subr.mxu0 0.0
    %3581 = vmatpush1.msra.mxu0 0.0
    %3582 = vmatprep.subr.mxu0 0.0
    %3583 = vmatpush1.msra.mxu0 0.0
    %3584 = vmatprep.subr.mxu0 0.0
    %3585 = vmatpush1.msra.mxu0 0.0
    %3586 = vmatprep.subr.mxu0 0.0
    %3587 = vmatpush1.msra.mxu0 0.0
    %3588 = vmatprep.subr.mxu0 0.0
    %3589 = vmatpush1.msra.mxu0 0.0
    %3590 = vmatprep.subr.mxu0 0.0
    %3591 = vmatpush1.msra.mxu0 0.0
    %3592 = vmatprep.subr.mxu0 0.0
    %3593 = vmatpush1.msra.mxu0 0.0
    %3594 = vmatprep.subr.mxu0 0.0
    %3595 = vmatpush1.msra.mxu0 0.0
    %3596 = vmatprep.subr.mxu0 0.0
    %3597 = vmatpush1.msra.mxu0 0.0
    %3598 = vmatprep.subr.mxu0 0.0
    %3599 = vmatpush1.msra.mxu0 0.0
    %3600 = vmatprep.subr.mxu0 0.0
    %3601 = vmatpush1.msra.mxu0 0.0
    %3602 = vmatprep.subr.mxu0 0.0
    %3603 = vmatpush1.msra.mxu0 0.0
    %3604 = vmatprep.subr.mxu0 0.0
    %3605 = vmatpush1.msra.mxu0 0.0
    %3606 = vmatprep.subr.mxu0 0.0
    %3607 = vmatpush1.msra.mxu0 0.0
    %3608 = vmatprep.subr.mxu0 0.0
    %3609 = vmatpush1.msra.mxu0 0.0
    %3610 = vmatprep.mubr.f32.mxu0 0.0
    %3611 = vmatmul.mubr.f32.gmra.mrb[0].mxu0 %v3541
    %v3612 = vpop.f32.mrb[0].mxu0
    %v3613 = vadd.f32 0.0, %v3612
    %v3614 = vpop.f32.mrb[0].mxu0
    %3615 = vdwg.mxu0
    %3616 = vst.msk [vmem:[#allocation5] sm:$0xf] %vm946, %v3613
    %3617 = vrot.lane.b32.xlu0 %v3449, 120
    %v3618 = vpop.permute.xlu0 %3617
    %3619 = vrot.lane.b32.xlu0 %v3450, 120
    %v3620 = vpop.permute.xlu0 %3619
    %v3621 = vsel %vm778, %v3618, 0
    %v3623 = vsel %vm778, %v3620, 0
    %3625 = vmatprep.subr.mxu0 0.0
    %3626 = vmatpush1.xpose.msra.mxu0 %v3623
    %3627 = vmatprep.subr.mxu0 0.0
    %3628 = vmatpush1.xpose.msra.mxu0 0.0
    %3629 = vmatprep.subr.mxu0 0.0
    %3630 = vmatpush1.xpose.msra.mxu0 0.0
    %3631 = vmatprep.subr.mxu0 0.0
    %3632 = vmatpush1.xpose.msra.mxu0 0.0
    %3633 = vmatprep.subr.mxu0 0.0
    %3634 = vmatpush1.xpose.msra.mxu0 0.0
    %3635 = vmatprep.subr.mxu0 0.0
    %3636 = vmatpush1.xpose.msra.mxu0 0.0
    %3637 = vmatprep.subr.mxu0 0.0
    %3638 = vmatpush1.xpose.msra.mxu0 0.0
    %3639 = vmatprep.subr.mxu0 0.0
    %3640 = vmatpush1.xpose.msra.mxu0 0.0
    %3641 = vmatprep.subr.mxu0 0.0
    %3642 = vmatpush1.xpose.msra.mxu0 0.0
    %3643 = vmatprep.subr.mxu0 0.0
    %3644 = vmatpush1.xpose.msra.mxu0 0.0
    %3645 = vmatprep.subr.mxu0 0.0
    %3646 = vmatpush1.xpose.msra.mxu0 0.0
    %3647 = vmatprep.subr.mxu0 0.0
    %3648 = vmatpush1.xpose.msra.mxu0 0.0
    %3649 = vmatprep.subr.mxu0 0.0
    %3650 = vmatpush1.xpose.msra.mxu0 0.0
    %3651 = vmatprep.subr.mxu0 0.0
    %3652 = vmatpush1.xpose.msra.mxu0 0.0
    %3653 = vmatprep.subr.mxu0 0.0
    %3654 = vmatpush1.xpose.msra.mxu0 0.0
    %3655 = vmatprep.subr.mxu0 0.0
    %3656 = vmatpush1.xpose.msra.mxu0 0.0
    %3657 = vmatprep.subr.mxu0 0.0
    %3658 = vmatpush1.xpose.msra.mxu0 0.0
    %3659 = vmatprep.subr.mxu0 0.0
    %3660 = vmatpush1.xpose.msra.mxu0 0.0
    %3661 = vmatprep.subr.mxu0 0.0
    %3662 = vmatpush1.xpose.msra.mxu0 0.0
    %3663 = vmatprep.subr.mxu0 0.0
    %3664 = vmatpush1.xpose.msra.mxu0 0.0
    %3665 = vmatprep.subr.mxu0 0.0
    %3666 = vmatpush1.xpose.msra.mxu0 0.0
    %3667 = vmatprep.subr.mxu0 0.0
    %3668 = vmatpush1.xpose.msra.mxu0 0.0
    %3669 = vmatprep.subr.mxu0 0.0
    %3670 = vmatpush1.xpose.msra.mxu0 0.0
    %3671 = vmatprep.subr.mxu0 0.0
    %3672 = vmatpush1.xpose.msra.mxu0 0.0
    %3673 = vmatprep.subr.mxu0 0.0
    %3674 = vmatpush1.xpose.msra.mxu0 0.0
    %3675 = vmatprep.subr.mxu0 0.0
    %3676 = vmatpush1.xpose.msra.mxu0 0.0
    %3677 = vmatprep.subr.mxu0 0.0
    %3678 = vmatpush1.xpose.msra.mxu0 0.0
    %3679 = vmatprep.subr.mxu0 0.0
    %3680 = vmatpush1.xpose.msra.mxu0 0.0
    %3681 = vmatprep.subr.mxu0 0.0
    %3682 = vmatpush1.xpose.msra.mxu0 0.0
    %3683 = vmatprep.subr.mxu0 0.0
    %3684 = vmatpush1.xpose.msra.mxu0 0.0
    %3685 = vmatprep.subr.mxu0 0.0
    %3686 = vmatpush1.xpose.msra.mxu0 0.0
    %3687 = vmatprep.subr.mxu0 0.0
    %3688 = vmatpush1.xpose.msra.mxu0 0.0
    %3689 = vmatprep.mubr.f32.mxu0 0.0
    %3690 = vmatmul.mubr.f32.gmra.mrb[0].mxu0 %v3621
    %v3691 = vpop.f32.mrb[0].mxu0
    %v3692 = vadd.f32 0.0, %v3691
    %v3693 = vpop.f32.mrb[0].mxu0
    %3694 = vdwg.mxu0
    %v3695 = vmul.f32 %v3692, 0.35355338
    %v3696 = vsel %vm856, %v3695, -inf
    %3697 = vmax.xlane.f32.xlu0 %v3696
    %v3698 = vpop.xlane.xlu0 %3697
    %v3699 = vsub.f32 %v3695, %v3698
    %v3700 = vmul.f32 %v3699, 1.442695
    %v3701 = vpow.pop %v3700
    %v3702 = vsel %vm856, %v3701, 0.0
    %3703 = vadd.xlane.f32.xlu0 %v3702
    %v3704 = vpop.xlane.xlu0 %3703
    %v3705 = vrcp.pop %v3704
    %v3706 = vmul.f32 %v3701, %v3705
    %3707 = vrot.lane.b32.xlu0 %v3451, 120
    %v3708 = vpop.permute.xlu0 %3707
    %v3710 = vsel %vm868, %v3706, 0
    %v3712 = vsel %vm872, %v3708, 0
    %3714 = vmatprep.subr.mxu0 0.0
    %3715 = vmatpush1.msra.mxu0 %v3712
    %3716 = vmatprep.subr.mxu0 0.0
    %3717 = vmatpush1.msra.mxu0 0.0
    %3718 = vmatprep.subr.mxu0 0.0
    %3719 = vmatpush1.msra.mxu0 0.0
    %3720 = vmatprep.subr.mxu0 0.0
    %3721 = vmatpush1.msra.mxu0 0.0
    %3722 = vmatprep.subr.mxu0 0.0
    %3723 = vmatpush1.msra.mxu0 0.0
    %3724 = vmatprep.subr.mxu0 0.0
    %3725 = vmatpush1.msra.mxu0 0.0
    %3726 = vmatprep.subr.mxu0 0.0
    %3727 = vmatpush1.msra.mxu0 0.0
    %3728 = vmatprep.subr.mxu0 0.0
    %3729 = vmatpush1.msra.mxu0 0.0
    %3730 = vmatprep.subr.mxu0 0.0
    %3731 = vmatpush1.msra.mxu0 0.0
    %3732 = vmatprep.subr.mxu0 0.0
    %3733 = vmatpush1.msra.mxu0 0.0
    %3734 = vmatprep.subr.mxu0 0.0
    %3735 = vmatpush1.msra.mxu0 0.0
    %3736 = vmatprep.subr.mxu0 0.0
    %3737 = vmatpush1.msra.mxu0 0.0
    %3738 = vmatprep.subr.mxu0 0.0
    %3739 = vmatpush1.msra.mxu0 0.0
    %3740 = vmatprep.subr.mxu0 0.0
    %3741 = vmatpush1.msra.mxu0 0.0
    %3742 = vmatprep.subr.mxu0 0.0
    %3743 = vmatpush1.msra.mxu0 0.0
    %3744 = vmatprep.subr.mxu0 0.0
    %3745 = vmatpush1.msra.mxu0 0.0
    %3746 = vmatprep.subr.mxu0 0.0
    %3747 = vmatpush1.msra.mxu0 0.0
    %3748 = vmatprep.subr.mxu0 0.0
    %3749 = vmatpush1.msra.mxu0 0.0
    %3750 = vmatprep.subr.mxu0 0.0
    %3751 = vmatpush1.msra.mxu0 0.0
    %3752 = vmatprep.subr.mxu0 0.0
    %3753 = vmatpush1.msra.mxu0 0.0
    %3754 = vmatprep.subr.mxu0 0.0
    %3755 = vmatpush1.msra.mxu0 0.0
    %3756 = vmatprep.subr.mxu0 0.0
    %3757 = vmatpush1.msra.mxu0 0.0
    %3758 = vmatprep.subr.mxu0 0.0
    %3759 = vmatpush1.msra.mxu0 0.0
    %3760 = vmatprep.subr.mxu0 0.0
    %3761 = vmatpush1.msra.mxu0 0.0
    %3762 = vmatprep.subr.mxu0 0.0
    %3763 = vmatpush1.msra.mxu0 0.0
    %3764 = vmatprep.subr.mxu0 0.0
    %3765 = vmatpush1.msra.mxu0 0.0
    %3766 = vmatprep.subr.mxu0 0.0
    %3767 = vmatpush1.msra.mxu0 0.0
    %3768 = vmatprep.subr.mxu0 0.0
    %3769 = vmatpush1.msra.mxu0 0.0
    %3770 = vmatprep.subr.mxu0 0.0
    %3771 = vmatpush1.msra.mxu0 0.0
    %3772 = vmatprep.subr.mxu0 0.0
    %3773 = vmatpush1.msra.mxu0 0.0
    %3774 = vmatprep.subr.mxu0 0.0
    %3775 = vmatpush1.msra.mxu0 0.0
    %3776 = vmatprep.subr.mxu0 0.0
    %3777 = vmatpush1.msra.mxu0 0.0
    %3778 = vmatprep.mubr.f32.mxu0 0.0
    %3779 = vmatmul.mubr.f32.gmra.mrb[0].mxu0 %v3710
    %v3780 = vpop.f32.mrb[0].mxu0
    %v3781 = vadd.f32 0.0, %v3780
    %v3782 = vpop.f32.mrb[0].mxu0
    %3783 = vdwg.mxu0
    %3785 = vrot.lane.b32.xlu0 %v3781, 8
    %v3786 = vpop.permute.xlu0 %3785
    %3788 = vst.msk [vmem:[#allocation5] sm:$0xf] %vm1119, %v3786
    %3789 = vrot.lane.b32.xlu0 %v3449, 112
    %v3790 = vpop.permute.xlu0 %3789
    %3791 = vrot.lane.b32.xlu0 %v3450, 112
    %v3792 = vpop.permute.xlu0 %3791
    %v3793 = vsel %vm778, %v3790, 0
    %v3795 = vsel %vm778, %v3792, 0
    %3797 = vmatprep.subr.mxu0 0.0
    %3798 = vmatpush1.xpose.msra.mxu0 %v3795
    %3799 = vmatprep.subr.mxu0 0.0
    %3800 = vmatpush1.xpose.msra.mxu0 0.0
    %3801 = vmatprep.subr.mxu0 0.0
    %3802 = vmatpush1.xpose.msra.mxu0 0.0
    %3803 = vmatprep.subr.mxu0 0.0
    %3804 = vmatpush1.xpose.msra.mxu0 0.0
    %3805 = vmatprep.subr.mxu0 0.0
    %3806 = vmatpush1.xpose.msra.mxu0 0.0
    %3807 = vmatprep.subr.mxu0 0.0
    %3808 = vmatpush1.xpose.msra.mxu0 0.0
    %3809 = vmatprep.subr.mxu0 0.0
    %3810 = vmatpush1.xpose.msra.mxu0 0.0
    %3811 = vmatprep.subr.mxu0 0.0
    %3812 = vmatpush1.xpose.msra.mxu0 0.0
    %3813 = vmatprep.subr.mxu0 0.0
    %3814 = vmatpush1.xpose.msra.mxu0 0.0
    %3815 = vmatprep.subr.mxu0 0.0
    %3816 = vmatpush1.xpose.msra.mxu0 0.0
    %3817 = vmatprep.subr.mxu0 0.0
    %3818 = vmatpush1.xpose.msra.mxu0 0.0
    %3819 = vmatprep.subr.mxu0 0.0
    %3820 = vmatpush1.xpose.msra.mxu0 0.0
    %3821 = vmatprep.subr.mxu0 0.0
    %3822 = vmatpush1.xpose.msra.mxu0 0.0
    %3823 = vmatprep.subr.mxu0 0.0
    %3824 = vmatpush1.xpose.msra.mxu0 0.0
    %3825 = vmatprep.subr.mxu0 0.0
    %3826 = vmatpush1.xpose.msra.mxu0 0.0
    %3827 = vmatprep.subr.mxu0 0.0
    %3828 = vmatpush1.xpose.msra.mxu0 0.0
    %3829 = vmatprep.subr.mxu0 0.0
    %3830 = vmatpush1.xpose.msra.mxu0 0.0
    %3831 = vmatprep.subr.mxu0 0.0
    %3832 = vmatpush1.xpose.msra.mxu0 0.0
    %3833 = vmatprep.subr.mxu0 0.0
    %3834 = vmatpush1.xpose.msra.mxu0 0.0
    %3835 = vmatprep.subr.mxu0 0.0
    %3836 = vmatpush1.xpose.msra.mxu0 0.0
    %3837 = vmatprep.subr.mxu0 0.0
    %3838 = vmatpush1.xpose.msra.mxu0 0.0
    %3839 = vmatprep.subr.mxu0 0.0
    %3840 = vmatpush1.xpose.msra.mxu0 0.0
    %3841 = vmatprep.subr.mxu0 0.0
    %3842 = vmatpush1.xpose.msra.mxu0 0.0
    %3843 = vmatprep.subr.mxu0 0.0
    %3844 = vmatpush1.xpose.msra.mxu0 0.0
    %3845 = vmatprep.subr.mxu0 0.0
    %3846 = vmatpush1.xpose.msra.mxu0 0.0
    %3847 = vmatprep.subr.mxu0 0.0
    %3848 = vmatpush1.xpose.msra.mxu0 0.0
    %3849 = vmatprep.subr.mxu0 0.0
    %3850 = vmatpush1.xpose.msra.mxu0 0.0
    %3851 = vmatprep.subr.mxu0 0.0
    %3852 = vmatpush1.xpose.msra.mxu0 0.0
    %3853 = vmatprep.subr.mxu0 0.0
    %3854 = vmatpush1.xpose.msra.mxu0 0.0
    %3855 = vmatprep.subr.mxu0 0.0
    %3856 = vmatpush1.xpose.msra.mxu0 0.0
    %3857 = vmatprep.subr.mxu0 0.0
    %3858 = vmatpush1.xpose.msra.mxu0 0.0
    %3859 = vmatprep.subr.mxu0 0.0
    %3860 = vmatpush1.xpose.msra.mxu0 0.0
    %3861 = vmatprep.mubr.f32.mxu0 0.0
    %3862 = vmatmul.mubr.f32.gmra.mrb[0].mxu0 %v3793
    %v3863 = vpop.f32.mrb[0].mxu0
    %v3864 = vadd.f32 0.0, %v3863
    %v3865 = vpop.f32.mrb[0].mxu0
    %3866 = vdwg.mxu0
    %v3867 = vmul.f32 %v3864, 0.35355338
    %v3868 = vsel %vm856, %v3867, -inf
    %3869 = vmax.xlane.f32.xlu0 %v3868
    %v3870 = vpop.xlane.xlu0 %3869
    %v3871 = vsub.f32 %v3867, %v3870
    %v3872 = vmul.f32 %v3871, 1.442695
    %v3873 = vpow.pop %v3872
    %v3874 = vsel %vm856, %v3873, 0.0
    %3875 = vadd.xlane.f32.xlu0 %v3874
    %v3876 = vpop.xlane.xlu0 %3875
    %v3877 = vrcp.pop %v3876
    %v3878 = vmul.f32 %v3873, %v3877
    %3879 = vrot.lane.b32.xlu0 %v3451, 112
    %v3880 = vpop.permute.xlu0 %3879
    %v3882 = vsel %vm868, %v3878, 0
    %v3884 = vsel %vm872, %v3880, 0
    %3886 = vmatprep.subr.mxu0 0.0
    %3887 = vmatpush1.msra.mxu0 %v3884
    %3888 = vmatprep.subr.mxu0 0.0
    %3889 = vmatpush1.msra.mxu0 0.0
    %3890 = vmatprep.subr.mxu0 0.0
    %3891 = vmatpush1.msra.mxu0 0.0
    %3892 = vmatprep.subr.mxu0 0.0
    %3893 = vmatpush1.msra.mxu0 0.0
    %3894 = vmatprep.subr.mxu0 0.0
    %3895 = vmatpush1.msra.mxu0 0.0
    %3896 = vmatprep.subr.mxu0 0.0
    %3897 = vmatpush1.msra.mxu0 0.0
    %3898 = vmatprep.subr.mxu0 0.0
    %3899 = vmatpush1.msra.mxu0 0.0
    %3900 = vmatprep.subr.mxu0 0.0
    %3901 = vmatpush1.msra.mxu0 0.0
    %3902 = vmatprep.subr.mxu0 0.0
    %3903 = vmatpush1.msra.mxu0 0.0
    %3904 = vmatprep.subr.mxu0 0.0
    %3905 = vmatpush1.msra.mxu0 0.0
    %3906 = vmatprep.subr.mxu0 0.0
    %3907 = vmatpush1.msra.mxu0 0.0
    %3908 = vmatprep.subr.mxu0 0.0
    %3909 = vmatpush1.msra.mxu0 0.0
    %3910 = vmatprep.subr.mxu0 0.0
    %3911 = vmatpush1.msra.mxu0 0.0
    %3912 = vmatprep.subr.mxu0 0.0
    %3913 = vmatpush1.msra.mxu0 0.0
    %3914 = vmatprep.subr.mxu0 0.0
    %3915 = vmatpush1.msra.mxu0 0.0
    %3916 = vmatprep.subr.mxu0 0.0
    %3917 = vmatpush1.msra.mxu0 0.0
    %3918 = vmatprep.subr.mxu0 0.0
    %3919 = vmatpush1.msra.mxu0 0.0
    %3920 = vmatprep.subr.mxu0 0.0
    %3921 = vmatpush1.msra.mxu0 0.0
    %3922 = vmatprep.subr.mxu0 0.0
    %3923 = vmatpush1.msra.mxu0 0.0
    %3924 = vmatprep.subr.mxu0 0.0
    %3925 = vmatpush1.msra.mxu0 0.0
    %3926 = vmatprep.subr.mxu0 0.0
    %3927 = vmatpush1.msra.mxu0 0.0
    %3928 = vmatprep.subr.mxu0 0.0
    %3929 = vmatpush1.msra.mxu0 0.0
    %3930 = vmatprep.subr.mxu0 0.0
    %3931 = vmatpush1.msra.mxu0 0.0
    %3932 = vmatprep.subr.mxu0 0.0
    %3933 = vmatpush1.msra.mxu0 0.0
    %3934 = vmatprep.subr.mxu0 0.0
    %3935 = vmatpush1.msra.mxu0 0.0
    %3936 = vmatprep.subr.mxu0 0.0
    %3937 = vmatpush1.msra.mxu0 0.0
    %3938 = vmatprep.subr.mxu0 0.0
    %3939 = vmatpush1.msra.mxu0 0.0
    %3940 = vmatprep.subr.mxu0 0.0
    %3941 = vmatpush1.msra.mxu0 0.0
    %3942 = vmatprep.subr.mxu0 0.0
    %3943 = vmatpush1.msra.mxu0 0.0
    %3944 = vmatprep.subr.mxu0 0.0
    %3945 = vmatpush1.msra.mxu0 0.0
    %3946 = vmatprep.subr.mxu0 0.0
    %3947 = vmatpush1.msra.mxu0 0.0
    %3948 = vmatprep.subr.mxu0 0.0
    %3949 = vmatpush1.msra.mxu0 0.0
    %3950 = vmatprep.mubr.f32.mxu0 0.0
    %3951 = vmatmul.mubr.f32.gmra.mrb[0].mxu0 %v3882
    %v3952 = vpop.f32.mrb[0].mxu0
    %v3953 = vadd.f32 0.0, %v3952
    %v3954 = vpop.f32.mrb[0].mxu0
    %3955 = vdwg.mxu0
    %3957 = vrot.lane.b32.xlu0 %v3953, 16
    %v3958 = vpop.permute.xlu0 %3957
    %3960 = vst.msk [vmem:[#allocation5] sm:$0xf] %vm1292, %v3958
    %3961 = vrot.lane.b32.xlu0 %v3449, 104
    %v3962 = vpop.permute.xlu0 %3961
    %3963 = vrot.lane.b32.xlu0 %v3450, 104
    %v3964 = vpop.permute.xlu0 %3963
    %v3965 = vsel %vm778, %v3962, 0
    %v3967 = vsel %vm778, %v3964, 0
    %3969 = vmatprep.subr.mxu0 0.0
    %3970 = vmatpush1.xpose.msra.mxu0 %v3967
    %3971 = vmatprep.subr.mxu0 0.0
    %3972 = vmatpush1.xpose.msra.mxu0 0.0
    %3973 = vmatprep.subr.mxu0 0.0
    %3974 = vmatpush1.xpose.msra.mxu0 0.0
    %3975 = vmatprep.subr.mxu0 0.0
    %3976 = vmatpush1.xpose.msra.mxu0 0.0
    %3977 = vmatprep.subr.mxu0 0.0
    %3978 = vmatpush1.xpose.msra.mxu0 0.0
    %3979 = vmatprep.subr.mxu0 0.0
    %3980 = vmatpush1.xpose.msra.mxu0 0.0
    %3981 = vmatprep.subr.mxu0 0.0
    %3982 = vmatpush1.xpose.msra.mxu0 0.0
    %3983 = vmatprep.subr.mxu0 0.0
    %3984 = vmatpush1.xpose.msra.mxu0 0.0
    %3985 = vmatprep.subr.mxu0 0.0
    %3986 = vmatpush1.xpose.msra.mxu0 0.0
    %3987 = vmatprep.subr.mxu0 0.0
    %3988 = vmatpush1.xpose.msra.mxu0 0.0
    %3989 = vmatprep.subr.mxu0 0.0
    %3990 = vmatpush1.xpose.msra.mxu0 0.0
    %3991 = vmatprep.subr.mxu0 0.0
    %3992 = vmatpush1.xpose.msra.mxu0 0.0
    %3993 = vmatprep.subr.mxu0 0.0
    %3994 = vmatpush1.xpose.msra.mxu0 0.0
    %3995 = vmatprep.subr.mxu0 0.0
    %3996 = vmatpush1.xpose.msra.mxu0 0.0
    %3997 = vmatprep.subr.mxu0 0.0
    %3998 = vmatpush1.xpose.msra.mxu0 0.0
    %3999 = vmatprep.subr.mxu0 0.0
    %4000 = vmatpush1.xpose.msra.mxu0 0.0
    %4001 = vmatprep.subr.mxu0 0.0
    %4002 = vmatpush1.xpose.msra.mxu0 0.0
    %4003 = vmatprep.subr.mxu0 0.0
    %4004 = vmatpush1.xpose.msra.mxu0 0.0
    %4005 = vmatprep.subr.mxu0 0.0
    %4006 = vmatpush1.xpose.msra.mxu0 0.0
    %4007 = vmatprep.subr.mxu0 0.0
    %4008 = vmatpush1.xpose.msra.mxu0 0.0
    %4009 = vmatprep.subr.mxu0 0.0
    %4010 = vmatpush1.xpose.msra.mxu0 0.0
    %4011 = vmatprep.subr.mxu0 0.0
    %4012 = vmatpush1.xpose.msra.mxu0 0.0
    %4013 = vmatprep.subr.mxu0 0.0
    %4014 = vmatpush1.xpose.msra.mxu0 0.0
    %4015 = vmatprep.subr.mxu0 0.0
    %4016 = vmatpush1.xpose.msra.mxu0 0.0
    %4017 = vmatprep.subr.mxu0 0.0
    %4018 = vmatpush1.xpose.msra.mxu0 0.0
    %4019 = vmatprep.subr.mxu0 0.0
    %4020 = vmatpush1.xpose.msra.mxu0 0.0
    %4021 = vmatprep.subr.mxu0 0.0
    %4022 = vmatpush1.xpose.msra.mxu0 0.0
    %4023 = vmatprep.subr.mxu0 0.0
    %4024 = vmatpush1.xpose.msra.mxu0 0.0
    %4025 = vmatprep.subr.mxu0 0.0
    %4026 = vmatpush1.xpose.msra.mxu0 0.0
    %4027 = vmatprep.subr.mxu0 0.0
    %4028 = vmatpush1.xpose.msra.mxu0 0.0
    %4029 = vmatprep.subr.mxu0 0.0
    %4030 = vmatpush1.xpose.msra.mxu0 0.0
    %4031 = vmatprep.subr.mxu0 0.0
    %4032 = vmatpush1.xpose.msra.mxu0 0.0
    %4033 = vmatprep.mubr.f32.mxu0 0.0
    %4034 = vmatmul.mubr.f32.gmra.mrb[0].mxu0 %v3965
    %v4035 = vpop.f32.mrb[0].mxu0
    %v4036 = vadd.f32 0.0, %v4035
    %v4037 = vpop.f32.mrb[0].mxu0
    %4038 = vdwg.mxu0
    %v4039 = vmul.f32 %v4036, 0.35355338
    %v4040 = vsel %vm856, %v4039, -inf
    %4041 = vmax.xlane.f32.xlu0 %v4040
    %v4042 = vpop.xlane.xlu0 %4041
    %v4043 = vsub.f32 %v4039, %v4042
    %v4044 = vmul.f32 %v4043, 1.442695
    %v4045 = vpow.pop %v4044
    %v4046 = vsel %vm856, %v4045, 0.0
    %4047 = vadd.xlane.f32.xlu0 %v4046
    %v4048 = vpop.xlane.xlu0 %4047
    %v4049 = vrcp.pop %v4048
    %v4050 = vmul.f32 %v4045, %v4049
    %4051 = vrot.lane.b32.xlu0 %v3451, 104
    %v4052 = vpop.permute.xlu0 %4051
    %v4054 = vsel %vm868, %v4050, 0
    %v4056 = vsel %vm872, %v4052, 0
    %4058 = vmatprep.subr.mxu0 0.0
    %4059 = vmatpush1.msra.mxu0 %v4056
    %4060 = vmatprep.subr.mxu0 0.0
    %4061 = vmatpush1.msra.mxu0 0.0
    %4062 = vmatprep.subr.mxu0 0.0
    %4063 = vmatpush1.msra.mxu0 0.0
    %4064 = vmatprep.subr.mxu0 0.0
    %4065 = vmatpush1.msra.mxu0 0.0
    %4066 = vmatprep.subr.mxu0 0.0
    %4067 = vmatpush1.msra.mxu0 0.0
    %4068 = vmatprep.subr.mxu0 0.0
    %4069 = vmatpush1.msra.mxu0 0.0
    %4070 = vmatprep.subr.mxu0 0.0
    %4071 = vmatpush1.msra.mxu0 0.0
    %4072 = vmatprep.subr.mxu0 0.0
    %4073 = vmatpush1.msra.mxu0 0.0
    %4074 = vmatprep.subr.mxu0 0.0
    %4075 = vmatpush1.msra.mxu0 0.0
    %4076 = vmatprep.subr.mxu0 0.0
    %4077 = vmatpush1.msra.mxu0 0.0
    %4078 = vmatprep.subr.mxu0 0.0
    %4079 = vmatpush1.msra.mxu0 0.0
    %4080 = vmatprep.subr.mxu0 0.0
    %4081 = vmatpush1.msra.mxu0 0.0
    %4082 = vmatprep.subr.mxu0 0.0
    %4083 = vmatpush1.msra.mxu0 0.0
    %4084 = vmatprep.subr.mxu0 0.0
    %4085 = vmatpush1.msra.mxu0 0.0
    %4086 = vmatprep.subr.mxu0 0.0
    %4087 = vmatpush1.msra.mxu0 0.0
    %4088 = vmatprep.subr.mxu0 0.0
    %4089 = vmatpush1.msra.mxu0 0.0
    %4090 = vmatprep.subr.mxu0 0.0
    %4091 = vmatpush1.msra.mxu0 0.0
    %4092 = vmatprep.subr.mxu0 0.0
    %4093 = vmatpush1.msra.mxu0 0.0
    %4094 = vmatprep.subr.mxu0 0.0
    %4095 = vmatpush1.msra.mxu0 0.0
    %4096 = vmatprep.subr.mxu0 0.0
    %4097 = vmatpush1.msra.mxu0 0.0
    %4098 = vmatprep.subr.mxu0 0.0
    %4099 = vmatpush1.msra.mxu0 0.0
    %4100 = vmatprep.subr.mxu0 0.0
    %4101 = vmatpush1.msra.mxu0 0.0
    %4102 = vmatprep.subr.mxu0 0.0
    %4103 = vmatpush1.msra.mxu0 0.0
    %4104 = vmatprep.subr.mxu0 0.0
    %4105 = vmatpush1.msra.mxu0 0.0
    %4106 = vmatprep.subr.mxu0 0.0
    %4107 = vmatpush1.msra.mxu0 0.0
    %4108 = vmatprep.subr.mxu0 0.0
    %4109 = vmatpush1.msra.mxu0 0.0
    %4110 = vmatprep.subr.mxu0 0.0
    %4111 = vmatpush1.msra.mxu0 0.0
    %4112 = vmatprep.subr.mxu0 0.0
    %4113 = vmatpush1.msra.mxu0 0.0
    %4114 = vmatprep.subr.mxu0 0.0
    %4115 = vmatpush1.msra.mxu0 0.0
    %4116 = vmatprep.subr.mxu0 0.0
    %4117 = vmatpush1.msra.mxu0 0.0
    %4118 = vmatprep.subr.mxu0 0.0
    %4119 = vmatpush1.msra.mxu0 0.0
    %4120 = vmatprep.subr.mxu0 0.0
    %4121 = vmatpush1.msra.mxu0 0.0
    %4122 = vmatprep.mubr.f32.mxu0 0.0
    %4123 = vmatmul.mubr.f32.gmra.mrb[0].mxu0 %v4054
    %v4124 = vpop.f32.mrb[0].mxu0
    %v4125 = vadd.f32 0.0, %v4124
    %v4126 = vpop.f32.mrb[0].mxu0
    %4127 = vdwg.mxu0
    %4129 = vrot.lane.b32.xlu0 %v4125, 24
    %v4130 = vpop.permute.xlu0 %4129
    %4132 = vst.msk [vmem:[#allocation5] sm:$0xf] %vm1465, %v4130
    %v4133 = vld [vmem:[%s1467] sm:$0xf]
    %v4134 = vld [vmem:[%s1469] sm:$0xf]
    %v4135 = vld [vmem:[%s1471] sm:$0xf]
    %v4137 = vsel %vm778, %v4133, 0
    %v4140 = vsel %vm778, %v4134, 0
    %4142 = vmatprep.subr.mxu0 0.0
    %4143 = vmatpush1.xpose.msra.mxu0 %v4140
    %4144 = vmatprep.subr.mxu0 0.0
    %4145 = vmatpush1.xpose.msra.mxu0 0.0
    %4146 = vmatprep.subr.mxu0 0.0
    %4147 = vmatpush1.xpose.msra.mxu0 0.0
    %4148 = vmatprep.subr.mxu0 0.0
    %4149 = vmatpush1.xpose.msra.mxu0 0.0
    %4150 = vmatprep.subr.mxu0 0.0
    %4151 = vmatpush1.xpose.msra.mxu0 0.0
    %4152 = vmatprep.subr.mxu0 0.0
    %4153 = vmatpush1.xpose.msra.mxu0 0.0
    %4154 = vmatprep.subr.mxu0 0.0
    %4155 = vmatpush1.xpose.msra.mxu0 0.0
    %4156 = vmatprep.subr.mxu0 0.0
    %4157 = vmatpush1.xpose.msra.mxu0 0.0
    %4158 = vmatprep.subr.mxu0 0.0
    %4159 = vmatpush1.xpose.msra.mxu0 0.0
    %4160 = vmatprep.subr.mxu0 0.0
    %4161 = vmatpush1.xpose.msra.mxu0 0.0
    %4162 = vmatprep.subr.mxu0 0.0
    %4163 = vmatpush1.xpose.msra.mxu0 0.0
    %4164 = vmatprep.subr.mxu0 0.0
    %4165 = vmatpush1.xpose.msra.mxu0 0.0
    %4166 = vmatprep.subr.mxu0 0.0
    %4167 = vmatpush1.xpose.msra.mxu0 0.0
    %4168 = vmatprep.subr.mxu0 0.0
    %4169 = vmatpush1.xpose.msra.mxu0 0.0
    %4170 = vmatprep.subr.mxu0 0.0
    %4171 = vmatpush1.xpose.msra.mxu0 0.0
    %4172 = vmatprep.subr.mxu0 0.0
    %4173 = vmatpush1.xpose.msra.mxu0 0.0
    %4174 = vmatprep.subr.mxu0 0.0
    %4175 = vmatpush1.xpose.msra.mxu0 0.0
    %4176 = vmatprep.subr.mxu0 0.0
    %4177 = vmatpush1.xpose.msra.mxu0 0.0
    %4178 = vmatprep.subr.mxu0 0.0
    %4179 = vmatpush1.xpose.msra.mxu0 0.0
    %4180 = vmatprep.subr.mxu0 0.0
    %4181 = vmatpush1.xpose.msra.mxu0 0.0
    %4182 = vmatprep.subr.mxu0 0.0
    %4183 = vmatpush1.xpose.msra.mxu0 0.0
    %4184 = vmatprep.subr.mxu0 0.0
    %4185 = vmatpush1.xpose.msra.mxu0 0.0
    %4186 = vmatprep.subr.mxu0 0.0
    %4187 = vmatpush1.xpose.msra.mxu0 0.0
    %4188 = vmatprep.subr.mxu0 0.0
    %4189 = vmatpush1.xpose.msra.mxu0 0.0
    %4190 = vmatprep.subr.mxu0 0.0
    %4191 = vmatpush1.xpose.msra.mxu0 0.0
    %4192 = vmatprep.subr.mxu0 0.0
    %4193 = vmatpush1.xpose.msra.mxu0 0.0
    %4194 = vmatprep.subr.mxu0 0.0
    %4195 = vmatpush1.xpose.msra.mxu0 0.0
    %4196 = vmatprep.subr.mxu0 0.0
    %4197 = vmatpush1.xpose.msra.mxu0 0.0
    %4198 = vmatprep.subr.mxu0 0.0
    %4199 = vmatpush1.xpose.msra.mxu0 0.0
    %4200 = vmatprep.subr.mxu0 0.0
    %4201 = vmatpush1.xpose.msra.mxu0 0.0
    %4202 = vmatprep.subr.mxu0 0.0
    %4203 = vmatpush1.xpose.msra.mxu0 0.0
    %4204 = vmatprep.subr.mxu0 0.0
    %4205 = vmatpush1.xpose.msra.mxu0 0.0
    %4206 = vmatprep.mubr.f32.mxu0 0.0
    %4207 = vmatmul.mubr.f32.gmra.mrb[0].mxu0 %v4137
    %v4208 = vpop.f32.mrb[0].mxu0
    %v4209 = vadd.f32 0.0, %v4208
    %v4210 = vpop.f32.mrb[0].mxu0
    %4211 = vdwg.mxu0
    %v4212 = vmul.f32 %v4209, 0.35355338
    %v4213 = vsel %vm856, %v4212, -inf
    %4214 = vmax.xlane.f32.xlu0 %v4213
    %v4215 = vpop.xlane.xlu0 %4214
    %v4216 = vsub.f32 %v4212, %v4215
    %v4217 = vmul.f32 %v4216, 1.442695
    %v4218 = vpow.pop %v4217
    %v4219 = vsel %vm856, %v4218, 0.0
    %4220 = vadd.xlane.f32.xlu0 %v4219
    %v4221 = vpop.xlane.xlu0 %4220
    %v4222 = vrcp.pop %v4221
    %v4223 = vmul.f32 %v4218, %v4222
    %v4225 = vsel %vm868, %v4223, 0
    %v4228 = vsel %vm872, %v4135, 0
    %4230 = vmatprep.subr.mxu0 0.0
    %4231 = vmatpush1.msra.mxu0 %v4228
    %4232 = vmatprep.subr.mxu0 0.0
    %4233 = vmatpush1.msra.mxu0 0.0
    %4234 = vmatprep.subr.mxu0 0.0
    %4235 = vmatpush1.msra.mxu0 0.0
    %4236 = vmatprep.subr.mxu0 0.0
    %4237 = vmatpush1.msra.mxu0 0.0
    %4238 = vmatprep.subr.mxu0 0.0
    %4239 = vmatpush1.msra.mxu0 0.0
    %4240 = vmatprep.subr.mxu0 0.0
    %4241 = vmatpush1.msra.mxu0 0.0
    %4242 = vmatprep.subr.mxu0 0.0
    %4243 = vmatpush1.msra.mxu0 0.0
    %4244 = vmatprep.subr.mxu0 0.0
    %4245 = vmatpush1.msra.mxu0 0.0
    %4246 = vmatprep.subr.mxu0 0.0
    %4247 = vmatpush1.msra.mxu0 0.0
    %4248 = vmatprep.subr.mxu0 0.0
    %4249 = vmatpush1.msra.mxu0 0.0
    %4250 = vmatprep.subr.mxu0 0.0
    %4251 = vmatpush1.msra.mxu0 0.0
    %4252 = vmatprep.subr.mxu0 0.0
    %4253 = vmatpush1.msra.mxu0 0.0
    %4254 = vmatprep.subr.mxu0 0.0
    %4255 = vmatpush1.msra.mxu0 0.0
    %4256 = vmatprep.subr.mxu0 0.0
    %4257 = vmatpush1.msra.mxu0 0.0
    %4258 = vmatprep.subr.mxu0 0.0
    %4259 = vmatpush1.msra.mxu0 0.0
    %4260 = vmatprep.subr.mxu0 0.0
    %4261 = vmatpush1.msra.mxu0 0.0
    %4262 = vmatprep.subr.mxu0 0.0
    %4263 = vmatpush1.msra.mxu0 0.0
    %4264 = vmatprep.subr.mxu0 0.0
    %4265 = vmatpush1.msra.mxu0 0.0
    %4266 = vmatprep.subr.mxu0 0.0
    %4267 = vmatpush1.msra.mxu0 0.0
    %4268 = vmatprep.subr.mxu0 0.0
    %4269 = vmatpush1.msra.mxu0 0.0
    %4270 = vmatprep.subr.mxu0 0.0
    %4271 = vmatpush1.msra.mxu0 0.0
    %4272 = vmatprep.subr.mxu0 0.0
    %4273 = vmatpush1.msra.mxu0 0.0
    %4274 = vmatprep.subr.mxu0 0.0
    %4275 = vmatpush1.msra.mxu0 0.0
    %4276 = vmatprep.subr.mxu0 0.0
    %4277 = vmatpush1.msra.mxu0 0.0
    %4278 = vmatprep.subr.mxu0 0.0
    %4279 = vmatpush1.msra.mxu0 0.0
    %4280 = vmatprep.subr.mxu0 0.0
    %4281 = vmatpush1.msra.mxu0 0.0
    %4282 = vmatprep.subr.mxu0 0.0
    %4283 = vmatpush1.msra.mxu0 0.0
    %4284 = vmatprep.subr.mxu0 0.0
    %4285 = vmatpush1.msra.mxu0 0.0
    %4286 = vmatprep.subr.mxu0 0.0
    %4287 = vmatpush1.msra.mxu0 0.0
    %4288 = vmatprep.subr.mxu0 0.0
    %4289 = vmatpush1.msra.mxu0 0.0
    %4290 = vmatprep.subr.mxu0 0.0
    %4291 = vmatpush1.msra.mxu0 0.0
    %4292 = vmatprep.subr.mxu0 0.0
    %4293 = vmatpush1.msra.mxu0 0.0
    %4294 = vmatprep.mubr.f32.mxu0 0.0
    %4295 = vmatmul.mubr.f32.gmra.mrb[0].mxu0 %v4225
    %v4296 = vpop.f32.mrb[0].mxu0
    %v4297 = vadd.f32 0.0, %v4296
    %v4298 = vpop.f32.mrb[0].mxu0
    %4299 = vdwg.mxu0
    %4300 = vst.msk [vmem:[%s1637] sm:$0xf] %vm946, %v4297
    %4301 = vrot.lane.b32.xlu0 %v4133, 120
    %v4302 = vpop.permute.xlu0 %4301
    %4303 = vrot.lane.b32.xlu0 %v4134, 120
    %v4304 = vpop.permute.xlu0 %4303
    %v4305 = vsel %vm778, %v4302, 0
    %v4307 = vsel %vm778, %v4304, 0
    %4309 = vmatprep.subr.mxu0 0.0
    %4310 = vmatpush1.xpose.msra.mxu0 %v4307
    %4311 = vmatprep.subr.mxu0 0.0
    %4312 = vmatpush1.xpose.msra.mxu0 0.0
    %4313 = vmatprep.subr.mxu0 0.0
    %4314 = vmatpush1.xpose.msra.mxu0 0.0
    %4315 = vmatprep.subr.mxu0 0.0
    %4316 = vmatpush1.xpose.msra.mxu0 0.0
    %4317 = vmatprep.subr.mxu0 0.0
    %4318 = vmatpush1.xpose.msra.mxu0 0.0
    %4319 = vmatprep.subr.mxu0 0.0
    %4320 = vmatpush1.xpose.msra.mxu0 0.0
    %4321 = vmatprep.subr.mxu0 0.0
    %4322 = vmatpush1.xpose.msra.mxu0 0.0
    %4323 = vmatprep.subr.mxu0 0.0
    %4324 = vmatpush1.xpose.msra.mxu0 0.0
    %4325 = vmatprep.subr.mxu0 0.0
    %4326 = vmatpush1.xpose.msra.mxu0 0.0
    %4327 = vmatprep.subr.mxu0 0.0
    %4328 = vmatpush1.xpose.msra.mxu0 0.0
    %4329 = vmatprep.subr.mxu0 0.0
    %4330 = vmatpush1.xpose.msra.mxu0 0.0
    %4331 = vmatprep.subr.mxu0 0.0
    %4332 = vmatpush1.xpose.msra.mxu0 0.0
    %4333 = vmatprep.subr.mxu0 0.0
    %4334 = vmatpush1.xpose.msra.mxu0 0.0
    %4335 = vmatprep.subr.mxu0 0.0
    %4336 = vmatpush1.xpose.msra.mxu0 0.0
    %4337 = vmatprep.subr.mxu0 0.0
    %4338 = vmatpush1.xpose.msra.mxu0 0.0
    %4339 = vmatprep.subr.mxu0 0.0
    %4340 = vmatpush1.xpose.msra.mxu0 0.0
    %4341 = vmatprep.subr.mxu0 0.0
    %4342 = vmatpush1.xpose.msra.mxu0 0.0
    %4343 = vmatprep.subr.mxu0 0.0
    %4344 = vmatpush1.xpose.msra.mxu0 0.0
    %4345 = vmatprep.subr.mxu0 0.0
    %4346 = vmatpush1.xpose.msra.mxu0 0.0
    %4347 = vmatprep.subr.mxu0 0.0
    %4348 = vmatpush1.xpose.msra.mxu0 0.0
    %4349 = vmatprep.subr.mxu0 0.0
    %4350 = vmatpush1.xpose.msra.mxu0 0.0
    %4351 = vmatprep.subr.mxu0 0.0
    %4352 = vmatpush1.xpose.msra.mxu0 0.0
    %4353 = vmatprep.subr.mxu0 0.0
    %4354 = vmatpush1.xpose.msra.mxu0 0.0
    %4355 = vmatprep.subr.mxu0 0.0
    %4356 = vmatpush1.xpose.msra.mxu0 0.0
    %4357 = vmatprep.subr.mxu0 0.0
    %4358 = vmatpush1.xpose.msra.mxu0 0.0
    %4359 = vmatprep.subr.mxu0 0.0
    %4360 = vmatpush1.xpose.msra.mxu0 0.0
    %4361 = vmatprep.subr.mxu0 0.0
    %4362 = vmatpush1.xpose.msra.mxu0 0.0
    %4363 = vmatprep.subr.mxu0 0.0
    %4364 = vmatpush1.xpose.msra.mxu0 0.0
    %4365 = vmatprep.subr.mxu0 0.0
    %4366 = vmatpush1.xpose.msra.mxu0 0.0
    %4367 = vmatprep.subr.mxu0 0.0
    %4368 = vmatpush1.xpose.msra.mxu0 0.0
    %4369 = vmatprep.subr.mxu0 0.0
    %4370 = vmatpush1.xpose.msra.mxu0 0.0
    %4371 = vmatprep.subr.mxu0 0.0
    %4372 = vmatpush1.xpose.msra.mxu0 0.0
    %4373 = vmatprep.mubr.f32.mxu0 0.0
    %4374 = vmatmul.mubr.f32.gmra.mrb[0].mxu0 %v4305
    %v4375 = vpop.f32.mrb[0].mxu0
    %v4376 = vadd.f32 0.0, %v4375
    %v4377 = vpop.f32.mrb[0].mxu0
    %4378 = vdwg.mxu0
    %v4379 = vmul.f32 %v4376, 0.35355338
    %v4380 = vsel %vm856, %v4379, -inf
    %4381 = vmax.xlane.f32.xlu0 %v4380
    %v4382 = vpop.xlane.xlu0 %4381
    %v4383 = vsub.f32 %v4379, %v4382
    %v4384 = vmul.f32 %v4383, 1.442695
    %v4385 = vpow.pop %v4384
    %v4386 = vsel %vm856, %v4385, 0.0
    %4387 = vadd.xlane.f32.xlu0 %v4386
    %v4388 = vpop.xlane.xlu0 %4387
    %v4389 = vrcp.pop %v4388
    %v4390 = vmul.f32 %v4385, %v4389
    %4391 = vrot.lane.b32.xlu0 %v4135, 120
    %v4392 = vpop.permute.xlu0 %4391
    %v4394 = vsel %vm868, %v4390, 0
    %v4396 = vsel %vm872, %v4392, 0
    %4398 = vmatprep.subr.mxu0 0.0
    %4399 = vmatpush1.msra.mxu0 %v4396
    %4400 = vmatprep.subr.mxu0 0.0
    %4401 = vmatpush1.msra.mxu0 0.0
    %4402 = vmatprep.subr.mxu0 0.0
    %4403 = vmatpush1.msra.mxu0 0.0
    %4404 = vmatprep.subr.mxu0 0.0
    %4405 = vmatpush1.msra.mxu0 0.0
    %4406 = vmatprep.subr.mxu0 0.0
    %4407 = vmatpush1.msra.mxu0 0.0
    %4408 = vmatprep.subr.mxu0 0.0
    %4409 = vmatpush1.msra.mxu0 0.0
    %4410 = vmatprep.subr.mxu0 0.0
    %4411 = vmatpush1.msra.mxu0 0.0
    %4412 = vmatprep.subr.mxu0 0.0
    %4413 = vmatpush1.msra.mxu0 0.0
    %4414 = vmatprep.subr.mxu0 0.0
    %4415 = vmatpush1.msra.mxu0 0.0
    %4416 = vmatprep.subr.mxu0 0.0
    %4417 = vmatpush1.msra.mxu0 0.0
    %4418 = vmatprep.subr.mxu0 0.0
    %4419 = vmatpush1.msra.mxu0 0.0
    %4420 = vmatprep.subr.mxu0 0.0
    %4421 = vmatpush1.msra.mxu0 0.0
    %4422 = vmatprep.subr.mxu0 0.0
    %4423 = vmatpush1.msra.mxu0 0.0
    %4424 = vmatprep.subr.mxu0 0.0
    %4425 = vmatpush1.msra.mxu0 0.0
    %4426 = vmatprep.subr.mxu0 0.0
    %4427 = vmatpush1.msra.mxu0 0.0
    %4428 = vmatprep.subr.mxu0 0.0
    %4429 = vmatpush1.msra.mxu0 0.0
    %4430 = vmatprep.subr.mxu0 0.0
    %4431 = vmatpush1.msra.mxu0 0.0
    %4432 = vmatprep.subr.mxu0 0.0
    %4433 = vmatpush1.msra.mxu0 0.0
    %4434 = vmatprep.subr.mxu0 0.0
    %4435 = vmatpush1.msra.mxu0 0.0
    %4436 = vmatprep.subr.mxu0 0.0
    %4437 = vmatpush1.msra.mxu0 0.0
    %4438 = vmatprep.subr.mxu0 0.0
    %4439 = vmatpush1.msra.mxu0 0.0
    %4440 = vmatprep.subr.mxu0 0.0
    %4441 = vmatpush1.msra.mxu0 0.0
    %4442 = vmatprep.subr.mxu0 0.0
    %4443 = vmatpush1.msra.mxu0 0.0
    %4444 = vmatprep.subr.mxu0 0.0
    %4445 = vmatpush1.msra.mxu0 0.0
    %4446 = vmatprep.subr.mxu0 0.0
    %4447 = vmatpush1.msra.mxu0 0.0
    %4448 = vmatprep.subr.mxu0 0.0
    %4449 = vmatpush1.msra.mxu0 0.0
    %4450 = vmatprep.subr.mxu0 0.0
    %4451 = vmatpush1.msra.mxu0 0.0
    %4452 = vmatprep.subr.mxu0 0.0
    %4453 = vmatpush1.msra.mxu0 0.0
    %4454 = vmatprep.subr.mxu0 0.0
    %4455 = vmatpush1.msra.mxu0 0.0
    %4456 = vmatprep.subr.mxu0 0.0
    %4457 = vmatpush1.msra.mxu0 0.0
    %4458 = vmatprep.subr.mxu0 0.0
    %4459 = vmatpush1.msra.mxu0 0.0
    %4460 = vmatprep.subr.mxu0 0.0
    %4461 = vmatpush1.msra.mxu0 0.0
    %4462 = vmatprep.mubr.f32.mxu0 0.0
    %4463 = vmatmul.mubr.f32.gmra.mrb[0].mxu0 %v4394
    %v4464 = vpop.f32.mrb[0].mxu0
    %v4465 = vadd.f32 0.0, %v4464
    %v4466 = vpop.f32.mrb[0].mxu0
    %4467 = vdwg.mxu0
    %4469 = vrot.lane.b32.xlu0 %v4465, 8
    %v4470 = vpop.permute.xlu0 %4469
    %4472 = vst.msk [vmem:[%s1637] sm:$0xf] %vm1119, %v4470
    %4473 = vrot.lane.b32.xlu0 %v4133, 112
    %v4474 = vpop.permute.xlu0 %4473
    %4475 = vrot.lane.b32.xlu0 %v4134, 112
    %v4476 = vpop.permute.xlu0 %4475
    %v4477 = vsel %vm778, %v4474, 0
    %v4479 = vsel %vm778, %v4476, 0
    %4481 = vmatprep.subr.mxu0 0.0
    %4482 = vmatpush1.xpose.msra.mxu0 %v4479
    %4483 = vmatprep.subr.mxu0 0.0
    %4484 = vmatpush1.xpose.msra.mxu0 0.0
    %4485 = vmatprep.subr.mxu0 0.0
    %4486 = vmatpush1.xpose.msra.mxu0 0.0
    %4487 = vmatprep.subr.mxu0 0.0
    %4488 = vmatpush1.xpose.msra.mxu0 0.0
    %4489 = vmatprep.subr.mxu0 0.0
    %4490 = vmatpush1.xpose.msra.mxu0 0.0
    %4491 = vmatprep.subr.mxu0 0.0
    %4492 = vmatpush1.xpose.msra.mxu0 0.0
    %4493 = vmatprep.subr.mxu0 0.0
    %4494 = vmatpush1.xpose.msra.mxu0 0.0
    %4495 = vmatprep.subr.mxu0 0.0
    %4496 = vmatpush1.xpose.msra.mxu0 0.0
    %4497 = vmatprep.subr.mxu0 0.0
    %4498 = vmatpush1.xpose.msra.mxu0 0.0
    %4499 = vmatprep.subr.mxu0 0.0
    %4500 = vmatpush1.xpose.msra.mxu0 0.0
    %4501 = vmatprep.subr.mxu0 0.0
    %4502 = vmatpush1.xpose.msra.mxu0 0.0
    %4503 = vmatprep.subr.mxu0 0.0
    %4504 = vmatpush1.xpose.msra.mxu0 0.0
    %4505 = vmatprep.subr.mxu0 0.0
    %4506 = vmatpush1.xpose.msra.mxu0 0.0
    %4507 = vmatprep.subr.mxu0 0.0
    %4508 = vmatpush1.xpose.msra.mxu0 0.0
    %4509 = vmatprep.subr.mxu0 0.0
    %4510 = vmatpush1.xpose.msra.mxu0 0.0
    %4511 = vmatprep.subr.mxu0 0.0
    %4512 = vmatpush1.xpose.msra.mxu0 0.0
    %4513 = vmatprep.subr.mxu0 0.0
    %4514 = vmatpush1.xpose.msra.mxu0 0.0
    %4515 = vmatprep.subr.mxu0 0.0
    %4516 = vmatpush1.xpose.msra.mxu0 0.0
    %4517 = vmatprep.subr.mxu0 0.0
    %4518 = vmatpush1.xpose.msra.mxu0 0.0
    %4519 = vmatprep.subr.mxu0 0.0
    %4520 = vmatpush1.xpose.msra.mxu0 0.0
    %4521 = vmatprep.subr.mxu0 0.0
    %4522 = vmatpush1.xpose.msra.mxu0 0.0
    %4523 = vmatprep.subr.mxu0 0.0
    %4524 = vmatpush1.xpose.msra.mxu0 0.0
    %4525 = vmatprep.subr.mxu0 0.0
    %4526 = vmatpush1.xpose.msra.mxu0 0.0
    %4527 = vmatprep.subr.mxu0 0.0
    %4528 = vmatpush1.xpose.msra.mxu0 0.0
    %4529 = vmatprep.subr.mxu0 0.0
    %4530 = vmatpush1.xpose.msra.mxu0 0.0
    %4531 = vmatprep.subr.mxu0 0.0
    %4532 = vmatpush1.xpose.msra.mxu0 0.0
    %4533 = vmatprep.subr.mxu0 0.0
    %4534 = vmatpush1.xpose.msra.mxu0 0.0
    %4535 = vmatprep.subr.mxu0 0.0
    %4536 = vmatpush1.xpose.msra.mxu0 0.0
    %4537 = vmatprep.subr.mxu0 0.0
    %4538 = vmatpush1.xpose.msra.mxu0 0.0
    %4539 = vmatprep.subr.mxu0 0.0
    %4540 = vmatpush1.xpose.msra.mxu0 0.0
    %4541 = vmatprep.subr.mxu0 0.0
    %4542 = vmatpush1.xpose.msra.mxu0 0.0
    %4543 = vmatprep.subr.mxu0 0.0
    %4544 = vmatpush1.xpose.msra.mxu0 0.0
    %4545 = vmatprep.mubr.f32.mxu0 0.0
    %4546 = vmatmul.mubr.f32.gmra.mrb[0].mxu0 %v4477
    %v4547 = vpop.f32.mrb[0].mxu0
    %v4548 = vadd.f32 0.0, %v4547
    %v4549 = vpop.f32.mrb[0].mxu0
    %4550 = vdwg.mxu0
    %v4551 = vmul.f32 %v4548, 0.35355338
    %v4552 = vsel %vm856, %v4551, -inf
    %4553 = vmax.xlane.f32.xlu0 %v4552
    %v4554 = vpop.xlane.xlu0 %4553
    %v4555 = vsub.f32 %v4551, %v4554
    %v4556 = vmul.f32 %v4555, 1.442695
    %v4557 = vpow.pop %v4556
    %v4558 = vsel %vm856, %v4557, 0.0
    %4559 = vadd.xlane.f32.xlu0 %v4558
    %v4560 = vpop.xlane.xlu0 %4559
    %v4561 = vrcp.pop %v4560
    %v4562 = vmul.f32 %v4557, %v4561
    %4563 = vrot.lane.b32.xlu0 %v4135, 112
    %v4564 = vpop.permute.xlu0 %4563
    %v4566 = vsel %vm868, %v4562, 0
    %v4568 = vsel %vm872, %v4564, 0
    %4570 = vmatprep.subr.mxu0 0.0
    %4571 = vmatpush1.msra.mxu0 %v4568
    %4572 = vmatprep.subr.mxu0 0.0
    %4573 = vmatpush1.msra.mxu0 0.0
    %4574 = vmatprep.subr.mxu0 0.0
    %4575 = vmatpush1.msra.mxu0 0.0
    %4576 = vmatprep.subr.mxu0 0.0
    %4577 = vmatpush1.msra.mxu0 0.0
    %4578 = vmatprep.subr.mxu0 0.0
    %4579 = vmatpush1.msra.mxu0 0.0
    %4580 = vmatprep.subr.mxu0 0.0
    %4581 = vmatpush1.msra.mxu0 0.0
    %4582 = vmatprep.subr.mxu0 0.0
    %4583 = vmatpush1.msra.mxu0 0.0
    %4584 = vmatprep.subr.mxu0 0.0
    %4585 = vmatpush1.msra.mxu0 0.0
    %4586 = vmatprep.subr.mxu0 0.0
    %4587 = vmatpush1.msra.mxu0 0.0
    %4588 = vmatprep.subr.mxu0 0.0
    %4589 = vmatpush1.msra.mxu0 0.0
    %4590 = vmatprep.subr.mxu0 0.0
    %4591 = vmatpush1.msra.mxu0 0.0
    %4592 = vmatprep.subr.mxu0 0.0
    %4593 = vmatpush1.msra.mxu0 0.0
    %4594 = vmatprep.subr.mxu0 0.0
    %4595 = vmatpush1.msra.mxu0 0.0
    %4596 = vmatprep.subr.mxu0 0.0
    %4597 = vmatpush1.msra.mxu0 0.0
    %4598 = vmatprep.subr.mxu0 0.0
    %4599 = vmatpush1.msra.mxu0 0.0
    %4600 = vmatprep.subr.mxu0 0.0
    %4601 = vmatpush1.msra.mxu0 0.0
    %4602 = vmatprep.subr.mxu0 0.0
    %4603 = vmatpush1.msra.mxu0 0.0
    %4604 = vmatprep.subr.mxu0 0.0
    %4605 = vmatpush1.msra.mxu0 0.0
    %4606 = vmatprep.subr.mxu0 0.0
    %4607 = vmatpush1.msra.mxu0 0.0
    %4608 = vmatprep.subr.mxu0 0.0
    %4609 = vmatpush1.msra.mxu0 0.0
    %4610 = vmatprep.subr.mxu0 0.0
    %4611 = vmatpush1.msra.mxu0 0.0
    %4612 = vmatprep.subr.mxu0 0.0
    %4613 = vmatpush1.msra.mxu0 0.0
    %4614 = vmatprep.subr.mxu0 0.0
    %4615 = vmatpush1.msra.mxu0 0.0
    %4616 = vmatprep.subr.mxu0 0.0
    %4617 = vmatpush1.msra.mxu0 0.0
    %4618 = vmatprep.subr.mxu0 0.0
    %4619 = vmatpush1.msra.mxu0 0.0
    %4620 = vmatprep.subr.mxu0 0.0
    %4621 = vmatpush1.msra.mxu0 0.0
    %4622 = vmatprep.subr.mxu0 0.0
    %4623 = vmatpush1.msra.mxu0 0.0
    %4624 = vmatprep.subr.mxu0 0.0
    %4625 = vmatpush1.msra.mxu0 0.0
    %4626 = vmatprep.subr.mxu0 0.0
    %4627 = vmatpush1.msra.mxu0 0.0
    %4628 = vmatprep.subr.mxu0 0.0
    %4629 = vmatpush1.msra.mxu0 0.0
    %4630 = vmatprep.subr.mxu0 0.0
    %4631 = vmatpush1.msra.mxu0 0.0
    %4632 = vmatprep.subr.mxu0 0.0
    %4633 = vmatpush1.msra.mxu0 0.0
    %4634 = vmatprep.mubr.f32.mxu0 0.0
    %4635 = vmatmul.mubr.f32.gmra.mrb[0].mxu0 %v4566
    %v4636 = vpop.f32.mrb[0].mxu0
    %v4637 = vadd.f32 0.0, %v4636
    %v4638 = vpop.f32.mrb[0].mxu0
    %4639 = vdwg.mxu0
    %4641 = vrot.lane.b32.xlu0 %v4637, 16
    %v4642 = vpop.permute.xlu0 %4641
    %4644 = vst.msk [vmem:[%s1637] sm:$0xf] %vm1292, %v4642
    %4645 = vrot.lane.b32.xlu0 %v4133, 104
    %v4646 = vpop.permute.xlu0 %4645
    %4647 = vrot.lane.b32.xlu0 %v4134, 104
    %v4648 = vpop.permute.xlu0 %4647
    %v4649 = vsel %vm778, %v4646, 0
    %v4651 = vsel %vm778, %v4648, 0
    %4653 = vmatprep.subr.mxu0 0.0
    %4654 = vmatpush1.xpose.msra.mxu0 %v4651
    %4655 = vmatprep.subr.mxu0 0.0
    %4656 = vmatpush1.xpose.msra.mxu0 0.0
    %4657 = vmatprep.subr.mxu0 0.0
    %4658 = vmatpush1.xpose.msra.mxu0 0.0
    %4659 = vmatprep.subr.mxu0 0.0
    %4660 = vmatpush1.xpose.msra.mxu0 0.0
    %4661 = vmatprep.subr.mxu0 0.0
    %4662 = vmatpush1.xpose.msra.mxu0 0.0
    %4663 = vmatprep.subr.mxu0 0.0
    %4664 = vmatpush1.xpose.msra.mxu0 0.0
    %4665 = vmatprep.subr.mxu0 0.0
    %4666 = vmatpush1.xpose.msra.mxu0 0.0
    %4667 = vmatprep.subr.mxu0 0.0
    %4668 = vmatpush1.xpose.msra.mxu0 0.0
    %4669 = vmatprep.subr.mxu0 0.0
    %4670 = vmatpush1.xpose.msra.mxu0 0.0
    %4671 = vmatprep.subr.mxu0 0.0
    %4672 = vmatpush1.xpose.msra.mxu0 0.0
    %4673 = vmatprep.subr.mxu0 0.0
    %4674 = vmatpush1.xpose.msra.mxu0 0.0
    %4675 = vmatprep.subr.mxu0 0.0
    %4676 = vmatpush1.xpose.msra.mxu0 0.0
    %4677 = vmatprep.subr.mxu0 0.0
    %4678 = vmatpush1.xpose.msra.mxu0 0.0
    %4679 = vmatprep.subr.mxu0 0.0
    %4680 = vmatpush1.xpose.msra.mxu0 0.0
    %4681 = vmatprep.subr.mxu0 0.0
    %4682 = vmatpush1.xpose.msra.mxu0 0.0
    %4683 = vmatprep.subr.mxu0 0.0
    %4684 = vmatpush1.xpose.msra.mxu0 0.0
    %4685 = vmatprep.subr.mxu0 0.0
    %4686 = vmatpush1.xpose.msra.mxu0 0.0
    %4687 = vmatprep.subr.mxu0 0.0
    %4688 = vmatpush1.xpose.msra.mxu0 0.0
    %4689 = vmatprep.subr.mxu0 0.0
    %4690 = vmatpush1.xpose.msra.mxu0 0.0
    %4691 = vmatprep.subr.mxu0 0.0
    %4692 = vmatpush1.xpose.msra.mxu0 0.0
    %4693 = vmatprep.subr.mxu0 0.0
    %4694 = vmatpush1.xpose.msra.mxu0 0.0
    %4695 = vmatprep.subr.mxu0 0.0
    %4696 = vmatpush1.xpose.msra.mxu0 0.0
    %4697 = vmatprep.subr.mxu0 0.0
    %4698 = vmatpush1.xpose.msra.mxu0 0.0
    %4699 = vmatprep.subr.mxu0 0.0
    %4700 = vmatpush1.xpose.msra.mxu0 0.0
    %4701 = vmatprep.subr.mxu0 0.0
    %4702 = vmatpush1.xpose.msra.mxu0 0.0
    %4703 = vmatprep.subr.mxu0 0.0
    %4704 = vmatpush1.xpose.msra.mxu0 0.0
    %4705 = vmatprep.subr.mxu0 0.0
    %4706 = vmatpush1.xpose.msra.mxu0 0.0
    %4707 = vmatprep.subr.mxu0 0.0
    %4708 = vmatpush1.xpose.msra.mxu0 0.0
    %4709 = vmatprep.subr.mxu0 0.0
    %4710 = vmatpush1.xpose.msra.mxu0 0.0
    %4711 = vmatprep.subr.mxu0 0.0
    %4712 = vmatpush1.xpose.msra.mxu0 0.0
    %4713 = vmatprep.subr.mxu0 0.0
    %4714 = vmatpush1.xpose.msra.mxu0 0.0
    %4715 = vmatprep.subr.mxu0 0.0
    %4716 = vmatpush1.xpose.msra.mxu0 0.0
    %4717 = vmatprep.mubr.f32.mxu0 0.0
    %4718 = vmatmul.mubr.f32.gmra.mrb[0].mxu0 %v4649
    %v4719 = vpop.f32.mrb[0].mxu0
    %v4720 = vadd.f32 0.0, %v4719
    %v4721 = vpop.f32.mrb[0].mxu0
    %4722 = vdwg.mxu0
    %v4723 = vmul.f32 %v4720, 0.35355338
    %v4724 = vsel %vm856, %v4723, -inf
    %4725 = vmax.xlane.f32.xlu0 %v4724
    %v4726 = vpop.xlane.xlu0 %4725
    %v4727 = vsub.f32 %v4723, %v4726
    %v4728 = vmul.f32 %v4727, 1.442695
    %v4729 = vpow.pop %v4728
    %v4730 = vsel %vm856, %v4729, 0.0
    %4731 = vadd.xlane.f32.xlu0 %v4730
    %v4732 = vpop.xlane.xlu0 %4731
    %v4733 = vrcp.pop %v4732
    %v4734 = vmul.f32 %v4729, %v4733
    %4735 = vrot.lane.b32.xlu0 %v4135, 104
    %v4736 = vpop.permute.xlu0 %4735
    %v4738 = vsel %vm868, %v4734, 0
    %v4740 = vsel %vm872, %v4736, 0
    %4742 = vmatprep.subr.mxu0 0.0
    %4743 = vmatpush1.msra.mxu0 %v4740
    %4744 = vmatprep.subr.mxu0 0.0
    %4745 = vmatpush1.msra.mxu0 0.0
    %4746 = vmatprep.subr.mxu0 0.0
    %4747 = vmatpush1.msra.mxu0 0.0
    %4748 = vmatprep.subr.mxu0 0.0
    %4749 = vmatpush1.msra.mxu0 0.0
    %4750 = vmatprep.subr.mxu0 0.0
    %4751 = vmatpush1.msra.mxu0 0.0
    %4752 = vmatprep.subr.mxu0 0.0
    %4753 = vmatpush1.msra.mxu0 0.0
    %4754 = vmatprep.subr.mxu0 0.0
    %4755 = vmatpush1.msra.mxu0 0.0
    %4756 = vmatprep.subr.mxu0 0.0
    %4757 = vmatpush1.msra.mxu0 0.0
    %4758 = vmatprep.subr.mxu0 0.0
    %4759 = vmatpush1.msra.mxu0 0.0
    %4760 = vmatprep.subr.mxu0 0.0
    %4761 = vmatpush1.msra.mxu0 0.0
    %4762 = vmatprep.subr.mxu0 0.0
    %4763 = vmatpush1.msra.mxu0 0.0
    %4764 = vmatprep.subr.mxu0 0.0
    %4765 = vmatpush1.msra.mxu0 0.0
    %4766 = vmatprep.subr.mxu0 0.0
    %4767 = vmatpush1.msra.mxu0 0.0
    %4768 = vmatprep.subr.mxu0 0.0
    %4769 = vmatpush1.msra.mxu0 0.0
    %4770 = vmatprep.subr.mxu0 0.0
    %4771 = vmatpush1.msra.mxu0 0.0
    %4772 = vmatprep.subr.mxu0 0.0
    %4773 = vmatpush1.msra.mxu0 0.0
    %4774 = vmatprep.subr.mxu0 0.0
    %4775 = vmatpush1.msra.mxu0 0.0
    %4776 = vmatprep.subr.mxu0 0.0
    %4777 = vmatpush1.msra.mxu0 0.0
    %4778 = vmatprep.subr.mxu0 0.0
    %4779 = vmatpush1.msra.mxu0 0.0
    %4780 = vmatprep.subr.mxu0 0.0
    %4781 = vmatpush1.msra.mxu0 0.0
    %4782 = vmatprep.subr.mxu0 0.0
    %4783 = vmatpush1.msra.mxu0 0.0
    %4784 = vmatprep.subr.mxu0 0.0
    %4785 = vmatpush1.msra.mxu0 0.0
    %4786 = vmatprep.subr.mxu0 0.0
    %4787 = vmatpush1.msra.mxu0 0.0
    %4788 = vmatprep.subr.mxu0 0.0
    %4789 = vmatpush1.msra.mxu0 0.0
    %4790 = vmatprep.subr.mxu0 0.0
    %4791 = vmatpush1.msra.mxu0 0.0
    %4792 = vmatprep.subr.mxu0 0.0
    %4793 = vmatpush1.msra.mxu0 0.0
    %4794 = vmatprep.subr.mxu0 0.0
    %4795 = vmatpush1.msra.mxu0 0.0
    %4796 = vmatprep.subr.mxu0 0.0
    %4797 = vmatpush1.msra.mxu0 0.0
    %4798 = vmatprep.subr.mxu0 0.0
    %4799 = vmatpush1.msra.mxu0 0.0
    %4800 = vmatprep.subr.mxu0 0.0
    %4801 = vmatpush1.msra.mxu0 0.0
    %4802 = vmatprep.subr.mxu0 0.0
    %4803 = vmatpush1.msra.mxu0 0.0
    %4804 = vmatprep.subr.mxu0 0.0
    %4805 = vmatpush1.msra.mxu0 0.0
    %4806 = vmatprep.mubr.f32.mxu0 0.0
    %4807 = vmatmul.mubr.f32.gmra.mrb[0].mxu0 %v4738
    %v4808 = vpop.f32.mrb[0].mxu0
    %v4809 = vadd.f32 0.0, %v4808
    %v4810 = vpop.f32.mrb[0].mxu0
    %4811 = vdwg.mxu0
    %4813 = vrot.lane.b32.xlu0 %v4809, 24
    %v4814 = vpop.permute.xlu0 %4813
    %4816 = vst.msk [vmem:[%s1637] sm:$0xf] %vm1465, %v4814
    %v4817 = vld [vmem:[#allocation5] sm:$0x1]
    %v4818 = vld [vmem:[#allocation5 + $0x4] sm:$0x1]
    %v4821 = vrot.slane %v4818, 7
    %v4822 = vsel %vm2160, %v4821, %v4817
    %4824 = vst.msk [vmem:[#allocation6] sm:$0x3] %vm2163, %v4822
    %v4825 = vld [vmem:[#allocation5 + $0x1] sm:$0x1]
    %v4826 = vld [vmem:[#allocation5 + $0x5] sm:$0x1]
    %v4829 = vrot.slane %v4826, 7
    %v4830 = vsel %vm2160, %v4829, %v4825
    %4831 = vrot.lane.b32.xlu0 %v4830, 32
    %v4832 = vpop.permute.xlu0 %4831
    %4834 = vst.msk [vmem:[#allocation6] sm:$0x3] %vm2174, %v4832
    %v4835 = vld [vmem:[#allocation5 + $0x2] sm:$0x1]
    %v4836 = vld [vmem:[#allocation5 + $0x6] sm:$0x1]
    %v4839 = vrot.slane %v4836, 7
    %v4840 = vsel %vm2160, %v4839, %v4835
    %4841 = vrot.lane.b32.xlu0 %v4840, 64
    %v4842 = vpop.permute.xlu0 %4841
    %4844 = vst.msk [vmem:[#allocation6] sm:$0x3] %vm2185, %v4842
    %v4845 = vld [vmem:[#allocation5 + $0x3] sm:$0x1]
    %v4846 = vld [vmem:[#allocation5 + $0x7] sm:$0x1]
    %v4849 = vrot.slane %v4846, 7
    %v4850 = vsel %vm2160, %v4849, %v4845
    %4851 = vrot.lane.b32.xlu0 %v4850, 96
    %v4852 = vpop.permute.xlu0 %4851
    %4854 = vst.msk [vmem:[#allocation6] sm:$0x3] %vm2196, %v4852
    %v4855 = vld [vmem:[#allocation6] sm:$0x3]
    %v4856 = vld [vmem:[%s9] sm:$0xff]
    %v4857 = vld [vmem:[%s9 + $0x8] sm:$0xff]
    %v4858 = vld [vmem:[%s9 + $0x10] sm:$0xff]
    %v4859 = vld [vmem:[%s9 + $0x18] sm:$0xff]
    %v4860 = vld [vmem:[%s9 + $0x20] sm:$0xff]
    %v4861 = vld [vmem:[%s9 + $0x28] sm:$0xff]
    %v4862 = vld [vmem:[%s9 + $0x30] sm:$0xff]
    %v4863 = vld [vmem:[%s9 + $0x38] sm:$0xff]
    %v4864 = vld [vmem:[%s9 + $0x40] sm:$0xff]
    %v4865 = vld [vmem:[%s9 + $0x48] sm:$0xff]
    %v4866 = vld [vmem:[%s9 + $0x50] sm:$0xff]
    %v4867 = vld [vmem:[%s9 + $0x58] sm:$0xff]
    %v4868 = vld [vmem:[%s9 + $0x60] sm:$0xff]
    %v4869 = vld [vmem:[%s9 + $0x68] sm:$0xff]
    %v4870 = vld [vmem:[%s9 + $0x70] sm:$0xff]
    %v4871 = vld [vmem:[%s9 + $0x78] sm:$0xff]
    %4872 = vmatprep.subr.mxu0 0.0
    %4873 = vmatpush1.msra.mxu0 %v4856
    %4874 = vmatprep.subr.mxu0 0.0
    %4875 = vmatpush1.msra.mxu0 %v4857
    %4876 = vmatprep.subr.mxu0 0.0
    %4877 = vmatpush1.msra.mxu0 %v4858
    %4878 = vmatprep.subr.mxu0 0.0
    %4879 = vmatpush1.msra.mxu0 %v4859
    %4880 = vmatprep.subr.mxu0 0.0
    %4881 = vmatpush1.msra.mxu0 %v4860
    %4882 = vmatprep.subr.mxu0 0.0
    %4883 = vmatpush1.msra.mxu0 %v4861
    %4884 = vmatprep.subr.mxu0 0.0
    %4885 = vmatpush1.msra.mxu0 %v4862
    %4886 = vmatprep.subr.mxu0 0.0
    %4887 = vmatpush1.msra.mxu0 %v4863
    %4888 = vmatprep.subr.mxu0 0.0
    %4889 = vmatpush1.msra.mxu0 %v4864
    %4890 = vmatprep.subr.mxu0 0.0
    %4891 = vmatpush1.msra.mxu0 %v4865
    %4892 = vmatprep.subr.mxu0 0.0
    %4893 = vmatpush1.msra.mxu0 %v4866
    %4894 = vmatprep.subr.mxu0 0.0
    %4895 = vmatpush1.msra.mxu0 %v4867
    %4896 = vmatprep.subr.mxu0 0.0
    %4897 = vmatpush1.msra.mxu0 %v4868
    %4898 = vmatprep.subr.mxu0 0.0
    %4899 = vmatpush1.msra.mxu0 %v4869
    %4900 = vmatprep.subr.mxu0 0.0
    %4901 = vmatpush1.msra.mxu0 %v4870
    %4902 = vmatprep.subr.mxu0 0.0
    %4903 = vmatpush1.msra.mxu0 %v4871
    %4904 = vmatprep.subr.mxu0 0.0
    %4905 = vmatpush1.msra.mxu0 0.0
    %4906 = vmatprep.subr.mxu0 0.0
    %4907 = vmatpush1.msra.mxu0 0.0
    %4908 = vmatprep.subr.mxu0 0.0
    %4909 = vmatpush1.msra.mxu0 0.0
    %4910 = vmatprep.subr.mxu0 0.0
    %4911 = vmatpush1.msra.mxu0 0.0
    %4912 = vmatprep.subr.mxu0 0.0
    %4913 = vmatpush1.msra.mxu0 0.0
    %4914 = vmatprep.subr.mxu0 0.0
    %4915 = vmatpush1.msra.mxu0 0.0
    %4916 = vmatprep.subr.mxu0 0.0
    %4917 = vmatpush1.msra.mxu0 0.0
    %4918 = vmatprep.subr.mxu0 0.0
    %4919 = vmatpush1.msra.mxu0 0.0
    %4920 = vmatprep.subr.mxu0 0.0
    %4921 = vmatpush1.msra.mxu0 0.0
    %4922 = vmatprep.subr.mxu0 0.0
    %4923 = vmatpush1.msra.mxu0 0.0
    %4924 = vmatprep.subr.mxu0 0.0
    %4925 = vmatpush1.msra.mxu0 0.0
    %4926 = vmatprep.subr.mxu0 0.0
    %4927 = vmatpush1.msra.mxu0 0.0
    %4928 = vmatprep.subr.mxu0 0.0
    %4929 = vmatpush1.msra.mxu0 0.0
    %4930 = vmatprep.subr.mxu0 0.0
    %4931 = vmatpush1.msra.mxu0 0.0
    %4932 = vmatprep.subr.mxu0 0.0
    %4933 = vmatpush1.msra.mxu0 0.0
    %4934 = vmatprep.subr.mxu0 0.0
    %4935 = vmatpush1.msra.mxu0 0.0
    %4936 = vmatprep.mubr.f32.mxu0 0.0
    %4937 = vmatmul.mubr.f32.gmra.mrb[0].mxu0 %v4855
    %v4938 = vpop.f32.mrb[0].mxu0
    %v4939 = vadd.f32 0.0, %v4938
    %v4940 = vpop.f32.mrb[0].mxu0
    %4941 = vdwg.mxu0
    %v4942 = vadd.f32 %v3011, %v4939
    %s4943 = scalar_lea.vmem %s10, 128
    %v4944 = vld [vmem:[%s4943] sm:$0xff]
    %v4945 = vld [vmem:[%s4943 + $0x8] sm:$0xff]
    %v4946 = vld [vmem:[%s4943 + $0x10] sm:$0xff]
    %v4947 = vld [vmem:[%s4943 + $0x18] sm:$0xff]
    %v4948 = vld [vmem:[%s4943 + $0x20] sm:$0xff]
    %v4949 = vld [vmem:[%s4943 + $0x28] sm:$0xff]
    %v4950 = vld [vmem:[%s4943 + $0x30] sm:$0xff]
    %v4951 = vld [vmem:[%s4943 + $0x38] sm:$0xff]
    %v4952 = vld [vmem:[%s4943 + $0x40] sm:$0xff]
    %v4953 = vld [vmem:[%s4943 + $0x48] sm:$0xff]
    %v4954 = vld [vmem:[%s4943 + $0x50] sm:$0xff]
    %v4955 = vld [vmem:[%s4943 + $0x58] sm:$0xff]
    %v4956 = vld [vmem:[%s4943 + $0x60] sm:$0xff]
    %v4957 = vld [vmem:[%s4943 + $0x68] sm:$0xff]
    %v4958 = vld [vmem:[%s4943 + $0x70] sm:$0xff]
    %v4959 = vld [vmem:[%s4943 + $0x78] sm:$0xff]
    %s4960 = scalar_lea.vmem %s11, 1
    %v4961 = vld [vmem:[%s4960] sm:$0x1]
    %v4963 = vlaneseq
    %v4964 = vshrl.u32 %v4963, 7
    %v4965 = vsub.s32 0, %v4964
    %v4966 = vrot.slane %v4961, %v4965
    %4968 = vmatprep.subr.mxu0 0.0
    %4969 = vmatpush1.msra.mxu0 %v4944
    %4970 = vmatprep.subr.mxu0 0.0
    %4971 = vmatpush1.msra.mxu0 %v4945
    %4972 = vmatprep.subr.mxu0 0.0
    %4973 = vmatpush1.msra.mxu0 %v4946
    %4974 = vmatprep.subr.mxu0 0.0
    %4975 = vmatpush1.msra.mxu0 %v4947
    %4976 = vmatprep.subr.mxu0 0.0
    %4977 = vmatpush1.msra.mxu0 %v4948
    %4978 = vmatprep.subr.mxu0 0.0
    %4979 = vmatpush1.msra.mxu0 %v4949
    %4980 = vmatprep.subr.mxu0 0.0
    %4981 = vmatpush1.msra.mxu0 %v4950
    %4982 = vmatprep.subr.mxu0 0.0
    %4983 = vmatpush1.msra.mxu0 %v4951
    %4984 = vmatprep.subr.mxu0 0.0
    %4985 = vmatpush1.msra.mxu0 %v4952
    %4986 = vmatprep.subr.mxu0 0.0
    %4987 = vmatpush1.msra.mxu0 %v4953
    %4988 = vmatprep.subr.mxu0 0.0
    %4989 = vmatpush1.msra.mxu0 %v4954
    %4990 = vmatprep.subr.mxu0 0.0
    %4991 = vmatpush1.msra.mxu0 %v4955
    %4992 = vmatprep.subr.mxu0 0.0
    %4993 = vmatpush1.msra.mxu0 %v4956
    %4994 = vmatprep.subr.mxu0 0.0
    %4995 = vmatpush1.msra.mxu0 %v4957
    %4996 = vmatprep.subr.mxu0 0.0
    %4997 = vmatpush1.msra.mxu0 %v4958
    %4998 = vmatprep.subr.mxu0 0.0
    %4999 = vmatpush1.msra.mxu0 %v4959
    %5000 = vmatprep.subr.mxu0 0.0
    %5001 = vmatpush1.msra.mxu0 0.0
    %5002 = vmatprep.subr.mxu0 0.0
    %5003 = vmatpush1.msra.mxu0 0.0
    %5004 = vmatprep.subr.mxu0 0.0
    %5005 = vmatpush1.msra.mxu0 0.0
    %5006 = vmatprep.subr.mxu0 0.0
    %5007 = vmatpush1.msra.mxu0 0.0
    %5008 = vmatprep.subr.mxu0 0.0
    %5009 = vmatpush1.msra.mxu0 0.0
    %5010 = vmatprep.subr.mxu0 0.0
    %5011 = vmatpush1.msra.mxu0 0.0
    %5012 = vmatprep.subr.mxu0 0.0
    %5013 = vmatpush1.msra.mxu0 0.0
    %5014 = vmatprep.subr.mxu0 0.0
    %5015 = vmatpush1.msra.mxu0 0.0
    %5016 = vmatprep.subr.mxu0 0.0
    %5017 = vmatpush1.msra.mxu0 0.0
    %5018 = vmatprep.subr.mxu0 0.0
    %5019 = vmatpush1.msra.mxu0 0.0
    %5020 = vmatprep.subr.mxu0 0.0
    %5021 = vmatpush1.msra.mxu0 0.0
    %5022 = vmatprep.subr.mxu0 0.0
    %5023 = vmatpush1.msra.mxu0 0.0
    %5024 = vmatprep.subr.mxu0 0.0
    %5025 = vmatpush1.msra.mxu0 0.0
    %5026 = vmatprep.subr.mxu0 0.0
    %5027 = vmatpush1.msra.mxu0 0.0
    %5028 = vmatprep.subr.mxu0 0.0
    %5029 = vmatpush1.msra.mxu0 0.0
    %5030 = vmatprep.subr.mxu0 0.0
    %5031 = vmatpush1.msra.mxu0 0.0
    %5032 = vmatprep.mubr.f32.mxu0 0.0
    %5033 = vmatmul.mubr.f32.gmra.mrb[0].mxu0 %v4942
    %v5034 = vpop.f32.mrb[0].mxu0
    %v5035 = vadd.f32 %v4966, %v5034
    %v5036 = vpop.f32.mrb[0].mxu0
    %5037 = vdwg.mxu0
    %v5038 = vmax.f32 %v5035, 0.0
    %s5039 = scalar_lea.vmem %s12, 128
    %v5040 = vld [vmem:[%s5039] sm:$0xff]
    %v5041 = vld [vmem:[%s5039 + $0x8] sm:$0xff]
    %v5042 = vld [vmem:[%s5039 + $0x10] sm:$0xff]
    %v5043 = vld [vmem:[%s5039 + $0x18] sm:$0xff]
    %v5044 = vld [vmem:[%s5039 + $0x20] sm:$0xff]
    %v5045 = vld [vmem:[%s5039 + $0x28] sm:$0xff]
    %v5046 = vld [vmem:[%s5039 + $0x30] sm:$0xff]
    %v5047 = vld [vmem:[%s5039 + $0x38] sm:$0xff]
    %v5048 = vld [vmem:[%s5039 + $0x40] sm:$0xff]
    %v5049 = vld [vmem:[%s5039 + $0x48] sm:$0xff]
    %v5050 = vld [vmem:[%s5039 + $0x50] sm:$0xff]
    %v5051 = vld [vmem:[%s5039 + $0x58] sm:$0xff]
    %v5052 = vld [vmem:[%s5039 + $0x60] sm:$0xff]
    %v5053 = vld [vmem:[%s5039 + $0x68] sm:$0xff]
    %v5054 = vld [vmem:[%s5039 + $0x70] sm:$0xff]
    %v5055 = vld [vmem:[%s5039 + $0x78] sm:$0xff]
    %s5056 = scalar_lea.vmem %s13, 1
    %v5057 = vld [vmem:[%s5056] sm:$0x1]
    %v5059 = vlaneseq
    %v5060 = vshrl.u32 %v5059, 7
    %v5061 = vsub.s32 0, %v5060
    %v5062 = vrot.slane %v5057, %v5061
    %5064 = vmatprep.subr.mxu0 0.0
    %5065 = vmatpush1.msra.mxu0 %v5040
    %5066 = vmatprep.subr.mxu0 0.0
    %5067 = vmatpush1.msra.mxu0 %v5041
    %5068 = vmatprep.subr.mxu0 0.0
    %5069 = vmatpush1.msra.mxu0 %v5042
    %5070 = vmatprep.subr.mxu0 0.0
    %5071 = vmatpush1.msra.mxu0 %v5043
    %5072 = vmatprep.subr.mxu0 0.0
    %5073 = vmatpush1.msra.mxu0 %v5044
    %5074 = vmatprep.subr.mxu0 0.0
    %5075 = vmatpush1.msra.mxu0 %v5045
    %5076 = vmatprep.subr.mxu0 0.0
    %5077 = vmatpush1.msra.mxu0 %v5046
    %5078 = vmatprep.subr.mxu0 0.0
    %5079 = vmatpush1.msra.mxu0 %v5047
    %5080 = vmatprep.subr.mxu0 0.0
    %5081 = vmatpush1.msra.mxu0 %v5048
    %5082 = vmatprep.subr.mxu0 0.0
    %5083 = vmatpush1.msra.mxu0 %v5049
    %5084 = vmatprep.subr.mxu0 0.0
    %5085 = vmatpush1.msra.mxu0 %v5050
    %5086 = vmatprep.subr.mxu0 0.0
    %5087 = vmatpush1.msra.mxu0 %v5051
    %5088 = vmatprep.subr.mxu0 0.0
    %5089 = vmatpush1.msra.mxu0 %v5052
    %5090 = vmatprep.subr.mxu0 0.0
    %5091 = vmatpush1.msra.mxu0 %v5053
    %5092 = vmatprep.subr.mxu0 0.0
    %5093 = vmatpush1.msra.mxu0 %v5054
    %5094 = vmatprep.subr.mxu0 0.0
    %5095 = vmatpush1.msra.mxu0 %v5055
    %5096 = vmatprep.subr.mxu0 0.0
    %5097 = vmatpush1.msra.mxu0 0.0
    %5098 = vmatprep.subr.mxu0 0.0
    %5099 = vmatpush1.msra.mxu0 0.0
    %5100 = vmatprep.subr.mxu0 0.0
    %5101 = vmatpush1.msra.mxu0 0.0
    %5102 = vmatprep.subr.mxu0 0.0
    %5103 = vmatpush1.msra.mxu0 0.0
    %5104 = vmatprep.subr.mxu0 0.0
    %5105 = vmatpush1.msra.mxu0 0.0
    %5106 = vmatprep.subr.mxu0 0.0
    %5107 = vmatpush1.msra.mxu0 0.0
    %5108 = vmatprep.subr.mxu0 0.0
    %5109 = vmatpush1.msra.mxu0 0.0
    %5110 = vmatprep.subr.mxu0 0.0
    %5111 = vmatpush1.msra.mxu0 0.0
    %5112 = vmatprep.subr.mxu0 0.0
    %5113 = vmatpush1.msra.mxu0 0.0
    %5114 = vmatprep.subr.mxu0 0.0
    %5115 = vmatpush1.msra.mxu0 0.0
    %5116 = vmatprep.subr.mxu0 0.0
    %5117 = vmatpush1.msra.mxu0 0.0
    %5118 = vmatprep.subr.mxu0 0.0
    %5119 = vmatpush1.msra.mxu0 0.0
    %5120 = vmatprep.subr.mxu0 0.0
    %5121 = vmatpush1.msra.mxu0 0.0
    %5122 = vmatprep.subr.mxu0 0.0
    %5123 = vmatpush1.msra.mxu0 0.0
    %5124 = vmatprep.subr.mxu0 0.0
    %5125 = vmatpush1.msra.mxu0 0.0
    %5126 = vmatprep.subr.mxu0 0.0
    %5127 = vmatpush1.msra.mxu0 0.0
    %5128 = vmatprep.mubr.f32.mxu0 0.0
    %5129 = vmatmul.mubr.f32.gmra.mrb[0].mxu0 %v5038
    %v5130 = vpop.f32.mrb[0].mxu0
    %v5131 = vadd.f32 %v5062, %v5130
    %v5132 = vpop.f32.mrb[0].mxu0
    %5133 = vdwg.mxu0
    %s5134 = scalar_lea.vmem %s14, 128
    %v5135 = vld [vmem:[%s5134] sm:$0xff]
    %v5136 = vld [vmem:[%s5134 + $0x8] sm:$0xff]
    %v5137 = vld [vmem:[%s5134 + $0x10] sm:$0xff]
    %v5138 = vld [vmem:[%s5134 + $0x18] sm:$0xff]
    %v5139 = vld [vmem:[%s5134 + $0x20] sm:$0xff]
    %v5140 = vld [vmem:[%s5134 + $0x28] sm:$0xff]
    %v5141 = vld [vmem:[%s5134 + $0x30] sm:$0xff]
    %v5142 = vld [vmem:[%s5134 + $0x38] sm:$0xff]
    %v5143 = vld [vmem:[%s5134 + $0x40] sm:$0xff]
    %v5144 = vld [vmem:[%s5134 + $0x48] sm:$0xff]
    %v5145 = vld [vmem:[%s5134 + $0x50] sm:$0xff]
    %v5146 = vld [vmem:[%s5134 + $0x58] sm:$0xff]
    %v5147 = vld [vmem:[%s5134 + $0x60] sm:$0xff]
    %v5148 = vld [vmem:[%s5134 + $0x68] sm:$0xff]
    %v5149 = vld [vmem:[%s5134 + $0x70] sm:$0xff]
    %v5150 = vld [vmem:[%s5134 + $0x78] sm:$0xff]
    %s5151 = scalar_lea.vmem %s15, 1
    %v5152 = vld [vmem:[%s5151] sm:$0x1]
    %v5154 = vlaneseq
    %v5155 = vshrl.u32 %v5154, 7
    %v5156 = vsub.s32 0, %v5155
    %v5157 = vrot.slane %v5152, %v5156
    %5159 = vmatprep.subr.mxu0 0.0
    %5160 = vmatpush1.msra.mxu0 %v5135
    %5161 = vmatprep.subr.mxu0 0.0
    %5162 = vmatpush1.msra.mxu0 %v5136
    %5163 = vmatprep.subr.mxu0 0.0
    %5164 = vmatpush1.msra.mxu0 %v5137
    %5165 = vmatprep.subr.mxu0 0.0
    %5166 = vmatpush1.msra.mxu0 %v5138
    %5167 = vmatprep.subr.mxu0 0.0
    %5168 = vmatpush1.msra.mxu0 %v5139
    %5169 = vmatprep.subr.mxu0 0.0
    %5170 = vmatpush1.msra.mxu0 %v5140
    %5171 = vmatprep.subr.mxu0 0.0
    %5172 = vmatpush1.msra.mxu0 %v5141
    %5173 = vmatprep.subr.mxu0 0.0
    %5174 = vmatpush1.msra.mxu0 %v5142
    %5175 = vmatprep.subr.mxu0 0.0
    %5176 = vmatpush1.msra.mxu0 %v5143
    %5177 = vmatprep.subr.mxu0 0.0
    %5178 = vmatpush1.msra.mxu0 %v5144
    %5179 = vmatprep.subr.mxu0 0.0
    %5180 = vmatpush1.msra.mxu0 %v5145
    %5181 = vmatprep.subr.mxu0 0.0
    %5182 = vmatpush1.msra.mxu0 %v5146
    %5183 = vmatprep.subr.mxu0 0.0
    %5184 = vmatpush1.msra.mxu0 %v5147
    %5185 = vmatprep.subr.mxu0 0.0
    %5186 = vmatpush1.msra.mxu0 %v5148
    %5187 = vmatprep.subr.mxu0 0.0
    %5188 = vmatpush1.msra.mxu0 %v5149
    %5189 = vmatprep.subr.mxu0 0.0
    %5190 = vmatpush1.msra.mxu0 %v5150
    %5191 = vmatprep.subr.mxu0 0.0
    %5192 = vmatpush1.msra.mxu0 0.0
    %5193 = vmatprep.subr.mxu0 0.0
    %5194 = vmatpush1.msra.mxu0 0.0
    %5195 = vmatprep.subr.mxu0 0.0
    %5196 = vmatpush1.msra.mxu0 0.0
    %5197 = vmatprep.subr.mxu0 0.0
    %5198 = vmatpush1.msra.mxu0 0.0
    %5199 = vmatprep.subr.mxu0 0.0
    %5200 = vmatpush1.msra.mxu0 0.0
    %5201 = vmatprep.subr.mxu0 0.0
    %5202 = vmatpush1.msra.mxu0 0.0
    %5203 = vmatprep.subr.mxu0 0.0
    %5204 = vmatpush1.msra.mxu0 0.0
    %5205 = vmatprep.subr.mxu0 0.0
    %5206 = vmatpush1.msra.mxu0 0.0
    %5207 = vmatprep.subr.mxu0 0.0
    %5208 = vmatpush1.msra.mxu0 0.0
    %5209 = vmatprep.subr.mxu0 0.0
    %5210 = vmatpush1.msra.mxu0 0.0
    %5211 = vmatprep.subr.mxu0 0.0
    %5212 = vmatpush1.msra.mxu0 0.0
    %5213 = vmatprep.subr.mxu0 0.0
    %5214 = vmatpush1.msra.mxu0 0.0
    %5215 = vmatprep.subr.mxu0 0.0
    %5216 = vmatpush1.msra.mxu0 0.0
    %5217 = vmatprep.subr.mxu0 0.0
    %5218 = vmatpush1.msra.mxu0 0.0
    %5219 = vmatprep.subr.mxu0 0.0
    %5220 = vmatpush1.msra.mxu0 0.0
    %5221 = vmatprep.subr.mxu0 0.0
    %5222 = vmatpush1.msra.mxu0 0.0
    %5223 = vmatprep.mubr.f32.mxu0 0.0
    %5224 = vmatmul.mubr.f32.gmra.mrb[0].mxu0 %v4942
    %v5225 = vpop.f32.mrb[0].mxu0
    %v5226 = vadd.f32 %v5157, %v5225
    %v5227 = vpop.f32.mrb[0].mxu0
    %5228 = vdwg.mxu0
    %v5229 = vmax.f32 %v5226, 0.0
    %s5230 = scalar_lea.vmem %s16, 128
    %v5231 = vld [vmem:[%s5230] sm:$0xff]
    %v5232 = vld [vmem:[%s5230 + $0x8] sm:$0xff]
    %v5233 = vld [vmem:[%s5230 + $0x10] sm:$0xff]
    %v5234 = vld [vmem:[%s5230 + $0x18] sm:$0xff]
    %v5235 = vld [vmem:[%s5230 + $0x20] sm:$0xff]
    %v5236 = vld [vmem:[%s5230 + $0x28] sm:$0xff]
    %v5237 = vld [vmem:[%s5230 + $0x30] sm:$0xff]
    %v5238 = vld [vmem:[%s5230 + $0x38] sm:$0xff]
    %v5239 = vld [vmem:[%s5230 + $0x40] sm:$0xff]
    %v5240 = vld [vmem:[%s5230 + $0x48] sm:$0xff]
    %v5241 = vld [vmem:[%s5230 + $0x50] sm:$0xff]
    %v5242 = vld [vmem:[%s5230 + $0x58] sm:$0xff]
    %v5243 = vld [vmem:[%s5230 + $0x60] sm:$0xff]
    %v5244 = vld [vmem:[%s5230 + $0x68] sm:$0xff]
    %v5245 = vld [vmem:[%s5230 + $0x70] sm:$0xff]
    %v5246 = vld [vmem:[%s5230 + $0x78] sm:$0xff]
    %s5247 = scalar_lea.vmem %s17, 1
    %v5248 = vld [vmem:[%s5247] sm:$0x1]
    %v5250 = vlaneseq
    %v5251 = vshrl.u32 %v5250, 7
    %v5252 = vsub.s32 0, %v5251
    %v5253 = vrot.slane %v5248, %v5252
    %5255 = vmatprep.subr.mxu0 0.0
    %5256 = vmatpush1.msra.mxu0 %v5231
    %5257 = vmatprep.subr.mxu0 0.0
    %5258 = vmatpush1.msra.mxu0 %v5232
    %5259 = vmatprep.subr.mxu0 0.0
    %5260 = vmatpush1.msra.mxu0 %v5233
    %5261 = vmatprep.subr.mxu0 0.0
    %5262 = vmatpush1.msra.mxu0 %v5234
    %5263 = vmatprep.subr.mxu0 0.0
    %5264 = vmatpush1.msra.mxu0 %v5235
    %5265 = vmatprep.subr.mxu0 0.0
    %5266 = vmatpush1.msra.mxu0 %v5236
    %5267 = vmatprep.subr.mxu0 0.0
    %5268 = vmatpush1.msra.mxu0 %v5237
    %5269 = vmatprep.subr.mxu0 0.0
    %5270 = vmatpush1.msra.mxu0 %v5238
    %5271 = vmatprep.subr.mxu0 0.0
    %5272 = vmatpush1.msra.mxu0 %v5239
    %5273 = vmatprep.subr.mxu0 0.0
    %5274 = vmatpush1.msra.mxu0 %v5240
    %5275 = vmatprep.subr.mxu0 0.0
    %5276 = vmatpush1.msra.mxu0 %v5241
    %5277 = vmatprep.subr.mxu0 0.0
    %5278 = vmatpush1.msra.mxu0 %v5242
    %5279 = vmatprep.subr.mxu0 0.0
    %5280 = vmatpush1.msra.mxu0 %v5243
    %5281 = vmatprep.subr.mxu0 0.0
    %5282 = vmatpush1.msra.mxu0 %v5244
    %5283 = vmatprep.subr.mxu0 0.0
    %5284 = vmatpush1.msra.mxu0 %v5245
    %5285 = vmatprep.subr.mxu0 0.0
    %5286 = vmatpush1.msra.mxu0 %v5246
    %5287 = vmatprep.subr.mxu0 0.0
    %5288 = vmatpush1.msra.mxu0 0.0
    %5289 = vmatprep.subr.mxu0 0.0
    %5290 = vmatpush1.msra.mxu0 0.0
    %5291 = vmatprep.subr.mxu0 0.0
    %5292 = vmatpush1.msra.mxu0 0.0
    %5293 = vmatprep.subr.mxu0 0.0
    %5294 = vmatpush1.msra.mxu0 0.0
    %5295 = vmatprep.subr.mxu0 0.0
    %5296 = vmatpush1.msra.mxu0 0.0
    %5297 = vmatprep.subr.mxu0 0.0
    %5298 = vmatpush1.msra.mxu0 0.0
    %5299 = vmatprep.subr.mxu0 0.0
    %5300 = vmatpush1.msra.mxu0 0.0
    %5301 = vmatprep.subr.mxu0 0.0
    %5302 = vmatpush1.msra.mxu0 0.0
    %5303 = vmatprep.subr.mxu0 0.0
    %5304 = vmatpush1.msra.mxu0 0.0
    %5305 = vmatprep.subr.mxu0 0.0
    %5306 = vmatpush1.msra.mxu0 0.0
    %5307 = vmatprep.subr.mxu0 0.0
    %5308 = vmatpush1.msra.mxu0 0.0
    %5309 = vmatprep.subr.mxu0 0.0
    %5310 = vmatpush1.msra.mxu0 0.0
    %5311 = vmatprep.subr.mxu0 0.0
    %5312 = vmatpush1.msra.mxu0 0.0
    %5313 = vmatprep.subr.mxu0 0.0
    %5314 = vmatpush1.msra.mxu0 0.0
    %5315 = vmatprep.subr.mxu0 0.0
    %5316 = vmatpush1.msra.mxu0 0.0
    %5317 = vmatprep.subr.mxu0 0.0
    %5318 = vmatpush1.msra.mxu0 0.0
    %5319 = vmatprep.mubr.f32.mxu0 0.0
    %5320 = vmatmul.mubr.f32.gmra.mrb[0].mxu0 %v5229
    %v5321 = vpop.f32.mrb[0].mxu0
    %v5322 = vadd.f32 %v5253, %v5321
    %v5323 = vpop.f32.mrb[0].mxu0
    %5324 = vdwg.mxu0
    %s5325 = scalar_lea.vmem %s18, 2
    %v5326 = vld [vmem:[%s5325] sm:$0x3]
    %v5327 = vmul.f32 %v5322, 0.5
    %v5328 = vmul.f32 %v5327, 1.442695
    %v5329 = vpow.pop %v5328
    %v5330 = vmul.f32 %v5326, %v5329
    %v5331 = vadd.f32 %v5131, %v5330
    %v5332 = vmul.f32 %v5322, -0.5
    %v5333 = vmul.f32 %v5326, 0.5
    %v5334 = vmul.f32 %v5333, %v5326
    %v5335 = vsub.f32 %v5332, %v5334
    %v5336 = vadd.f32 %v2670, %v5335
    %v5337 = vsub.f32 0.0, %v5331
    %v5338 = vmul.f32 %v5337, 1.442695
    %v5339 = vpow.pop %v5338
    %v5340 = vadd.f32 %v5339, 1.0
    %v5341 = vrcp.pop %v5340
    %v5342 = vmul.f32 1.0, %v5341
    %s5343 = scalar_lea.vmem %s19, 2
    %vm5344 = vcmask 156672
    %5345 = vst.msk [vmem:[%s5343] sm:$0x3] %vm5344, %v5342
    %s5346 = scalar_lea.vmem %s2, 256
    %v5347 = vld [vmem:[%s5346] sm:$0xff]
    %v5348 = vld [vmem:[%s5346 + $0x8] sm:$0xff]
    %v5349 = vld [vmem:[%s5346 + $0x10] sm:$0xff]
    %v5350 = vld [vmem:[%s5346 + $0x18] sm:$0xff]
    %v5351 = vld [vmem:[%s5346 + $0x20] sm:$0xff]
    %v5352 = vld [vmem:[%s5346 + $0x28] sm:$0xff]
    %v5353 = vld [vmem:[%s5346 + $0x30] sm:$0xff]
    %v5354 = vld [vmem:[%s5346 + $0x38] sm:$0xff]
    %v5355 = vld [vmem:[%s5346 + $0x40] sm:$0xff]
    %v5356 = vld [vmem:[%s5346 + $0x48] sm:$0xff]
    %v5357 = vld [vmem:[%s5346 + $0x50] sm:$0xff]
    %v5358 = vld [vmem:[%s5346 + $0x58] sm:$0xff]
    %v5359 = vld [vmem:[%s5346 + $0x60] sm:$0xff]
    %v5360 = vld [vmem:[%s5346 + $0x68] sm:$0xff]
    %v5361 = vld [vmem:[%s5346 + $0x70] sm:$0xff]
    %v5362 = vld [vmem:[%s5346 + $0x78] sm:$0xff]
    %s5363 = scalar_lea.vmem %s3, 2
    %v5364 = vld [vmem:[%s5363] sm:$0x1]
    %v5366 = vlaneseq
    %v5367 = vshrl.u32 %v5366, 7
    %v5368 = vsub.s32 0, %v5367
    %v5369 = vrot.slane %v5364, %v5368
    %5371 = vmatprep.subr.mxu0 0.0
    %5372 = vmatpush1.msra.mxu0 %v5347
    %5373 = vmatprep.subr.mxu0 0.0
    %5374 = vmatpush1.msra.mxu0 %v5348
    %5375 = vmatprep.subr.mxu0 0.0
    %5376 = vmatpush1.msra.mxu0 %v5349
    %5377 = vmatprep.subr.mxu0 0.0
    %5378 = vmatpush1.msra.mxu0 %v5350
    %5379 = vmatprep.subr.mxu0 0.0
    %5380 = vmatpush1.msra.mxu0 %v5351
    %5381 = vmatprep.subr.mxu0 0.0
    %5382 = vmatpush1.msra.mxu0 %v5352
    %5383 = vmatprep.subr.mxu0 0.0
    %5384 = vmatpush1.msra.mxu0 %v5353
    %5385 = vmatprep.subr.mxu0 0.0
    %5386 = vmatpush1.msra.mxu0 %v5354
    %5387 = vmatprep.subr.mxu0 0.0
    %5388 = vmatpush1.msra.mxu0 %v5355
    %5389 = vmatprep.subr.mxu0 0.0
    %5390 = vmatpush1.msra.mxu0 %v5356
    %5391 = vmatprep.subr.mxu0 0.0
    %5392 = vmatpush1.msra.mxu0 %v5357
    %5393 = vmatprep.subr.mxu0 0.0
    %5394 = vmatpush1.msra.mxu0 %v5358
    %5395 = vmatprep.subr.mxu0 0.0
    %5396 = vmatpush1.msra.mxu0 %v5359
    %5397 = vmatprep.subr.mxu0 0.0
    %5398 = vmatpush1.msra.mxu0 %v5360
    %5399 = vmatprep.subr.mxu0 0.0
    %5400 = vmatpush1.msra.mxu0 %v5361
    %5401 = vmatprep.subr.mxu0 0.0
    %5402 = vmatpush1.msra.mxu0 %v5362
    %5403 = vmatprep.subr.mxu0 0.0
    %5404 = vmatpush1.msra.mxu0 0.0
    %5405 = vmatprep.subr.mxu0 0.0
    %5406 = vmatpush1.msra.mxu0 0.0
    %5407 = vmatprep.subr.mxu0 0.0
    %5408 = vmatpush1.msra.mxu0 0.0
    %5409 = vmatprep.subr.mxu0 0.0
    %5410 = vmatpush1.msra.mxu0 0.0
    %5411 = vmatprep.subr.mxu0 0.0
    %5412 = vmatpush1.msra.mxu0 0.0
    %5413 = vmatprep.subr.mxu0 0.0
    %5414 = vmatpush1.msra.mxu0 0.0
    %5415 = vmatprep.subr.mxu0 0.0
    %5416 = vmatpush1.msra.mxu0 0.0
    %5417 = vmatprep.subr.mxu0 0.0
    %5418 = vmatpush1.msra.mxu0 0.0
    %5419 = vmatprep.subr.mxu0 0.0
    %5420 = vmatpush1.msra.mxu0 0.0
    %5421 = vmatprep.subr.mxu0 0.0
    %5422 = vmatpush1.msra.mxu0 0.0
    %5423 = vmatprep.subr.mxu0 0.0
    %5424 = vmatpush1.msra.mxu0 0.0
    %5425 = vmatprep.subr.mxu0 0.0
    %5426 = vmatpush1.msra.mxu0 0.0
    %5427 = vmatprep.subr.mxu0 0.0
    %5428 = vmatpush1.msra.mxu0 0.0
    %5429 = vmatprep.subr.mxu0 0.0
    %5430 = vmatpush1.msra.mxu0 0.0
    %5431 = vmatprep.subr.mxu0 0.0
    %5432 = vmatpush1.msra.mxu0 0.0
    %5433 = vmatprep.subr.mxu0 0.0
    %5434 = vmatpush1.msra.mxu0 0.0
    %5435 = vmatprep.mubr.f32.mxu0 0.0
    %5436 = vmatmul.mubr.f32.gmra.mrb[0].mxu0 %v65
    %v5437 = vpop.f32.mrb[0].mxu0
    %v5438 = vadd.f32 %v5369, %v5437
    %v5439 = vpop.f32.mrb[0].mxu0
    %5440 = vdwg.mxu0
    %v5441 = vmax.f32 %v5438, 0.0
    %s5442 = scalar_lea.vmem %s4, 256
    %v5443 = vld [vmem:[%s5442] sm:$0xff]
    %v5444 = vld [vmem:[%s5442 + $0x8] sm:$0xff]
    %v5445 = vld [vmem:[%s5442 + $0x10] sm:$0xff]
    %v5446 = vld [vmem:[%s5442 + $0x18] sm:$0xff]
    %v5447 = vld [vmem:[%s5442 + $0x20] sm:$0xff]
    %v5448 = vld [vmem:[%s5442 + $0x28] sm:$0xff]
    %v5449 = vld [vmem:[%s5442 + $0x30] sm:$0xff]
    %v5450 = vld [vmem:[%s5442 + $0x38] sm:$0xff]
    %v5451 = vld [vmem:[%s5442 + $0x40] sm:$0xff]
    %v5452 = vld [vmem:[%s5442 + $0x48] sm:$0xff]
    %v5453 = vld [vmem:[%s5442 + $0x50] sm:$0xff]
    %v5454 = vld [vmem:[%s5442 + $0x58] sm:$0xff]
    %v5455 = vld [vmem:[%s5442 + $0x60] sm:$0xff]
    %v5456 = vld [vmem:[%s5442 + $0x68] sm:$0xff]
    %v5457 = vld [vmem:[%s5442 + $0x70] sm:$0xff]
    %v5458 = vld [vmem:[%s5442 + $0x78] sm:$0xff]
    %s5459 = scalar_lea.vmem %s5, 2
    %v5460 = vld [vmem:[%s5459] sm:$0x1]
    %v5462 = vlaneseq
    %v5463 = vshrl.u32 %v5462, 7
    %v5464 = vsub.s32 0, %v5463
    %v5465 = vrot.slane %v5460, %v5464
    %5467 = vmatprep.subr.mxu0 0.0
    %5468 = vmatpush1.msra.mxu0 %v5443
    %5469 = vmatprep.subr.mxu0 0.0
    %5470 = vmatpush1.msra.mxu0 %v5444
    %5471 = vmatprep.subr.mxu0 0.0
    %5472 = vmatpush1.msra.mxu0 %v5445
    %5473 = vmatprep.subr.mxu0 0.0
    %5474 = vmatpush1.msra.mxu0 %v5446
    %5475 = vmatprep.subr.mxu0 0.0
    %5476 = vmatpush1.msra.mxu0 %v5447
    %5477 = vmatprep.subr.mxu0 0.0
    %5478 = vmatpush1.msra.mxu0 %v5448
    %5479 = vmatprep.subr.mxu0 0.0
    %5480 = vmatpush1.msra.mxu0 %v5449
    %5481 = vmatprep.subr.mxu0 0.0
    %5482 = vmatpush1.msra.mxu0 %v5450
    %5483 = vmatprep.subr.mxu0 0.0
    %5484 = vmatpush1.msra.mxu0 %v5451
    %5485 = vmatprep.subr.mxu0 0.0
    %5486 = vmatpush1.msra.mxu0 %v5452
    %5487 = vmatprep.subr.mxu0 0.0
    %5488 = vmatpush1.msra.mxu0 %v5453
    %5489 = vmatprep.subr.mxu0 0.0
    %5490 = vmatpush1.msra.mxu0 %v5454
    %5491 = vmatprep.subr.mxu0 0.0
    %5492 = vmatpush1.msra.mxu0 %v5455
    %5493 = vmatprep.subr.mxu0 0.0
    %5494 = vmatpush1.msra.mxu0 %v5456
    %5495 = vmatprep.subr.mxu0 0.0
    %5496 = vmatpush1.msra.mxu0 %v5457
    %5497 = vmatprep.subr.mxu0 0.0
    %5498 = vmatpush1.msra.mxu0 %v5458
    %5499 = vmatprep.subr.mxu0 0.0
    %5500 = vmatpush1.msra.mxu0 0.0
    %5501 = vmatprep.subr.mxu0 0.0
    %5502 = vmatpush1.msra.mxu0 0.0
    %5503 = vmatprep.subr.mxu0 0.0
    %5504 = vmatpush1.msra.mxu0 0.0
    %5505 = vmatprep.subr.mxu0 0.0
    %5506 = vmatpush1.msra.mxu0 0.0
    %5507 = vmatprep.subr.mxu0 0.0
    %5508 = vmatpush1.msra.mxu0 0.0
    %5509 = vmatprep.subr.mxu0 0.0
    %5510 = vmatpush1.msra.mxu0 0.0
    %5511 = vmatprep.subr.mxu0 0.0
    %5512 = vmatpush1.msra.mxu0 0.0
    %5513 = vmatprep.subr.mxu0 0.0
    %5514 = vmatpush1.msra.mxu0 0.0
    %5515 = vmatprep.subr.mxu0 0.0
    %5516 = vmatpush1.msra.mxu0 0.0
    %5517 = vmatprep.subr.mxu0 0.0
    %5518 = vmatpush1.msra.mxu0 0.0
    %5519 = vmatprep.subr.mxu0 0.0
    %5520 = vmatpush1.msra.mxu0 0.0
    %5521 = vmatprep.subr.mxu0 0.0
    %5522 = vmatpush1.msra.mxu0 0.0
    %5523 = vmatprep.subr.mxu0 0.0
    %5524 = vmatpush1.msra.mxu0 0.0
    %5525 = vmatprep.subr.mxu0 0.0
    %5526 = vmatpush1.msra.mxu0 0.0
    %5527 = vmatprep.subr.mxu0 0.0
    %5528 = vmatpush1.msra.mxu0 0.0
    %5529 = vmatprep.subr.mxu0 0.0
    %5530 = vmatpush1.msra.mxu0 0.0
    %5531 = vmatprep.mubr.f32.mxu0 0.0
    %5532 = vmatmul.mubr.f32.gmra.mrb[0].mxu0 %v5441
    %v5533 = vpop.f32.mrb[0].mxu0
    %v5534 = vadd.f32 %v5465, %v5533
    %v5535 = vpop.f32.mrb[0].mxu0
    %5536 = vdwg.mxu0
    %s5537 = scalar_lea.vmem %s1, 256
    %v5538 = vld [vmem:[%s5537] sm:$0xff]
    %v5539 = vld [vmem:[%s5537 + $0x8] sm:$0xff]
    %v5540 = vld [vmem:[%s5537 + $0x10] sm:$0xff]
    %v5541 = vld [vmem:[%s5537 + $0x18] sm:$0xff]
    %v5542 = vld [vmem:[%s5537 + $0x20] sm:$0xff]
    %v5543 = vld [vmem:[%s5537 + $0x28] sm:$0xff]
    %v5544 = vld [vmem:[%s5537 + $0x30] sm:$0xff]
    %v5545 = vld [vmem:[%s5537 + $0x38] sm:$0xff]
    %v5546 = vld [vmem:[%s5537 + $0x40] sm:$0xff]
    %v5547 = vld [vmem:[%s5537 + $0x48] sm:$0xff]
    %v5548 = vld [vmem:[%s5537 + $0x50] sm:$0xff]
    %v5549 = vld [vmem:[%s5537 + $0x58] sm:$0xff]
    %v5550 = vld [vmem:[%s5537 + $0x60] sm:$0xff]
    %v5551 = vld [vmem:[%s5537 + $0x68] sm:$0xff]
    %v5552 = vld [vmem:[%s5537 + $0x70] sm:$0xff]
    %v5553 = vld [vmem:[%s5537 + $0x78] sm:$0xff]
    %5554 = vmatprep.subr.mxu0 0.0
    %5555 = vmatpush1.msra.mxu0 %v5538
    %5556 = vmatprep.subr.mxu0 0.0
    %5557 = vmatpush1.msra.mxu0 %v5539
    %5558 = vmatprep.subr.mxu0 0.0
    %5559 = vmatpush1.msra.mxu0 %v5540
    %5560 = vmatprep.subr.mxu0 0.0
    %5561 = vmatpush1.msra.mxu0 %v5541
    %5562 = vmatprep.subr.mxu0 0.0
    %5563 = vmatpush1.msra.mxu0 %v5542
    %5564 = vmatprep.subr.mxu0 0.0
    %5565 = vmatpush1.msra.mxu0 %v5543
    %5566 = vmatprep.subr.mxu0 0.0
    %5567 = vmatpush1.msra.mxu0 %v5544
    %5568 = vmatprep.subr.mxu0 0.0
    %5569 = vmatpush1.msra.mxu0 %v5545
    %5570 = vmatprep.subr.mxu0 0.0
    %5571 = vmatpush1.msra.mxu0 %v5546
    %5572 = vmatprep.subr.mxu0 0.0
    %5573 = vmatpush1.msra.mxu0 %v5547
    %5574 = vmatprep.subr.mxu0 0.0
    %5575 = vmatpush1.msra.mxu0 %v5548
    %5576 = vmatprep.subr.mxu0 0.0
    %5577 = vmatpush1.msra.mxu0 %v5549
    %5578 = vmatprep.subr.mxu0 0.0
    %5579 = vmatpush1.msra.mxu0 %v5550
    %5580 = vmatprep.subr.mxu0 0.0
    %5581 = vmatpush1.msra.mxu0 %v5551
    %5582 = vmatprep.subr.mxu0 0.0
    %5583 = vmatpush1.msra.mxu0 %v5552
    %5584 = vmatprep.subr.mxu0 0.0
    %5585 = vmatpush1.msra.mxu0 %v5553
    %5586 = vmatprep.subr.mxu0 0.0
    %5587 = vmatpush1.msra.mxu0 0.0
    %5588 = vmatprep.subr.mxu0 0.0
    %5589 = vmatpush1.msra.mxu0 0.0
    %5590 = vmatprep.subr.mxu0 0.0
    %5591 = vmatpush1.msra.mxu0 0.0
    %5592 = vmatprep.subr.mxu0 0.0
    %5593 = vmatpush1.msra.mxu0 0.0
    %5594 = vmatprep.subr.mxu0 0.0
    %5595 = vmatpush1.msra.mxu0 0.0
    %5596 = vmatprep.subr.mxu0 0.0
    %5597 = vmatpush1.msra.mxu0 0.0
    %5598 = vmatprep.subr.mxu0 0.0
    %5599 = vmatpush1.msra.mxu0 0.0
    %5600 = vmatprep.subr.mxu0 0.0
    %5601 = vmatpush1.msra.mxu0 0.0
    %5602 = vmatprep.subr.mxu0 0.0
    %5603 = vmatpush1.msra.mxu0 0.0
    %5604 = vmatprep.subr.mxu0 0.0
    %5605 = vmatpush1.msra.mxu0 0.0
    %5606 = vmatprep.subr.mxu0 0.0
    %5607 = vmatpush1.msra.mxu0 0.0
    %5608 = vmatprep.subr.mxu0 0.0
    %5609 = vmatpush1.msra.mxu0 0.0
    %5610 = vmatprep.subr.mxu0 0.0
    %5611 = vmatpush1.msra.mxu0 0.0
    %5612 = vmatprep.subr.mxu0 0.0
    %5613 = vmatpush1.msra.mxu0 0.0
    %5614 = vmatprep.subr.mxu0 0.0
    %5615 = vmatpush1.msra.mxu0 0.0
    %5616 = vmatprep.subr.mxu0 0.0
    %5617 = vmatpush1.msra.mxu0 0.0
    %5618 = vmatprep.mubr.f32.mxu0 0.0
    %5619 = vmatmul.mubr.f32.gmra.mrb[0].mxu0 %v5534
    %v5620 = vpop.f32.mrb[0].mxu0
    %v5621 = vadd.f32 0.0, %v5620
    %v5622 = vpop.f32.mrb[0].mxu0
    %5623 = vdwg.mxu0
    %v5624 = vld [vmem:[%s6] sm:$0xff]
    %v5625 = vld [vmem:[%s6 + $0x8] sm:$0xff]
    %v5626 = vld [vmem:[%s6 + $0x10] sm:$0xff]
    %v5627 = vld [vmem:[%s6 + $0x18] sm:$0xff]
    %v5628 = vld [vmem:[%s6 + $0x20] sm:$0xff]
    %v5629 = vld [vmem:[%s6 + $0x28] sm:$0xff]
    %v5630 = vld [vmem:[%s6 + $0x30] sm:$0xff]
    %v5631 = vld [vmem:[%s6 + $0x38] sm:$0xff]
    %v5632 = vld [vmem:[%s6 + $0x40] sm:$0xff]
    %v5633 = vld [vmem:[%s6 + $0x48] sm:$0xff]
    %v5634 = vld [vmem:[%s6 + $0x50] sm:$0xff]
    %v5635 = vld [vmem:[%s6 + $0x58] sm:$0xff]
    %v5636 = vld [vmem:[%s6 + $0x60] sm:$0xff]
    %v5637 = vld [vmem:[%s6 + $0x68] sm:$0xff]
    %v5638 = vld [vmem:[%s6 + $0x70] sm:$0xff]
    %v5639 = vld [vmem:[%s6 + $0x78] sm:$0xff]
    %5640 = vmatprep.subr.mxu0 0.0
    %5641 = vmatpush1.msra.mxu0 %v5624
    %5642 = vmatprep.subr.mxu0 0.0
    %5643 = vmatpush1.msra.mxu0 %v5625
    %5644 = vmatprep.subr.mxu0 0.0
    %5645 = vmatpush1.msra.mxu0 %v5626
    %5646 = vmatprep.subr.mxu0 0.0
    %5647 = vmatpush1.msra.mxu0 %v5627
    %5648 = vmatprep.subr.mxu0 0.0
    %5649 = vmatpush1.msra.mxu0 %v5628
    %5650 = vmatprep.subr.mxu0 0.0
    %5651 = vmatpush1.msra.mxu0 %v5629
    %5652 = vmatprep.subr.mxu0 0.0
    %5653 = vmatpush1.msra.mxu0 %v5630
    %5654 = vmatprep.subr.mxu0 0.0
    %5655 = vmatpush1.msra.mxu0 %v5631
    %5656 = vmatprep.subr.mxu0 0.0
    %5657 = vmatpush1.msra.mxu0 %v5632
    %5658 = vmatprep.subr.mxu0 0.0
    %5659 = vmatpush1.msra.mxu0 %v5633
    %5660 = vmatprep.subr.mxu0 0.0
    %5661 = vmatpush1.msra.mxu0 %v5634
    %5662 = vmatprep.subr.mxu0 0.0
    %5663 = vmatpush1.msra.mxu0 %v5635
    %5664 = vmatprep.subr.mxu0 0.0
    %5665 = vmatpush1.msra.mxu0 %v5636
    %5666 = vmatprep.subr.mxu0 0.0
    %5667 = vmatpush1.msra.mxu0 %v5637
    %5668 = vmatprep.subr.mxu0 0.0
    %5669 = vmatpush1.msra.mxu0 %v5638
    %5670 = vmatprep.subr.mxu0 0.0
    %5671 = vmatpush1.msra.mxu0 %v5639
    %5672 = vmatprep.subr.mxu0 0.0
    %5673 = vmatpush1.msra.mxu0 0.0
    %5674 = vmatprep.subr.mxu0 0.0
    %5675 = vmatpush1.msra.mxu0 0.0
    %5676 = vmatprep.subr.mxu0 0.0
    %5677 = vmatpush1.msra.mxu0 0.0
    %5678 = vmatprep.subr.mxu0 0.0
    %5679 = vmatpush1.msra.mxu0 0.0
    %5680 = vmatprep.subr.mxu0 0.0
    %5681 = vmatpush1.msra.mxu0 0.0
    %5682 = vmatprep.subr.mxu0 0.0
    %5683 = vmatpush1.msra.mxu0 0.0
    %5684 = vmatprep.subr.mxu0 0.0
    %5685 = vmatpush1.msra.mxu0 0.0
    %5686 = vmatprep.subr.mxu0 0.0
    %5687 = vmatpush1.msra.mxu0 0.0
    %5688 = vmatprep.subr.mxu0 0.0
    %5689 = vmatpush1.msra.mxu0 0.0
    %5690 = vmatprep.subr.mxu0 0.0
    %5691 = vmatpush1.msra.mxu0 0.0
    %5692 = vmatprep.subr.mxu0 0.0
    %5693 = vmatpush1.msra.mxu0 0.0
    %5694 = vmatprep.subr.mxu0 0.0
    %5695 = vmatpush1.msra.mxu0 0.0
    %5696 = vmatprep.subr.mxu0 0.0
    %5697 = vmatpush1.msra.mxu0 0.0
    %5698 = vmatprep.subr.mxu0 0.0
    %5699 = vmatpush1.msra.mxu0 0.0
    %5700 = vmatprep.subr.mxu0 0.0
    %5701 = vmatpush1.msra.mxu0 0.0
    %5702 = vmatprep.subr.mxu0 0.0
    %5703 = vmatpush1.msra.mxu0 0.0
    %5704 = vmatprep.mubr.f32.mxu0 0.0
    %5705 = vmatmul.mubr.f32.gmra.mrb[0].mxu0 %v5621
    %v5706 = vpop.f32.mrb[0].mxu0
    %v5707 = vadd.f32 0.0, %v5706
    %v5708 = vpop.f32.mrb[0].mxu0
    %5709 = vdwg.mxu0
    %v5710 = vld [vmem:[%s7] sm:$0xff]
    %v5711 = vld [vmem:[%s7 + $0x8] sm:$0xff]
    %v5712 = vld [vmem:[%s7 + $0x10] sm:$0xff]
    %v5713 = vld [vmem:[%s7 + $0x18] sm:$0xff]
    %v5714 = vld [vmem:[%s7 + $0x20] sm:$0xff]
    %v5715 = vld [vmem:[%s7 + $0x28] sm:$0xff]
    %v5716 = vld [vmem:[%s7 + $0x30] sm:$0xff]
    %v5717 = vld [vmem:[%s7 + $0x38] sm:$0xff]
    %v5718 = vld [vmem:[%s7 + $0x40] sm:$0xff]
    %v5719 = vld [vmem:[%s7 + $0x48] sm:$0xff]
    %v5720 = vld [vmem:[%s7 + $0x50] sm:$0xff]
    %v5721 = vld [vmem:[%s7 + $0x58] sm:$0xff]
    %v5722 = vld [vmem:[%s7 + $0x60] sm:$0xff]
    %v5723 = vld [vmem:[%s7 + $0x68] sm:$0xff]
    %v5724 = vld [vmem:[%s7 + $0x70] sm:$0xff]
    %v5725 = vld [vmem:[%s7 + $0x78] sm:$0xff]
    %5726 = vmatprep.subr.mxu0 0.0
    %5727 = vmatpush1.msra.mxu0 %v5710
    %5728 = vmatprep.subr.mxu0 0.0
    %5729 = vmatpush1.msra.mxu0 %v5711
    %5730 = vmatprep.subr.mxu0 0.0
    %5731 = vmatpush1.msra.mxu0 %v5712
    %5732 = vmatprep.subr.mxu0 0.0
    %5733 = vmatpush1.msra.mxu0 %v5713
    %5734 = vmatprep.subr.mxu0 0.0
    %5735 = vmatpush1.msra.mxu0 %v5714
    %5736 = vmatprep.subr.mxu0 0.0
    %5737 = vmatpush1.msra.mxu0 %v5715
    %5738 = vmatprep.subr.mxu0 0.0
    %5739 = vmatpush1.msra.mxu0 %v5716
    %5740 = vmatprep.subr.mxu0 0.0
    %5741 = vmatpush1.msra.mxu0 %v5717
    %5742 = vmatprep.subr.mxu0 0.0
    %5743 = vmatpush1.msra.mxu0 %v5718
    %5744 = vmatprep.subr.mxu0 0.0
    %5745 = vmatpush1.msra.mxu0 %v5719
    %5746 = vmatprep.subr.mxu0 0.0
    %5747 = vmatpush1.msra.mxu0 %v5720
    %5748 = vmatprep.subr.mxu0 0.0
    %5749 = vmatpush1.msra.mxu0 %v5721
    %5750 = vmatprep.subr.mxu0 0.0
    %5751 = vmatpush1.msra.mxu0 %v5722
    %5752 = vmatprep.subr.mxu0 0.0
    %5753 = vmatpush1.msra.mxu0 %v5723
    %5754 = vmatprep.subr.mxu0 0.0
    %5755 = vmatpush1.msra.mxu0 %v5724
    %5756 = vmatprep.subr.mxu0 0.0
    %5757 = vmatpush1.msra.mxu0 %v5725
    %5758 = vmatprep.subr.mxu0 0.0
    %5759 = vmatpush1.msra.mxu0 0.0
    %5760 = vmatprep.subr.mxu0 0.0
    %5761 = vmatpush1.msra.mxu0 0.0
    %5762 = vmatprep.subr.mxu0 0.0
    %5763 = vmatpush1.msra.mxu0 0.0
    %5764 = vmatprep.subr.mxu0 0.0
    %5765 = vmatpush1.msra.mxu0 0.0
    %5766 = vmatprep.subr.mxu0 0.0
    %5767 = vmatpush1.msra.mxu0 0.0
    %5768 = vmatprep.subr.mxu0 0.0
    %5769 = vmatpush1.msra.mxu0 0.0
    %5770 = vmatprep.subr.mxu0 0.0
    %5771 = vmatpush1.msra.mxu0 0.0
    %5772 = vmatprep.subr.mxu0 0.0
    %5773 = vmatpush1.msra.mxu0 0.0
    %5774 = vmatprep.subr.mxu0 0.0
    %5775 = vmatpush1.msra.mxu0 0.0
    %5776 = vmatprep.subr.mxu0 0.0
    %5777 = vmatpush1.msra.mxu0 0.0
    %5778 = vmatprep.subr.mxu0 0.0
    %5779 = vmatpush1.msra.mxu0 0.0
    %5780 = vmatprep.subr.mxu0 0.0
    %5781 = vmatpush1.msra.mxu0 0.0
    %5782 = vmatprep.subr.mxu0 0.0
    %5783 = vmatpush1.msra.mxu0 0.0
    %5784 = vmatprep.subr.mxu0 0.0
    %5785 = vmatpush1.msra.mxu0 0.0
    %5786 = vmatprep.subr.mxu0 0.0
    %5787 = vmatpush1.msra.mxu0 0.0
    %5788 = vmatprep.subr.mxu0 0.0
    %5789 = vmatpush1.msra.mxu0 0.0
    %5790 = vmatprep.mubr.f32.mxu0 0.0
    %5791 = vmatmul.mubr.f32.gmra.mrb[0].mxu0 %v5621
    %v5792 = vpop.f32.mrb[0].mxu0
    %v5793 = vadd.f32 0.0, %v5792
    %v5794 = vpop.f32.mrb[0].mxu0
    %5795 = vdwg.mxu0
    %v5796 = vld [vmem:[%s8] sm:$0xff]
    %v5797 = vld [vmem:[%s8 + $0x8] sm:$0xff]
    %v5798 = vld [vmem:[%s8 + $0x10] sm:$0xff]
    %v5799 = vld [vmem:[%s8 + $0x18] sm:$0xff]
    %v5800 = vld [vmem:[%s8 + $0x20] sm:$0xff]
    %v5801 = vld [vmem:[%s8 + $0x28] sm:$0xff]
    %v5802 = vld [vmem:[%s8 + $0x30] sm:$0xff]
    %v5803 = vld [vmem:[%s8 + $0x38] sm:$0xff]
    %v5804 = vld [vmem:[%s8 + $0x40] sm:$0xff]
    %v5805 = vld [vmem:[%s8 + $0x48] sm:$0xff]
    %v5806 = vld [vmem:[%s8 + $0x50] sm:$0xff]
    %v5807 = vld [vmem:[%s8 + $0x58] sm:$0xff]
    %v5808 = vld [vmem:[%s8 + $0x60] sm:$0xff]
    %v5809 = vld [vmem:[%s8 + $0x68] sm:$0xff]
    %v5810 = vld [vmem:[%s8 + $0x70] sm:$0xff]
    %v5811 = vld [vmem:[%s8 + $0x78] sm:$0xff]
    %5812 = vmatprep.subr.mxu0 0.0
    %5813 = vmatpush1.msra.mxu0 %v5796
    %5814 = vmatprep.subr.mxu0 0.0
    %5815 = vmatpush1.msra.mxu0 %v5797
    %5816 = vmatprep.subr.mxu0 0.0
    %5817 = vmatpush1.msra.mxu0 %v5798
    %5818 = vmatprep.subr.mxu0 0.0
    %5819 = vmatpush1.msra.mxu0 %v5799
    %5820 = vmatprep.subr.mxu0 0.0
    %5821 = vmatpush1.msra.mxu0 %v5800
    %5822 = vmatprep.subr.mxu0 0.0
    %5823 = vmatpush1.msra.mxu0 %v5801
    %5824 = vmatprep.subr.mxu0 0.0
    %5825 = vmatpush1.msra.mxu0 %v5802
    %5826 = vmatprep.subr.mxu0 0.0
    %5827 = vmatpush1.msra.mxu0 %v5803
    %5828 = vmatprep.subr.mxu0 0.0
    %5829 = vmatpush1.msra.mxu0 %v5804
    %5830 = vmatprep.subr.mxu0 0.0
    %5831 = vmatpush1.msra.mxu0 %v5805
    %5832 = vmatprep.subr.mxu0 0.0
    %5833 = vmatpush1.msra.mxu0 %v5806
    %5834 = vmatprep.subr.mxu0 0.0
    %5835 = vmatpush1.msra.mxu0 %v5807
    %5836 = vmatprep.subr.mxu0 0.0
    %5837 = vmatpush1.msra.mxu0 %v5808
    %5838 = vmatprep.subr.mxu0 0.0
    %5839 = vmatpush1.msra.mxu0 %v5809
    %5840 = vmatprep.subr.mxu0 0.0
    %5841 = vmatpush1.msra.mxu0 %v5810
    %5842 = vmatprep.subr.mxu0 0.0
    %5843 = vmatpush1.msra.mxu0 %v5811
    %5844 = vmatprep.subr.mxu0 0.0
    %5845 = vmatpush1.msra.mxu0 0.0
    %5846 = vmatprep.subr.mxu0 0.0
    %5847 = vmatpush1.msra.mxu0 0.0
    %5848 = vmatprep.subr.mxu0 0.0
    %5849 = vmatpush1.msra.mxu0 0.0
    %5850 = vmatprep.subr.mxu0 0.0
    %5851 = vmatpush1.msra.mxu0 0.0
    %5852 = vmatprep.subr.mxu0 0.0
    %5853 = vmatpush1.msra.mxu0 0.0
    %5854 = vmatprep.subr.mxu0 0.0
    %5855 = vmatpush1.msra.mxu0 0.0
    %5856 = vmatprep.subr.mxu0 0.0
    %5857 = vmatpush1.msra.mxu0 0.0
    %5858 = vmatprep.subr.mxu0 0.0
    %5859 = vmatpush1.msra.mxu0 0.0
    %5860 = vmatprep.subr.mxu0 0.0
    %5861 = vmatpush1.msra.mxu0 0.0
    %5862 = vmatprep.subr.mxu0 0.0
    %5863 = vmatpush1.msra.mxu0 0.0
    %5864 = vmatprep.subr.mxu0 0.0
    %5865 = vmatpush1.msra.mxu0 0.0
    %5866 = vmatprep.subr.mxu0 0.0
    %5867 = vmatpush1.msra.mxu0 0.0
    %5868 = vmatprep.subr.mxu0 0.0
    %5869 = vmatpush1.msra.mxu0 0.0
    %5870 = vmatprep.subr.mxu0 0.0
    %5871 = vmatpush1.msra.mxu0 0.0
    %5872 = vmatprep.subr.mxu0 0.0
    %5873 = vmatpush1.msra.mxu0 0.0
    %5874 = vmatprep.subr.mxu0 0.0
    %5875 = vmatpush1.msra.mxu0 0.0
    %5876 = vmatprep.mubr.f32.mxu0 0.0
    %5877 = vmatmul.mubr.f32.gmra.mrb[0].mxu0 %v5621
    %v5878 = vpop.f32.mrb[0].mxu0
    %v5879 = vadd.f32 0.0, %v5878
    %v5880 = vpop.f32.mrb[0].mxu0
    %5881 = vdwg.mxu0
    %v5884 = vunpack.c.l.s4 1966171168
    %v5885 = vunpack.c.0.s8 %v5884
    %v5886 = vlaneseq
    %v5887 = vshrl.u32 %v5886, 7
    %v5888 = vsub.s32 %v5885, %v5887
    %v5889 = vrot.slane %v5707, %v5888
    %v5890 = vcombine.high %v5889, %v5889
    %v5892 = vunpack.c.l.s4 1966171168
    %v5893 = vunpack.c.0.s8 %v5892
    %v5894 = vlaneseq
    %v5895 = vshrl.u32 %v5894, 7
    %v5896 = vsub.s32 %v5893, %v5895
    %v5897 = vrot.slane %v5889, %v5896
    %v5899 = vunpack.c.l.s4 1966171168
    %v5900 = vunpack.c.0.s8 %v5899
    %v5901 = vlaneseq
    %v5902 = vshrl.u32 %v5901, 7
    %v5903 = vsub.s32 %v5900, %v5902
    %v5904 = vrot.slane %v5890, %v5903
    %5907 = vst.msk [vmem:[#allocation2] sm:$0x1] %vm622, %v5897
    %5908 = vst.msk [vmem:[#allocation2 + $0x4] sm:$0x1] %vm622, %v5904
    %v5911 = vunpack.c.l.s4 1966171168
    %v5912 = vunpack.c.0.s8 %v5911
    %v5913 = vlaneseq
    %v5914 = vshrl.u32 %v5913, 7
    %v5915 = vsub.s32 %v5912, %v5914
    %v5916 = vrot.slane %v5793, %v5915
    %v5917 = vcombine.high %v5916, %v5916
    %v5919 = vunpack.c.l.s4 1966171168
    %v5920 = vunpack.c.0.s8 %v5919
    %v5921 = vlaneseq
    %v5922 = vshrl.u32 %v5921, 7
    %v5923 = vsub.s32 %v5920, %v5922
    %v5924 = vrot.slane %v5916, %v5923
    %v5926 = vunpack.c.l.s4 1966171168
    %v5927 = vunpack.c.0.s8 %v5926
    %v5928 = vlaneseq
    %v5929 = vshrl.u32 %v5928, 7
    %v5930 = vsub.s32 %v5927, %v5929
    %v5931 = vrot.slane %v5917, %v5930
    %5934 = vst.msk [vmem:[#allocation3] sm:$0x1] %vm622, %v5924
    %5935 = vst.msk [vmem:[#allocation3 + $0x4] sm:$0x1] %vm622, %v5931
    %v5938 = vunpack.c.l.s4 1966171168
    %v5939 = vunpack.c.0.s8 %v5938
    %v5940 = vlaneseq
    %v5941 = vshrl.u32 %v5940, 7
    %v5942 = vsub.s32 %v5939, %v5941
    %v5943 = vrot.slane %v5879, %v5942
    %v5944 = vcombine.high %v5943, %v5943
    %v5946 = vunpack.c.l.s4 1966171168
    %v5947 = vunpack.c.0.s8 %v5946
    %v5948 = vlaneseq
    %v5949 = vshrl.u32 %v5948, 7
    %v5950 = vsub.s32 %v5947, %v5949
    %v5951 = vrot.slane %v5943, %v5950
    %v5953 = vunpack.c.l.s4 1966171168
    %v5954 = vunpack.c.0.s8 %v5953
    %v5955 = vlaneseq
    %v5956 = vshrl.u32 %v5955, 7
    %v5957 = vsub.s32 %v5954, %v5956
    %v5958 = vrot.slane %v5944, %v5957
    %5961 = vst.msk [vmem:[#allocation4] sm:$0x1] %vm622, %v5951
    %5962 = vst.msk [vmem:[#allocation4 + $0x4] sm:$0x1] %vm622, %v5958
    %v5963 = vlaneseq
    %v5964 = vshrl.u32 %v5963, 7
    %v5965 = vsub.s32 0, %v5964
    %v5966 = vrot.slane %v5897, %v5965
    %v5967 = vlaneseq
    %v5968 = vshrl.u32 %v5967, 7
    %v5969 = vsub.s32 0, %v5968
    %v5970 = vrot.slane %v5904, %v5969
    %5971 = vrot.lane.b32.xlu0 %v5966, 96
    %v5972 = vpop.permute.xlu0 %5971
    %5973 = vrot.lane.b32.xlu0 %v5970, 96
    %v5974 = vpop.permute.xlu0 %5973
    %5977 = vst.msk [vmem:[#allocation2 + $0x1] sm:$0x1] %vm622, %v5972
    %5978 = vst.msk [vmem:[#allocation2 + $0x5] sm:$0x1] %vm622, %v5974
    %v5979 = vlaneseq
    %v5980 = vshrl.u32 %v5979, 7
    %v5981 = vsub.s32 0, %v5980
    %v5982 = vrot.slane %v5924, %v5981
    %v5983 = vlaneseq
    %v5984 = vshrl.u32 %v5983, 7
    %v5985 = vsub.s32 0, %v5984
    %v5986 = vrot.slane %v5931, %v5985
    %5987 = vrot.lane.b32.xlu0 %v5982, 96
    %v5988 = vpop.permute.xlu0 %5987
    %5989 = vrot.lane.b32.xlu0 %v5986, 96
    %v5990 = vpop.permute.xlu0 %5989
    %5993 = vst.msk [vmem:[#allocation3 + $0x1] sm:$0x1] %vm622, %v5988
    %5994 = vst.msk [vmem:[#allocation3 + $0x5] sm:$0x1] %vm622, %v5990
    %v5995 = vlaneseq
    %v5996 = vshrl.u32 %v5995, 7
    %v5997 = vsub.s32 0, %v5996
    %v5998 = vrot.slane %v5951, %v5997
    %v5999 = vlaneseq
    %v6000 = vshrl.u32 %v5999, 7
    %v6001 = vsub.s32 0, %v6000
    %v6002 = vrot.slane %v5958, %v6001
    %6003 = vrot.lane.b32.xlu0 %v5998, 96
    %v6004 = vpop.permute.xlu0 %6003
    %6005 = vrot.lane.b32.xlu0 %v6002, 96
    %v6006 = vpop.permute.xlu0 %6005
    %6009 = vst.msk [vmem:[#allocation4 + $0x1] sm:$0x1] %vm622, %v6004
    %6010 = vst.msk [vmem:[#allocation4 + $0x5] sm:$0x1] %vm622, %v6006
    %6011 = vrot.lane.b32.xlu0 %v5966, 64
    %v6012 = vpop.permute.xlu0 %6011
    %6013 = vrot.lane.b32.xlu0 %v5970, 64
    %v6014 = vpop.permute.xlu0 %6013
    %6017 = vst.msk [vmem:[#allocation2 + $0x2] sm:$0x1] %vm622, %v6012
    %6018 = vst.msk [vmem:[#allocation2 + $0x6] sm:$0x1] %vm622, %v6014
    %6019 = vrot.lane.b32.xlu0 %v5982, 64
    %v6020 = vpop.permute.xlu0 %6019
    %6021 = vrot.lane.b32.xlu0 %v5986, 64
    %v6022 = vpop.permute.xlu0 %6021
    %6025 = vst.msk [vmem:[#allocation3 + $0x2] sm:$0x1] %vm622, %v6020
    %6026 = vst.msk [vmem:[#allocation3 + $0x6] sm:$0x1] %vm622, %v6022
    %6027 = vrot.lane.b32.xlu0 %v5998, 64
    %v6028 = vpop.permute.xlu0 %6027
    %6029 = vrot.lane.b32.xlu0 %v6002, 64
    %v6030 = vpop.permute.xlu0 %6029
    %6033 = vst.msk [vmem:[#allocation4 + $0x2] sm:$0x1] %vm622, %v6028
    %6034 = vst.msk [vmem:[#allocation4 + $0x6] sm:$0x1] %vm622, %v6030
    %6035 = vrot.lane.b32.xlu0 %v5966, 32
    %v6036 = vpop.permute.xlu0 %6035
    %6037 = vrot.lane.b32.xlu0 %v5970, 32
    %v6038 = vpop.permute.xlu0 %6037
    %6041 = vst.msk [vmem:[#allocation2 + $0x3] sm:$0x1] %vm622, %v6036
    %6042 = vst.msk [vmem:[#allocation2 + $0x7] sm:$0x1] %vm622, %v6038
    %6043 = vrot.lane.b32.xlu0 %v5982, 32
    %v6044 = vpop.permute.xlu0 %6043
    %6045 = vrot.lane.b32.xlu0 %v5986, 32
    %v6046 = vpop.permute.xlu0 %6045
    %6049 = vst.msk [vmem:[#allocation3 + $0x3] sm:$0x1] %vm622, %v6044
    %6050 = vst.msk [vmem:[#allocation3 + $0x7] sm:$0x1] %vm622, %v6046
    %6051 = vrot.lane.b32.xlu0 %v5998, 32
    %v6052 = vpop.permute.xlu0 %6051
    %6053 = vrot.lane.b32.xlu0 %v6002, 32
    %v6054 = vpop.permute.xlu0 %6053
    %6057 = vst.msk [vmem:[#allocation4 + $0x3] sm:$0x1] %vm622, %v6052
    %6058 = vst.msk [vmem:[#allocation4 + $0x7] sm:$0x1] %vm622, %v6054
    %v6059 = vld [vmem:[#allocation2] sm:$0xf]
    %v6060 = vld [vmem:[#allocation3] sm:$0xf]
    %v6061 = vld [vmem:[#allocation4] sm:$0xf]
    %v6063 = vsel %vm778, %v6059, 0
    %v6066 = vsel %vm778, %v6060, 0
    %6068 = vmatprep.subr.mxu0 0.0
    %6069 = vmatpush1.xpose.msra.mxu0 %v6066
    %6070 = vmatprep.subr.mxu0 0.0
    %6071 = vmatpush1.xpose.msra.mxu0 0.0
    %6072 = vmatprep.subr.mxu0 0.0
    %6073 = vmatpush1.xpose.msra.mxu0 0.0
    %6074 = vmatprep.subr.mxu0 0.0
    %6075 = vmatpush1.xpose.msra.mxu0 0.0
    %6076 = vmatprep.subr.mxu0 0.0
    %6077 = vmatpush1.xpose.msra.mxu0 0.0
    %6078 = vmatprep.subr.mxu0 0.0
    %6079 = vmatpush1.xpose.msra.mxu0 0.0
    %6080 = vmatprep.subr.mxu0 0.0
    %6081 = vmatpush1.xpose.msra.mxu0 0.0
    %6082 = vmatprep.subr.mxu0 0.0
    %6083 = vmatpush1.xpose.msra.mxu0 0.0
    %6084 = vmatprep.subr.mxu0 0.0
    %6085 = vmatpush1.xpose.msra.mxu0 0.0
    %6086 = vmatprep.subr.mxu0 0.0
    %6087 = vmatpush1.xpose.msra.mxu0 0.0
    %6088 = vmatprep.subr.mxu0 0.0
    %6089 = vmatpush1.xpose.msra.mxu0 0.0
    %6090 = vmatprep.subr.mxu0 0.0
    %6091 = vmatpush1.xpose.msra.mxu0 0.0
    %6092 = vmatprep.subr.mxu0 0.0
    %6093 = vmatpush1.xpose.msra.mxu0 0.0
    %6094 = vmatprep.subr.mxu0 0.0
    %6095 = vmatpush1.xpose.msra.mxu0 0.0
    %6096 = vmatprep.subr.mxu0 0.0
    %6097 = vmatpush1.xpose.msra.mxu0 0.0
    %6098 = vmatprep.subr.mxu0 0.0
    %6099 = vmatpush1.xpose.msra.mxu0 0.0
    %6100 = vmatprep.subr.mxu0 0.0
    %6101 = vmatpush1.xpose.msra.mxu0 0.0
    %6102 = vmatprep.subr.mxu0 0.0
    %6103 = vmatpush1.xpose.msra.mxu0 0.0
    %6104 = vmatprep.subr.mxu0 0.0
    %6105 = vmatpush1.xpose.msra.mxu0 0.0
    %6106 = vmatprep.subr.mxu0 0.0
    %6107 = vmatpush1.xpose.msra.mxu0 0.0
    %6108 = vmatprep.subr.mxu0 0.0
    %6109 = vmatpush1.xpose.msra.mxu0 0.0
    %6110 = vmatprep.subr.mxu0 0.0
    %6111 = vmatpush1.xpose.msra.mxu0 0.0
    %6112 = vmatprep.subr.mxu0 0.0
    %6113 = vmatpush1.xpose.msra.mxu0 0.0
    %6114 = vmatprep.subr.mxu0 0.0
    %6115 = vmatpush1.xpose.msra.mxu0 0.0
    %6116 = vmatprep.subr.mxu0 0.0
    %6117 = vmatpush1.xpose.msra.mxu0 0.0
    %6118 = vmatprep.subr.mxu0 0.0
    %6119 = vmatpush1.xpose.msra.mxu0 0.0
    %6120 = vmatprep.subr.mxu0 0.0
    %6121 = vmatpush1.xpose.msra.mxu0 0.0
    %6122 = vmatprep.subr.mxu0 0.0
    %6123 = vmatpush1.xpose.msra.mxu0 0.0
    %6124 = vmatprep.subr.mxu0 0.0
    %6125 = vmatpush1.xpose.msra.mxu0 0.0
    %6126 = vmatprep.subr.mxu0 0.0
    %6127 = vmatpush1.xpose.msra.mxu0 0.0
    %6128 = vmatprep.subr.mxu0 0.0
    %6129 = vmatpush1.xpose.msra.mxu0 0.0
    %6130 = vmatprep.subr.mxu0 0.0
    %6131 = vmatpush1.xpose.msra.mxu0 0.0
    %6132 = vmatprep.mubr.f32.mxu0 0.0
    %6133 = vmatmul.mubr.f32.gmra.mrb[0].mxu0 %v6063
    %v6134 = vpop.f32.mrb[0].mxu0
    %v6135 = vadd.f32 0.0, %v6134
    %v6136 = vpop.f32.mrb[0].mxu0
    %6137 = vdwg.mxu0
    %v6138 = vmul.f32 %v6135, 0.35355338
    %v6139 = vsel %vm856, %v6138, -inf
    %6140 = vmax.xlane.f32.xlu0 %v6139
    %v6141 = vpop.xlane.xlu0 %6140
    %v6142 = vsub.f32 %v6138, %v6141
    %v6143 = vmul.f32 %v6142, 1.442695
    %v6144 = vpow.pop %v6143
    %v6145 = vsel %vm856, %v6144, 0.0
    %6146 = vadd.xlane.f32.xlu0 %v6145
    %v6147 = vpop.xlane.xlu0 %6146
    %v6148 = vrcp.pop %v6147
    %v6149 = vmul.f32 %v6144, %v6148
    %v6151 = vsel %vm868, %v6149, 0
    %v6154 = vsel %vm872, %v6061, 0
    %6156 = vmatprep.subr.mxu0 0.0
    %6157 = vmatpush1.msra.mxu0 %v6154
    %6158 = vmatprep.subr.mxu0 0.0
    %6159 = vmatpush1.msra.mxu0 0.0
    %6160 = vmatprep.subr.mxu0 0.0
    %6161 = vmatpush1.msra.mxu0 0.0
    %6162 = vmatprep.subr.mxu0 0.0
    %6163 = vmatpush1.msra.mxu0 0.0
    %6164 = vmatprep.subr.mxu0 0.0
    %6165 = vmatpush1.msra.mxu0 0.0
    %6166 = vmatprep.subr.mxu0 0.0
    %6167 = vmatpush1.msra.mxu0 0.0
    %6168 = vmatprep.subr.mxu0 0.0
    %6169 = vmatpush1.msra.mxu0 0.0
    %6170 = vmatprep.subr.mxu0 0.0
    %6171 = vmatpush1.msra.mxu0 0.0
    %6172 = vmatprep.subr.mxu0 0.0
    %6173 = vmatpush1.msra.mxu0 0.0
    %6174 = vmatprep.subr.mxu0 0.0
    %6175 = vmatpush1.msra.mxu0 0.0
    %6176 = vmatprep.subr.mxu0 0.0
    %6177 = vmatpush1.msra.mxu0 0.0
    %6178 = vmatprep.subr.mxu0 0.0
    %6179 = vmatpush1.msra.mxu0 0.0
    %6180 = vmatprep.subr.mxu0 0.0
    %6181 = vmatpush1.msra.mxu0 0.0
    %6182 = vmatprep.subr.mxu0 0.0
    %6183 = vmatpush1.msra.mxu0 0.0
    %6184 = vmatprep.subr.mxu0 0.0
    %6185 = vmatpush1.msra.mxu0 0.0
    %6186 = vmatprep.subr.mxu0 0.0
    %6187 = vmatpush1.msra.mxu0 0.0
    %6188 = vmatprep.subr.mxu0 0.0
    %6189 = vmatpush1.msra.mxu0 0.0
    %6190 = vmatprep.subr.mxu0 0.0
    %6191 = vmatpush1.msra.mxu0 0.0
    %6192 = vmatprep.subr.mxu0 0.0
    %6193 = vmatpush1.msra.mxu0 0.0
    %6194 = vmatprep.subr.mxu0 0.0
    %6195 = vmatpush1.msra.mxu0 0.0
    %6196 = vmatprep.subr.mxu0 0.0
    %6197 = vmatpush1.msra.mxu0 0.0
    %6198 = vmatprep.subr.mxu0 0.0
    %6199 = vmatpush1.msra.mxu0 0.0
    %6200 = vmatprep.subr.mxu0 0.0
    %6201 = vmatpush1.msra.mxu0 0.0
    %6202 = vmatprep.subr.mxu0 0.0
    %6203 = vmatpush1.msra.mxu0 0.0
    %6204 = vmatprep.subr.mxu0 0.0
    %6205 = vmatpush1.msra.mxu0 0.0
    %6206 = vmatprep.subr.mxu0 0.0
    %6207 = vmatpush1.msra.mxu0 0.0
    %6208 = vmatprep.subr.mxu0 0.0
    %6209 = vmatpush1.msra.mxu0 0.0
    %6210 = vmatprep.subr.mxu0 0.0
    %6211 = vmatpush1.msra.mxu0 0.0
    %6212 = vmatprep.subr.mxu0 0.0
    %6213 = vmatpush1.msra.mxu0 0.0
    %6214 = vmatprep.subr.mxu0 0.0
    %6215 = vmatpush1.msra.mxu0 0.0
    %6216 = vmatprep.subr.mxu0 0.0
    %6217 = vmatpush1.msra.mxu0 0.0
    %6218 = vmatprep.subr.mxu0 0.0
    %6219 = vmatpush1.msra.mxu0 0.0
    %6220 = vmatprep.mubr.f32.mxu0 0.0
    %6221 = vmatmul.mubr.f32.gmra.mrb[0].mxu0 %v6151
    %v6222 = vpop.f32.mrb[0].mxu0
    %v6223 = vadd.f32 0.0, %v6222
    %v6224 = vpop.f32.mrb[0].mxu0
    %6225 = vdwg.mxu0
    %6226 = vst.msk [vmem:[#allocation5] sm:$0xf] %vm946, %v6223
    %6227 = vrot.lane.b32.xlu0 %v6059, 120
    %v6228 = vpop.permute.xlu0 %6227
    %6229 = vrot.lane.b32.xlu0 %v6060, 120
    %v6230 = vpop.permute.xlu0 %6229
    %v6231 = vsel %vm778, %v6228, 0
    %v6233 = vsel %vm778, %v6230, 0
    %6235 = vmatprep.subr.mxu0 0.0
    %6236 = vmatpush1.xpose.msra.mxu0 %v6233
    %6237 = vmatprep.subr.mxu0 0.0
    %6238 = vmatpush1.xpose.msra.mxu0 0.0
    %6239 = vmatprep.subr.mxu0 0.0
    %6240 = vmatpush1.xpose.msra.mxu0 0.0
    %6241 = vmatprep.subr.mxu0 0.0
    %6242 = vmatpush1.xpose.msra.mxu0 0.0
    %6243 = vmatprep.subr.mxu0 0.0
    %6244 = vmatpush1.xpose.msra.mxu0 0.0
    %6245 = vmatprep.subr.mxu0 0.0
    %6246 = vmatpush1.xpose.msra.mxu0 0.0
    %6247 = vmatprep.subr.mxu0 0.0
    %6248 = vmatpush1.xpose.msra.mxu0 0.0
    %6249 = vmatprep.subr.mxu0 0.0
    %6250 = vmatpush1.xpose.msra.mxu0 0.0
    %6251 = vmatprep.subr.mxu0 0.0
    %6252 = vmatpush1.xpose.msra.mxu0 0.0
    %6253 = vmatprep.subr.mxu0 0.0
    %6254 = vmatpush1.xpose.msra.mxu0 0.0
    %6255 = vmatprep.subr.mxu0 0.0
    %6256 = vmatpush1.xpose.msra.mxu0 0.0
    %6257 = vmatprep.subr.mxu0 0.0
    %6258 = vmatpush1.xpose.msra.mxu0 0.0
    %6259 = vmatprep.subr.mxu0 0.0
    %6260 = vmatpush1.xpose.msra.mxu0 0.0
    %6261 = vmatprep.subr.mxu0 0.0
    %6262 = vmatpush1.xpose.msra.mxu0 0.0
    %6263 = vmatprep.subr.mxu0 0.0
    %6264 = vmatpush1.xpose.msra.mxu0 0.0
    %6265 = vmatprep.subr.mxu0 0.0
    %6266 = vmatpush1.xpose.msra.mxu0 0.0
    %6267 = vmatprep.subr.mxu0 0.0
    %6268 = vmatpush1.xpose.msra.mxu0 0.0
    %6269 = vmatprep.subr.mxu0 0.0
    %6270 = vmatpush1.xpose.msra.mxu0 0.0
    %6271 = vmatprep.subr.mxu0 0.0
    %6272 = vmatpush1.xpose.msra.mxu0 0.0
    %6273 = vmatprep.subr.mxu0 0.0
    %6274 = vmatpush1.xpose.msra.mxu0 0.0
    %6275 = vmatprep.subr.mxu0 0.0
    %6276 = vmatpush1.xpose.msra.mxu0 0.0
    %6277 = vmatprep.subr.mxu0 0.0
    %6278 = vmatpush1.xpose.msra.mxu0 0.0
    %6279 = vmatprep.subr.mxu0 0.0
    %6280 = vmatpush1.xpose.msra.mxu0 0.0
    %6281 = vmatprep.subr.mxu0 0.0
    %6282 = vmatpush1.xpose.msra.mxu0 0.0
    %6283 = vmatprep.subr.mxu0 0.0
    %6284 = vmatpush1.xpose.msra.mxu0 0.0
    %6285 = vmatprep.subr.mxu0 0.0
    %6286 = vmatpush1.xpose.msra.mxu0 0.0
    %6287 = vmatprep.subr.mxu0 0.0
    %6288 = vmatpush1.xpose.msra.mxu0 0.0
    %6289 = vmatprep.subr.mxu0 0.0
    %6290 = vmatpush1.xpose.msra.mxu0 0.0
    %6291 = vmatprep.subr.mxu0 0.0
    %6292 = vmatpush1.xpose.msra.mxu0 0.0
    %6293 = vmatprep.subr.mxu0 0.0
    %6294 = vmatpush1.xpose.msra.mxu0 0.0
    %6295 = vmatprep.subr.mxu0 0.0
    %6296 = vmatpush1.xpose.msra.mxu0 0.0
    %6297 = vmatprep.subr.mxu0 0.0
    %6298 = vmatpush1.xpose.msra.mxu0 0.0
    %6299 = vmatprep.mubr.f32.mxu0 0.0
    %6300 = vmatmul.mubr.f32.gmra.mrb[0].mxu0 %v6231
    %v6301 = vpop.f32.mrb[0].mxu0
    %v6302 = vadd.f32 0.0, %v6301
    %v6303 = vpop.f32.mrb[0].mxu0
    %6304 = vdwg.mxu0
    %v6305 = vmul.f32 %v6302, 0.35355338
    %v6306 = vsel %vm856, %v6305, -inf
    %6307 = vmax.xlane.f32.xlu0 %v6306
    %v6308 = vpop.xlane.xlu0 %6307
    %v6309 = vsub.f32 %v6305, %v6308
    %v6310 = vmul.f32 %v6309, 1.442695
    %v6311 = vpow.pop %v6310
    %v6312 = vsel %vm856, %v6311, 0.0
    %6313 = vadd.xlane.f32.xlu0 %v6312
    %v6314 = vpop.xlane.xlu0 %6313
    %v6315 = vrcp.pop %v6314
    %v6316 = vmul.f32 %v6311, %v6315
    %6317 = vrot.lane.b32.xlu0 %v6061, 120
    %v6318 = vpop.permute.xlu0 %6317
    %v6320 = vsel %vm868, %v6316, 0
    %v6322 = vsel %vm872, %v6318, 0
    %6324 = vmatprep.subr.mxu0 0.0
    %6325 = vmatpush1.msra.mxu0 %v6322
    %6326 = vmatprep.subr.mxu0 0.0
    %6327 = vmatpush1.msra.mxu0 0.0
    %6328 = vmatprep.subr.mxu0 0.0
    %6329 = vmatpush1.msra.mxu0 0.0
    %6330 = vmatprep.subr.mxu0 0.0
    %6331 = vmatpush1.msra.mxu0 0.0
    %6332 = vmatprep.subr.mxu0 0.0
    %6333 = vmatpush1.msra.mxu0 0.0
    %6334 = vmatprep.subr.mxu0 0.0
    %6335 = vmatpush1.msra.mxu0 0.0
    %6336 = vmatprep.subr.mxu0 0.0
    %6337 = vmatpush1.msra.mxu0 0.0
    %6338 = vmatprep.subr.mxu0 0.0
    %6339 = vmatpush1.msra.mxu0 0.0
    %6340 = vmatprep.subr.mxu0 0.0
    %6341 = vmatpush1.msra.mxu0 0.0
    %6342 = vmatprep.subr.mxu0 0.0
    %6343 = vmatpush1.msra.mxu0 0.0
    %6344 = vmatprep.subr.mxu0 0.0
    %6345 = vmatpush1.msra.mxu0 0.0
    %6346 = vmatprep.subr.mxu0 0.0
    %6347 = vmatpush1.msra.mxu0 0.0
    %6348 = vmatprep.subr.mxu0 0.0
    %6349 = vmatpush1.msra.mxu0 0.0
    %6350 = vmatprep.subr.mxu0 0.0
    %6351 = vmatpush1.msra.mxu0 0.0
    %6352 = vmatprep.subr.mxu0 0.0
    %6353 = vmatpush1.msra.mxu0 0.0
    %6354 = vmatprep.subr.mxu0 0.0
    %6355 = vmatpush1.msra.mxu0 0.0
    %6356 = vmatprep.subr.mxu0 0.0
    %6357 = vmatpush1.msra.mxu0 0.0
    %6358 = vmatprep.subr.mxu0 0.0
    %6359 = vmatpush1.msra.mxu0 0.0
    %6360 = vmatprep.subr.mxu0 0.0
    %6361 = vmatpush1.msra.mxu0 0.0
    %6362 = vmatprep.subr.mxu0 0.0
    %6363 = vmatpush1.msra.mxu0 0.0
    %6364 = vmatprep.subr.mxu0 0.0
    %6365 = vmatpush1.msra.mxu0 0.0
    %6366 = vmatprep.subr.mxu0 0.0
    %6367 = vmatpush1.msra.mxu0 0.0
    %6368 = vmatprep.subr.mxu0 0.0
    %6369 = vmatpush1.msra.mxu0 0.0
    %6370 = vmatprep.subr.mxu0 0.0
    %6371 = vmatpush1.msra.mxu0 0.0
    %6372 = vmatprep.subr.mxu0 0.0
    %6373 = vmatpush1.msra.mxu0 0.0
    %6374 = vmatprep.subr.mxu0 0.0
    %6375 = vmatpush1.msra.mxu0 0.0
    %6376 = vmatprep.subr.mxu0 0.0
    %6377 = vmatpush1.msra.mxu0 0.0
    %6378 = vmatprep.subr.mxu0 0.0
    %6379 = vmatpush1.msra.mxu0 0.0
    %6380 = vmatprep.subr.mxu0 0.0
    %6381 = vmatpush1.msra.mxu0 0.0
    %6382 = vmatprep.subr.mxu0 0.0
    %6383 = vmatpush1.msra.mxu0 0.0
    %6384 = vmatprep.subr.mxu0 0.0
    %6385 = vmatpush1.msra.mxu0 0.0
    %6386 = vmatprep.subr.mxu0 0.0
    %6387 = vmatpush1.msra.mxu0 0.0
    %6388 = vmatprep.mubr.f32.mxu0 0.0
    %6389 = vmatmul.mubr.f32.gmra.mrb[0].mxu0 %v6320
    %v6390 = vpop.f32.mrb[0].mxu0
    %v6391 = vadd.f32 0.0, %v6390
    %v6392 = vpop.f32.mrb[0].mxu0
    %6393 = vdwg.mxu0
    %6395 = vrot.lane.b32.xlu0 %v6391, 8
    %v6396 = vpop.permute.xlu0 %6395
    %6398 = vst.msk [vmem:[#allocation5] sm:$0xf] %vm1119, %v6396
    %6399 = vrot.lane.b32.xlu0 %v6059, 112
    %v6400 = vpop.permute.xlu0 %6399
    %6401 = vrot.lane.b32.xlu0 %v6060, 112
    %v6402 = vpop.permute.xlu0 %6401
    %v6403 = vsel %vm778, %v6400, 0
    %v6405 = vsel %vm778, %v6402, 0
    %6407 = vmatprep.subr.mxu0 0.0
    %6408 = vmatpush1.xpose.msra.mxu0 %v6405
    %6409 = vmatprep.subr.mxu0 0.0
    %6410 = vmatpush1.xpose.msra.mxu0 0.0
    %6411 = vmatprep.subr.mxu0 0.0
    %6412 = vmatpush1.xpose.msra.mxu0 0.0
    %6413 = vmatprep.subr.mxu0 0.0
    %6414 = vmatpush1.xpose.msra.mxu0 0.0
    %6415 = vmatprep.subr.mxu0 0.0
    %6416 = vmatpush1.xpose.msra.mxu0 0.0
    %6417 = vmatprep.subr.mxu0 0.0
    %6418 = vmatpush1.xpose.msra.mxu0 0.0
    %6419 = vmatprep.subr.mxu0 0.0
    %6420 = vmatpush1.xpose.msra.mxu0 0.0
    %6421 = vmatprep.subr.mxu0 0.0
    %6422 = vmatpush1.xpose.msra.mxu0 0.0
    %6423 = vmatprep.subr.mxu0 0.0
    %6424 = vmatpush1.xpose.msra.mxu0 0.0
    %6425 = vmatprep.subr.mxu0 0.0
    %6426 = vmatpush1.xpose.msra.mxu0 0.0
    %6427 = vmatprep.subr.mxu0 0.0
    %6428 = vmatpush1.xpose.msra.mxu0 0.0
    %6429 = vmatprep.subr.mxu0 0.0
    %6430 = vmatpush1.xpose.msra.mxu0 0.0
    %6431 = vmatprep.subr.mxu0 0.0
    %6432 = vmatpush1.xpose.msra.mxu0 0.0
    %6433 = vmatprep.subr.mxu0 0.0
    %6434 = vmatpush1.xpose.msra.mxu0 0.0
    %6435 = vmatprep.subr.mxu0 0.0
    %6436 = vmatpush1.xpose.msra.mxu0 0.0
    %6437 = vmatprep.subr.mxu0 0.0
    %6438 = vmatpush1.xpose.msra.mxu0 0.0
    %6439 = vmatprep.subr.mxu0 0.0
    %6440 = vmatpush1.xpose.msra.mxu0 0.0
    %6441 = vmatprep.subr.mxu0 0.0
    %6442 = vmatpush1.xpose.msra.mxu0 0.0
    %6443 = vmatprep.subr.mxu0 0.0
    %6444 = vmatpush1.xpose.msra.mxu0 0.0
    %6445 = vmatprep.subr.mxu0 0.0
    %6446 = vmatpush1.xpose.msra.mxu0 0.0
    %6447 = vmatprep.subr.mxu0 0.0
    %6448 = vmatpush1.xpose.msra.mxu0 0.0
    %6449 = vmatprep.subr.mxu0 0.0
    %6450 = vmatpush1.xpose.msra.mxu0 0.0
    %6451 = vmatprep.subr.mxu0 0.0
    %6452 = vmatpush1.xpose.msra.mxu0 0.0
    %6453 = vmatprep.subr.mxu0 0.0
    %6454 = vmatpush1.xpose.msra.mxu0 0.0
    %6455 = vmatprep.subr.mxu0 0.0
    %6456 = vmatpush1.xpose.msra.mxu0 0.0
    %6457 = vmatprep.subr.mxu0 0.0
    %6458 = vmatpush1.xpose.msra.mxu0 0.0
    %6459 = vmatprep.subr.mxu0 0.0
    %6460 = vmatpush1.xpose.msra.mxu0 0.0
    %6461 = vmatprep.subr.mxu0 0.0
    %6462 = vmatpush1.xpose.msra.mxu0 0.0
    %6463 = vmatprep.subr.mxu0 0.0
    %6464 = vmatpush1.xpose.msra.mxu0 0.0
    %6465 = vmatprep.subr.mxu0 0.0
    %6466 = vmatpush1.xpose.msra.mxu0 0.0
    %6467 = vmatprep.subr.mxu0 0.0
    %6468 = vmatpush1.xpose.msra.mxu0 0.0
    %6469 = vmatprep.subr.mxu0 0.0
    %6470 = vmatpush1.xpose.msra.mxu0 0.0
    %6471 = vmatprep.mubr.f32.mxu0 0.0
    %6472 = vmatmul.mubr.f32.gmra.mrb[0].mxu0 %v6403
    %v6473 = vpop.f32.mrb[0].mxu0
    %v6474 = vadd.f32 0.0, %v6473
    %v6475 = vpop.f32.mrb[0].mxu0
    %6476 = vdwg.mxu0
    %v6477 = vmul.f32 %v6474, 0.35355338
    %v6478 = vsel %vm856, %v6477, -inf
    %6479 = vmax.xlane.f32.xlu0 %v6478
    %v6480 = vpop.xlane.xlu0 %6479
    %v6481 = vsub.f32 %v6477, %v6480
    %v6482 = vmul.f32 %v6481, 1.442695
    %v6483 = vpow.pop %v6482
    %v6484 = vsel %vm856, %v6483, 0.0
    %6485 = vadd.xlane.f32.xlu0 %v6484
    %v6486 = vpop.xlane.xlu0 %6485
    %v6487 = vrcp.pop %v6486
    %v6488 = vmul.f32 %v6483, %v6487
    %6489 = vrot.lane.b32.xlu0 %v6061, 112
    %v6490 = vpop.permute.xlu0 %6489
    %v6492 = vsel %vm868, %v6488, 0
    %v6494 = vsel %vm872, %v6490, 0
    %6496 = vmatprep.subr.mxu0 0.0
    %6497 = vmatpush1.msra.mxu0 %v6494
    %6498 = vmatprep.subr.mxu0 0.0
    %6499 = vmatpush1.msra.mxu0 0.0
    %6500 = vmatprep.subr.mxu0 0.0
    %6501 = vmatpush1.msra.mxu0 0.0
    %6502 = vmatprep.subr.mxu0 0.0
    %6503 = vmatpush1.msra.mxu0 0.0
    %6504 = vmatprep.subr.mxu0 0.0
    %6505 = vmatpush1.msra.mxu0 0.0
    %6506 = vmatprep.subr.mxu0 0.0
    %6507 = vmatpush1.msra.mxu0 0.0
    %6508 = vmatprep.subr.mxu0 0.0
    %6509 = vmatpush1.msra.mxu0 0.0
    %6510 = vmatprep.subr.mxu0 0.0
    %6511 = vmatpush1.msra.mxu0 0.0
    %6512 = vmatprep.subr.mxu0 0.0
    %6513 = vmatpush1.msra.mxu0 0.0
    %6514 = vmatprep.subr.mxu0 0.0
    %6515 = vmatpush1.msra.mxu0 0.0
    %6516 = vmatprep.subr.mxu0 0.0
    %6517 = vmatpush1.msra.mxu0 0.0
    %6518 = vmatprep.subr.mxu0 0.0
    %6519 = vmatpush1.msra.mxu0 0.0
    %6520 = vmatprep.subr.mxu0 0.0
    %6521 = vmatpush1.msra.mxu0 0.0
    %6522 = vmatprep.subr.mxu0 0.0
    %6523 = vmatpush1.msra.mxu0 0.0
    %6524 = vmatprep.subr.mxu0 0.0
    %6525 = vmatpush1.msra.mxu0 0.0
    %6526 = vmatprep.subr.mxu0 0.0
    %6527 = vmatpush1.msra.mxu0 0.0
    %6528 = vmatprep.subr.mxu0 0.0
    %6529 = vmatpush1.msra.mxu0 0.0
    %6530 = vmatprep.subr.mxu0 0.0
    %6531 = vmatpush1.msra.mxu0 0.0
    %6532 = vmatprep.subr.mxu0 0.0
    %6533 = vmatpush1.msra.mxu0 0.0
    %6534 = vmatprep.subr.mxu0 0.0
    %6535 = vmatpush1.msra.mxu0 0.0
    %6536 = vmatprep.subr.mxu0 0.0
    %6537 = vmatpush1.msra.mxu0 0.0
    %6538 = vmatprep.subr.mxu0 0.0
    %6539 = vmatpush1.msra.mxu0 0.0
    %6540 = vmatprep.subr.mxu0 0.0
    %6541 = vmatpush1.msra.mxu0 0.0
    %6542 = vmatprep.subr.mxu0 0.0
    %6543 = vmatpush1.msra.mxu0 0.0
    %6544 = vmatprep.subr.mxu0 0.0
    %6545 = vmatpush1.msra.mxu0 0.0
    %6546 = vmatprep.subr.mxu0 0.0
    %6547 = vmatpush1.msra.mxu0 0.0
    %6548 = vmatprep.subr.mxu0 0.0
    %6549 = vmatpush1.msra.mxu0 0.0
    %6550 = vmatprep.subr.mxu0 0.0
    %6551 = vmatpush1.msra.mxu0 0.0
    %6552 = vmatprep.subr.mxu0 0.0
    %6553 = vmatpush1.msra.mxu0 0.0
    %6554 = vmatprep.subr.mxu0 0.0
    %6555 = vmatpush1.msra.mxu0 0.0
    %6556 = vmatprep.subr.mxu0 0.0
    %6557 = vmatpush1.msra.mxu0 0.0
    %6558 = vmatprep.subr.mxu0 0.0
    %6559 = vmatpush1.msra.mxu0 0.0
    %6560 = vmatprep.mubr.f32.mxu0 0.0
    %6561 = vmatmul.mubr.f32.gmra.mrb[0].mxu0 %v6492
    %v6562 = vpop.f32.mrb[0].mxu0
    %v6563 = vadd.f32 0.0, %v6562
    %v6564 = vpop.f32.mrb[0].mxu0
    %6565 = vdwg.mxu0
    %6567 = vrot.lane.b32.xlu0 %v6563, 16
    %v6568 = vpop.permute.xlu0 %6567
    %6570 = vst.msk [vmem:[#allocation5] sm:$0xf] %vm1292, %v6568
    %6571 = vrot.lane.b32.xlu0 %v6059, 104
    %v6572 = vpop.permute.xlu0 %6571
    %6573 = vrot.lane.b32.xlu0 %v6060, 104
    %v6574 = vpop.permute.xlu0 %6573
    %v6575 = vsel %vm778, %v6572, 0
    %v6577 = vsel %vm778, %v6574, 0
    %6579 = vmatprep.subr.mxu0 0.0
    %6580 = vmatpush1.xpose.msra.mxu0 %v6577
    %6581 = vmatprep.subr.mxu0 0.0
    %6582 = vmatpush1.xpose.msra.mxu0 0.0
    %6583 = vmatprep.subr.mxu0 0.0
    %6584 = vmatpush1.xpose.msra.mxu0 0.0
    %6585 = vmatprep.subr.mxu0 0.0
    %6586 = vmatpush1.xpose.msra.mxu0 0.0
    %6587 = vmatprep.subr.mxu0 0.0
    %6588 = vmatpush1.xpose.msra.mxu0 0.0
    %6589 = vmatprep.subr.mxu0 0.0
    %6590 = vmatpush1.xpose.msra.mxu0 0.0
    %6591 = vmatprep.subr.mxu0 0.0
    %6592 = vmatpush1.xpose.msra.mxu0 0.0
    %6593 = vmatprep.subr.mxu0 0.0
    %6594 = vmatpush1.xpose.msra.mxu0 0.0
    %6595 = vmatprep.subr.mxu0 0.0
    %6596 = vmatpush1.xpose.msra.mxu0 0.0
    %6597 = vmatprep.subr.mxu0 0.0
    %6598 = vmatpush1.xpose.msra.mxu0 0.0
    %6599 = vmatprep.subr.mxu0 0.0
    %6600 = vmatpush1.xpose.msra.mxu0 0.0
    %6601 = vmatprep.subr.mxu0 0.0
    %6602 = vmatpush1.xpose.msra.mxu0 0.0
    %6603 = vmatprep.subr.mxu0 0.0
    %6604 = vmatpush1.xpose.msra.mxu0 0.0
    %6605 = vmatprep.subr.mxu0 0.0
    %6606 = vmatpush1.xpose.msra.mxu0 0.0
    %6607 = vmatprep.subr.mxu0 0.0
    %6608 = vmatpush1.xpose.msra.mxu0 0.0
    %6609 = vmatprep.subr.mxu0 0.0
    %6610 = vmatpush1.xpose.msra.mxu0 0.0
    %6611 = vmatprep.subr.mxu0 0.0
    %6612 = vmatpush1.xpose.msra.mxu0 0.0
    %6613 = vmatprep.subr.mxu0 0.0
    %6614 = vmatpush1.xpose.msra.mxu0 0.0
    %6615 = vmatprep.subr.mxu0 0.0
    %6616 = vmatpush1.xpose.msra.mxu0 0.0
    %6617 = vmatprep.subr.mxu0 0.0
    %6618 = vmatpush1.xpose.msra.mxu0 0.0
    %6619 = vmatprep.subr.mxu0 0.0
    %6620 = vmatpush1.xpose.msra.mxu0 0.0
    %6621 = vmatprep.subr.mxu0 0.0
    %6622 = vmatpush1.xpose.msra.mxu0 0.0
    %6623 = vmatprep.subr.mxu0 0.0
    %6624 = vmatpush1.xpose.msra.mxu0 0.0
    %6625 = vmatprep.subr.mxu0 0.0
    %6626 = vmatpush1.xpose.msra.mxu0 0.0
    %6627 = vmatprep.subr.mxu0 0.0
    %6628 = vmatpush1.xpose.msra.mxu0 0.0
    %6629 = vmatprep.subr.mxu0 0.0
    %6630 = vmatpush1.xpose.msra.mxu0 0.0
    %6631 = vmatprep.subr.mxu0 0.0
    %6632 = vmatpush1.xpose.msra.mxu0 0.0
    %6633 = vmatprep.subr.mxu0 0.0
    %6634 = vmatpush1.xpose.msra.mxu0 0.0
    %6635 = vmatprep.subr.mxu0 0.0
    %6636 = vmatpush1.xpose.msra.mxu0 0.0
    %6637 = vmatprep.subr.mxu0 0.0
    %6638 = vmatpush1.xpose.msra.mxu0 0.0
    %6639 = vmatprep.subr.mxu0 0.0
    %6640 = vmatpush1.xpose.msra.mxu0 0.0
    %6641 = vmatprep.subr.mxu0 0.0
    %6642 = vmatpush1.xpose.msra.mxu0 0.0
    %6643 = vmatprep.mubr.f32.mxu0 0.0
    %6644 = vmatmul.mubr.f32.gmra.mrb[0].mxu0 %v6575
    %v6645 = vpop.f32.mrb[0].mxu0
    %v6646 = vadd.f32 0.0, %v6645
    %v6647 = vpop.f32.mrb[0].mxu0
    %6648 = vdwg.mxu0
    %v6649 = vmul.f32 %v6646, 0.35355338
    %v6650 = vsel %vm856, %v6649, -inf
    %6651 = vmax.xlane.f32.xlu0 %v6650
    %v6652 = vpop.xlane.xlu0 %6651
    %v6653 = vsub.f32 %v6649, %v6652
    %v6654 = vmul.f32 %v6653, 1.442695
    %v6655 = vpow.pop %v6654
    %v6656 = vsel %vm856, %v6655, 0.0
    %6657 = vadd.xlane.f32.xlu0 %v6656
    %v6658 = vpop.xlane.xlu0 %6657
    %v6659 = vrcp.pop %v6658
    %v6660 = vmul.f32 %v6655, %v6659
    %6661 = vrot.lane.b32.xlu0 %v6061, 104
    %v6662 = vpop.permute.xlu0 %6661
    %v6664 = vsel %vm868, %v6660, 0
    %v6666 = vsel %vm872, %v6662, 0
    %6668 = vmatprep.subr.mxu0 0.0
    %6669 = vmatpush1.msra.mxu0 %v6666
    %6670 = vmatprep.subr.mxu0 0.0
    %6671 = vmatpush1.msra.mxu0 0.0
    %6672 = vmatprep.subr.mxu0 0.0
    %6673 = vmatpush1.msra.mxu0 0.0
    %6674 = vmatprep.subr.mxu0 0.0
    %6675 = vmatpush1.msra.mxu0 0.0
    %6676 = vmatprep.subr.mxu0 0.0
    %6677 = vmatpush1.msra.mxu0 0.0
    %6678 = vmatprep.subr.mxu0 0.0
    %6679 = vmatpush1.msra.mxu0 0.0
    %6680 = vmatprep.subr.mxu0 0.0
    %6681 = vmatpush1.msra.mxu0 0.0
    %6682 = vmatprep.subr.mxu0 0.0
    %6683 = vmatpush1.msra.mxu0 0.0
    %6684 = vmatprep.subr.mxu0 0.0
    %6685 = vmatpush1.msra.mxu0 0.0
    %6686 = vmatprep.subr.mxu0 0.0
    %6687 = vmatpush1.msra.mxu0 0.0
    %6688 = vmatprep.subr.mxu0 0.0
    %6689 = vmatpush1.msra.mxu0 0.0
    %6690 = vmatprep.subr.mxu0 0.0
    %6691 = vmatpush1.msra.mxu0 0.0
    %6692 = vmatprep.subr.mxu0 0.0
    %6693 = vmatpush1.msra.mxu0 0.0
    %6694 = vmatprep.subr.mxu0 0.0
    %6695 = vmatpush1.msra.mxu0 0.0
    %6696 = vmatprep.subr.mxu0 0.0
    %6697 = vmatpush1.msra.mxu0 0.0
    %6698 = vmatprep.subr.mxu0 0.0
    %6699 = vmatpush1.msra.mxu0 0.0
    %6700 = vmatprep.subr.mxu0 0.0
    %6701 = vmatpush1.msra.mxu0 0.0
    %6702 = vmatprep.subr.mxu0 0.0
    %6703 = vmatpush1.msra.mxu0 0.0
    %6704 = vmatprep.subr.mxu0 0.0
    %6705 = vmatpush1.msra.mxu0 0.0
    %6706 = vmatprep.subr.mxu0 0.0
    %6707 = vmatpush1.msra.mxu0 0.0
    %6708 = vmatprep.subr.mxu0 0.0
    %6709 = vmatpush1.msra.mxu0 0.0
    %6710 = vmatprep.subr.mxu0 0.0
    %6711 = vmatpush1.msra.mxu0 0.0
    %6712 = vmatprep.subr.mxu0 0.0
    %6713 = vmatpush1.msra.mxu0 0.0
    %6714 = vmatprep.subr.mxu0 0.0
    %6715 = vmatpush1.msra.mxu0 0.0
    %6716 = vmatprep.subr.mxu0 0.0
    %6717 = vmatpush1.msra.mxu0 0.0
    %6718 = vmatprep.subr.mxu0 0.0
    %6719 = vmatpush1.msra.mxu0 0.0
    %6720 = vmatprep.subr.mxu0 0.0
    %6721 = vmatpush1.msra.mxu0 0.0
    %6722 = vmatprep.subr.mxu0 0.0
    %6723 = vmatpush1.msra.mxu0 0.0
    %6724 = vmatprep.subr.mxu0 0.0
    %6725 = vmatpush1.msra.mxu0 0.0
    %6726 = vmatprep.subr.mxu0 0.0
    %6727 = vmatpush1.msra.mxu0 0.0
    %6728 = vmatprep.subr.mxu0 0.0
    %6729 = vmatpush1.msra.mxu0 0.0
    %6730 = vmatprep.subr.mxu0 0.0
    %6731 = vmatpush1.msra.mxu0 0.0
    %6732 = vmatprep.mubr.f32.mxu0 0.0
    %6733 = vmatmul.mubr.f32.gmra.mrb[0].mxu0 %v6664
    %v6734 = vpop.f32.mrb[0].mxu0
    %v6735 = vadd.f32 0.0, %v6734
    %v6736 = vpop.f32.mrb[0].mxu0
    %6737 = vdwg.mxu0
    %6739 = vrot.lane.b32.xlu0 %v6735, 24
    %v6740 = vpop.permute.xlu0 %6739
    %6742 = vst.msk [vmem:[#allocation5] sm:$0xf] %vm1465, %v6740
    %v6743 = vld [vmem:[%s1467] sm:$0xf]
    %v6744 = vld [vmem:[%s1469] sm:$0xf]
    %v6745 = vld [vmem:[%s1471] sm:$0xf]
    %v6747 = vsel %vm778, %v6743, 0
    %v6750 = vsel %vm778, %v6744, 0
    %6752 = vmatprep.subr.mxu0 0.0
    %6753 = vmatpush1.xpose.msra.mxu0 %v6750
    %6754 = vmatprep.subr.mxu0 0.0
    %6755 = vmatpush1.xpose.msra.mxu0 0.0
    %6756 = vmatprep.subr.mxu0 0.0
    %6757 = vmatpush1.xpose.msra.mxu0 0.0
    %6758 = vmatprep.subr.mxu0 0.0
    %6759 = vmatpush1.xpose.msra.mxu0 0.0
    %6760 = vmatprep.subr.mxu0 0.0
    %6761 = vmatpush1.xpose.msra.mxu0 0.0
    %6762 = vmatprep.subr.mxu0 0.0
    %6763 = vmatpush1.xpose.msra.mxu0 0.0
    %6764 = vmatprep.subr.mxu0 0.0
    %6765 = vmatpush1.xpose.msra.mxu0 0.0
    %6766 = vmatprep.subr.mxu0 0.0
    %6767 = vmatpush1.xpose.msra.mxu0 0.0
    %6768 = vmatprep.subr.mxu0 0.0
    %6769 = vmatpush1.xpose.msra.mxu0 0.0
    %6770 = vmatprep.subr.mxu0 0.0
    %6771 = vmatpush1.xpose.msra.mxu0 0.0
    %6772 = vmatprep.subr.mxu0 0.0
    %6773 = vmatpush1.xpose.msra.mxu0 0.0
    %6774 = vmatprep.subr.mxu0 0.0
    %6775 = vmatpush1.xpose.msra.mxu0 0.0
    %6776 = vmatprep.subr.mxu0 0.0
    %6777 = vmatpush1.xpose.msra.mxu0 0.0
    %6778 = vmatprep.subr.mxu0 0.0
    %6779 = vmatpush1.xpose.msra.mxu0 0.0
    %6780 = vmatprep.subr.mxu0 0.0
    %6781 = vmatpush1.xpose.msra.mxu0 0.0
    %6782 = vmatprep.subr.mxu0 0.0
    %6783 = vmatpush1.xpose.msra.mxu0 0.0
    %6784 = vmatprep.subr.mxu0 0.0
    %6785 = vmatpush1.xpose.msra.mxu0 0.0
    %6786 = vmatprep.subr.mxu0 0.0
    %6787 = vmatpush1.xpose.msra.mxu0 0.0
    %6788 = vmatprep.subr.mxu0 0.0
    %6789 = vmatpush1.xpose.msra.mxu0 0.0
    %6790 = vmatprep.subr.mxu0 0.0
    %6791 = vmatpush1.xpose.msra.mxu0 0.0
    %6792 = vmatprep.subr.mxu0 0.0
    %6793 = vmatpush1.xpose.msra.mxu0 0.0
    %6794 = vmatprep.subr.mxu0 0.0
    %6795 = vmatpush1.xpose.msra.mxu0 0.0
    %6796 = vmatprep.subr.mxu0 0.0
    %6797 = vmatpush1.xpose.msra.mxu0 0.0
    %6798 = vmatprep.subr.mxu0 0.0
    %6799 = vmatpush1.xpose.msra.mxu0 0.0
    %6800 = vmatprep.subr.mxu0 0.0
    %6801 = vmatpush1.xpose.msra.mxu0 0.0
    %6802 = vmatprep.subr.mxu0 0.0
    %6803 = vmatpush1.xpose.msra.mxu0 0.0
    %6804 = vmatprep.subr.mxu0 0.0
    %6805 = vmatpush1.xpose.msra.mxu0 0.0
    %6806 = vmatprep.subr.mxu0 0.0
    %6807 = vmatpush1.xpose.msra.mxu0 0.0
    %6808 = vmatprep.subr.mxu0 0.0
    %6809 = vmatpush1.xpose.msra.mxu0 0.0
    %6810 = vmatprep.subr.mxu0 0.0
    %6811 = vmatpush1.xpose.msra.mxu0 0.0
    %6812 = vmatprep.subr.mxu0 0.0
    %6813 = vmatpush1.xpose.msra.mxu0 0.0
    %6814 = vmatprep.subr.mxu0 0.0
    %6815 = vmatpush1.xpose.msra.mxu0 0.0
    %6816 = vmatprep.mubr.f32.mxu0 0.0
    %6817 = vmatmul.mubr.f32.gmra.mrb[0].mxu0 %v6747
    %v6818 = vpop.f32.mrb[0].mxu0
    %v6819 = vadd.f32 0.0, %v6818
    %v6820 = vpop.f32.mrb[0].mxu0
    %6821 = vdwg.mxu0
    %v6822 = vmul.f32 %v6819, 0.35355338
    %v6823 = vsel %vm856, %v6822, -inf
    %6824 = vmax.xlane.f32.xlu0 %v6823
    %v6825 = vpop.xlane.xlu0 %6824
    %v6826 = vsub.f32 %v6822, %v6825
    %v6827 = vmul.f32 %v6826, 1.442695
    %v6828 = vpow.pop %v6827
    %v6829 = vsel %vm856, %v6828, 0.0
    %6830 = vadd.xlane.f32.xlu0 %v6829
    %v6831 = vpop.xlane.xlu0 %6830
    %v6832 = vrcp.pop %v6831
    %v6833 = vmul.f32 %v6828, %v6832
    %v6835 = vsel %vm868, %v6833, 0
    %v6838 = vsel %vm872, %v6745, 0
    %6840 = vmatprep.subr.mxu0 0.0
    %6841 = vmatpush1.msra.mxu0 %v6838
    %6842 = vmatprep.subr.mxu0 0.0
    %6843 = vmatpush1.msra.mxu0 0.0
    %6844 = vmatprep.subr.mxu0 0.0
    %6845 = vmatpush1.msra.mxu0 0.0
    %6846 = vmatprep.subr.mxu0 0.0
    %6847 = vmatpush1.msra.mxu0 0.0
    %6848 = vmatprep.subr.mxu0 0.0
    %6849 = vmatpush1.msra.mxu0 0.0
    %6850 = vmatprep.subr.mxu0 0.0
    %6851 = vmatpush1.msra.mxu0 0.0
    %6852 = vmatprep.subr.mxu0 0.0
    %6853 = vmatpush1.msra.mxu0 0.0
    %6854 = vmatprep.subr.mxu0 0.0
    %6855 = vmatpush1.msra.mxu0 0.0
    %6856 = vmatprep.subr.mxu0 0.0
    %6857 = vmatpush1.msra.mxu0 0.0
    %6858 = vmatprep.subr.mxu0 0.0
    %6859 = vmatpush1.msra.mxu0 0.0
    %6860 = vmatprep.subr.mxu0 0.0
    %6861 = vmatpush1.msra.mxu0 0.0
    %6862 = vmatprep.subr.mxu0 0.0
    %6863 = vmatpush1.msra.mxu0 0.0
    %6864 = vmatprep.subr.mxu0 0.0
    %6865 = vmatpush1.msra.mxu0 0.0
    %6866 = vmatprep.subr.mxu0 0.0
    %6867 = vmatpush1.msra.mxu0 0.0
    %6868 = vmatprep.subr.mxu0 0.0
    %6869 = vmatpush1.msra.mxu0 0.0
    %6870 = vmatprep.subr.mxu0 0.0
    %6871 = vmatpush1.msra.mxu0 0.0
    %6872 = vmatprep.subr.mxu0 0.0
    %6873 = vmatpush1.msra.mxu0 0.0
    %6874 = vmatprep.subr.mxu0 0.0
    %6875 = vmatpush1.msra.mxu0 0.0
    %6876 = vmatprep.subr.mxu0 0.0
    %6877 = vmatpush1.msra.mxu0 0.0
    %6878 = vmatprep.subr.mxu0 0.0
    %6879 = vmatpush1.msra.mxu0 0.0
    %6880 = vmatprep.subr.mxu0 0.0
    %6881 = vmatpush1.msra.mxu0 0.0
    %6882 = vmatprep.subr.mxu0 0.0
    %6883 = vmatpush1.msra.mxu0 0.0
    %6884 = vmatprep.subr.mxu0 0.0
    %6885 = vmatpush1.msra.mxu0 0.0
    %6886 = vmatprep.subr.mxu0 0.0
    %6887 = vmatpush1.msra.mxu0 0.0
    %6888 = vmatprep.subr.mxu0 0.0
    %6889 = vmatpush1.msra.mxu0 0.0
    %6890 = vmatprep.subr.mxu0 0.0
    %6891 = vmatpush1.msra.mxu0 0.0
    %6892 = vmatprep.subr.mxu0 0.0
    %6893 = vmatpush1.msra.mxu0 0.0
    %6894 = vmatprep.subr.mxu0 0.0
    %6895 = vmatpush1.msra.mxu0 0.0
    %6896 = vmatprep.subr.mxu0 0.0
    %6897 = vmatpush1.msra.mxu0 0.0
    %6898 = vmatprep.subr.mxu0 0.0
    %6899 = vmatpush1.msra.mxu0 0.0
    %6900 = vmatprep.subr.mxu0 0.0
    %6901 = vmatpush1.msra.mxu0 0.0
    %6902 = vmatprep.subr.mxu0 0.0
    %6903 = vmatpush1.msra.mxu0 0.0
    %6904 = vmatprep.mubr.f32.mxu0 0.0
    %6905 = vmatmul.mubr.f32.gmra.mrb[0].mxu0 %v6835
    %v6906 = vpop.f32.mrb[0].mxu0
    %v6907 = vadd.f32 0.0, %v6906
    %v6908 = vpop.f32.mrb[0].mxu0
    %6909 = vdwg.mxu0
    %6910 = vst.msk [vmem:[%s1637] sm:$0xf] %vm946, %v6907
    %6911 = vrot.lane.b32.xlu0 %v6743, 120
    %v6912 = vpop.permute.xlu0 %6911
    %6913 = vrot.lane.b32.xlu0 %v6744, 120
    %v6914 = vpop.permute.xlu0 %6913
    %v6915 = vsel %vm778, %v6912, 0
    %v6917 = vsel %vm778, %v6914, 0
    %6919 = vmatprep.subr.mxu0 0.0
    %6920 = vmatpush1.xpose.msra.mxu0 %v6917
    %6921 = vmatprep.subr.mxu0 0.0
    %6922 = vmatpush1.xpose.msra.mxu0 0.0
    %6923 = vmatprep.subr.mxu0 0.0
    %6924 = vmatpush1.xpose.msra.mxu0 0.0
    %6925 = vmatprep.subr.mxu0 0.0
    %6926 = vmatpush1.xpose.msra.mxu0 0.0
    %6927 = vmatprep.subr.mxu0 0.0
    %6928 = vmatpush1.xpose.msra.mxu0 0.0
    %6929 = vmatprep.subr.mxu0 0.0
    %6930 = vmatpush1.xpose.msra.mxu0 0.0
    %6931 = vmatprep.subr.mxu0 0.0
    %6932 = vmatpush1.xpose.msra.mxu0 0.0
    %6933 = vmatprep.subr.mxu0 0.0
    %6934 = vmatpush1.xpose.msra.mxu0 0.0
    %6935 = vmatprep.subr.mxu0 0.0
    %6936 = vmatpush1.xpose.msra.mxu0 0.0
    %6937 = vmatprep.subr.mxu0 0.0
    %6938 = vmatpush1.xpose.msra.mxu0 0.0
    %6939 = vmatprep.subr.mxu0 0.0
    %6940 = vmatpush1.xpose.msra.mxu0 0.0
    %6941 = vmatprep.subr.mxu0 0.0
    %6942 = vmatpush1.xpose.msra.mxu0 0.0
    %6943 = vmatprep.subr.mxu0 0.0
    %6944 = vmatpush1.xpose.msra.mxu0 0.0
    %6945 = vmatprep.subr.mxu0 0.0
    %6946 = vmatpush1.xpose.msra.mxu0 0.0
    %6947 = vmatprep.subr.mxu0 0.0
    %6948 = vmatpush1.xpose.msra.mxu0 0.0
    %6949 = vmatprep.subr.mxu0 0.0
    %6950 = vmatpush1.xpose.msra.mxu0 0.0
    %6951 = vmatprep.subr.mxu0 0.0
    %6952 = vmatpush1.xpose.msra.mxu0 0.0
    %6953 = vmatprep.subr.mxu0 0.0
    %6954 = vmatpush1.xpose.msra.mxu0 0.0
    %6955 = vmatprep.subr.mxu0 0.0
    %6956 = vmatpush1.xpose.msra.mxu0 0.0
    %6957 = vmatprep.subr.mxu0 0.0
    %6958 = vmatpush1.xpose.msra.mxu0 0.0
    %6959 = vmatprep.subr.mxu0 0.0
    %6960 = vmatpush1.xpose.msra.mxu0 0.0
    %6961 = vmatprep.subr.mxu0 0.0
    %6962 = vmatpush1.xpose.msra.mxu0 0.0
    %6963 = vmatprep.subr.mxu0 0.0
    %6964 = vmatpush1.xpose.msra.mxu0 0.0
    %6965 = vmatprep.subr.mxu0 0.0
    %6966 = vmatpush1.xpose.msra.mxu0 0.0
    %6967 = vmatprep.subr.mxu0 0.0
    %6968 = vmatpush1.xpose.msra.mxu0 0.0
    %6969 = vmatprep.subr.mxu0 0.0
    %6970 = vmatpush1.xpose.msra.mxu0 0.0
    %6971 = vmatprep.subr.mxu0 0.0
    %6972 = vmatpush1.xpose.msra.mxu0 0.0
    %6973 = vmatprep.subr.mxu0 0.0
    %6974 = vmatpush1.xpose.msra.mxu0 0.0
    %6975 = vmatprep.subr.mxu0 0.0
    %6976 = vmatpush1.xpose.msra.mxu0 0.0
    %6977 = vmatprep.subr.mxu0 0.0
    %6978 = vmatpush1.xpose.msra.mxu0 0.0
    %6979 = vmatprep.subr.mxu0 0.0
    %6980 = vmatpush1.xpose.msra.mxu0 0.0
    %6981 = vmatprep.subr.mxu0 0.0
    %6982 = vmatpush1.xpose.msra.mxu0 0.0
    %6983 = vmatprep.mubr.f32.mxu0 0.0
    %6984 = vmatmul.mubr.f32.gmra.mrb[0].mxu0 %v6915
    %v6985 = vpop.f32.mrb[0].mxu0
    %v6986 = vadd.f32 0.0, %v6985
    %v6987 = vpop.f32.mrb[0].mxu0
    %6988 = vdwg.mxu0
    %v6989 = vmul.f32 %v6986, 0.35355338
    %v6990 = vsel %vm856, %v6989, -inf
    %6991 = vmax.xlane.f32.xlu0 %v6990
    %v6992 = vpop.xlane.xlu0 %6991
    %v6993 = vsub.f32 %v6989, %v6992
    %v6994 = vmul.f32 %v6993, 1.442695
    %v6995 = vpow.pop %v6994
    %v6996 = vsel %vm856, %v6995, 0.0
    %6997 = vadd.xlane.f32.xlu0 %v6996
    %v6998 = vpop.xlane.xlu0 %6997
    %v6999 = vrcp.pop %v6998
    %v7000 = vmul.f32 %v6995, %v6999
    %7001 = vrot.lane.b32.xlu0 %v6745, 120
    %v7002 = vpop.permute.xlu0 %7001
    %v7004 = vsel %vm868, %v7000, 0
    %v7006 = vsel %vm872, %v7002, 0
    %7008 = vmatprep.subr.mxu0 0.0
    %7009 = vmatpush1.msra.mxu0 %v7006
    %7010 = vmatprep.subr.mxu0 0.0
    %7011 = vmatpush1.msra.mxu0 0.0
    %7012 = vmatprep.subr.mxu0 0.0
    %7013 = vmatpush1.msra.mxu0 0.0
    %7014 = vmatprep.subr.mxu0 0.0
    %7015 = vmatpush1.msra.mxu0 0.0
    %7016 = vmatprep.subr.mxu0 0.0
    %7017 = vmatpush1.msra.mxu0 0.0
    %7018 = vmatprep.subr.mxu0 0.0
    %7019 = vmatpush1.msra.mxu0 0.0
    %7020 = vmatprep.subr.mxu0 0.0
    %7021 = vmatpush1.msra.mxu0 0.0
    %7022 = vmatprep.subr.mxu0 0.0
    %7023 = vmatpush1.msra.mxu0 0.0
    %7024 = vmatprep.subr.mxu0 0.0
    %7025 = vmatpush1.msra.mxu0 0.0
    %7026 = vmatprep.subr.mxu0 0.0
    %7027 = vmatpush1.msra.mxu0 0.0
    %7028 = vmatprep.subr.mxu0 0.0
    %7029 = vmatpush1.msra.mxu0 0.0
    %7030 = vmatprep.subr.mxu0 0.0
    %7031 = vmatpush1.msra.mxu0 0.0
    %7032 = vmatprep.subr.mxu0 0.0
    %7033 = vmatpush1.msra.mxu0 0.0
    %7034 = vmatprep.subr.mxu0 0.0
    %7035 = vmatpush1.msra.mxu0 0.0
    %7036 = vmatprep.subr.mxu0 0.0
    %7037 = vmatpush1.msra.mxu0 0.0
    %7038 = vmatprep.subr.mxu0 0.0
    %7039 = vmatpush1.msra.mxu0 0.0
    %7040 = vmatprep.subr.mxu0 0.0
    %7041 = vmatpush1.msra.mxu0 0.0
    %7042 = vmatprep.subr.mxu0 0.0
    %7043 = vmatpush1.msra.mxu0 0.0
    %7044 = vmatprep.subr.mxu0 0.0
    %7045 = vmatpush1.msra.mxu0 0.0
    %7046 = vmatprep.subr.mxu0 0.0
    %7047 = vmatpush1.msra.mxu0 0.0
    %7048 = vmatprep.subr.mxu0 0.0
    %7049 = vmatpush1.msra.mxu0 0.0
    %7050 = vmatprep.subr.mxu0 0.0
    %7051 = vmatpush1.msra.mxu0 0.0
    %7052 = vmatprep.subr.mxu0 0.0
    %7053 = vmatpush1.msra.mxu0 0.0
    %7054 = vmatprep.subr.mxu0 0.0
    %7055 = vmatpush1.msra.mxu0 0.0
    %7056 = vmatprep.subr.mxu0 0.0
    %7057 = vmatpush1.msra.mxu0 0.0
    %7058 = vmatprep.subr.mxu0 0.0
    %7059 = vmatpush1.msra.mxu0 0.0
    %7060 = vmatprep.subr.mxu0 0.0
    %7061 = vmatpush1.msra.mxu0 0.0
    %7062 = vmatprep.subr.mxu0 0.0
    %7063 = vmatpush1.msra.mxu0 0.0
    %7064 = vmatprep.subr.mxu0 0.0
    %7065 = vmatpush1.msra.mxu0 0.0
    %7066 = vmatprep.subr.mxu0 0.0
    %7067 = vmatpush1.msra.mxu0 0.0
    %7068 = vmatprep.subr.mxu0 0.0
    %7069 = vmatpush1.msra.mxu0 0.0
    %7070 = vmatprep.subr.mxu0 0.0
    %7071 = vmatpush1.msra.mxu0 0.0
    %7072 = vmatprep.mubr.f32.mxu0 0.0
    %7073 = vmatmul.mubr.f32.gmra.mrb[0].mxu0 %v7004
    %v7074 = vpop.f32.mrb[0].mxu0
    %v7075 = vadd.f32 0.0, %v7074
    %v7076 = vpop.f32.mrb[0].mxu0
    %7077 = vdwg.mxu0
    %7079 = vrot.lane.b32.xlu0 %v7075, 8
    %v7080 = vpop.permute.xlu0 %7079
    %7082 = vst.msk [vmem:[%s1637] sm:$0xf] %vm1119, %v7080
    %7083 = vrot.lane.b32.xlu0 %v6743, 112
    %v7084 = vpop.permute.xlu0 %7083
    %7085 = vrot.lane.b32.xlu0 %v6744, 112
    %v7086 = vpop.permute.xlu0 %7085
    %v7087 = vsel %vm778, %v7084, 0
    %v7089 = vsel %vm778, %v7086, 0
    %7091 = vmatprep.subr.mxu0 0.0
    %7092 = vmatpush1.xpose.msra.mxu0 %v7089
    %7093 = vmatprep.subr.mxu0 0.0
    %7094 = vmatpush1.xpose.msra.mxu0 0.0
    %7095 = vmatprep.subr.mxu0 0.0
    %7096 = vmatpush1.xpose.msra.mxu0 0.0
    %7097 = vmatprep.subr.mxu0 0.0
    %7098 = vmatpush1.xpose.msra.mxu0 0.0
    %7099 = vmatprep.subr.mxu0 0.0
    %7100 = vmatpush1.xpose.msra.mxu0 0.0
    %7101 = vmatprep.subr.mxu0 0.0
    %7102 = vmatpush1.xpose.msra.mxu0 0.0
    %7103 = vmatprep.subr.mxu0 0.0
    %7104 = vmatpush1.xpose.msra.mxu0 0.0
    %7105 = vmatprep.subr.mxu0 0.0
    %7106 = vmatpush1.xpose.msra.mxu0 0.0
    %7107 = vmatprep.subr.mxu0 0.0
    %7108 = vmatpush1.xpose.msra.mxu0 0.0
    %7109 = vmatprep.subr.mxu0 0.0
    %7110 = vmatpush1.xpose.msra.mxu0 0.0
    %7111 = vmatprep.subr.mxu0 0.0
    %7112 = vmatpush1.xpose.msra.mxu0 0.0
    %7113 = vmatprep.subr.mxu0 0.0
    %7114 = vmatpush1.xpose.msra.mxu0 0.0
    %7115 = vmatprep.subr.mxu0 0.0
    %7116 = vmatpush1.xpose.msra.mxu0 0.0
    %7117 = vmatprep.subr.mxu0 0.0
    %7118 = vmatpush1.xpose.msra.mxu0 0.0
    %7119 = vmatprep.subr.mxu0 0.0
    %7120 = vmatpush1.xpose.msra.mxu0 0.0
    %7121 = vmatprep.subr.mxu0 0.0
    %7122 = vmatpush1.xpose.msra.mxu0 0.0
    %7123 = vmatprep.subr.mxu0 0.0
    %7124 = vmatpush1.xpose.msra.mxu0 0.0
    %7125 = vmatprep.subr.mxu0 0.0
    %7126 = vmatpush1.xpose.msra.mxu0 0.0
    %7127 = vmatprep.subr.mxu0 0.0
    %7128 = vmatpush1.xpose.msra.mxu0 0.0
    %7129 = vmatprep.subr.mxu0 0.0
    %7130 = vmatpush1.xpose.msra.mxu0 0.0
    %7131 = vmatprep.subr.mxu0 0.0
    %7132 = vmatpush1.xpose.msra.mxu0 0.0
    %7133 = vmatprep.subr.mxu0 0.0
    %7134 = vmatpush1.xpose.msra.mxu0 0.0
    %7135 = vmatprep.subr.mxu0 0.0
    %7136 = vmatpush1.xpose.msra.mxu0 0.0
    %7137 = vmatprep.subr.mxu0 0.0
    %7138 = vmatpush1.xpose.msra.mxu0 0.0
    %7139 = vmatprep.subr.mxu0 0.0
    %7140 = vmatpush1.xpose.msra.mxu0 0.0
    %7141 = vmatprep.subr.mxu0 0.0
    %7142 = vmatpush1.xpose.msra.mxu0 0.0
    %7143 = vmatprep.subr.mxu0 0.0
    %7144 = vmatpush1.xpose.msra.mxu0 0.0
    %7145 = vmatprep.subr.mxu0 0.0
    %7146 = vmatpush1.xpose.msra.mxu0 0.0
    %7147 = vmatprep.subr.mxu0 0.0
    %7148 = vmatpush1.xpose.msra.mxu0 0.0
    %7149 = vmatprep.subr.mxu0 0.0
    %7150 = vmatpush1.xpose.msra.mxu0 0.0
    %7151 = vmatprep.subr.mxu0 0.0
    %7152 = vmatpush1.xpose.msra.mxu0 0.0
    %7153 = vmatprep.subr.mxu0 0.0
    %7154 = vmatpush1.xpose.msra.mxu0 0.0
    %7155 = vmatprep.mubr.f32.mxu0 0.0
    %7156 = vmatmul.mubr.f32.gmra.mrb[0].mxu0 %v7087
    %v7157 = vpop.f32.mrb[0].mxu0
    %v7158 = vadd.f32 0.0, %v7157
    %v7159 = vpop.f32.mrb[0].mxu0
    %7160 = vdwg.mxu0
    %v7161 = vmul.f32 %v7158, 0.35355338
    %v7162 = vsel %vm856, %v7161, -inf
    %7163 = vmax.xlane.f32.xlu0 %v7162
    %v7164 = vpop.xlane.xlu0 %7163
    %v7165 = vsub.f32 %v7161, %v7164
    %v7166 = vmul.f32 %v7165, 1.442695
    %v7167 = vpow.pop %v7166
    %v7168 = vsel %vm856, %v7167, 0.0
    %7169 = vadd.xlane.f32.xlu0 %v7168
    %v7170 = vpop.xlane.xlu0 %7169
    %v7171 = vrcp.pop %v7170
    %v7172 = vmul.f32 %v7167, %v7171
    %7173 = vrot.lane.b32.xlu0 %v6745, 112
    %v7174 = vpop.permute.xlu0 %7173
    %v7176 = vsel %vm868, %v7172, 0
    %v7178 = vsel %vm872, %v7174, 0
    %7180 = vmatprep.subr.mxu0 0.0
    %7181 = vmatpush1.msra.mxu0 %v7178
    %7182 = vmatprep.subr.mxu0 0.0
    %7183 = vmatpush1.msra.mxu0 0.0
    %7184 = vmatprep.subr.mxu0 0.0
    %7185 = vmatpush1.msra.mxu0 0.0
    %7186 = vmatprep.subr.mxu0 0.0
    %7187 = vmatpush1.msra.mxu0 0.0
    %7188 = vmatprep.subr.mxu0 0.0
    %7189 = vmatpush1.msra.mxu0 0.0
    %7190 = vmatprep.subr.mxu0 0.0
    %7191 = vmatpush1.msra.mxu0 0.0
    %7192 = vmatprep.subr.mxu0 0.0
    %7193 = vmatpush1.msra.mxu0 0.0
    %7194 = vmatprep.subr.mxu0 0.0
    %7195 = vmatpush1.msra.mxu0 0.0
    %7196 = vmatprep.subr.mxu0 0.0
    %7197 = vmatpush1.msra.mxu0 0.0
    %7198 = vmatprep.subr.mxu0 0.0
    %7199 = vmatpush1.msra.mxu0 0.0
    %7200 = vmatprep.subr.mxu0 0.0
    %7201 = vmatpush1.msra.mxu0 0.0
    %7202 = vmatprep.subr.mxu0 0.0
    %7203 = vmatpush1.msra.mxu0 0.0
    %7204 = vmatprep.subr.mxu0 0.0
    %7205 = vmatpush1.msra.mxu0 0.0
    %7206 = vmatprep.subr.mxu0 0.0
    %7207 = vmatpush1.msra.mxu0 0.0
    %7208 = vmatprep.subr.mxu0 0.0
    %7209 = vmatpush1.msra.mxu0 0.0
    %7210 = vmatprep.subr.mxu0 0.0
    %7211 = vmatpush1.msra.mxu0 0.0
    %7212 = vmatprep.subr.mxu0 0.0
    %7213 = vmatpush1.msra.mxu0 0.0
    %7214 = vmatprep.subr.mxu0 0.0
    %7215 = vmatpush1.msra.mxu0 0.0
    %7216 = vmatprep.subr.mxu0 0.0
    %7217 = vmatpush1.msra.mxu0 0.0
    %7218 = vmatprep.subr.mxu0 0.0
    %7219 = vmatpush1.msra.mxu0 0.0
    %7220 = vmatprep.subr.mxu0 0.0
    %7221 = vmatpush1.msra.mxu0 0.0
    %7222 = vmatprep.subr.mxu0 0.0
    %7223 = vmatpush1.msra.mxu0 0.0
    %7224 = vmatprep.subr.mxu0 0.0
    %7225 = vmatpush1.msra.mxu0 0.0
    %7226 = vmatprep.subr.mxu0 0.0
    %7227 = vmatpush1.msra.mxu0 0.0
    %7228 = vmatprep.subr.mxu0 0.0
    %7229 = vmatpush1.msra.mxu0 0.0
    %7230 = vmatprep.subr.mxu0 0.0
    %7231 = vmatpush1.msra.mxu0 0.0
    %7232 = vmatprep.subr.mxu0 0.0
    %7233 = vmatpush1.msra.mxu0 0.0
    %7234 = vmatprep.subr.mxu0 0.0
    %7235 = vmatpush1.msra.mxu0 0.0
    %7236 = vmatprep.subr.mxu0 0.0
    %7237 = vmatpush1.msra.mxu0 0.0
    %7238 = vmatprep.subr.mxu0 0.0
    %7239 = vmatpush1.msra.mxu0 0.0
    %7240 = vmatprep.subr.mxu0 0.0
    %7241 = vmatpush1.msra.mxu0 0.0
    %7242 = vmatprep.subr.mxu0 0.0
    %7243 = vmatpush1.msra.mxu0 0.0
    %7244 = vmatprep.mubr.f32.mxu0 0.0
    %7245 = vmatmul.mubr.f32.gmra.mrb[0].mxu0 %v7176
    %v7246 = vpop.f32.mrb[0].mxu0
    %v7247 = vadd.f32 0.0, %v7246
    %v7248 = vpop.f32.mrb[0].mxu0
    %7249 = vdwg.mxu0
    %7251 = vrot.lane.b32.xlu0 %v7247, 16
    %v7252 = vpop.permute.xlu0 %7251
    %7254 = vst.msk [vmem:[%s1637] sm:$0xf] %vm1292, %v7252
    %7255 = vrot.lane.b32.xlu0 %v6743, 104
    %v7256 = vpop.permute.xlu0 %7255
    %7257 = vrot.lane.b32.xlu0 %v6744, 104
    %v7258 = vpop.permute.xlu0 %7257
    %v7259 = vsel %vm778, %v7256, 0
    %v7261 = vsel %vm778, %v7258, 0
    %7263 = vmatprep.subr.mxu0 0.0
    %7264 = vmatpush1.xpose.msra.mxu0 %v7261
    %7265 = vmatprep.subr.mxu0 0.0
    %7266 = vmatpush1.xpose.msra.mxu0 0.0
    %7267 = vmatprep.subr.mxu0 0.0
    %7268 = vmatpush1.xpose.msra.mxu0 0.0
    %7269 = vmatprep.subr.mxu0 0.0
    %7270 = vmatpush1.xpose.msra.mxu0 0.0
    %7271 = vmatprep.subr.mxu0 0.0
    %7272 = vmatpush1.xpose.msra.mxu0 0.0
    %7273 = vmatprep.subr.mxu0 0.0
    %7274 = vmatpush1.xpose.msra.mxu0 0.0
    %7275 = vmatprep.subr.mxu0 0.0
    %7276 = vmatpush1.xpose.msra.mxu0 0.0
    %7277 = vmatprep.subr.mxu0 0.0
    %7278 = vmatpush1.xpose.msra.mxu0 0.0
    %7279 = vmatprep.subr.mxu0 0.0
    %7280 = vmatpush1.xpose.msra.mxu0 0.0
    %7281 = vmatprep.subr.mxu0 0.0
    %7282 = vmatpush1.xpose.msra.mxu0 0.0
    %7283 = vmatprep.subr.mxu0 0.0
    %7284 = vmatpush1.xpose.msra.mxu0 0.0
    %7285 = vmatprep.subr.mxu0 0.0
    %7286 = vmatpush1.xpose.msra.mxu0 0.0
    %7287 = vmatprep.subr.mxu0 0.0
    %7288 = vmatpush1.xpose.msra.mxu0 0.0
    %7289 = vmatprep.subr.mxu0 0.0
    %7290 = vmatpush1.xpose.msra.mxu0 0.0
    %7291 = vmatprep.subr.mxu0 0.0
    %7292 = vmatpush1.xpose.msra.mxu0 0.0
    %7293 = vmatprep.subr.mxu0 0.0
    %7294 = vmatpush1.xpose.msra.mxu0 0.0
    %7295 = vmatprep.subr.mxu0 0.0
    %7296 = vmatpush1.xpose.msra.mxu0 0.0
    %7297 = vmatprep.subr.mxu0 0.0
    %7298 = vmatpush1.xpose.msra.mxu0 0.0
    %7299 = vmatprep.subr.mxu0 0.0
    %7300 = vmatpush1.xpose.msra.mxu0 0.0
    %7301 = vmatprep.subr.mxu0 0.0
    %7302 = vmatpush1.xpose.msra.mxu0 0.0
    %7303 = vmatprep.subr.mxu0 0.0
    %7304 = vmatpush1.xpose.msra.mxu0 0.0
    %7305 = vmatprep.subr.mxu0 0.0
    %7306 = vmatpush1.xpose.msra.mxu0 0.0
    %7307 = vmatprep.subr.mxu0 0.0
    %7308 = vmatpush1.xpose.msra.mxu0 0.0
    %7309 = vmatprep.subr.mxu0 0.0
    %7310 = vmatpush1.xpose.msra.mxu0 0.0
    %7311 = vmatprep.subr.mxu0 0.0
    %7312 = vmatpush1.xpose.msra.mxu0 0.0
    %7313 = vmatprep.subr.mxu0 0.0
    %7314 = vmatpush1.xpose.msra.mxu0 0.0
    %7315 = vmatprep.subr.mxu0 0.0
    %7316 = vmatpush1.xpose.msra.mxu0 0.0
    %7317 = vmatprep.subr.mxu0 0.0
    %7318 = vmatpush1.xpose.msra.mxu0 0.0
    %7319 = vmatprep.subr.mxu0 0.0
    %7320 = vmatpush1.xpose.msra.mxu0 0.0
    %7321 = vmatprep.subr.mxu0 0.0
    %7322 = vmatpush1.xpose.msra.mxu0 0.0
    %7323 = vmatprep.subr.mxu0 0.0
    %7324 = vmatpush1.xpose.msra.mxu0 0.0
    %7325 = vmatprep.subr.mxu0 0.0
    %7326 = vmatpush1.xpose.msra.mxu0 0.0
    %7327 = vmatprep.mubr.f32.mxu0 0.0
    %7328 = vmatmul.mubr.f32.gmra.mrb[0].mxu0 %v7259
    %v7329 = vpop.f32.mrb[0].mxu0
    %v7330 = vadd.f32 0.0, %v7329
    %v7331 = vpop.f32.mrb[0].mxu0
    %7332 = vdwg.mxu0
    %v7333 = vmul.f32 %v7330, 0.35355338
    %v7334 = vsel %vm856, %v7333, -inf
    %7335 = vmax.xlane.f32.xlu0 %v7334
    %v7336 = vpop.xlane.xlu0 %7335
    %v7337 = vsub.f32 %v7333, %v7336
    %v7338 = vmul.f32 %v7337, 1.442695
    %v7339 = vpow.pop %v7338
    %v7340 = vsel %vm856, %v7339, 0.0
    %7341 = vadd.xlane.f32.xlu0 %v7340
    %v7342 = vpop.xlane.xlu0 %7341
    %v7343 = vrcp.pop %v7342
    %v7344 = vmul.f32 %v7339, %v7343
    %7345 = vrot.lane.b32.xlu0 %v6745, 104
    %v7346 = vpop.permute.xlu0 %7345
    %v7348 = vsel %vm868, %v7344, 0
    %v7350 = vsel %vm872, %v7346, 0
    %7352 = vmatprep.subr.mxu0 0.0
    %7353 = vmatpush1.msra.mxu0 %v7350
    %7354 = vmatprep.subr.mxu0 0.0
    %7355 = vmatpush1.msra.mxu0 0.0
    %7356 = vmatprep.subr.mxu0 0.0
    %7357 = vmatpush1.msra.mxu0 0.0
    %7358 = vmatprep.subr.mxu0 0.0
    %7359 = vmatpush1.msra.mxu0 0.0
    %7360 = vmatprep.subr.mxu0 0.0
    %7361 = vmatpush1.msra.mxu0 0.0
    %7362 = vmatprep.subr.mxu0 0.0
    %7363 = vmatpush1.msra.mxu0 0.0
    %7364 = vmatprep.subr.mxu0 0.0
    %7365 = vmatpush1.msra.mxu0 0.0
    %7366 = vmatprep.subr.mxu0 0.0
    %7367 = vmatpush1.msra.mxu0 0.0
    %7368 = vmatprep.subr.mxu0 0.0
    %7369 = vmatpush1.msra.mxu0 0.0
    %7370 = vmatprep.subr.mxu0 0.0
    %7371 = vmatpush1.msra.mxu0 0.0
    %7372 = vmatprep.subr.mxu0 0.0
    %7373 = vmatpush1.msra.mxu0 0.0
    %7374 = vmatprep.subr.mxu0 0.0
    %7375 = vmatpush1.msra.mxu0 0.0
    %7376 = vmatprep.subr.mxu0 0.0
    %7377 = vmatpush1.msra.mxu0 0.0
    %7378 = vmatprep.subr.mxu0 0.0
    %7379 = vmatpush1.msra.mxu0 0.0
    %7380 = vmatprep.subr.mxu0 0.0
    %7381 = vmatpush1.msra.mxu0 0.0
    %7382 = vmatprep.subr.mxu0 0.0
    %7383 = vmatpush1.msra.mxu0 0.0
    %7384 = vmatprep.subr.mxu0 0.0
    %7385 = vmatpush1.msra.mxu0 0.0
    %7386 = vmatprep.subr.mxu0 0.0
    %7387 = vmatpush1.msra.mxu0 0.0
    %7388 = vmatprep.subr.mxu0 0.0
    %7389 = vmatpush1.msra.mxu0 0.0
    %7390 = vmatprep.subr.mxu0 0.0
    %7391 = vmatpush1.msra.mxu0 0.0
    %7392 = vmatprep.subr.mxu0 0.0
    %7393 = vmatpush1.msra.mxu0 0.0
    %7394 = vmatprep.subr.mxu0 0.0
    %7395 = vmatpush1.msra.mxu0 0.0
    %7396 = vmatprep.subr.mxu0 0.0
    %7397 = vmatpush1.msra.mxu0 0.0
    %7398 = vmatprep.subr.mxu0 0.0
    %7399 = vmatpush1.msra.mxu0 0.0
    %7400 = vmatprep.subr.mxu0 0.0
    %7401 = vmatpush1.msra.mxu0 0.0
    %7402 = vmatprep.subr.mxu0 0.0
    %7403 = vmatpush1.msra.mxu0 0.0
    %7404 = vmatprep.subr.mxu0 0.0
    %7405 = vmatpush1.msra.mxu0 0.0
    %7406 = vmatprep.subr.mxu0 0.0
    %7407 = vmatpush1.msra.mxu0 0.0
    %7408 = vmatprep.subr.mxu0 0.0
    %7409 = vmatpush1.msra.mxu0 0.0
    %7410 = vmatprep.subr.mxu0 0.0
    %7411 = vmatpush1.msra.mxu0 0.0
    %7412 = vmatprep.subr.mxu0 0.0
    %7413 = vmatpush1.msra.mxu0 0.0
    %7414 = vmatprep.subr.mxu0 0.0
    %7415 = vmatpush1.msra.mxu0 0.0
    %7416 = vmatprep.mubr.f32.mxu0 0.0
    %7417 = vmatmul.mubr.f32.gmra.mrb[0].mxu0 %v7348
    %v7418 = vpop.f32.mrb[0].mxu0
    %v7419 = vadd.f32 0.0, %v7418
    %v7420 = vpop.f32.mrb[0].mxu0
    %7421 = vdwg.mxu0
    %7423 = vrot.lane.b32.xlu0 %v7419, 24
    %v7424 = vpop.permute.xlu0 %7423
    %7426 = vst.msk [vmem:[%s1637] sm:$0xf] %vm1465, %v7424
    %v7427 = vld [vmem:[#allocation5] sm:$0x1]
    %v7428 = vld [vmem:[#allocation5 + $0x4] sm:$0x1]
    %v7431 = vrot.slane %v7428, 7
    %v7432 = vsel %vm2160, %v7431, %v7427
    %7434 = vst.msk [vmem:[#allocation6] sm:$0x3] %vm2163, %v7432
    %v7435 = vld [vmem:[#allocation5 + $0x1] sm:$0x1]
    %v7436 = vld [vmem:[#allocation5 + $0x5] sm:$0x1]
    %v7439 = vrot.slane %v7436, 7
    %v7440 = vsel %vm2160, %v7439, %v7435
    %7441 = vrot.lane.b32.xlu0 %v7440, 32
    %v7442 = vpop.permute.xlu0 %7441
    %7444 = vst.msk [vmem:[#allocation6] sm:$0x3] %vm2174, %v7442
    %v7445 = vld [vmem:[#allocation5 + $0x2] sm:$0x1]
    %v7446 = vld [vmem:[#allocation5 + $0x6] sm:$0x1]
    %v7449 = vrot.slane %v7446, 7
    %v7450 = vsel %vm2160, %v7449, %v7445
    %7451 = vrot.lane.b32.xlu0 %v7450, 64
    %v7452 = vpop.permute.xlu0 %7451
    %7454 = vst.msk [vmem:[#allocation6] sm:$0x3] %vm2185, %v7452
    %v7455 = vld [vmem:[#allocation5 + $0x3] sm:$0x1]
    %v7456 = vld [vmem:[#allocation5 + $0x7] sm:$0x1]
    %v7459 = vrot.slane %v7456, 7
    %v7460 = vsel %vm2160, %v7459, %v7455
    %7461 = vrot.lane.b32.xlu0 %v7460, 96
    %v7462 = vpop.permute.xlu0 %7461
    %7464 = vst.msk [vmem:[#allocation6] sm:$0x3] %vm2196, %v7462
    %v7465 = vld [vmem:[#allocation6] sm:$0x3]
    %v7466 = vld [vmem:[%s9] sm:$0xff]
    %v7467 = vld [vmem:[%s9 + $0x8] sm:$0xff]
    %v7468 = vld [vmem:[%s9 + $0x10] sm:$0xff]
    %v7469 = vld [vmem:[%s9 + $0x18] sm:$0xff]
    %v7470 = vld [vmem:[%s9 + $0x20] sm:$0xff]
    %v7471 = vld [vmem:[%s9 + $0x28] sm:$0xff]
    %v7472 = vld [vmem:[%s9 + $0x30] sm:$0xff]
    %v7473 = vld [vmem:[%s9 + $0x38] sm:$0xff]
    %v7474 = vld [vmem:[%s9 + $0x40] sm:$0xff]
    %v7475 = vld [vmem:[%s9 + $0x48] sm:$0xff]
    %v7476 = vld [vmem:[%s9 + $0x50] sm:$0xff]
    %v7477 = vld [vmem:[%s9 + $0x58] sm:$0xff]
    %v7478 = vld [vmem:[%s9 + $0x60] sm:$0xff]
    %v7479 = vld [vmem:[%s9 + $0x68] sm:$0xff]
    %v7480 = vld [vmem:[%s9 + $0x70] sm:$0xff]
    %v7481 = vld [vmem:[%s9 + $0x78] sm:$0xff]
    %7482 = vmatprep.subr.mxu0 0.0
    %7483 = vmatpush1.msra.mxu0 %v7466
    %7484 = vmatprep.subr.mxu0 0.0
    %7485 = vmatpush1.msra.mxu0 %v7467
    %7486 = vmatprep.subr.mxu0 0.0
    %7487 = vmatpush1.msra.mxu0 %v7468
    %7488 = vmatprep.subr.mxu0 0.0
    %7489 = vmatpush1.msra.mxu0 %v7469
    %7490 = vmatprep.subr.mxu0 0.0
    %7491 = vmatpush1.msra.mxu0 %v7470
    %7492 = vmatprep.subr.mxu0 0.0
    %7493 = vmatpush1.msra.mxu0 %v7471
    %7494 = vmatprep.subr.mxu0 0.0
    %7495 = vmatpush1.msra.mxu0 %v7472
    %7496 = vmatprep.subr.mxu0 0.0
    %7497 = vmatpush1.msra.mxu0 %v7473
    %7498 = vmatprep.subr.mxu0 0.0
    %7499 = vmatpush1.msra.mxu0 %v7474
    %7500 = vmatprep.subr.mxu0 0.0
    %7501 = vmatpush1.msra.mxu0 %v7475
    %7502 = vmatprep.subr.mxu0 0.0
    %7503 = vmatpush1.msra.mxu0 %v7476
    %7504 = vmatprep.subr.mxu0 0.0
    %7505 = vmatpush1.msra.mxu0 %v7477
    %7506 = vmatprep.subr.mxu0 0.0
    %7507 = vmatpush1.msra.mxu0 %v7478
    %7508 = vmatprep.subr.mxu0 0.0
    %7509 = vmatpush1.msra.mxu0 %v7479
    %7510 = vmatprep.subr.mxu0 0.0
    %7511 = vmatpush1.msra.mxu0 %v7480
    %7512 = vmatprep.subr.mxu0 0.0
    %7513 = vmatpush1.msra.mxu0 %v7481
    %7514 = vmatprep.subr.mxu0 0.0
    %7515 = vmatpush1.msra.mxu0 0.0
    %7516 = vmatprep.subr.mxu0 0.0
    %7517 = vmatpush1.msra.mxu0 0.0
    %7518 = vmatprep.subr.mxu0 0.0
    %7519 = vmatpush1.msra.mxu0 0.0
    %7520 = vmatprep.subr.mxu0 0.0
    %7521 = vmatpush1.msra.mxu0 0.0
    %7522 = vmatprep.subr.mxu0 0.0
    %7523 = vmatpush1.msra.mxu0 0.0
    %7524 = vmatprep.subr.mxu0 0.0
    %7525 = vmatpush1.msra.mxu0 0.0
    %7526 = vmatprep.subr.mxu0 0.0
    %7527 = vmatpush1.msra.mxu0 0.0
    %7528 = vmatprep.subr.mxu0 0.0
    %7529 = vmatpush1.msra.mxu0 0.0
    %7530 = vmatprep.subr.mxu0 0.0
    %7531 = vmatpush1.msra.mxu0 0.0
    %7532 = vmatprep.subr.mxu0 0.0
    %7533 = vmatpush1.msra.mxu0 0.0
    %7534 = vmatprep.subr.mxu0 0.0
    %7535 = vmatpush1.msra.mxu0 0.0
    %7536 = vmatprep.subr.mxu0 0.0
    %7537 = vmatpush1.msra.mxu0 0.0
    %7538 = vmatprep.subr.mxu0 0.0
    %7539 = vmatpush1.msra.mxu0 0.0
    %7540 = vmatprep.subr.mxu0 0.0
    %7541 = vmatpush1.msra.mxu0 0.0
    %7542 = vmatprep.subr.mxu0 0.0
    %7543 = vmatpush1.msra.mxu0 0.0
    %7544 = vmatprep.subr.mxu0 0.0
    %7545 = vmatpush1.msra.mxu0 0.0
    %7546 = vmatprep.mubr.f32.mxu0 0.0
    %7547 = vmatmul.mubr.f32.gmra.mrb[0].mxu0 %v7465
    %v7548 = vpop.f32.mrb[0].mxu0
    %v7549 = vadd.f32 0.0, %v7548
    %v7550 = vpop.f32.mrb[0].mxu0
    %7551 = vdwg.mxu0
    %v7552 = vadd.f32 %v5621, %v7549
    %s7553 = scalar_lea.vmem %s10, 256
    %v7554 = vld [vmem:[%s7553] sm:$0xff]
    %v7555 = vld [vmem:[%s7553 + $0x8] sm:$0xff]
    %v7556 = vld [vmem:[%s7553 + $0x10] sm:$0xff]
    %v7557 = vld [vmem:[%s7553 + $0x18] sm:$0xff]
    %v7558 = vld [vmem:[%s7553 + $0x20] sm:$0xff]
    %v7559 = vld [vmem:[%s7553 + $0x28] sm:$0xff]
    %v7560 = vld [vmem:[%s7553 + $0x30] sm:$0xff]
    %v7561 = vld [vmem:[%s7553 + $0x38] sm:$0xff]
    %v7562 = vld [vmem:[%s7553 + $0x40] sm:$0xff]
    %v7563 = vld [vmem:[%s7553 + $0x48] sm:$0xff]
    %v7564 = vld [vmem:[%s7553 + $0x50] sm:$0xff]
    %v7565 = vld [vmem:[%s7553 + $0x58] sm:$0xff]
    %v7566 = vld [vmem:[%s7553 + $0x60] sm:$0xff]
    %v7567 = vld [vmem:[%s7553 + $0x68] sm:$0xff]
    %v7568 = vld [vmem:[%s7553 + $0x70] sm:$0xff]
    %v7569 = vld [vmem:[%s7553 + $0x78] sm:$0xff]
    %s7570 = scalar_lea.vmem %s11, 2
    %v7571 = vld [vmem:[%s7570] sm:$0x1]
    %v7573 = vlaneseq
    %v7574 = vshrl.u32 %v7573, 7
    %v7575 = vsub.s32 0, %v7574
    %v7576 = vrot.slane %v7571, %v7575
    %7578 = vmatprep.subr.mxu0 0.0
    %7579 = vmatpush1.msra.mxu0 %v7554
    %7580 = vmatprep.subr.mxu0 0.0
    %7581 = vmatpush1.msra.mxu0 %v7555
    %7582 = vmatprep.subr.mxu0 0.0
    %7583 = vmatpush1.msra.mxu0 %v7556
    %7584 = vmatprep.subr.mxu0 0.0
    %7585 = vmatpush1.msra.mxu0 %v7557
    %7586 = vmatprep.subr.mxu0 0.0
    %7587 = vmatpush1.msra.mxu0 %v7558
    %7588 = vmatprep.subr.mxu0 0.0
    %7589 = vmatpush1.msra.mxu0 %v7559
    %7590 = vmatprep.subr.mxu0 0.0
    %7591 = vmatpush1.msra.mxu0 %v7560
    %7592 = vmatprep.subr.mxu0 0.0
    %7593 = vmatpush1.msra.mxu0 %v7561
    %7594 = vmatprep.subr.mxu0 0.0
    %7595 = vmatpush1.msra.mxu0 %v7562
    %7596 = vmatprep.subr.mxu0 0.0
    %7597 = vmatpush1.msra.mxu0 %v7563
    %7598 = vmatprep.subr.mxu0 0.0
    %7599 = vmatpush1.msra.mxu0 %v7564
    %7600 = vmatprep.subr.mxu0 0.0
    %7601 = vmatpush1.msra.mxu0 %v7565
    %7602 = vmatprep.subr.mxu0 0.0
    %7603 = vmatpush1.msra.mxu0 %v7566
    %7604 = vmatprep.subr.mxu0 0.0
    %7605 = vmatpush1.msra.mxu0 %v7567
    %7606 = vmatprep.subr.mxu0 0.0
    %7607 = vmatpush1.msra.mxu0 %v7568
    %7608 = vmatprep.subr.mxu0 0.0
    %7609 = vmatpush1.msra.mxu0 %v7569
    %7610 = vmatprep.subr.mxu0 0.0
    %7611 = vmatpush1.msra.mxu0 0.0
    %7612 = vmatprep.subr.mxu0 0.0
    %7613 = vmatpush1.msra.mxu0 0.0
    %7614 = vmatprep.subr.mxu0 0.0
    %7615 = vmatpush1.msra.mxu0 0.0
    %7616 = vmatprep.subr.mxu0 0.0
    %7617 = vmatpush1.msra.mxu0 0.0
    %7618 = vmatprep.subr.mxu0 0.0
    %7619 = vmatpush1.msra.mxu0 0.0
    %7620 = vmatprep.subr.mxu0 0.0
    %7621 = vmatpush1.msra.mxu0 0.0
    %7622 = vmatprep.subr.mxu0 0.0
    %7623 = vmatpush1.msra.mxu0 0.0
    %7624 = vmatprep.subr.mxu0 0.0
    %7625 = vmatpush1.msra.mxu0 0.0
    %7626 = vmatprep.subr.mxu0 0.0
    %7627 = vmatpush1.msra.mxu0 0.0
    %7628 = vmatprep.subr.mxu0 0.0
    %7629 = vmatpush1.msra.mxu0 0.0
    %7630 = vmatprep.subr.mxu0 0.0
    %7631 = vmatpush1.msra.mxu0 0.0
    %7632 = vmatprep.subr.mxu0 0.0
    %7633 = vmatpush1.msra.mxu0 0.0
    %7634 = vmatprep.subr.mxu0 0.0
    %7635 = vmatpush1.msra.mxu0 0.0
    %7636 = vmatprep.subr.mxu0 0.0
    %7637 = vmatpush1.msra.mxu0 0.0
    %7638 = vmatprep.subr.mxu0 0.0
    %7639 = vmatpush1.msra.mxu0 0.0
    %7640 = vmatprep.subr.mxu0 0.0
    %7641 = vmatpush1.msra.mxu0 0.0
    %7642 = vmatprep.mubr.f32.mxu0 0.0
    %7643 = vmatmul.mubr.f32.gmra.mrb[0].mxu0 %v7552
    %v7644 = vpop.f32.mrb[0].mxu0
    %v7645 = vadd.f32 %v7576, %v7644
    %v7646 = vpop.f32.mrb[0].mxu0
    %7647 = vdwg.mxu0
    %v7648 = vmax.f32 %v7645, 0.0
    %s7649 = scalar_lea.vmem %s12, 256
    %v7650 = vld [vmem:[%s7649] sm:$0xff]
    %v7651 = vld [vmem:[%s7649 + $0x8] sm:$0xff]
    %v7652 = vld [vmem:[%s7649 + $0x10] sm:$0xff]
    %v7653 = vld [vmem:[%s7649 + $0x18] sm:$0xff]
    %v7654 = vld [vmem:[%s7649 + $0x20] sm:$0xff]
    %v7655 = vld [vmem:[%s7649 + $0x28] sm:$0xff]
    %v7656 = vld [vmem:[%s7649 + $0x30] sm:$0xff]
    %v7657 = vld [vmem:[%s7649 + $0x38] sm:$0xff]
    %v7658 = vld [vmem:[%s7649 + $0x40] sm:$0xff]
    %v7659 = vld [vmem:[%s7649 + $0x48] sm:$0xff]
    %v7660 = vld [vmem:[%s7649 + $0x50] sm:$0xff]
    %v7661 = vld [vmem:[%s7649 + $0x58] sm:$0xff]
    %v7662 = vld [vmem:[%s7649 + $0x60] sm:$0xff]
    %v7663 = vld [vmem:[%s7649 + $0x68] sm:$0xff]
    %v7664 = vld [vmem:[%s7649 + $0x70] sm:$0xff]
    %v7665 = vld [vmem:[%s7649 + $0x78] sm:$0xff]
    %s7666 = scalar_lea.vmem %s13, 2
    %v7667 = vld [vmem:[%s7666] sm:$0x1]
    %v7669 = vlaneseq
    %v7670 = vshrl.u32 %v7669, 7
    %v7671 = vsub.s32 0, %v7670
    %v7672 = vrot.slane %v7667, %v7671
    %7674 = vmatprep.subr.mxu0 0.0
    %7675 = vmatpush1.msra.mxu0 %v7650
    %7676 = vmatprep.subr.mxu0 0.0
    %7677 = vmatpush1.msra.mxu0 %v7651
    %7678 = vmatprep.subr.mxu0 0.0
    %7679 = vmatpush1.msra.mxu0 %v7652
    %7680 = vmatprep.subr.mxu0 0.0
    %7681 = vmatpush1.msra.mxu0 %v7653
    %7682 = vmatprep.subr.mxu0 0.0
    %7683 = vmatpush1.msra.mxu0 %v7654
    %7684 = vmatprep.subr.mxu0 0.0
    %7685 = vmatpush1.msra.mxu0 %v7655
    %7686 = vmatprep.subr.mxu0 0.0
    %7687 = vmatpush1.msra.mxu0 %v7656
    %7688 = vmatprep.subr.mxu0 0.0
    %7689 = vmatpush1.msra.mxu0 %v7657
    %7690 = vmatprep.subr.mxu0 0.0
    %7691 = vmatpush1.msra.mxu0 %v7658
    %7692 = vmatprep.subr.mxu0 0.0
    %7693 = vmatpush1.msra.mxu0 %v7659
    %7694 = vmatprep.subr.mxu0 0.0
    %7695 = vmatpush1.msra.mxu0 %v7660
    %7696 = vmatprep.subr.mxu0 0.0
    %7697 = vmatpush1.msra.mxu0 %v7661
    %7698 = vmatprep.subr.mxu0 0.0
    %7699 = vmatpush1.msra.mxu0 %v7662
    %7700 = vmatprep.subr.mxu0 0.0
    %7701 = vmatpush1.msra.mxu0 %v7663
    %7702 = vmatprep.subr.mxu0 0.0
    %7703 = vmatpush1.msra.mxu0 %v7664
    %7704 = vmatprep.subr.mxu0 0.0
    %7705 = vmatpush1.msra.mxu0 %v7665
    %7706 = vmatprep.subr.mxu0 0.0
    %7707 = vmatpush1.msra.mxu0 0.0
    %7708 = vmatprep.subr.mxu0 0.0
    %7709 = vmatpush1.msra.mxu0 0.0
    %7710 = vmatprep.subr.mxu0 0.0
    %7711 = vmatpush1.msra.mxu0 0.0
    %7712 = vmatprep.subr.mxu0 0.0
    %7713 = vmatpush1.msra.mxu0 0.0
    %7714 = vmatprep.subr.mxu0 0.0
    %7715 = vmatpush1.msra.mxu0 0.0
    %7716 = vmatprep.subr.mxu0 0.0
    %7717 = vmatpush1.msra.mxu0 0.0
    %7718 = vmatprep.subr.mxu0 0.0
    %7719 = vmatpush1.msra.mxu0 0.0
    %7720 = vmatprep.subr.mxu0 0.0
    %7721 = vmatpush1.msra.mxu0 0.0
    %7722 = vmatprep.subr.mxu0 0.0
    %7723 = vmatpush1.msra.mxu0 0.0
    %7724 = vmatprep.subr.mxu0 0.0
    %7725 = vmatpush1.msra.mxu0 0.0
    %7726 = vmatprep.subr.mxu0 0.0
    %7727 = vmatpush1.msra.mxu0 0.0
    %7728 = vmatprep.subr.mxu0 0.0
    %7729 = vmatpush1.msra.mxu0 0.0
    %7730 = vmatprep.subr.mxu0 0.0
    %7731 = vmatpush1.msra.mxu0 0.0
    %7732 = vmatprep.subr.mxu0 0.0
    %7733 = vmatpush1.msra.mxu0 0.0
    %7734 = vmatprep.subr.mxu0 0.0
    %7735 = vmatpush1.msra.mxu0 0.0
    %7736 = vmatprep.subr.mxu0 0.0
    %7737 = vmatpush1.msra.mxu0 0.0
    %7738 = vmatprep.mubr.f32.mxu0 0.0
    %7739 = vmatmul.mubr.f32.gmra.mrb[0].mxu0 %v7648
    %v7740 = vpop.f32.mrb[0].mxu0
    %v7741 = vadd.f32 %v7672, %v7740
    %v7742 = vpop.f32.mrb[0].mxu0
    %7743 = vdwg.mxu0
    %s7744 = scalar_lea.vmem %s14, 256
    %v7745 = vld [vmem:[%s7744] sm:$0xff]
    %v7746 = vld [vmem:[%s7744 + $0x8] sm:$0xff]
    %v7747 = vld [vmem:[%s7744 + $0x10] sm:$0xff]
    %v7748 = vld [vmem:[%s7744 + $0x18] sm:$0xff]
    %v7749 = vld [vmem:[%s7744 + $0x20] sm:$0xff]
    %v7750 = vld [vmem:[%s7744 + $0x28] sm:$0xff]
    %v7751 = vld [vmem:[%s7744 + $0x30] sm:$0xff]
    %v7752 = vld [vmem:[%s7744 + $0x38] sm:$0xff]
    %v7753 = vld [vmem:[%s7744 + $0x40] sm:$0xff]
    %v7754 = vld [vmem:[%s7744 + $0x48] sm:$0xff]
    %v7755 = vld [vmem:[%s7744 + $0x50] sm:$0xff]
    %v7756 = vld [vmem:[%s7744 + $0x58] sm:$0xff]
    %v7757 = vld [vmem:[%s7744 + $0x60] sm:$0xff]
    %v7758 = vld [vmem:[%s7744 + $0x68] sm:$0xff]
    %v7759 = vld [vmem:[%s7744 + $0x70] sm:$0xff]
    %v7760 = vld [vmem:[%s7744 + $0x78] sm:$0xff]
    %s7761 = scalar_lea.vmem %s15, 2
    %v7762 = vld [vmem:[%s7761] sm:$0x1]
    %v7764 = vlaneseq
    %v7765 = vshrl.u32 %v7764, 7
    %v7766 = vsub.s32 0, %v7765
    %v7767 = vrot.slane %v7762, %v7766
    %7769 = vmatprep.subr.mxu0 0.0
    %7770 = vmatpush1.msra.mxu0 %v7745
    %7771 = vmatprep.subr.mxu0 0.0
    %7772 = vmatpush1.msra.mxu0 %v7746
    %7773 = vmatprep.subr.mxu0 0.0
    %7774 = vmatpush1.msra.mxu0 %v7747
    %7775 = vmatprep.subr.mxu0 0.0
    %7776 = vmatpush1.msra.mxu0 %v7748
    %7777 = vmatprep.subr.mxu0 0.0
    %7778 = vmatpush1.msra.mxu0 %v7749
    %7779 = vmatprep.subr.mxu0 0.0
    %7780 = vmatpush1.msra.mxu0 %v7750
    %7781 = vmatprep.subr.mxu0 0.0
    %7782 = vmatpush1.msra.mxu0 %v7751
    %7783 = vmatprep.subr.mxu0 0.0
    %7784 = vmatpush1.msra.mxu0 %v7752
    %7785 = vmatprep.subr.mxu0 0.0
    %7786 = vmatpush1.msra.mxu0 %v7753
    %7787 = vmatprep.subr.mxu0 0.0
    %7788 = vmatpush1.msra.mxu0 %v7754
    %7789 = vmatprep.subr.mxu0 0.0
    %7790 = vmatpush1.msra.mxu0 %v7755
    %7791 = vmatprep.subr.mxu0 0.0
    %7792 = vmatpush1.msra.mxu0 %v7756
    %7793 = vmatprep.subr.mxu0 0.0
    %7794 = vmatpush1.msra.mxu0 %v7757
    %7795 = vmatprep.subr.mxu0 0.0
    %7796 = vmatpush1.msra.mxu0 %v7758
    %7797 = vmatprep.subr.mxu0 0.0
    %7798 = vmatpush1.msra.mxu0 %v7759
    %7799 = vmatprep.subr.mxu0 0.0
    %7800 = vmatpush1.msra.mxu0 %v7760
    %7801 = vmatprep.subr.mxu0 0.0
    %7802 = vmatpush1.msra.mxu0 0.0
    %7803 = vmatprep.subr.mxu0 0.0
    %7804 = vmatpush1.msra.mxu0 0.0
    %7805 = vmatprep.subr.mxu0 0.0
    %7806 = vmatpush1.msra.mxu0 0.0
    %7807 = vmatprep.subr.mxu0 0.0
    %7808 = vmatpush1.msra.mxu0 0.0
    %7809 = vmatprep.subr.mxu0 0.0
    %7810 = vmatpush1.msra.mxu0 0.0
    %7811 = vmatprep.subr.mxu0 0.0
    %7812 = vmatpush1.msra.mxu0 0.0
    %7813 = vmatprep.subr.mxu0 0.0
    %7814 = vmatpush1.msra.mxu0 0.0
    %7815 = vmatprep.subr.mxu0 0.0
    %7816 = vmatpush1.msra.mxu0 0.0
    %7817 = vmatprep.subr.mxu0 0.0
    %7818 = vmatpush1.msra.mxu0 0.0
    %7819 = vmatprep.subr.mxu0 0.0
    %7820 = vmatpush1.msra.mxu0 0.0
    %7821 = vmatprep.subr.mxu0 0.0
    %7822 = vmatpush1.msra.mxu0 0.0
    %7823 = vmatprep.subr.mxu0 0.0
    %7824 = vmatpush1.msra.mxu0 0.0
    %7825 = vmatprep.subr.mxu0 0.0
    %7826 = vmatpush1.msra.mxu0 0.0
    %7827 = vmatprep.subr.mxu0 0.0
    %7828 = vmatpush1.msra.mxu0 0.0
    %7829 = vmatprep.subr.mxu0 0.0
    %7830 = vmatpush1.msra.mxu0 0.0
    %7831 = vmatprep.subr.mxu0 0.0
    %7832 = vmatpush1.msra.mxu0 0.0
    %7833 = vmatprep.mubr.f32.mxu0 0.0
    %7834 = vmatmul.mubr.f32.gmra.mrb[0].mxu0 %v7552
    %v7835 = vpop.f32.mrb[0].mxu0
    %v7836 = vadd.f32 %v7767, %v7835
    %v7837 = vpop.f32.mrb[0].mxu0
    %7838 = vdwg.mxu0
    %v7839 = vmax.f32 %v7836, 0.0
    %s7840 = scalar_lea.vmem %s16, 256
    %v7841 = vld [vmem:[%s7840] sm:$0xff]
    %v7842 = vld [vmem:[%s7840 + $0x8] sm:$0xff]
    %v7843 = vld [vmem:[%s7840 + $0x10] sm:$0xff]
    %v7844 = vld [vmem:[%s7840 + $0x18] sm:$0xff]
    %v7845 = vld [vmem:[%s7840 + $0x20] sm:$0xff]
    %v7846 = vld [vmem:[%s7840 + $0x28] sm:$0xff]
    %v7847 = vld [vmem:[%s7840 + $0x30] sm:$0xff]
    %v7848 = vld [vmem:[%s7840 + $0x38] sm:$0xff]
    %v7849 = vld [vmem:[%s7840 + $0x40] sm:$0xff]
    %v7850 = vld [vmem:[%s7840 + $0x48] sm:$0xff]
    %v7851 = vld [vmem:[%s7840 + $0x50] sm:$0xff]
    %v7852 = vld [vmem:[%s7840 + $0x58] sm:$0xff]
    %v7853 = vld [vmem:[%s7840 + $0x60] sm:$0xff]
    %v7854 = vld [vmem:[%s7840 + $0x68] sm:$0xff]
    %v7855 = vld [vmem:[%s7840 + $0x70] sm:$0xff]
    %v7856 = vld [vmem:[%s7840 + $0x78] sm:$0xff]
    %s7857 = scalar_lea.vmem %s17, 2
    %v7858 = vld [vmem:[%s7857] sm:$0x1]
    %v7860 = vlaneseq
    %v7861 = vshrl.u32 %v7860, 7
    %v7862 = vsub.s32 0, %v7861
    %v7863 = vrot.slane %v7858, %v7862
    %7865 = vmatprep.subr.mxu0 0.0
    %7866 = vmatpush1.msra.mxu0 %v7841
    %7867 = vmatprep.subr.mxu0 0.0
    %7868 = vmatpush1.msra.mxu0 %v7842
    %7869 = vmatprep.subr.mxu0 0.0
    %7870 = vmatpush1.msra.mxu0 %v7843
    %7871 = vmatprep.subr.mxu0 0.0
    %7872 = vmatpush1.msra.mxu0 %v7844
    %7873 = vmatprep.subr.mxu0 0.0
    %7874 = vmatpush1.msra.mxu0 %v7845
    %7875 = vmatprep.subr.mxu0 0.0
    %7876 = vmatpush1.msra.mxu0 %v7846
    %7877 = vmatprep.subr.mxu0 0.0
    %7878 = vmatpush1.msra.mxu0 %v7847
    %7879 = vmatprep.subr.mxu0 0.0
    %7880 = vmatpush1.msra.mxu0 %v7848
    %7881 = vmatprep.subr.mxu0 0.0
    %7882 = vmatpush1.msra.mxu0 %v7849
    %7883 = vmatprep.subr.mxu0 0.0
    %7884 = vmatpush1.msra.mxu0 %v7850
    %7885 = vmatprep.subr.mxu0 0.0
    %7886 = vmatpush1.msra.mxu0 %v7851
    %7887 = vmatprep.subr.mxu0 0.0
    %7888 = vmatpush1.msra.mxu0 %v7852
    %7889 = vmatprep.subr.mxu0 0.0
    %7890 = vmatpush1.msra.mxu0 %v7853
    %7891 = vmatprep.subr.mxu0 0.0
    %7892 = vmatpush1.msra.mxu0 %v7854
    %7893 = vmatprep.subr.mxu0 0.0
    %7894 = vmatpush1.msra.mxu0 %v7855
    %7895 = vmatprep.subr.mxu0 0.0
    %7896 = vmatpush1.msra.mxu0 %v7856
    %7897 = vmatprep.subr.mxu0 0.0
    %7898 = vmatpush1.msra.mxu0 0.0
    %7899 = vmatprep.subr.mxu0 0.0
    %7900 = vmatpush1.msra.mxu0 0.0
    %7901 = vmatprep.subr.mxu0 0.0
    %7902 = vmatpush1.msra.mxu0 0.0
    %7903 = vmatprep.subr.mxu0 0.0
    %7904 = vmatpush1.msra.mxu0 0.0
    %7905 = vmatprep.subr.mxu0 0.0
    %7906 = vmatpush1.msra.mxu0 0.0
    %7907 = vmatprep.subr.mxu0 0.0
    %7908 = vmatpush1.msra.mxu0 0.0
    %7909 = vmatprep.subr.mxu0 0.0
    %7910 = vmatpush1.msra.mxu0 0.0
    %7911 = vmatprep.subr.mxu0 0.0
    %7912 = vmatpush1.msra.mxu0 0.0
    %7913 = vmatprep.subr.mxu0 0.0
    %7914 = vmatpush1.msra.mxu0 0.0
    %7915 = vmatprep.subr.mxu0 0.0
    %7916 = vmatpush1.msra.mxu0 0.0
    %7917 = vmatprep.subr.mxu0 0.0
    %7918 = vmatpush1.msra.mxu0 0.0
    %7919 = vmatprep.subr.mxu0 0.0
    %7920 = vmatpush1.msra.mxu0 0.0
    %7921 = vmatprep.subr.mxu0 0.0
    %7922 = vmatpush1.msra.mxu0 0.0
    %7923 = vmatprep.subr.mxu0 0.0
    %7924 = vmatpush1.msra.mxu0 0.0
    %7925 = vmatprep.subr.mxu0 0.0
    %7926 = vmatpush1.msra.mxu0 0.0
    %7927 = vmatprep.subr.mxu0 0.0
    %7928 = vmatpush1.msra.mxu0 0.0
    %7929 = vmatprep.mubr.f32.mxu0 0.0
    %7930 = vmatmul.mubr.f32.gmra.mrb[0].mxu0 %v7839
    %v7931 = vpop.f32.mrb[0].mxu0
    %v7932 = vadd.f32 %v7863, %v7931
    %v7933 = vpop.f32.mrb[0].mxu0
    %7934 = vdwg.mxu0
    %s7935 = scalar_lea.vmem %s18, 4
    %v7936 = vld [vmem:[%s7935] sm:$0x3]
    %v7937 = vmul.f32 %v7932, 0.5
    %v7938 = vmul.f32 %v7937, 1.442695
    %v7939 = vpow.pop %v7938
    %v7940 = vmul.f32 %v7936, %v7939
    %v7941 = vadd.f32 %v7741, %v7940
    %v7942 = vmul.f32 %v7932, -0.5
    %v7943 = vmul.f32 %v7936, 0.5
    %v7944 = vmul.f32 %v7943, %v7936
    %v7945 = vsub.f32 %v7942, %v7944
    %v7946 = vadd.f32 %v5336, %v7945
    %v7947 = vtanh.pop %v7941
    %s7948 = scalar_lea.vmem %s19, 4
    %7949 = vst.msk [vmem:[%s7948] sm:$0x3] %vm5344, %v7947
    %v7950 = vsel %vm2672, %v7946, 0.0
    %7951 = vadd.xlane.f32.xlu0 %v7950
    %v7952 = vpop.xlane.xlu0 %7951
    %vm7953 = vcmask 1024
    %7954 = vst.msk [vmem:[#allocation7] sm:$0x3] %vm7953, %v7952
    %7956 = vrot.lane.b32.xlu0 %v7946, 123
    %v7957 = vpop.permute.xlu0 %7956
    %v7959 = vsel %vm2672, %v7957, 0.0
    %7960 = vadd.xlane.f32.xlu0 %v7959
    %v7961 = vpop.xlane.xlu0 %7960
    %vm7962 = vcmask 9224
    %7963 = vst.msk [vmem:[#allocation7] sm:$0x3] %vm7962, %v7961
    %7964 = vrot.lane.b32.xlu0 %v7946, 118
    %v7965 = vpop.permute.xlu0 %7964
    %v7967 = vsel %vm2672, %v7965, 0.0
    %7968 = vadd.xlane.f32.xlu0 %v7967
    %v7969 = vpop.xlane.xlu0 %7968
    %vm7970 = vcmask 17424
    %7971 = vst.msk [vmem:[#allocation7] sm:$0x3] %vm7970, %v7969
    %7972 = vrot.lane.b32.xlu0 %v7946, 113
    %v7973 = vpop.permute.xlu0 %7972
    %v7975 = vsel %vm2672, %v7973, 0.0
    %7976 = vadd.xlane.f32.xlu0 %v7975
    %v7977 = vpop.xlane.xlu0 %7976
    %vm7978 = vcmask 25624
    %7979 = vst.msk [vmem:[#allocation7] sm:$0x3] %vm7978, %v7977
    // Predicated region
    $region78: #{actor_forward.1} parent=1 // pred_check
      _
    $region79: #{actor_forward.1} parent=1 // pred_check_branch
      %7981 = sbr.rel (0) target = $region81
    $region80: #{actor_forward.1} parent=1 // pred_region
      _
    $region81: #{actor_forward.1} parent=1 // pred_fallthru
      _
    // Predicated region
    $region82: #{actor_forward.1} parent=1 // pred_check
      _
    $region83: #{actor_forward.1} parent=1 // pred_check_branch
      %7983 = sbr.rel (0) target = $region85
    $region84: #{actor_forward.1} parent=1 // pred_region
      %s7985 = ssub.s32 32, 32
      %7986 = vsyncadd [#allocation8], %s7985
      %s7988 = sshll.u32 [#allocation7], 4
      %s7989 = int_to_ptr.vmem [resolvable:$true] %s7988
      %7991 = dma.vmem_to_hbm [thread:$0]  %s7989, 32, %s20, [#allocation8]
    $region85: #{actor_forward.1} parent=1 // pred_fallthru
      _
    // Predicated region
    $region86: #{actor_forward.1} parent=1 // pred_check
      _
    $region87: #{actor_forward.1} parent=1 // pred_check_branch
      %7993 = sbr.rel (0) target = $region89
    $region88: #{actor_forward.1} parent=1 // pred_region
      _
    $region89: #{actor_forward.1} parent=1 // pred_fallthru
      _
    // Predicated region
    $region90: #{actor_forward.1} parent=1 // pred_check
      _
    $region91: #{actor_forward.1} parent=1 // pred_check_branch
      %7995 = sbr.rel (0) target = $region93
    $region92: #{actor_forward.1} parent=1 // pred_region
      %7996 = dma.done [#allocation8], 32
    $region93: #{actor_forward.1} parent=1 // pred_fallthru
      _
    %7997 = vsyncpa [#allocation8], 1

</llo_original>
